<compile_context>
chip_gen: v5e
topology: v5e:2x2
jax: 0.10.0
libtpu: 0.0.40
codegen_flags: <defaults>
</compile_context>

<pallas_src>
import functools

import jax
import jax.numpy as jnp
from jax.experimental import pallas as pl
from jax.experimental.pallas import tpu as pltpu


def _round_up(x, m):
    return ((x + m - 1) // m) * m


# ----------------------------------------------------------------------------
# Fused kernel: 3x (folded GGC + GRUCell) then 2-layer MLP.
# One batch block (bb rows of the lane-dense (B, N*C) slab) per grid step.
# ----------------------------------------------------------------------------
def fused_gnn_kernel(x_ref, cmds_ref, wgru_ref, bgru_ref, w1_ref, b1_ref,
                     w2_ref, b2_ref, o_ref, *, num_layers, D, tanh_bf16):
    x = x_ref[...]                               # (bb, D) f32 node-state slab
    b_gru = bgru_ref[...]                        # (1, 6D) f32  [b_ih | b_hh]

    for layer in range(num_layers):              # unrolled x3
        xb = x.astype(jnp.bfloat16)
        # One (bb,D)@(D,6D) MXU launch per layer.
        #   cols [0:3D)  = x @ (kron(A.T, W_l) @ W_ih_blockdiag)  -> input gates
        #   cols [3D:6D) = x @ W_hh_blockdiag                     -> hidden gates
        # Gate layout is gate-major, so every slice below is 128-lane aligned.
        g = jnp.dot(xb, wgru_ref[layer],
                    preferred_element_type=jnp.float32) + b_gru
        r = jax.nn.sigmoid(g[:, 0:D] + g[:, 3 * D:4 * D])
        z = jax.nn.sigmoid(g[:, D:2 * D] + g[:, 4 * D:5 * D])
        n = jnp.tanh(g[:, 2 * D:3 * D] + r * g[:, 5 * D:6 * D])
        x = (1.0 - z) * n + z * x                # f32 VPU (v5e-safe)

    # MLP fused in: single K = D + cmdP matmul (cmds merged & lane-padded).
    xin = jnp.concatenate([x, cmds_ref[...]], axis=1).astype(jnp.bfloat16)
    h = jnp.dot(xin, w1_ref[...],
                preferred_element_type=jnp.float32) + b1_ref[...]
    if tanh_bf16:
        h_act = jnp.tanh(h.astype(jnp.bfloat16))      # bf16 EUP (v6e/v7x)
    else:
        h_act = jnp.tanh(h).astype(jnp.bfloat16)      # f32 EUP (v5e-safe)
    out = jnp.dot(h_act, w2_ref[...], preferred_element_type=jnp.float32)
    o_ref[...] = out + b2_ref[...]               # (bb, covP) lane-dense store


# ----------------------------------------------------------------------------
# Block / chip heuristics
# ----------------------------------------------------------------------------
def _device_kind():
    try:
        return jax.devices()[0].device_kind.lower()
    except Exception:
        return ""


def _num_tensorcores_per_chip():
    return 2 if "v7" in _device_kind() else 1


def _bf16_eup_ok():
    kind = _device_kind()
    return ("v6" in kind) or ("v7" in kind)


def _pick_batch_block(batch):
    # BlockSpec sublane rule: bb must be a multiple of 8 or equal the full
    # batch.  MXU wants M >= 128-256 and per-grid-step overhead is ~0.35 us,
    # so prefer few, large blocks.  On 2-TC chips (v7x) keep >= 2 grid steps
    # when each block can still have M >= 128.
    cap = 256
    if batch <= cap:
        if _num_tensorcores_per_chip() >= 2 and batch >= 256 and batch % 16 == 0:
            return batch // 2              # two blocks, each M >= 128
        return batch                       # one full-batch block
    for bb in range(cap, 7, -8):           # largest multiple-of-8 divisor <= cap
        if batch % bb == 0:
            return bb
    return batch                           # fallback: single full-batch block


# ----------------------------------------------------------------------------
# pallas_call wrapper
# ----------------------------------------------------------------------------
def gnn_fused(x0, cmds_pad, prep):
    """x0: (B, N*C) f32 lane-dense node inputs; cmds_pad: (B, cmdP) f32."""
    B, D = x0.shape
    cmdP = cmds_pad.shape[1]
    L = prep["wgru"].shape[0]
    H = prep["w1"].shape[1]
    covP = prep["w2_pad"].shape[1]
    bb = _pick_batch_block(B)
    assert B % bb == 0

    operands = (x0, cmds_pad, prep["wgru"], prep["bgru"], prep["w1"],
                prep["b1"], prep["w2_pad"], prep["b2_pad"])

    flops = 2 * B * (L * D * 6 * D + (D + cmdP) * H + H * covP)
    transcendentals = B * (5 * L * D + H)        # sigmoid counted as ~2 EUP ops
    bytes_accessed = (sum(int(a.size) * a.dtype.itemsize for a in operands)
                      + B * covP * 4)

    weight_bytes = sum(int(prep[k].size) * prep[k].dtype.itemsize
                       for k in ("wgru", "bgru", "w1", "b1", "w2_pad", "b2_pad"))
    act_bytes = bb * (D + cmdP + covP) * 4
    # default double-buffering on weights + activations, plus headroom for the
    # in-kernel f32 intermediates (g: bb x 6D, h: bb x H).
    vmem_need = 2 * weight_bytes + 2 * act_bytes + bb * (6 * D + H) * 4 + (4 << 20)
    vmem_limit = int(min(max(vmem_need, 16 << 20), 48 << 20))

    kernel = functools.partial(fused_gnn_kernel, num_layers=L, D=D,
                               tanh_bf16=_bf16_eup_ok())

    def _full(shape):
        # Grid-invariant operand: constant index_map -> its tile is DMA'd once.
        return pl.BlockSpec(shape, lambda *_: (0,) * len(shape))

    return pl.pallas_call(
        kernel,
        out_shape=jax.ShapeDtypeStruct((B, covP), jnp.float32),
        grid_spec=pltpu.PrefetchScalarGridSpec(
            num_scalar_prefetch=0,
            grid=(B // bb,),
            in_specs=[
                pl.BlockSpec((bb, D), lambda i: (i, 0)),       # node states
                pl.BlockSpec((bb, cmdP), lambda i: (i, 0)),    # cmds (padded)
                _full((L, D, 6 * D)),                          # folded GRU W
                _full((1, 6 * D)),                             # folded GRU b
                _full((D + cmdP, H)),                          # W1 (merged)
                _full((1, H)),                                 # b1
                _full((H, covP)),                              # W2 (lane-padded)
                _full((1, covP)),                              # b2 (lane-padded)
            ],
            out_specs=pl.BlockSpec((bb, covP), lambda i: (i, 0)),
        ),
        compiler_params=pltpu.CompilerParams(
            dimension_semantics=("parallel",),
            vmem_limit_bytes=vmem_limit),
        cost_estimate=pl.CostEstimate(
            flops=int(flops), transcendentals=int(transcendentals),
            bytes_accessed=int(bytes_accessed)),
    )(*operands)


# ----------------------------------------------------------------------------
# One-time host-side weight preparation (lane-dense expansions, folds, bf16).
# ----------------------------------------------------------------------------
def _gru_block_diag(w_t, N, C):
    # w_t: (C, 3C) = W^T, PyTorch gate order (r,z,n) on columns.
    # Returns (N*C, 3*N*C), gate-major:
    #   big[n*C+c, g*N*C + m*C + k] = (n==m) * w_t[c, g*C+k]
    wt3 = w_t.reshape(C, 3, C)
    eye = jnp.eye(N, dtype=w_t.dtype)
    big = jnp.einsum('nm,cgk->ncgmk', eye, wt3)
    return big.reshape(N * C, 3 * N * C)


def _gru_bias_big(b, N, C):
    # b: (1, 3C) -> (1, 3*N*C), gate-major, tiled over nodes.
    b3 = b.reshape(3, C)
    return jnp.broadcast_to(b3[:, None, :], (3, N, C)).reshape(1, 3 * N * C)


def prepare_fused_params(params, *, lane=128):
    nodes = params["nodes"]
    N, F = nodes.shape
    C = F + 1
    D = N * C
    L = params["ggc_weight"].shape[0]
    H = params["mlp_w1"].shape[1]
    cov_len = params["mlp_w2"].shape[1]
    cmd_len = params["mlp_w1"].shape[0] - D
    covP = _round_up(cov_len, lane)
    cmdP = _round_up(cmd_len, lane)
    hp = "highest"

    # GRU gate weights expanded to lane-dense, gate-major block-diagonals.
    wih_big = _gru_block_diag(params["gru_w_ih_t"], N, C)   # (D, 3D)
    whh_big = _gru_block_diag(params["gru_w_hh_t"], N, C)   # (D, 3D)

    # Fold channel-mix + 'add' edge aggregation + GRU input gates (all f32):
    #   agg = x @ kron(I_N, W_l) @ kron(A.T, I_C) = x @ kron(A.T, W_l)
    #   gi  = agg @ wih_big = x @ (kron(A.T, W_l) @ wih_big)
    adj_t = params["adj"].T
    wih_fold = jnp.stack([
        jnp.dot(jnp.kron(adj_t, params["ggc_weight"][l]), wih_big, precision=hp)
        for l in range(L)])                                   # (L, D, 3D)
    wgru = jnp.concatenate(
        [wih_fold, jnp.tile(whh_big[None], (L, 1, 1))], axis=2)  # (L, D, 6D)
    bgru = jnp.concatenate(
        [_gru_bias_big(params["gru_b_ih"], N, C),
         _gru_bias_big(params["gru_b_hh"], N, C)], axis=1)       # (1, 6D)

    # MLP layer 1: graph-state rows + (lane-padded) cmd rows stacked into one
    # (D + cmdP, H) weight -> single K = D + cmdP matmul in the kernel.
    w1 = params["mlp_w1"]
    w1_comb = jnp.zeros((D + cmdP, H), jnp.float32)
    w1_comb = w1_comb.at[:D, :].set(w1[:D]).at[D:D + cmd_len, :].set(w1[D:])
    w2_pad = jnp.zeros((H, covP), jnp.float32).at[:, :cov_len].set(params["mlp_w2"])
    b2_pad = jnp.zeros((1, covP), jnp.float32).at[:, :cov_len].set(params["mlp_b2"])

    bf16 = jnp.bfloat16
    return dict(
        wgru=wgru.astype(bf16),
        bgru=bgru,
        w1=w1_comb.astype(bf16),
        b1=params["mlp_b1"],
        w2_pad=w2_pad.astype(bf16),
        b2_pad=b2_pad,
    )


# ----------------------------------------------------------------------------
# Forward pass glue
# ----------------------------------------------------------------------------
def build_node_inputs(nodes, count2label, cov):
    """(B, covLength) cov -> (B, N*C) lane-dense node inputs (nodes ++ cov col)."""
    B = cov.shape[0]
    N, F = nodes.shape
    cov_col = jnp.zeros((B, N), jnp.float32).at[:, count2label].set(cov)
    x = jnp.concatenate(
        [jnp.broadcast_to(nodes, (B, N, F)), cov_col[:, :, None]], axis=-1)
    return x.reshape(B, N * (F + 1))


def gnn_forward(params, prep, cmds, cov):
    cov_len = params["mlp_w2"].shape[1]
    x0 = build_node_inputs(params["nodes"], params["count2label"], cov)
    D = x0.shape[1]
    cmdP = prep["w1"].shape[0] - D
    B, cmdL = cmds.shape
    cmds_pad = jnp.zeros((B, cmdP), jnp.float32).at[:, :cmdL].set(cmds)
    out_padded = gnn_fused(x0, cmds_pad, prep)      # (B, covP)
    return out_padded[:, :cov_len]                  # (B, covLength)


# ----------------------------------------------------------------------------
# Reference (pure JAX, f32) mirroring the PyTorch module — for sanity check.
# ----------------------------------------------------------------------------
def gnn_reference(params, cmds, cov):
    nodes = params["nodes"]
    N, F = nodes.shape
    C = F + 1
    B = cmds.shape[0]
    hp = "highest"
    cov_col = jnp.zeros((B, N), jnp.float32).at[:, params["count2label"]].set(cov)
    x = jnp.concatenate(
        [jnp.broadcast_to(nodes, (B, N, F)), cov_col[:, :, None]], axis=-1)
    A = params["adj"]
    for l in range(params["ggc_weight"].shape[0]):
        m = jnp.einsum('bnc,ck->bnk', x, params["ggc_weight"][l], precision=hp)
        agg = jnp.einsum('ts,bsc->btc', A, m, precision=hp)
        gi = jnp.einsum('bnc,ck->bnk', agg, params["gru_w_ih_t"], precision=hp) \
            + params["gru_b_ih"]
        gh = jnp.einsum('bnc,ck->bnk', x, params["gru_w_hh_t"], precision=hp) \
            + params["gru_b_hh"]
        r = jax.nn.sigmoid(gi[..., :C] + gh[..., :C])
        z = jax.nn.sigmoid(gi[..., C:2 * C] + gh[..., C:2 * C])
        n = jnp.tanh(gi[..., 2 * C:] + r * gh[..., 2 * C:])
        x = (1.0 - z) * n + z * x
    xin = jnp.concatenate([x.reshape(B, -1), cmds], axis=1)
    h = jnp.tanh(jnp.dot(xin, params["mlp_w1"], precision=hp) + params["mlp_b1"])
    return jnp.dot(h, params["mlp_w2"], precision=hp) + params["mlp_b2"]


# ----------------------------------------------------------------------------
# Parameter construction (matches the PyTorch __init__ initialization)
# ----------------------------------------------------------------------------
def build_params(key, *, node_num, node_feat, cov_length, cmd_length,
                 num_edges, num_layers=3, hidden=1024):
    C = node_feat + 1
    ks = jax.random.split(key, 10)

    nodes = jax.random.normal(ks[0], (node_num, node_feat), jnp.float32)
    edges = jax.random.randint(ks[1], (2, num_edges), 0, node_num)
    count2label = jax.random.permutation(ks[2], node_num)[:cov_length]

    # Dense adjacency for aggr='add': out[t] = sum_{edges s->t} m[s]
    adj = jnp.zeros((node_num, node_num), jnp.float32).at[
        edges[1], edges[0]].add(1.0)

    std = 0.5   # 'weight' ~ N(0, 0.5), 'bias' = 0  (as in the module __init__)
    ggc_weight = std * jax.random.normal(ks[3], (num_layers, C, C), jnp.float32)
    gru_w_ih = std * jax.random.normal(ks[4], (3 * C, C), jnp.float32)
    gru_w_hh = std * jax.random.normal(ks[5], (3 * C, C), jnp.float32)
    gru_b_ih = jnp.zeros((1, 3 * C), jnp.float32)
    gru_b_hh = jnp.zeros((1, 3 * C), jnp.float32)

    mlp_in = node_num * C + cmd_length
    mlp_w1 = std * jax.random.normal(ks[6], (mlp_in, hidden), jnp.float32)
    mlp_b1 = jnp.zeros((1, hidden), jnp.float32)
    mlp_w2 = std * jax.random.normal(ks[7], (hidden, cov_length), jnp.float32)
    mlp_b2 = jnp.zeros((1, cov_length), jnp.float32)

    return dict(
        nodes=nodes, edges=edges, count2label=count2label, adj=adj,
        ggc_weight=ggc_weight,
        gru_w_ih_t=gru_w_ih.T, gru_w_hh_t=gru_w_hh.T,
        gru_b_ih=gru_b_ih, gru_b_hh=gru_b_hh,
        mlp_w1=mlp_w1, mlp_b1=mlp_b1, mlp_w2=mlp_w2, mlp_b2=mlp_b2,
    )


if __name__ == "__main__":
    # Small, deterministic shapes consistent with the module.
    NODE_NUM = 16      # graph nodes
    NODE_FEAT = 7      # node feature dim -> channels = 8, N*C = 128 (lane-dense)
    COV_LENGTH = 8
    CMD_LENGTH = 16
    NUM_EDGES = 32
    BATCH = 256        # -> bb = 256 (1 TC/chip) or 128 x 2 grid steps (v7x)

    key = jax.random.PRNGKey(0)
    k_param, k_cmds, k_cov = jax.random.split(key, 3)

    params = build_params(
        k_param, node_num=NODE_NUM, node_feat=NODE_FEAT,
        cov_length=COV_LENGTH, cmd_length=CMD_LENGTH, num_edges=NUM_EDGES)
    prep = prepare_fused_params(params)

    cmds = jax.random.normal(k_cmds, (BATCH, CMD_LENGTH), jnp.float32)
    cov = jax.random.normal(k_cov, (BATCH, COV_LENGTH), jnp.float32)

    fwd = jax.jit(gnn_forward)
    out = jax.block_until_ready(fwd(params, prep, cmds, cov))
    assert out.shape == (BATCH, COV_LENGTH)
    assert bool(jnp.all(jnp.isfinite(out)))

    # Numerical sanity check vs. the f32 reference (kernel uses bf16 MXU
    # operands with f32 accumulation; host-side weight folds are done in f32).
    ref = gnn_reference(params, cmds, cov)
    rel = float(jnp.max(jnp.abs(out - ref)) / (jnp.max(jnp.abs(ref)) + 1e-6))
    assert rel < 0.1, f"relative error too large: {rel}"

    print("KERNEL_OK")
</pallas_src>

<mosaic_0001>
module attributes {stable_mosaic.version = 11 : i64} {
  func.func @fused_gnn_kernel(%arg0: i32, %arg1: memref<256x128xf32, #tpu.memory_space<vmem>>, %arg2: memref<256x128xf32, #tpu.memory_space<vmem>>, %arg3: memref<3x128x768xbf16, #tpu.memory_space<vmem>>, %arg4: memref<1x768xf32, #tpu.memory_space<vmem>>, %arg5: memref<256x1024xbf16, #tpu.memory_space<vmem>>, %arg6: memref<1x1024xf32, #tpu.memory_space<vmem>>, %arg7: memref<1024x128xbf16, #tpu.memory_space<vmem>>, %arg8: memref<1x128xf32, #tpu.memory_space<vmem>>, %arg9: memref<256x128xf32, #tpu.memory_space<vmem>>) attributes {dimension_semantics = [#tpu.dimension_semantics<parallel>], iteration_bounds = array<i64: 1>, scalar_prefetch = 0 : i64, scratch_operands = 0 : i64, tpu.core_type = #tpu.core_type<tc>, window_params = [{transform_indices = @transform_0, window_bounds = array<i64: 256, 128>}, {transform_indices = @transform_1, window_bounds = array<i64: 256, 128>}, {pipeline_mode = #tpu.pipeline_mode<synchronous>, transform_indices = @transform_2, window_bounds = array<i64: 3, 128, 768>}, {pipeline_mode = #tpu.pipeline_mode<synchronous>, transform_indices = @transform_3, window_bounds = array<i64: 1, 768>}, {pipeline_mode = #tpu.pipeline_mode<synchronous>, transform_indices = @transform_4, window_bounds = array<i64: 256, 1024>}, {pipeline_mode = #tpu.pipeline_mode<synchronous>, transform_indices = @transform_5, window_bounds = array<i64: 1, 1024>}, {pipeline_mode = #tpu.pipeline_mode<synchronous>, transform_indices = @transform_6, window_bounds = array<i64: 1024, 128>}, {pipeline_mode = #tpu.pipeline_mode<synchronous>, transform_indices = @transform_7, window_bounds = array<i64: 1, 128>}, {transform_indices = @transform_8, window_bounds = array<i64: 256, 128>}]} {
    %c0 = arith.constant 0 : index
    %c0_0 = arith.constant 0 : index
    %0 = vector.load %arg1[%c0, %c0_0] : memref<256x128xf32, #tpu.memory_space<vmem>>, vector<256x128xf32>
    %c0_1 = arith.constant 0 : index
    %c0_2 = arith.constant 0 : index
    %1 = vector.load %arg4[%c0_1, %c0_2] : memref<1x768xf32, #tpu.memory_space<vmem>>, vector<1x768xf32>
    %2 = arith.truncf %0 : vector<256x128xf32> to vector<256x128xbf16>
    %c0_3 = arith.constant 0 : index
    %c0_4 = arith.constant 0 : index
    %c0_5 = arith.constant 0 : index
    %3 = vector.load %arg3[%c0_3, %c0_4, %c0_5] : memref<3x128x768xbf16, #tpu.memory_space<vmem>>, vector<1x128x768xbf16>
    %4 = vector.shape_cast %3 : vector<1x128x768xbf16> to vector<128x768xbf16>
    %cst = arith.constant dense<0.000000e+00> : vector<256x768xf32>
    %5 = tpu.matmul %2, %4, %cst {dimension_numbers = #tpu.dot_dimension_numbers<[1], [0], [0], [1], [0, 0, 1, 1], [], []>} : vector<256x128xbf16>, vector<128x768xbf16>, vector<256x768xf32> -> vector<256x768xf32>
    %6 = vector.broadcast %1 : vector<1x768xf32> to vector<256x768xf32>
    %7 = arith.addf %5, %6 : vector<256x768xf32>
    %8 = vector.extract_strided_slice %7 {offsets = [0, 0], sizes = [256, 128], strides = [1, 1]} : vector<256x768xf32> to vector<256x128xf32>
    %9 = vector.extract_strided_slice %7 {offsets = [0, 384], sizes = [256, 128], strides = [1, 1]} : vector<256x768xf32> to vector<256x128xf32>
    %10 = arith.addf %8, %9 : vector<256x128xf32>
    %11 = arith.negf %10 : vector<256x128xf32>
    %12 = math.exp %11 : vector<256x128xf32>
    %cst_6 = arith.constant 1.000000e+00 : f32
    %13 = vector.broadcast %cst_6 : f32 to vector<256x128xf32>
    %14 = arith.addf %13, %12 : vector<256x128xf32>
    %15 = arith.divf %13, %14 : vector<256x128xf32>
    %16 = vector.extract_strided_slice %7 {offsets = [0, 128], sizes = [256, 128], strides = [1, 1]} : vector<256x768xf32> to vector<256x128xf32>
    %17 = vector.extract_strided_slice %7 {offsets = [0, 512], sizes = [256, 128], strides = [1, 1]} : vector<256x768xf32> to vector<256x128xf32>
    %18 = arith.addf %16, %17 : vector<256x128xf32>
    %19 = arith.negf %18 : vector<256x128xf32>
    %20 = math.exp %19 : vector<256x128xf32>
    %cst_7 = arith.constant 1.000000e+00 : f32
    %21 = vector.broadcast %cst_7 : f32 to vector<256x128xf32>
    %22 = arith.addf %21, %20 : vector<256x128xf32>
    %23 = arith.divf %21, %22 : vector<256x128xf32>
    %24 = vector.extract_strided_slice %7 {offsets = [0, 256], sizes = [256, 128], strides = [1, 1]} : vector<256x768xf32> to vector<256x128xf32>
    %25 = vector.extract_strided_slice %7 {offsets = [0, 640], sizes = [256, 128], strides = [1, 1]} : vector<256x768xf32> to vector<256x128xf32>
    %26 = arith.mulf %15, %25 : vector<256x128xf32>
    %27 = arith.addf %24, %26 : vector<256x128xf32>
    %28 = math.tanh %27 : vector<256x128xf32>
    %cst_8 = arith.constant 1.000000e+00 : f32
    %29 = vector.broadcast %cst_8 : f32 to vector<256x128xf32>
    %30 = arith.subf %29, %23 : vector<256x128xf32>
    %31 = arith.mulf %30, %28 : vector<256x128xf32>
    %32 = arith.mulf %23, %0 : vector<256x128xf32>
    %33 = arith.addf %31, %32 : vector<256x128xf32>
    %34 = arith.truncf %33 : vector<256x128xf32> to vector<256x128xbf16>
    %c1 = arith.constant 1 : index
    %c0_9 = arith.constant 0 : index
    %c0_10 = arith.constant 0 : index
    %35 = vector.load %arg3[%c1, %c0_9, %c0_10] : memref<3x128x768xbf16, #tpu.memory_space<vmem>>, vector<1x128x768xbf16>
    %36 = vector.shape_cast %35 : vector<1x128x768xbf16> to vector<128x768xbf16>
    %cst_11 = arith.constant dense<0.000000e+00> : vector<256x768xf32>
    %37 = tpu.matmul %34, %36, %cst_11 {dimension_numbers = #tpu.dot_dimension_numbers<[1], [0], [0], [1], [0, 0, 1, 1], [], []>} : vector<256x128xbf16>, vector<128x768xbf16>, vector<256x768xf32> -> vector<256x768xf32>
    %38 = vector.broadcast %1 : vector<1x768xf32> to vector<256x768xf32>
    %39 = arith.addf %37, %38 : vector<256x768xf32>
    %40 = vector.extract_strided_slice %39 {offsets = [0, 0], sizes = [256, 128], strides = [1, 1]} : vector<256x768xf32> to vector<256x128xf32>
    %41 = vector.extract_strided_slice %39 {offsets = [0, 384], sizes = [256, 128], strides = [1, 1]} : vector<256x768xf32> to vector<256x128xf32>
    %42 = arith.addf %40, %41 : vector<256x128xf32>
    %43 = arith.negf %42 : vector<256x128xf32>
    %44 = math.exp %43 : vector<256x128xf32>
    %cst_12 = arith.constant 1.000000e+00 : f32
    %45 = vector.broadcast %cst_12 : f32 to vector<256x128xf32>
    %46 = arith.addf %45, %44 : vector<256x128xf32>
    %47 = arith.divf %45, %46 : vector<256x128xf32>
    %48 = vector.extract_strided_slice %39 {offsets = [0, 128], sizes = [256, 128], strides = [1, 1]} : vector<256x768xf32> to vector<256x128xf32>
    %49 = vector.extract_strided_slice %39 {offsets = [0, 512], sizes = [256, 128], strides = [1, 1]} : vector<256x768xf32> to vector<256x128xf32>
    %50 = arith.addf %48, %49 : vector<256x128xf32>
    %51 = arith.negf %50 : vector<256x128xf32>
    %52 = math.exp %51 : vector<256x128xf32>
    %cst_13 = arith.constant 1.000000e+00 : f32
    %53 = vector.broadcast %cst_13 : f32 to vector<256x128xf32>
    %54 = arith.addf %53, %52 : vector<256x128xf32>
    %55 = arith.divf %53, %54 : vector<256x128xf32>
    %56 = vector.extract_strided_slice %39 {offsets = [0, 256], sizes = [256, 128], strides = [1, 1]} : vector<256x768xf32> to vector<256x128xf32>
    %57 = vector.extract_strided_slice %39 {offsets = [0, 640], sizes = [256, 128], strides = [1, 1]} : vector<256x768xf32> to vector<256x128xf32>
    %58 = arith.mulf %47, %57 : vector<256x128xf32>
    %59 = arith.addf %56, %58 : vector<256x128xf32>
    %60 = math.tanh %59 : vector<256x128xf32>
    %cst_14 = arith.constant 1.000000e+00 : f32
    %61 = vector.broadcast %cst_14 : f32 to vector<256x128xf32>
    %62 = arith.subf %61, %55 : vector<256x128xf32>
    %63 = arith.mulf %62, %60 : vector<256x128xf32>
    %64 = arith.mulf %55, %33 : vector<256x128xf32>
    %65 = arith.addf %63, %64 : vector<256x128xf32>
    %66 = arith.truncf %65 : vector<256x128xf32> to vector<256x128xbf16>
    %c2 = arith.constant 2 : index
    %c0_15 = arith.constant 0 : index
    %c0_16 = arith.constant 0 : index
    %67 = vector.load %arg3[%c2, %c0_15, %c0_16] : memref<3x128x768xbf16, #tpu.memory_space<vmem>>, vector<1x128x768xbf16>
    %68 = vector.shape_cast %67 : vector<1x128x768xbf16> to vector<128x768xbf16>
    %cst_17 = arith.constant dense<0.000000e+00> : vector<256x768xf32>
    %69 = tpu.matmul %66, %68, %cst_17 {dimension_numbers = #tpu.dot_dimension_numbers<[1], [0], [0], [1], [0, 0, 1, 1], [], []>} : vector<256x128xbf16>, vector<128x768xbf16>, vector<256x768xf32> -> vector<256x768xf32>
    %70 = vector.broadcast %1 : vector<1x768xf32> to vector<256x768xf32>
    %71 = arith.addf %69, %70 : vector<256x768xf32>
    %72 = vector.extract_strided_slice %71 {offsets = [0, 0], sizes = [256, 128], strides = [1, 1]} : vector<256x768xf32> to vector<256x128xf32>
    %73 = vector.extract_strided_slice %71 {offsets = [0, 384], sizes = [256, 128], strides = [1, 1]} : vector<256x768xf32> to vector<256x128xf32>
    %74 = arith.addf %72, %73 : vector<256x128xf32>
    %75 = arith.negf %74 : vector<256x128xf32>
    %76 = math.exp %75 : vector<256x128xf32>
    %cst_18 = arith.constant 1.000000e+00 : f32
    %77 = vector.broadcast %cst_18 : f32 to vector<256x128xf32>
    %78 = arith.addf %77, %76 : vector<256x128xf32>
    %79 = arith.divf %77, %78 : vector<256x128xf32>
    %80 = vector.extract_strided_slice %71 {offsets = [0, 128], sizes = [256, 128], strides = [1, 1]} : vector<256x768xf32> to vector<256x128xf32>
    %81 = vector.extract_strided_slice %71 {offsets = [0, 512], sizes = [256, 128], strides = [1, 1]} : vector<256x768xf32> to vector<256x128xf32>
    %82 = arith.addf %80, %81 : vector<256x128xf32>
    %83 = arith.negf %82 : vector<256x128xf32>
    %84 = math.exp %83 : vector<256x128xf32>
    %cst_19 = arith.constant 1.000000e+00 : f32
    %85 = vector.broadcast %cst_19 : f32 to vector<256x128xf32>
    %86 = arith.addf %85, %84 : vector<256x128xf32>
    %87 = arith.divf %85, %86 : vector<256x128xf32>
    %88 = vector.extract_strided_slice %71 {offsets = [0, 256], sizes = [256, 128], strides = [1, 1]} : vector<256x768xf32> to vector<256x128xf32>
    %89 = vector.extract_strided_slice %71 {offsets = [0, 640], sizes = [256, 128], strides = [1, 1]} : vector<256x768xf32> to vector<256x128xf32>
    %90 = arith.mulf %79, %89 : vector<256x128xf32>
    %91 = arith.addf %88, %90 : vector<256x128xf32>
    %92 = math.tanh %91 : vector<256x128xf32>
    %cst_20 = arith.constant 1.000000e+00 : f32
    %93 = vector.broadcast %cst_20 : f32 to vector<256x128xf32>
    %94 = arith.subf %93, %87 : vector<256x128xf32>
    %95 = arith.mulf %94, %92 : vector<256x128xf32>
    %96 = arith.mulf %87, %65 : vector<256x128xf32>
    %97 = arith.addf %95, %96 : vector<256x128xf32>
    %c0_21 = arith.constant 0 : index
    %c0_22 = arith.constant 0 : index
    %98 = vector.load %arg2[%c0_21, %c0_22] : memref<256x128xf32, #tpu.memory_space<vmem>>, vector<256x128xf32>
    %99 = tpu.concatenate %97, %98 in 1 : vector<256x128xf32>, vector<256x128xf32> -> vector<256x256xf32>
    %100 = arith.truncf %99 : vector<256x256xf32> to vector<256x256xbf16>
    %c0_23 = arith.constant 0 : index
    %c0_24 = arith.constant 0 : index
    %101 = vector.load %arg5[%c0_23, %c0_24] : memref<256x1024xbf16, #tpu.memory_space<vmem>>, vector<256x1024xbf16>
    %cst_25 = arith.constant dense<0.000000e+00> : vector<256x1024xf32>
    %102 = tpu.matmul %100, %101, %cst_25 {dimension_numbers = #tpu.dot_dimension_numbers<[1], [0], [0], [1], [0, 0, 1, 1], [], []>} : vector<256x256xbf16>, vector<256x1024xbf16>, vector<256x1024xf32> -> vector<256x1024xf32>
    %c0_26 = arith.constant 0 : index
    %c0_27 = arith.constant 0 : index
    %103 = vector.load %arg6[%c0_26, %c0_27] : memref<1x1024xf32, #tpu.memory_space<vmem>>, vector<1x1024xf32>
    %104 = vector.broadcast %103 : vector<1x1024xf32> to vector<256x1024xf32>
    %105 = arith.addf %102, %104 : vector<256x1024xf32>
    %106 = math.tanh %105 : vector<256x1024xf32>
    %107 = arith.truncf %106 : vector<256x1024xf32> to vector<256x1024xbf16>
    %c0_28 = arith.constant 0 : index
    %c0_29 = arith.constant 0 : index
    %108 = vector.load %arg7[%c0_28, %c0_29] : memref<1024x128xbf16, #tpu.memory_space<vmem>>, vector<1024x128xbf16>
    %cst_30 = arith.constant dense<0.000000e+00> : vector<256x128xf32>
    %109 = tpu.matmul %107, %108, %cst_30 {dimension_numbers = #tpu.dot_dimension_numbers<[1], [0], [0], [1], [0, 0, 1, 1], [], []>} : vector<256x1024xbf16>, vector<1024x128xbf16>, vector<256x128xf32> -> vector<256x128xf32>
    %c0_31 = arith.constant 0 : index
    %c0_32 = arith.constant 0 : index
    %110 = vector.load %arg8[%c0_31, %c0_32] : memref<1x128xf32, #tpu.memory_space<vmem>>, vector<1x128xf32>
    %111 = vector.broadcast %110 : vector<1x128xf32> to vector<256x128xf32>
    %112 = arith.addf %109, %111 : vector<256x128xf32>
    %c0_33 = arith.constant 0 : index
    %c0_34 = arith.constant 0 : index
    %113 = vector.load %arg9[%c0_33, %c0_34] : memref<256x128xf32, #tpu.memory_space<vmem>>, vector<256x128xf32>
    tpu.vector_store %arg9[%c0_33, %c0_34], %112 {strides = array<i32>} : memref<256x128xf32, #tpu.memory_space<vmem>>, vector<256x128xf32>,
    return
  }
  func.func @transform_0(%arg0: i32) -> (i32, i32) {
    %c0_i32 = arith.constant 0 : i32
    %c0_i32_0 = arith.constant 0 : i32
    return %arg0, %c0_i32 : i32, i32
  }
  func.func @transform_1(%arg0: i32) -> (i32, i32) {
    %c0_i32 = arith.constant 0 : i32
    %c0_i32_0 = arith.constant 0 : i32
    return %arg0, %c0_i32 : i32, i32
  }
  func.func @transform_2(%arg0: i32) -> (i32, i32, i32) {
    %c0_i32 = arith.constant 0 : i32
    %c0_i32_0 = arith.constant 0 : i32
    %c0_i32_1 = arith.constant 0 : i32
    %c0_i32_2 = arith.constant 0 : i32
    return %c0_i32, %c0_i32_0, %c0_i32_1 : i32, i32, i32
  }
  func.func @transform_3(%arg0: i32) -> (i32, i32) {
    %c0_i32 = arith.constant 0 : i32
    %c0_i32_0 = arith.constant 0 : i32
    %c0_i32_1 = arith.constant 0 : i32
    return %c0_i32, %c0_i32_0 : i32, i32
  }
  func.func @transform_4(%arg0: i32) -> (i32, i32) {
    %c0_i32 = arith.constant 0 : i32
    %c0_i32_0 = arith.constant 0 : i32
    %c0_i32_1 = arith.constant 0 : i32
    return %c0_i32, %c0_i32_0 : i32, i32
  }
  func.func @transform_5(%arg0: i32) -> (i32, i32) {
    %c0_i32 = arith.constant 0 : i32
    %c0_i32_0 = arith.constant 0 : i32
    %c0_i32_1 = arith.constant 0 : i32
    return %c0_i32, %c0_i32_0 : i32, i32
  }
  func.func @transform_6(%arg0: i32) -> (i32, i32) {
    %c0_i32 = arith.constant 0 : i32
    %c0_i32_0 = arith.constant 0 : i32
    %c0_i32_1 = arith.constant 0 : i32
    return %c0_i32, %c0_i32_0 : i32, i32
  }
  func.func @transform_7(%arg0: i32) -> (i32, i32) {
    %c0_i32 = arith.constant 0 : i32
    %c0_i32_0 = arith.constant 0 : i32
    %c0_i32_1 = arith.constant 0 : i32
    return %c0_i32, %c0_i32_0 : i32, i32
  }
  func.func @transform_8(%arg0: i32) -> (i32, i32) {
    %c0_i32 = arith.constant 0 : i32
    %c0_i32_0 = arith.constant 0 : i32
    return %arg0, %c0_i32 : i32, i32
  }
}

</mosaic_0001>

<llo_original>
// kernel: gnn_forward.1
$region0: #{gnn_forward.1}
  #allocation0 [shape = 'u32[]', space=smem, size = 0x4, offset = 0x4, fixed_abs, tag = 'smem constant byte address 0x4 - core index']
  #allocation1 [shape = 'u32[72,128]{1,0:T(1,128)}', space=vmem, size = 0x9000, scoped, tag = 'internal scratch']
  %s0 = inlined_call_operand.vmem [shape: f32[256,128], index: 0, kind: input, shape index: {}]
  %s1 = inlined_call_operand.vmem [shape: f32[256,128], index: 1, kind: input, shape index: {}]
  %s2 = inlined_call_operand.vmem [shape: bf16[3,128,768], index: 2, kind: input, shape index: {}]
  %s3 = inlined_call_operand.vmem [shape: f32[1,768], index: 3, kind: input, shape index: {}]
  %s4 = inlined_call_operand.vmem [shape: bf16[256,1024], index: 4, kind: input, shape index: {}]
  %s5 = inlined_call_operand.vmem [shape: f32[1,1024], index: 5, kind: input, shape index: {}]
  %s6 = inlined_call_operand.vmem [shape: bf16[1024,128], index: 6, kind: input, shape index: {}]
  %s7 = inlined_call_operand.vmem [shape: f32[1,128], index: 7, kind: input, shape index: {}]
  %s8 = inlined_call_operand.vmem [shape: f32[256,128], index: 8, kind: output, shape index: {}]
  %s9 = sld [smem:[#allocation0]]
  $region42: #{gnn_forward.1} parent=0
    _
  %s11 = ssub.s32 1, %s9
  %s12 = scalar_select 0, %s11, %s9
  // Predicated region
  $region2: #{gnn_forward.1} parent=0 // pred_check
    _
  $region3: #{gnn_forward.1} parent=0 // pred_check_branch
    %14 = sbr.rel (0) target = $region5
  $region4: #{gnn_forward.1} parent=0 // pred_region
    _
  $region5: #{gnn_forward.1} parent=0 // pred_fallthru
    _
  // Predicated region
  $region6: #{gnn_forward.1} parent=0 // pred_check
    _
  $region7: #{gnn_forward.1} parent=0 // pred_check_branch
    %16 = sbr.rel (0) target = $region9
  $region8: #{gnn_forward.1} parent=0 // pred_region
    _
  $region9: #{gnn_forward.1} parent=0 // pred_fallthru
    _
  // Predicated region
  $region10: #{gnn_forward.1} parent=0 // pred_check
    _
  $region11: #{gnn_forward.1} parent=0 // pred_check_branch
    %18 = sbr.rel (0) target = $region13
  $region12: #{gnn_forward.1} parent=0 // pred_region
    _
  $region13: #{gnn_forward.1} parent=0 // pred_fallthru
    _
  // Predicated region
  $region14: #{gnn_forward.1} parent=0 // pred_check
    _
  $region15: #{gnn_forward.1} parent=0 // pred_check_branch
    %20 = sbr.rel (0) target = $region17
  $region16: #{gnn_forward.1} parent=0 // pred_region
    _
  $region17: #{gnn_forward.1} parent=0 // pred_fallthru
    _
  // Predicated region
  $region18: #{gnn_forward.1} parent=0 // pred_check
    _
  $region19: #{gnn_forward.1} parent=0 // pred_check_branch
    %22 = sbr.rel (0) target = $region21
  $region20: #{gnn_forward.1} parent=0 // pred_region
    _
  $region21: #{gnn_forward.1} parent=0 // pred_fallthru
    _
  // Predicated region
  $region22: #{gnn_forward.1} parent=0 // pred_check
    _
  $region23: #{gnn_forward.1} parent=0 // pred_check_branch
    %24 = sbr.rel (0) target = $region25
  $region24: #{gnn_forward.1} parent=0 // pred_region
    _
  $region25: #{gnn_forward.1} parent=0 // pred_fallthru
    _
  // Predicated region
  $region26: #{gnn_forward.1} parent=0 // pred_check
    _
  $region27: #{gnn_forward.1} parent=0 // pred_check_branch
    %26 = sbr.rel (0) target = $region29
  $region28: #{gnn_forward.1} parent=0 // pred_region
    _
  $region29: #{gnn_forward.1} parent=0 // pred_fallthru
    _
  // Predicated region
  $region30: #{gnn_forward.1} parent=0 // pred_check
    _
  $region31: #{gnn_forward.1} parent=0 // pred_check_branch
    %28 = sbr.rel (0) target = $region33
  $region32: #{gnn_forward.1} parent=0 // pred_region
    _
  $region33: #{gnn_forward.1} parent=0 // pred_fallthru
    _
  %v29 = vld [vmem:[%s0] sm:$0xff]
  %v30 = vld [vmem:[%s0 + $0x8] sm:$0xff]
  %v31 = vld [vmem:[%s0 + $0x10] sm:$0xff]
  %v32 = vld [vmem:[%s0 + $0x18] sm:$0xff]
  %v33 = vld [vmem:[%s0 + $0x20] sm:$0xff]
  %v34 = vld [vmem:[%s0 + $0x28] sm:$0xff]
  %v35 = vld [vmem:[%s0 + $0x30] sm:$0xff]
  %v36 = vld [vmem:[%s0 + $0x38] sm:$0xff]
  %v37 = vld [vmem:[%s0 + $0x40] sm:$0xff]
  %v38 = vld [vmem:[%s0 + $0x48] sm:$0xff]
  %v39 = vld [vmem:[%s0 + $0x50] sm:$0xff]
  %v40 = vld [vmem:[%s0 + $0x58] sm:$0xff]
  %v41 = vld [vmem:[%s0 + $0x60] sm:$0xff]
  %v42 = vld [vmem:[%s0 + $0x68] sm:$0xff]
  %v43 = vld [vmem:[%s0 + $0x70] sm:$0xff]
  %v44 = vld [vmem:[%s0 + $0x78] sm:$0xff]
  %v45 = vld [vmem:[%s0 + $0x80] sm:$0xff]
  %v46 = vld [vmem:[%s0 + $0x88] sm:$0xff]
  %v47 = vld [vmem:[%s0 + $0x90] sm:$0xff]
  %v48 = vld [vmem:[%s0 + $0x98] sm:$0xff]
  %v49 = vld [vmem:[%s0 + $0xa0] sm:$0xff]
  %v50 = vld [vmem:[%s0 + $0xa8] sm:$0xff]
  %v51 = vld [vmem:[%s0 + $0xb0] sm:$0xff]
  %v52 = vld [vmem:[%s0 + $0xb8] sm:$0xff]
  %v53 = vld [vmem:[%s0 + $0xc0] sm:$0xff]
  %v54 = vld [vmem:[%s0 + $0xc8] sm:$0xff]
  %v55 = vld [vmem:[%s0 + $0xd0] sm:$0xff]
  %v56 = vld [vmem:[%s0 + $0xd8] sm:$0xff]
  %v57 = vld [vmem:[%s0 + $0xe0] sm:$0xff]
  %v58 = vld [vmem:[%s0 + $0xe8] sm:$0xff]
  %v59 = vld [vmem:[%s0 + $0xf0] sm:$0xff]
  %v60 = vld [vmem:[%s0 + $0xf8] sm:$0xff]
  %v61 = vld [vmem:[%s3] sm:$0x3f]
  %v62 = vpack.c.bf16 %v30, %v29
  %v63 = vpack.c.bf16 %v32, %v31
  %v64 = vpack.c.bf16 %v34, %v33
  %v65 = vpack.c.bf16 %v36, %v35
  %v66 = vpack.c.bf16 %v38, %v37
  %v67 = vpack.c.bf16 %v40, %v39
  %v68 = vpack.c.bf16 %v42, %v41
  %v69 = vpack.c.bf16 %v44, %v43
  %v70 = vpack.c.bf16 %v46, %v45
  %v71 = vpack.c.bf16 %v48, %v47
  %v72 = vpack.c.bf16 %v50, %v49
  %v73 = vpack.c.bf16 %v52, %v51
  %v74 = vpack.c.bf16 %v54, %v53
  %v75 = vpack.c.bf16 %v56, %v55
  %v76 = vpack.c.bf16 %v58, %v57
  %v77 = vpack.c.bf16 %v60, %v59
  %v78 = vld [vmem:[%s2] sm:$0xff]
  %v79 = vld [vmem:[%s2 + $0x8] sm:$0xff]
  %v80 = vld [vmem:[%s2 + $0x10] sm:$0xff]
  %v81 = vld [vmem:[%s2 + $0x18] sm:$0xff]
  %v82 = vld [vmem:[%s2 + $0x20] sm:$0xff]
  %v83 = vld [vmem:[%s2 + $0x28] sm:$0xff]
  %v84 = vld [vmem:[%s2 + $0x30] sm:$0xff]
  %v85 = vld [vmem:[%s2 + $0x38] sm:$0xff]
  %v86 = vld [vmem:[%s2 + $0x40] sm:$0xff]
  %v87 = vld [vmem:[%s2 + $0x48] sm:$0xff]
  %v88 = vld [vmem:[%s2 + $0x50] sm:$0xff]
  %v89 = vld [vmem:[%s2 + $0x58] sm:$0xff]
  %v90 = vld [vmem:[%s2 + $0x60] sm:$0xff]
  %v91 = vld [vmem:[%s2 + $0x68] sm:$0xff]
  %v92 = vld [vmem:[%s2 + $0x70] sm:$0xff]
  %v93 = vld [vmem:[%s2 + $0x78] sm:$0xff]
  %v94 = vld [vmem:[%s2 + $0x80] sm:$0xff]
  %v95 = vld [vmem:[%s2 + $0x88] sm:$0xff]
  %v96 = vld [vmem:[%s2 + $0x90] sm:$0xff]
  %v97 = vld [vmem:[%s2 + $0x98] sm:$0xff]
  %v98 = vld [vmem:[%s2 + $0xa0] sm:$0xff]
  %v99 = vld [vmem:[%s2 + $0xa8] sm:$0xff]
  %v100 = vld [vmem:[%s2 + $0xb0] sm:$0xff]
  %v101 = vld [vmem:[%s2 + $0xb8] sm:$0xff]
  %v102 = vld [vmem:[%s2 + $0xc0] sm:$0xff]
  %v103 = vld [vmem:[%s2 + $0xc8] sm:$0xff]
  %v104 = vld [vmem:[%s2 + $0xd0] sm:$0xff]
  %v105 = vld [vmem:[%s2 + $0xd8] sm:$0xff]
  %v106 = vld [vmem:[%s2 + $0xe0] sm:$0xff]
  %v107 = vld [vmem:[%s2 + $0xe8] sm:$0xff]
  %v108 = vld [vmem:[%s2 + $0xf0] sm:$0xff]
  %v109 = vld [vmem:[%s2 + $0xf8] sm:$0xff]
  %v110 = vld [vmem:[%s2 + $0x100] sm:$0xff]
  %v111 = vld [vmem:[%s2 + $0x108] sm:$0xff]
  %v112 = vld [vmem:[%s2 + $0x110] sm:$0xff]
  %v113 = vld [vmem:[%s2 + $0x118] sm:$0xff]
  %v114 = vld [vmem:[%s2 + $0x120] sm:$0xff]
  %v115 = vld [vmem:[%s2 + $0x128] sm:$0xff]
  %v116 = vld [vmem:[%s2 + $0x130] sm:$0xff]
  %v117 = vld [vmem:[%s2 + $0x138] sm:$0xff]
  %v118 = vld [vmem:[%s2 + $0x140] sm:$0xff]
  %v119 = vld [vmem:[%s2 + $0x148] sm:$0xff]
  %v120 = vld [vmem:[%s2 + $0x150] sm:$0xff]
  %v121 = vld [vmem:[%s2 + $0x158] sm:$0xff]
  %v122 = vld [vmem:[%s2 + $0x160] sm:$0xff]
  %v123 = vld [vmem:[%s2 + $0x168] sm:$0xff]
  %v124 = vld [vmem:[%s2 + $0x170] sm:$0xff]
  %v125 = vld [vmem:[%s2 + $0x178] sm:$0xff]
  %v127 = vperm.slane %v61, 0
  %v128 = vperm.slane %v61, 1
  %v129 = vperm.slane %v61, 2
  %v130 = vperm.slane %v61, 3
  %v131 = vperm.slane %v61, 4
  %v132 = vperm.slane %v61, 5
  %v187 = vunpack.c.l.b16 %v78
  %v188 = vunpack.c.h.b16 %v78
  %v189 = vunpack.c.l.b16 %v79
  %v190 = vunpack.c.h.b16 %v79
  %v191 = vunpack.c.l.b16 %v80
  %v192 = vunpack.c.h.b16 %v80
  %v193 = vunpack.c.l.b16 %v81
  %v194 = vunpack.c.h.b16 %v81
  %v195 = vunpack.c.l.b16 %v82
  %v196 = vunpack.c.h.b16 %v82
  %v197 = vunpack.c.l.b16 %v83
  %v198 = vunpack.c.h.b16 %v83
  %v199 = vunpack.c.l.b16 %v84
  %v200 = vunpack.c.h.b16 %v84
  %v201 = vunpack.c.l.b16 %v85
  %v202 = vunpack.c.h.b16 %v85
  %v203 = vunpack.c.l.b16 %v86
  %v204 = vunpack.c.h.b16 %v86
  %v205 = vunpack.c.l.b16 %v87
  %v206 = vunpack.c.h.b16 %v87
  %v207 = vunpack.c.l.b16 %v88
  %v208 = vunpack.c.h.b16 %v88
  %v209 = vunpack.c.l.b16 %v89
  %v210 = vunpack.c.h.b16 %v89
  %v211 = vunpack.c.l.b16 %v90
  %v212 = vunpack.c.h.b16 %v90
  %v213 = vunpack.c.l.b16 %v91
  %v214 = vunpack.c.h.b16 %v91
  %v215 = vunpack.c.l.b16 %v92
  %v216 = vunpack.c.h.b16 %v92
  %v217 = vunpack.c.l.b16 %v93
  %v218 = vunpack.c.h.b16 %v93
  %v219 = vunpack.c.l.b16 %v94
  %v220 = vunpack.c.h.b16 %v94
  %v221 = vunpack.c.l.b16 %v95
  %v222 = vunpack.c.h.b16 %v95
  %v223 = vunpack.c.l.b16 %v96
  %v224 = vunpack.c.h.b16 %v96
  %v225 = vunpack.c.l.b16 %v97
  %v226 = vunpack.c.h.b16 %v97
  %v227 = vunpack.c.l.b16 %v98
  %v228 = vunpack.c.h.b16 %v98
  %v229 = vunpack.c.l.b16 %v99
  %v230 = vunpack.c.h.b16 %v99
  %v231 = vunpack.c.l.b16 %v100
  %v232 = vunpack.c.h.b16 %v100
  %v233 = vunpack.c.l.b16 %v101
  %v234 = vunpack.c.h.b16 %v101
  %v235 = vunpack.c.l.b16 %v102
  %v236 = vunpack.c.h.b16 %v102
  %v237 = vunpack.c.l.b16 %v103
  %v238 = vunpack.c.h.b16 %v103
  %v239 = vunpack.c.l.b16 %v104
  %v240 = vunpack.c.h.b16 %v104
  %v241 = vunpack.c.l.b16 %v105
  %v242 = vunpack.c.h.b16 %v105
  %v243 = vunpack.c.l.b16 %v106
  %v244 = vunpack.c.h.b16 %v106
  %v245 = vunpack.c.l.b16 %v107
  %v246 = vunpack.c.h.b16 %v107
  %v247 = vunpack.c.l.b16 %v108
  %v248 = vunpack.c.h.b16 %v108
  %v249 = vunpack.c.l.b16 %v109
  %v250 = vunpack.c.h.b16 %v109
  %v251 = vunpack.c.l.b16 %v110
  %v252 = vunpack.c.h.b16 %v110
  %v253 = vunpack.c.l.b16 %v111
  %v254 = vunpack.c.h.b16 %v111
  %v255 = vunpack.c.l.b16 %v112
  %v256 = vunpack.c.h.b16 %v112
  %v257 = vunpack.c.l.b16 %v113
  %v258 = vunpack.c.h.b16 %v113
  %v259 = vunpack.c.l.b16 %v114
  %v260 = vunpack.c.h.b16 %v114
  %v261 = vunpack.c.l.b16 %v115
  %v262 = vunpack.c.h.b16 %v115
  %v263 = vunpack.c.l.b16 %v116
  %v264 = vunpack.c.h.b16 %v116
  %v265 = vunpack.c.l.b16 %v117
  %v266 = vunpack.c.h.b16 %v117
  %v267 = vunpack.c.l.b16 %v118
  %v268 = vunpack.c.h.b16 %v118
  %v269 = vunpack.c.l.b16 %v119
  %v270 = vunpack.c.h.b16 %v119
  %v271 = vunpack.c.l.b16 %v120
  %v272 = vunpack.c.h.b16 %v120
  %v273 = vunpack.c.l.b16 %v121
  %v274 = vunpack.c.h.b16 %v121
  %v275 = vunpack.c.l.b16 %v122
  %v276 = vunpack.c.h.b16 %v122
  %v277 = vunpack.c.l.b16 %v123
  %v278 = vunpack.c.h.b16 %v123
  %v279 = vunpack.c.l.b16 %v124
  %v280 = vunpack.c.h.b16 %v124
  %v281 = vunpack.c.l.b16 %v125
  %v282 = vunpack.c.h.b16 %v125
  %v283 = vpack.c.b16 %v193, %v187
  %v284 = vpack.c.b16 %v194, %v188
  %v285 = vpack.c.b16 %v195, %v189
  %v286 = vpack.c.b16 %v196, %v190
  %v287 = vpack.c.b16 %v197, %v191
  %v288 = vpack.c.b16 %v198, %v192
  %v289 = vpack.c.b16 %v205, %v199
  %v290 = vpack.c.b16 %v206, %v200
  %v291 = vpack.c.b16 %v207, %v201
  %v292 = vpack.c.b16 %v208, %v202
  %v293 = vpack.c.b16 %v209, %v203
  %v294 = vpack.c.b16 %v210, %v204
  %v295 = vpack.c.b16 %v217, %v211
  %v296 = vpack.c.b16 %v218, %v212
  %v297 = vpack.c.b16 %v219, %v213
  %v298 = vpack.c.b16 %v220, %v214
  %v299 = vpack.c.b16 %v221, %v215
  %v300 = vpack.c.b16 %v222, %v216
  %v301 = vpack.c.b16 %v229, %v223
  %v302 = vpack.c.b16 %v230, %v224
  %v303 = vpack.c.b16 %v231, %v225
  %v304 = vpack.c.b16 %v232, %v226
  %v305 = vpack.c.b16 %v233, %v227
  %v306 = vpack.c.b16 %v234, %v228
  %v307 = vpack.c.b16 %v241, %v235
  %v308 = vpack.c.b16 %v242, %v236
  %v309 = vpack.c.b16 %v243, %v237
  %v310 = vpack.c.b16 %v244, %v238
  %v311 = vpack.c.b16 %v245, %v239
  %v312 = vpack.c.b16 %v246, %v240
  %v313 = vpack.c.b16 %v253, %v247
  %v314 = vpack.c.b16 %v254, %v248
  %v315 = vpack.c.b16 %v255, %v249
  %v316 = vpack.c.b16 %v256, %v250
  %v317 = vpack.c.b16 %v257, %v251
  %v318 = vpack.c.b16 %v258, %v252
  %v319 = vpack.c.b16 %v265, %v259
  %v320 = vpack.c.b16 %v266, %v260
  %v321 = vpack.c.b16 %v267, %v261
  %v322 = vpack.c.b16 %v268, %v262
  %v323 = vpack.c.b16 %v269, %v263
  %v324 = vpack.c.b16 %v270, %v264
  %v325 = vpack.c.b16 %v277, %v271
  %v326 = vpack.c.b16 %v278, %v272
  %v327 = vpack.c.b16 %v279, %v273
  %v328 = vpack.c.b16 %v280, %v274
  %v329 = vpack.c.b16 %v281, %v275
  %v330 = vpack.c.b16 %v282, %v276
  %379 = vmatpush.bf16.msra.mxu0 %v325
  %380 = vmatpush.bf16.msra.mxu0 %v319
  %381 = vmatpush.bf16.msra.mxu0 %v313
  %382 = vmatpush.bf16.msra.mxu0 %v307
  %383 = vmatpush.bf16.msra.mxu0 %v301
  %384 = vmatpush.bf16.msra.mxu0 %v295
  %385 = vmatpush.bf16.msra.mxu0 %v289
  %386 = vmatpush.bf16.msra.mxu0 %v283
  %387 = vmatmul.bf16.gmra.mxu0 %v62
  %v388 = vpop.f32.mrf.mxu0
  %v389 = vadd.f32 %v127, %v388
  %v390 = vpop.f32.mrf.mxu0
  %v391 = vadd.f32 %v127, %v390
  %392 = vmatmul.bf16.gmra.mxu0 %v63
  %v393 = vpop.f32.mrf.mxu0
  %v394 = vadd.f32 %v127, %v393
  %v395 = vpop.f32.mrf.mxu0
  %v396 = vadd.f32 %v127, %v395
  %397 = vmatmul.bf16.gmra.mxu0 %v64
  %v398 = vpop.f32.mrf.mxu0
  %v399 = vadd.f32 %v127, %v398
  %v400 = vpop.f32.mrf.mxu0
  %v401 = vadd.f32 %v127, %v400
  %402 = vmatmul.bf16.gmra.mxu0 %v65
  %v403 = vpop.f32.mrf.mxu0
  %v404 = vadd.f32 %v127, %v403
  %v405 = vpop.f32.mrf.mxu0
  %v406 = vadd.f32 %v127, %v405
  %407 = vmatmul.bf16.gmra.mxu0 %v66
  %v408 = vpop.f32.mrf.mxu0
  %v409 = vadd.f32 %v127, %v408
  %v410 = vpop.f32.mrf.mxu0
  %v411 = vadd.f32 %v127, %v410
  %412 = vmatmul.bf16.gmra.mxu0 %v67
  %v413 = vpop.f32.mrf.mxu0
  %v414 = vadd.f32 %v127, %v413
  %v415 = vpop.f32.mrf.mxu0
  %v416 = vadd.f32 %v127, %v415
  %417 = vmatmul.bf16.gmra.mxu0 %v68
  %v418 = vpop.f32.mrf.mxu0
  %v419 = vadd.f32 %v127, %v418
  %v420 = vpop.f32.mrf.mxu0
  %v421 = vadd.f32 %v127, %v420
  %422 = vmatmul.bf16.gmra.mxu0 %v69
  %v423 = vpop.f32.mrf.mxu0
  %v424 = vadd.f32 %v127, %v423
  %v425 = vpop.f32.mrf.mxu0
  %v426 = vadd.f32 %v127, %v425
  %427 = vmatmul.bf16.gmra.mxu0 %v70
  %v428 = vpop.f32.mrf.mxu0
  %v429 = vadd.f32 %v127, %v428
  %v430 = vpop.f32.mrf.mxu0
  %v431 = vadd.f32 %v127, %v430
  %432 = vmatmul.bf16.gmra.mxu0 %v71
  %v433 = vpop.f32.mrf.mxu0
  %v434 = vadd.f32 %v127, %v433
  %v435 = vpop.f32.mrf.mxu0
  %v436 = vadd.f32 %v127, %v435
  %437 = vmatmul.bf16.gmra.mxu0 %v72
  %v438 = vpop.f32.mrf.mxu0
  %v439 = vadd.f32 %v127, %v438
  %v440 = vpop.f32.mrf.mxu0
  %v441 = vadd.f32 %v127, %v440
  %442 = vmatmul.bf16.gmra.mxu0 %v73
  %v443 = vpop.f32.mrf.mxu0
  %v444 = vadd.f32 %v127, %v443
  %v445 = vpop.f32.mrf.mxu0
  %v446 = vadd.f32 %v127, %v445
  %447 = vmatmul.bf16.gmra.mxu0 %v74
  %v448 = vpop.f32.mrf.mxu0
  %v449 = vadd.f32 %v127, %v448
  %v450 = vpop.f32.mrf.mxu0
  %v451 = vadd.f32 %v127, %v450
  %452 = vmatmul.bf16.gmra.mxu0 %v75
  %v453 = vpop.f32.mrf.mxu0
  %v454 = vadd.f32 %v127, %v453
  %v455 = vpop.f32.mrf.mxu0
  %v456 = vadd.f32 %v127, %v455
  %457 = vmatmul.bf16.gmra.mxu0 %v76
  %v458 = vpop.f32.mrf.mxu0
  %v459 = vadd.f32 %v127, %v458
  %v460 = vpop.f32.mrf.mxu0
  %v461 = vadd.f32 %v127, %v460
  %462 = vmatmul.bf16.gmra.mxu0 %v77
  %v463 = vpop.f32.mrf.mxu0
  %v464 = vadd.f32 %v127, %v463
  %v465 = vpop.f32.mrf.mxu0
  %v466 = vadd.f32 %v127, %v465
  %467 = vdwg.mxu0
  %468 = vmatpush.bf16.msra.mxu0 %v326
  %469 = vmatpush.bf16.msra.mxu0 %v320
  %470 = vmatpush.bf16.msra.mxu0 %v314
  %471 = vmatpush.bf16.msra.mxu0 %v308
  %472 = vmatpush.bf16.msra.mxu0 %v302
  %473 = vmatpush.bf16.msra.mxu0 %v296
  %474 = vmatpush.bf16.msra.mxu0 %v290
  %475 = vmatpush.bf16.msra.mxu0 %v284
  %476 = vmatmul.bf16.gmra.mxu0 %v62
  %v477 = vpop.f32.mrf.mxu0
  %v478 = vadd.f32 %v128, %v477
  %v479 = vpop.f32.mrf.mxu0
  %v480 = vadd.f32 %v128, %v479
  %481 = vmatmul.bf16.gmra.mxu0 %v63
  %v482 = vpop.f32.mrf.mxu0
  %v483 = vadd.f32 %v128, %v482
  %v484 = vpop.f32.mrf.mxu0
  %v485 = vadd.f32 %v128, %v484
  %486 = vmatmul.bf16.gmra.mxu0 %v64
  %v487 = vpop.f32.mrf.mxu0
  %v488 = vadd.f32 %v128, %v487
  %v489 = vpop.f32.mrf.mxu0
  %v490 = vadd.f32 %v128, %v489
  %491 = vmatmul.bf16.gmra.mxu0 %v65
  %v492 = vpop.f32.mrf.mxu0
  %v493 = vadd.f32 %v128, %v492
  %v494 = vpop.f32.mrf.mxu0
  %v495 = vadd.f32 %v128, %v494
  %496 = vmatmul.bf16.gmra.mxu0 %v66
  %v497 = vpop.f32.mrf.mxu0
  %v498 = vadd.f32 %v128, %v497
  %v499 = vpop.f32.mrf.mxu0
  %v500 = vadd.f32 %v128, %v499
  %501 = vmatmul.bf16.gmra.mxu0 %v67
  %v502 = vpop.f32.mrf.mxu0
  %v503 = vadd.f32 %v128, %v502
  %v504 = vpop.f32.mrf.mxu0
  %v505 = vadd.f32 %v128, %v504
  %506 = vmatmul.bf16.gmra.mxu0 %v68
  %v507 = vpop.f32.mrf.mxu0
  %v508 = vadd.f32 %v128, %v507
  %v509 = vpop.f32.mrf.mxu0
  %v510 = vadd.f32 %v128, %v509
  %511 = vmatmul.bf16.gmra.mxu0 %v69
  %v512 = vpop.f32.mrf.mxu0
  %v513 = vadd.f32 %v128, %v512
  %v514 = vpop.f32.mrf.mxu0
  %v515 = vadd.f32 %v128, %v514
  %516 = vmatmul.bf16.gmra.mxu0 %v70
  %v517 = vpop.f32.mrf.mxu0
  %v518 = vadd.f32 %v128, %v517
  %v519 = vpop.f32.mrf.mxu0
  %v520 = vadd.f32 %v128, %v519
  %521 = vmatmul.bf16.gmra.mxu0 %v71
  %v522 = vpop.f32.mrf.mxu0
  %v523 = vadd.f32 %v128, %v522
  %v524 = vpop.f32.mrf.mxu0
  %v525 = vadd.f32 %v128, %v524
  %526 = vmatmul.bf16.gmra.mxu0 %v72
  %v527 = vpop.f32.mrf.mxu0
  %v528 = vadd.f32 %v128, %v527
  %v529 = vpop.f32.mrf.mxu0
  %v530 = vadd.f32 %v128, %v529
  %531 = vmatmul.bf16.gmra.mxu0 %v73
  %v532 = vpop.f32.mrf.mxu0
  %v533 = vadd.f32 %v128, %v532
  %v534 = vpop.f32.mrf.mxu0
  %v535 = vadd.f32 %v128, %v534
  %536 = vmatmul.bf16.gmra.mxu0 %v74
  %v537 = vpop.f32.mrf.mxu0
  %v538 = vadd.f32 %v128, %v537
  %v539 = vpop.f32.mrf.mxu0
  %v540 = vadd.f32 %v128, %v539
  %541 = vmatmul.bf16.gmra.mxu0 %v75
  %v542 = vpop.f32.mrf.mxu0
  %v543 = vadd.f32 %v128, %v542
  %v544 = vpop.f32.mrf.mxu0
  %v545 = vadd.f32 %v128, %v544
  %546 = vmatmul.bf16.gmra.mxu0 %v76
  %v547 = vpop.f32.mrf.mxu0
  %v548 = vadd.f32 %v128, %v547
  %v549 = vpop.f32.mrf.mxu0
  %v550 = vadd.f32 %v128, %v549
  %551 = vmatmul.bf16.gmra.mxu0 %v77
  %v552 = vpop.f32.mrf.mxu0
  %v553 = vadd.f32 %v128, %v552
  %v554 = vpop.f32.mrf.mxu0
  %v555 = vadd.f32 %v128, %v554
  %556 = vdwg.mxu0
  %557 = vmatpush.bf16.msra.mxu0 %v327
  %558 = vmatpush.bf16.msra.mxu0 %v321
  %559 = vmatpush.bf16.msra.mxu0 %v315
  %560 = vmatpush.bf16.msra.mxu0 %v309
  %561 = vmatpush.bf16.msra.mxu0 %v303
  %562 = vmatpush.bf16.msra.mxu0 %v297
  %563 = vmatpush.bf16.msra.mxu0 %v291
  %564 = vmatpush.bf16.msra.mxu0 %v285
  %565 = vmatmul.bf16.gmra.mxu0 %v62
  %v566 = vpop.f32.mrf.mxu0
  %v567 = vadd.f32 %v129, %v566
  %v568 = vpop.f32.mrf.mxu0
  %v569 = vadd.f32 %v129, %v568
  %570 = vmatmul.bf16.gmra.mxu0 %v63
  %v571 = vpop.f32.mrf.mxu0
  %v572 = vadd.f32 %v129, %v571
  %v573 = vpop.f32.mrf.mxu0
  %v574 = vadd.f32 %v129, %v573
  %575 = vmatmul.bf16.gmra.mxu0 %v64
  %v576 = vpop.f32.mrf.mxu0
  %v577 = vadd.f32 %v129, %v576
  %v578 = vpop.f32.mrf.mxu0
  %v579 = vadd.f32 %v129, %v578
  %580 = vmatmul.bf16.gmra.mxu0 %v65
  %v581 = vpop.f32.mrf.mxu0
  %v582 = vadd.f32 %v129, %v581
  %v583 = vpop.f32.mrf.mxu0
  %v584 = vadd.f32 %v129, %v583
  %585 = vmatmul.bf16.gmra.mxu0 %v66
  %v586 = vpop.f32.mrf.mxu0
  %v587 = vadd.f32 %v129, %v586
  %v588 = vpop.f32.mrf.mxu0
  %v589 = vadd.f32 %v129, %v588
  %590 = vmatmul.bf16.gmra.mxu0 %v67
  %v591 = vpop.f32.mrf.mxu0
  %v592 = vadd.f32 %v129, %v591
  %v593 = vpop.f32.mrf.mxu0
  %v594 = vadd.f32 %v129, %v593
  %595 = vmatmul.bf16.gmra.mxu0 %v68
  %v596 = vpop.f32.mrf.mxu0
  %v597 = vadd.f32 %v129, %v596
  %v598 = vpop.f32.mrf.mxu0
  %v599 = vadd.f32 %v129, %v598
  %600 = vmatmul.bf16.gmra.mxu0 %v69
  %v601 = vpop.f32.mrf.mxu0
  %v602 = vadd.f32 %v129, %v601
  %v603 = vpop.f32.mrf.mxu0
  %v604 = vadd.f32 %v129, %v603
  %605 = vmatmul.bf16.gmra.mxu0 %v70
  %v606 = vpop.f32.mrf.mxu0
  %v607 = vadd.f32 %v129, %v606
  %v608 = vpop.f32.mrf.mxu0
  %v609 = vadd.f32 %v129, %v608
  %610 = vmatmul.bf16.gmra.mxu0 %v71
  %v611 = vpop.f32.mrf.mxu0
  %v612 = vadd.f32 %v129, %v611
  %v613 = vpop.f32.mrf.mxu0
  %v614 = vadd.f32 %v129, %v613
  %615 = vmatmul.bf16.gmra.mxu0 %v72
  %v616 = vpop.f32.mrf.mxu0
  %v617 = vadd.f32 %v129, %v616
  %v618 = vpop.f32.mrf.mxu0
  %v619 = vadd.f32 %v129, %v618
  %620 = vmatmul.bf16.gmra.mxu0 %v73
  %v621 = vpop.f32.mrf.mxu0
  %v622 = vadd.f32 %v129, %v621
  %v623 = vpop.f32.mrf.mxu0
  %v624 = vadd.f32 %v129, %v623
  %625 = vmatmul.bf16.gmra.mxu0 %v74
  %v626 = vpop.f32.mrf.mxu0
  %v627 = vadd.f32 %v129, %v626
  %v628 = vpop.f32.mrf.mxu0
  %v629 = vadd.f32 %v129, %v628
  %630 = vmatmul.bf16.gmra.mxu0 %v75
  %v631 = vpop.f32.mrf.mxu0
  %v632 = vadd.f32 %v129, %v631
  %v633 = vpop.f32.mrf.mxu0
  %v634 = vadd.f32 %v129, %v633
  %635 = vmatmul.bf16.gmra.mxu0 %v76
  %v636 = vpop.f32.mrf.mxu0
  %v637 = vadd.f32 %v129, %v636
  %v638 = vpop.f32.mrf.mxu0
  %v639 = vadd.f32 %v129, %v638
  %640 = vmatmul.bf16.gmra.mxu0 %v77
  %v641 = vpop.f32.mrf.mxu0
  %v642 = vadd.f32 %v129, %v641
  %v643 = vpop.f32.mrf.mxu0
  %v644 = vadd.f32 %v129, %v643
  %645 = vdwg.mxu0
  %646 = vmatpush.bf16.msra.mxu0 %v328
  %647 = vmatpush.bf16.msra.mxu0 %v322
  %648 = vmatpush.bf16.msra.mxu0 %v316
  %649 = vmatpush.bf16.msra.mxu0 %v310
  %650 = vmatpush.bf16.msra.mxu0 %v304
  %651 = vmatpush.bf16.msra.mxu0 %v298
  %652 = vmatpush.bf16.msra.mxu0 %v292
  %653 = vmatpush.bf16.msra.mxu0 %v286
  %654 = vmatmul.bf16.gmra.mxu0 %v62
  %v655 = vpop.f32.mrf.mxu0
  %v656 = vadd.f32 %v130, %v655
  %v657 = vpop.f32.mrf.mxu0
  %v658 = vadd.f32 %v130, %v657
  %659 = vmatmul.bf16.gmra.mxu0 %v63
  %v660 = vpop.f32.mrf.mxu0
  %v661 = vadd.f32 %v130, %v660
  %v662 = vpop.f32.mrf.mxu0
  %v663 = vadd.f32 %v130, %v662
  %664 = vmatmul.bf16.gmra.mxu0 %v64
  %v665 = vpop.f32.mrf.mxu0
  %v666 = vadd.f32 %v130, %v665
  %v667 = vpop.f32.mrf.mxu0
  %v668 = vadd.f32 %v130, %v667
  %669 = vmatmul.bf16.gmra.mxu0 %v65
  %v670 = vpop.f32.mrf.mxu0
  %v671 = vadd.f32 %v130, %v670
  %v672 = vpop.f32.mrf.mxu0
  %v673 = vadd.f32 %v130, %v672
  %674 = vmatmul.bf16.gmra.mxu0 %v66
  %v675 = vpop.f32.mrf.mxu0
  %v676 = vadd.f32 %v130, %v675
  %v677 = vpop.f32.mrf.mxu0
  %v678 = vadd.f32 %v130, %v677
  %679 = vmatmul.bf16.gmra.mxu0 %v67
  %v680 = vpop.f32.mrf.mxu0
  %v681 = vadd.f32 %v130, %v680
  %v682 = vpop.f32.mrf.mxu0
  %v683 = vadd.f32 %v130, %v682
  %684 = vmatmul.bf16.gmra.mxu0 %v68
  %v685 = vpop.f32.mrf.mxu0
  %v686 = vadd.f32 %v130, %v685
  %v687 = vpop.f32.mrf.mxu0
  %v688 = vadd.f32 %v130, %v687
  %689 = vmatmul.bf16.gmra.mxu0 %v69
  %v690 = vpop.f32.mrf.mxu0
  %v691 = vadd.f32 %v130, %v690
  %v692 = vpop.f32.mrf.mxu0
  %v693 = vadd.f32 %v130, %v692
  %694 = vmatmul.bf16.gmra.mxu0 %v70
  %v695 = vpop.f32.mrf.mxu0
  %v696 = vadd.f32 %v130, %v695
  %v697 = vpop.f32.mrf.mxu0
  %v698 = vadd.f32 %v130, %v697
  %699 = vmatmul.bf16.gmra.mxu0 %v71
  %v700 = vpop.f32.mrf.mxu0
  %v701 = vadd.f32 %v130, %v700
  %v702 = vpop.f32.mrf.mxu0
  %v703 = vadd.f32 %v130, %v702
  %704 = vmatmul.bf16.gmra.mxu0 %v72
  %v705 = vpop.f32.mrf.mxu0
  %v706 = vadd.f32 %v130, %v705
  %v707 = vpop.f32.mrf.mxu0
  %v708 = vadd.f32 %v130, %v707
  %709 = vmatmul.bf16.gmra.mxu0 %v73
  %v710 = vpop.f32.mrf.mxu0
  %v711 = vadd.f32 %v130, %v710
  %v712 = vpop.f32.mrf.mxu0
  %v713 = vadd.f32 %v130, %v712
  %714 = vmatmul.bf16.gmra.mxu0 %v74
  %v715 = vpop.f32.mrf.mxu0
  %v716 = vadd.f32 %v130, %v715
  %v717 = vpop.f32.mrf.mxu0
  %v718 = vadd.f32 %v130, %v717
  %719 = vmatmul.bf16.gmra.mxu0 %v75
  %v720 = vpop.f32.mrf.mxu0
  %v721 = vadd.f32 %v130, %v720
  %v722 = vpop.f32.mrf.mxu0
  %v723 = vadd.f32 %v130, %v722
  %724 = vmatmul.bf16.gmra.mxu0 %v76
  %v725 = vpop.f32.mrf.mxu0
  %v726 = vadd.f32 %v130, %v725
  %v727 = vpop.f32.mrf.mxu0
  %v728 = vadd.f32 %v130, %v727
  %729 = vmatmul.bf16.gmra.mxu0 %v77
  %v730 = vpop.f32.mrf.mxu0
  %v731 = vadd.f32 %v130, %v730
  %v732 = vpop.f32.mrf.mxu0
  %v733 = vadd.f32 %v130, %v732
  %734 = vdwg.mxu0
  %735 = vmatpush.bf16.msra.mxu0 %v329
  %736 = vmatpush.bf16.msra.mxu0 %v323
  %737 = vmatpush.bf16.msra.mxu0 %v317
  %738 = vmatpush.bf16.msra.mxu0 %v311
  %739 = vmatpush.bf16.msra.mxu0 %v305
  %740 = vmatpush.bf16.msra.mxu0 %v299
  %741 = vmatpush.bf16.msra.mxu0 %v293
  %742 = vmatpush.bf16.msra.mxu0 %v287
  %743 = vmatmul.bf16.gmra.mxu0 %v62
  %v744 = vpop.f32.mrf.mxu0
  %v745 = vadd.f32 %v131, %v744
  %v746 = vpop.f32.mrf.mxu0
  %v747 = vadd.f32 %v131, %v746
  %748 = vmatmul.bf16.gmra.mxu0 %v63
  %v749 = vpop.f32.mrf.mxu0
  %v750 = vadd.f32 %v131, %v749
  %v751 = vpop.f32.mrf.mxu0
  %v752 = vadd.f32 %v131, %v751
  %753 = vmatmul.bf16.gmra.mxu0 %v64
  %v754 = vpop.f32.mrf.mxu0
  %v755 = vadd.f32 %v131, %v754
  %v756 = vpop.f32.mrf.mxu0
  %v757 = vadd.f32 %v131, %v756
  %758 = vmatmul.bf16.gmra.mxu0 %v65
  %v759 = vpop.f32.mrf.mxu0
  %v760 = vadd.f32 %v131, %v759
  %v761 = vpop.f32.mrf.mxu0
  %v762 = vadd.f32 %v131, %v761
  %763 = vmatmul.bf16.gmra.mxu0 %v66
  %v764 = vpop.f32.mrf.mxu0
  %v765 = vadd.f32 %v131, %v764
  %v766 = vpop.f32.mrf.mxu0
  %v767 = vadd.f32 %v131, %v766
  %768 = vmatmul.bf16.gmra.mxu0 %v67
  %v769 = vpop.f32.mrf.mxu0
  %v770 = vadd.f32 %v131, %v769
  %v771 = vpop.f32.mrf.mxu0
  %v772 = vadd.f32 %v131, %v771
  %773 = vmatmul.bf16.gmra.mxu0 %v68
  %v774 = vpop.f32.mrf.mxu0
  %v775 = vadd.f32 %v131, %v774
  %v776 = vpop.f32.mrf.mxu0
  %v777 = vadd.f32 %v131, %v776
  %778 = vmatmul.bf16.gmra.mxu0 %v69
  %v779 = vpop.f32.mrf.mxu0
  %v780 = vadd.f32 %v131, %v779
  %v781 = vpop.f32.mrf.mxu0
  %v782 = vadd.f32 %v131, %v781
  %783 = vmatmul.bf16.gmra.mxu0 %v70
  %v784 = vpop.f32.mrf.mxu0
  %v785 = vadd.f32 %v131, %v784
  %v786 = vpop.f32.mrf.mxu0
  %v787 = vadd.f32 %v131, %v786
  %788 = vmatmul.bf16.gmra.mxu0 %v71
  %v789 = vpop.f32.mrf.mxu0
  %v790 = vadd.f32 %v131, %v789
  %v791 = vpop.f32.mrf.mxu0
  %v792 = vadd.f32 %v131, %v791
  %793 = vmatmul.bf16.gmra.mxu0 %v72
  %v794 = vpop.f32.mrf.mxu0
  %v795 = vadd.f32 %v131, %v794
  %v796 = vpop.f32.mrf.mxu0
  %v797 = vadd.f32 %v131, %v796
  %798 = vmatmul.bf16.gmra.mxu0 %v73
  %v799 = vpop.f32.mrf.mxu0
  %v800 = vadd.f32 %v131, %v799
  %v801 = vpop.f32.mrf.mxu0
  %v802 = vadd.f32 %v131, %v801
  %803 = vmatmul.bf16.gmra.mxu0 %v74
  %v804 = vpop.f32.mrf.mxu0
  %v805 = vadd.f32 %v131, %v804
  %v806 = vpop.f32.mrf.mxu0
  %v807 = vadd.f32 %v131, %v806
  %808 = vmatmul.bf16.gmra.mxu0 %v75
  %v809 = vpop.f32.mrf.mxu0
  %v810 = vadd.f32 %v131, %v809
  %v811 = vpop.f32.mrf.mxu0
  %v812 = vadd.f32 %v131, %v811
  %813 = vmatmul.bf16.gmra.mxu0 %v76
  %v814 = vpop.f32.mrf.mxu0
  %v815 = vadd.f32 %v131, %v814
  %v816 = vpop.f32.mrf.mxu0
  %v817 = vadd.f32 %v131, %v816
  %818 = vmatmul.bf16.gmra.mxu0 %v77
  %v819 = vpop.f32.mrf.mxu0
  %v820 = vadd.f32 %v131, %v819
  %v821 = vpop.f32.mrf.mxu0
  %v822 = vadd.f32 %v131, %v821
  %823 = vdwg.mxu0
  %824 = vmatpush.bf16.msra.mxu0 %v330
  %825 = vmatpush.bf16.msra.mxu0 %v324
  %826 = vmatpush.bf16.msra.mxu0 %v318
  %827 = vmatpush.bf16.msra.mxu0 %v312
  %828 = vmatpush.bf16.msra.mxu0 %v306
  %829 = vmatpush.bf16.msra.mxu0 %v300
  %830 = vmatpush.bf16.msra.mxu0 %v294
  %831 = vmatpush.bf16.msra.mxu0 %v288
  %832 = vmatmul.bf16.gmra.mxu0 %v62
  %v833 = vpop.f32.mrf.mxu0
  %v834 = vadd.f32 %v132, %v833
  %v835 = vpop.f32.mrf.mxu0
  %v836 = vadd.f32 %v132, %v835
  %837 = vmatmul.bf16.gmra.mxu0 %v63
  %v838 = vpop.f32.mrf.mxu0
  %v839 = vadd.f32 %v132, %v838
  %v840 = vpop.f32.mrf.mxu0
  %v841 = vadd.f32 %v132, %v840
  %842 = vmatmul.bf16.gmra.mxu0 %v64
  %v843 = vpop.f32.mrf.mxu0
  %v844 = vadd.f32 %v132, %v843
  %v845 = vpop.f32.mrf.mxu0
  %v846 = vadd.f32 %v132, %v845
  %847 = vmatmul.bf16.gmra.mxu0 %v65
  %v848 = vpop.f32.mrf.mxu0
  %v849 = vadd.f32 %v132, %v848
  %v850 = vpop.f32.mrf.mxu0
  %v851 = vadd.f32 %v132, %v850
  %852 = vmatmul.bf16.gmra.mxu0 %v66
  %v853 = vpop.f32.mrf.mxu0
  %v854 = vadd.f32 %v132, %v853
  %v855 = vpop.f32.mrf.mxu0
  %v856 = vadd.f32 %v132, %v855
  %857 = vmatmul.bf16.gmra.mxu0 %v67
  %v858 = vpop.f32.mrf.mxu0
  %v859 = vadd.f32 %v132, %v858
  %v860 = vpop.f32.mrf.mxu0
  %v861 = vadd.f32 %v132, %v860
  %862 = vmatmul.bf16.gmra.mxu0 %v68
  %v863 = vpop.f32.mrf.mxu0
  %v864 = vadd.f32 %v132, %v863
  %v865 = vpop.f32.mrf.mxu0
  %v866 = vadd.f32 %v132, %v865
  %867 = vmatmul.bf16.gmra.mxu0 %v69
  %v868 = vpop.f32.mrf.mxu0
  %v869 = vadd.f32 %v132, %v868
  %v870 = vpop.f32.mrf.mxu0
  %v871 = vadd.f32 %v132, %v870
  %872 = vmatmul.bf16.gmra.mxu0 %v70
  %v873 = vpop.f32.mrf.mxu0
  %v874 = vadd.f32 %v132, %v873
  %v875 = vpop.f32.mrf.mxu0
  %v876 = vadd.f32 %v132, %v875
  %877 = vmatmul.bf16.gmra.mxu0 %v71
  %v878 = vpop.f32.mrf.mxu0
  %v879 = vadd.f32 %v132, %v878
  %v880 = vpop.f32.mrf.mxu0
  %v881 = vadd.f32 %v132, %v880
  %882 = vmatmul.bf16.gmra.mxu0 %v72
  %v883 = vpop.f32.mrf.mxu0
  %v884 = vadd.f32 %v132, %v883
  %v885 = vpop.f32.mrf.mxu0
  %v886 = vadd.f32 %v132, %v885
  %887 = vmatmul.bf16.gmra.mxu0 %v73
  %v888 = vpop.f32.mrf.mxu0
  %v889 = vadd.f32 %v132, %v888
  %v890 = vpop.f32.mrf.mxu0
  %v891 = vadd.f32 %v132, %v890
  %892 = vmatmul.bf16.gmra.mxu0 %v74
  %v893 = vpop.f32.mrf.mxu0
  %v894 = vadd.f32 %v132, %v893
  %v895 = vpop.f32.mrf.mxu0
  %v896 = vadd.f32 %v132, %v895
  %897 = vmatmul.bf16.gmra.mxu0 %v75
  %v898 = vpop.f32.mrf.mxu0
  %v899 = vadd.f32 %v132, %v898
  %v900 = vpop.f32.mrf.mxu0
  %v901 = vadd.f32 %v132, %v900
  %902 = vmatmul.bf16.gmra.mxu0 %v76
  %v903 = vpop.f32.mrf.mxu0
  %v904 = vadd.f32 %v132, %v903
  %v905 = vpop.f32.mrf.mxu0
  %v906 = vadd.f32 %v132, %v905
  %907 = vmatmul.bf16.gmra.mxu0 %v77
  %v908 = vpop.f32.mrf.mxu0
  %v909 = vadd.f32 %v132, %v908
  %v910 = vpop.f32.mrf.mxu0
  %v911 = vadd.f32 %v132, %v910
  %912 = vdwg.mxu0
  %v913 = vadd.f32 %v389, %v656
  %v914 = vadd.f32 %v391, %v658
  %v915 = vadd.f32 %v394, %v661
  %v916 = vadd.f32 %v396, %v663
  %v917 = vadd.f32 %v399, %v666
  %v918 = vadd.f32 %v401, %v668
  %v919 = vadd.f32 %v404, %v671
  %v920 = vadd.f32 %v406, %v673
  %v921 = vadd.f32 %v409, %v676
  %v922 = vadd.f32 %v411, %v678
  %v923 = vadd.f32 %v414, %v681
  %v924 = vadd.f32 %v416, %v683
  %v925 = vadd.f32 %v419, %v686
  %v926 = vadd.f32 %v421, %v688
  %v927 = vadd.f32 %v424, %v691
  %v928 = vadd.f32 %v426, %v693
  %v929 = vadd.f32 %v429, %v696
  %v930 = vadd.f32 %v431, %v698
  %v931 = vadd.f32 %v434, %v701
  %v932 = vadd.f32 %v436, %v703
  %v933 = vadd.f32 %v439, %v706
  %v934 = vadd.f32 %v441, %v708
  %v935 = vadd.f32 %v444, %v711
  %v936 = vadd.f32 %v446, %v713
  %v937 = vadd.f32 %v449, %v716
  %v938 = vadd.f32 %v451, %v718
  %v939 = vadd.f32 %v454, %v721
  %v940 = vadd.f32 %v456, %v723
  %v941 = vadd.f32 %v459, %v726
  %v942 = vadd.f32 %v461, %v728
  %v943 = vadd.f32 %v464, %v731
  %v944 = vadd.f32 %v466, %v733
  %v945 = vxor.u32 %v913, 2147483648
  %v946 = vxor.u32 %v914, 2147483648
  %v947 = vxor.u32 %v915, 2147483648
  %v948 = vxor.u32 %v916, 2147483648
  %v949 = vxor.u32 %v917, 2147483648
  %v950 = vxor.u32 %v918, 2147483648
  %v951 = vxor.u32 %v919, 2147483648
  %v952 = vxor.u32 %v920, 2147483648
  %v953 = vxor.u32 %v921, 2147483648
  %v954 = vxor.u32 %v922, 2147483648
  %v955 = vxor.u32 %v923, 2147483648
  %v956 = vxor.u32 %v924, 2147483648
  %v957 = vxor.u32 %v925, 2147483648
  %v958 = vxor.u32 %v926, 2147483648
  %v959 = vxor.u32 %v927, 2147483648
  %v960 = vxor.u32 %v928, 2147483648
  %v961 = vxor.u32 %v929, 2147483648
  %v962 = vxor.u32 %v930, 2147483648
  %v963 = vxor.u32 %v931, 2147483648
  %v964 = vxor.u32 %v932, 2147483648
  %v965 = vxor.u32 %v933, 2147483648
  %v966 = vxor.u32 %v934, 2147483648
  %v967 = vxor.u32 %v935, 2147483648
  %v968 = vxor.u32 %v936, 2147483648
  %v969 = vxor.u32 %v937, 2147483648
  %v970 = vxor.u32 %v938, 2147483648
  %v971 = vxor.u32 %v939, 2147483648
  %v972 = vxor.u32 %v940, 2147483648
  %v973 = vxor.u32 %v941, 2147483648
  %v974 = vxor.u32 %v942, 2147483648
  %v975 = vxor.u32 %v943, 2147483648
  %v976 = vxor.u32 %v944, 2147483648
  %v977 = vmul.f32 %v945, 1.442695
  %v978 = vpow.pop %v977
  %v979 = vmul.f32 %v946, 1.442695
  %v980 = vpow.pop %v979
  %v981 = vmul.f32 %v947, 1.442695
  %v982 = vpow.pop %v981
  %v983 = vmul.f32 %v948, 1.442695
  %v984 = vpow.pop %v983
  %v985 = vmul.f32 %v949, 1.442695
  %v986 = vpow.pop %v985
  %v987 = vmul.f32 %v950, 1.442695
  %v988 = vpow.pop %v987
  %v989 = vmul.f32 %v951, 1.442695
  %v990 = vpow.pop %v989
  %v991 = vmul.f32 %v952, 1.442695
  %v992 = vpow.pop %v991
  %v993 = vmul.f32 %v953, 1.442695
  %v994 = vpow.pop %v993
  %v995 = vmul.f32 %v954, 1.442695
  %v996 = vpow.pop %v995
  %v997 = vmul.f32 %v955, 1.442695
  %v998 = vpow.pop %v997
  %v999 = vmul.f32 %v956, 1.442695
  %v1000 = vpow.pop %v999
  %v1001 = vmul.f32 %v957, 1.442695
  %v1002 = vpow.pop %v1001
  %v1003 = vmul.f32 %v958, 1.442695
  %v1004 = vpow.pop %v1003
  %v1005 = vmul.f32 %v959, 1.442695
  %v1006 = vpow.pop %v1005
  %v1007 = vmul.f32 %v960, 1.442695
  %v1008 = vpow.pop %v1007
  %v1009 = vmul.f32 %v961, 1.442695
  %v1010 = vpow.pop %v1009
  %v1011 = vmul.f32 %v962, 1.442695
  %v1012 = vpow.pop %v1011
  %v1013 = vmul.f32 %v963, 1.442695
  %v1014 = vpow.pop %v1013
  %v1015 = vmul.f32 %v964, 1.442695
  %v1016 = vpow.pop %v1015
  %v1017 = vmul.f32 %v965, 1.442695
  %v1018 = vpow.pop %v1017
  %v1019 = vmul.f32 %v966, 1.442695
  %v1020 = vpow.pop %v1019
  %v1021 = vmul.f32 %v967, 1.442695
  %v1022 = vpow.pop %v1021
  %v1023 = vmul.f32 %v968, 1.442695
  %v1024 = vpow.pop %v1023
  %v1025 = vmul.f32 %v969, 1.442695
  %v1026 = vpow.pop %v1025
  %v1027 = vmul.f32 %v970, 1.442695
  %v1028 = vpow.pop %v1027
  %v1029 = vmul.f32 %v971, 1.442695
  %v1030 = vpow.pop %v1029
  %v1031 = vmul.f32 %v972, 1.442695
  %v1032 = vpow.pop %v1031
  %v1033 = vmul.f32 %v973, 1.442695
  %v1034 = vpow.pop %v1033
  %v1035 = vmul.f32 %v974, 1.442695
  %v1036 = vpow.pop %v1035
  %v1037 = vmul.f32 %v975, 1.442695
  %v1038 = vpow.pop %v1037
  %v1039 = vmul.f32 %v976, 1.442695
  %v1040 = vpow.pop %v1039
  %v1041 = vadd.f32 %v978, 1.0
  %v1042 = vadd.f32 %v980, 1.0
  %v1043 = vadd.f32 %v982, 1.0
  %v1044 = vadd.f32 %v984, 1.0
  %v1045 = vadd.f32 %v986, 1.0
  %v1046 = vadd.f32 %v988, 1.0
  %v1047 = vadd.f32 %v990, 1.0
  %v1048 = vadd.f32 %v992, 1.0
  %v1049 = vadd.f32 %v994, 1.0
  %v1050 = vadd.f32 %v996, 1.0
  %v1051 = vadd.f32 %v998, 1.0
  %v1052 = vadd.f32 %v1000, 1.0
  %v1053 = vadd.f32 %v1002, 1.0
  %v1054 = vadd.f32 %v1004, 1.0
  %v1055 = vadd.f32 %v1006, 1.0
  %v1056 = vadd.f32 %v1008, 1.0
  %v1057 = vadd.f32 %v1010, 1.0
  %v1058 = vadd.f32 %v1012, 1.0
  %v1059 = vadd.f32 %v1014, 1.0
  %v1060 = vadd.f32 %v1016, 1.0
  %v1061 = vadd.f32 %v1018, 1.0
  %v1062 = vadd.f32 %v1020, 1.0
  %v1063 = vadd.f32 %v1022, 1.0
  %v1064 = vadd.f32 %v1024, 1.0
  %v1065 = vadd.f32 %v1026, 1.0
  %v1066 = vadd.f32 %v1028, 1.0
  %v1067 = vadd.f32 %v1030, 1.0
  %v1068 = vadd.f32 %v1032, 1.0
  %v1069 = vadd.f32 %v1034, 1.0
  %v1070 = vadd.f32 %v1036, 1.0
  %v1071 = vadd.f32 %v1038, 1.0
  %v1072 = vadd.f32 %v1040, 1.0
  %v1073 = vrcp.pop %v1041
  %v1074 = vmul.f32 %v1041, %v1073
  %v1075 = vsub.f32 1.0, %v1074
  %v1076 = vmul.f32 %v1073, %v1075
  %v1077 = vadd.f32 %v1073, %v1076
  %vm1078 = vweird.f32 %v1041
  %vm1079 = vweird.f32 %v1073
  %vm1080 = vmor %vm1078, %vm1079
  %v1081 = vsel %vm1080, %v1073, %v1077
  %v1082 = vand.u32 2147483647, %v1041
  %vm1083 = vcmp.eq.f32.partialorder %v1082, 8.507059e+37
  %v1084 = vand.u32 %v1041, 2147483648
  %v1085 = vor.u32 1.1754944e-38, %v1084
  %v1086 = vsel %vm1083, %v1085, %v1081
  %v1087 = vmul.f32 1.0, %v1086
  %v1088 = vrcp.pop %v1042
  %v1089 = vmul.f32 %v1042, %v1088
  %v1090 = vsub.f32 1.0, %v1089
  %v1091 = vmul.f32 %v1088, %v1090
  %v1092 = vadd.f32 %v1088, %v1091
  %vm1093 = vweird.f32 %v1042
  %vm1094 = vweird.f32 %v1088
  %vm1095 = vmor %vm1093, %vm1094
  %v1096 = vsel %vm1095, %v1088, %v1092
  %v1097 = vand.u32 2147483647, %v1042
  %vm1098 = vcmp.eq.f32.partialorder %v1097, 8.507059e+37
  %v1099 = vand.u32 %v1042, 2147483648
  %v1100 = vor.u32 1.1754944e-38, %v1099
  %v1101 = vsel %vm1098, %v1100, %v1096
  %v1102 = vmul.f32 1.0, %v1101
  %v1103 = vrcp.pop %v1043
  %v1104 = vmul.f32 %v1043, %v1103
  %v1105 = vsub.f32 1.0, %v1104
  %v1106 = vmul.f32 %v1103, %v1105
  %v1107 = vadd.f32 %v1103, %v1106
  %vm1108 = vweird.f32 %v1043
  %vm1109 = vweird.f32 %v1103
  %vm1110 = vmor %vm1108, %vm1109
  %v1111 = vsel %vm1110, %v1103, %v1107
  %v1112 = vand.u32 2147483647, %v1043
  %vm1113 = vcmp.eq.f32.partialorder %v1112, 8.507059e+37
  %v1114 = vand.u32 %v1043, 2147483648
  %v1115 = vor.u32 1.1754944e-38, %v1114
  %v1116 = vsel %vm1113, %v1115, %v1111
  %v1117 = vmul.f32 1.0, %v1116
  %v1118 = vrcp.pop %v1044
  %v1119 = vmul.f32 %v1044, %v1118
  %v1120 = vsub.f32 1.0, %v1119
  %v1121 = vmul.f32 %v1118, %v1120
  %v1122 = vadd.f32 %v1118, %v1121
  %vm1123 = vweird.f32 %v1044
  %vm1124 = vweird.f32 %v1118
  %vm1125 = vmor %vm1123, %vm1124
  %v1126 = vsel %vm1125, %v1118, %v1122
  %v1127 = vand.u32 2147483647, %v1044
  %vm1128 = vcmp.eq.f32.partialorder %v1127, 8.507059e+37
  %v1129 = vand.u32 %v1044, 2147483648
  %v1130 = vor.u32 1.1754944e-38, %v1129
  %v1131 = vsel %vm1128, %v1130, %v1126
  %v1132 = vmul.f32 1.0, %v1131
  %v1133 = vrcp.pop %v1045
  %v1134 = vmul.f32 %v1045, %v1133
  %v1135 = vsub.f32 1.0, %v1134
  %v1136 = vmul.f32 %v1133, %v1135
  %v1137 = vadd.f32 %v1133, %v1136
  %vm1138 = vweird.f32 %v1045
  %vm1139 = vweird.f32 %v1133
  %vm1140 = vmor %vm1138, %vm1139
  %v1141 = vsel %vm1140, %v1133, %v1137
  %v1142 = vand.u32 2147483647, %v1045
  %vm1143 = vcmp.eq.f32.partialorder %v1142, 8.507059e+37
  %v1144 = vand.u32 %v1045, 2147483648
  %v1145 = vor.u32 1.1754944e-38, %v1144
  %v1146 = vsel %vm1143, %v1145, %v1141
  %v1147 = vmul.f32 1.0, %v1146
  %v1148 = vrcp.pop %v1046
  %v1149 = vmul.f32 %v1046, %v1148
  %v1150 = vsub.f32 1.0, %v1149
  %v1151 = vmul.f32 %v1148, %v1150
  %v1152 = vadd.f32 %v1148, %v1151
  %vm1153 = vweird.f32 %v1046
  %vm1154 = vweird.f32 %v1148
  %vm1155 = vmor %vm1153, %vm1154
  %v1156 = vsel %vm1155, %v1148, %v1152
  %v1157 = vand.u32 2147483647, %v1046
  %vm1158 = vcmp.eq.f32.partialorder %v1157, 8.507059e+37
  %v1159 = vand.u32 %v1046, 2147483648
  %v1160 = vor.u32 1.1754944e-38, %v1159
  %v1161 = vsel %vm1158, %v1160, %v1156
  %v1162 = vmul.f32 1.0, %v1161
  %v1163 = vrcp.pop %v1047
  %v1164 = vmul.f32 %v1047, %v1163
  %v1165 = vsub.f32 1.0, %v1164
  %v1166 = vmul.f32 %v1163, %v1165
  %v1167 = vadd.f32 %v1163, %v1166
  %vm1168 = vweird.f32 %v1047
  %vm1169 = vweird.f32 %v1163
  %vm1170 = vmor %vm1168, %vm1169
  %v1171 = vsel %vm1170, %v1163, %v1167
  %v1172 = vand.u32 2147483647, %v1047
  %vm1173 = vcmp.eq.f32.partialorder %v1172, 8.507059e+37
  %v1174 = vand.u32 %v1047, 2147483648
  %v1175 = vor.u32 1.1754944e-38, %v1174
  %v1176 = vsel %vm1173, %v1175, %v1171
  %v1177 = vmul.f32 1.0, %v1176
  %v1178 = vrcp.pop %v1048
  %v1179 = vmul.f32 %v1048, %v1178
  %v1180 = vsub.f32 1.0, %v1179
  %v1181 = vmul.f32 %v1178, %v1180
  %v1182 = vadd.f32 %v1178, %v1181
  %vm1183 = vweird.f32 %v1048
  %vm1184 = vweird.f32 %v1178
  %vm1185 = vmor %vm1183, %vm1184
  %v1186 = vsel %vm1185, %v1178, %v1182
  %v1187 = vand.u32 2147483647, %v1048
  %vm1188 = vcmp.eq.f32.partialorder %v1187, 8.507059e+37
  %v1189 = vand.u32 %v1048, 2147483648
  %v1190 = vor.u32 1.1754944e-38, %v1189
  %v1191 = vsel %vm1188, %v1190, %v1186
  %v1192 = vmul.f32 1.0, %v1191
  %v1193 = vrcp.pop %v1049
  %v1194 = vmul.f32 %v1049, %v1193
  %v1195 = vsub.f32 1.0, %v1194
  %v1196 = vmul.f32 %v1193, %v1195
  %v1197 = vadd.f32 %v1193, %v1196
  %vm1198 = vweird.f32 %v1049
  %vm1199 = vweird.f32 %v1193
  %vm1200 = vmor %vm1198, %vm1199
  %v1201 = vsel %vm1200, %v1193, %v1197
  %v1202 = vand.u32 2147483647, %v1049
  %vm1203 = vcmp.eq.f32.partialorder %v1202, 8.507059e+37
  %v1204 = vand.u32 %v1049, 2147483648
  %v1205 = vor.u32 1.1754944e-38, %v1204
  %v1206 = vsel %vm1203, %v1205, %v1201
  %v1207 = vmul.f32 1.0, %v1206
  %v1208 = vrcp.pop %v1050
  %v1209 = vmul.f32 %v1050, %v1208
  %v1210 = vsub.f32 1.0, %v1209
  %v1211 = vmul.f32 %v1208, %v1210
  %v1212 = vadd.f32 %v1208, %v1211
  %vm1213 = vweird.f32 %v1050
  %vm1214 = vweird.f32 %v1208
  %vm1215 = vmor %vm1213, %vm1214
  %v1216 = vsel %vm1215, %v1208, %v1212
  %v1217 = vand.u32 2147483647, %v1050
  %vm1218 = vcmp.eq.f32.partialorder %v1217, 8.507059e+37
  %v1219 = vand.u32 %v1050, 2147483648
  %v1220 = vor.u32 1.1754944e-38, %v1219
  %v1221 = vsel %vm1218, %v1220, %v1216
  %v1222 = vmul.f32 1.0, %v1221
  %v1223 = vrcp.pop %v1051
  %v1224 = vmul.f32 %v1051, %v1223
  %v1225 = vsub.f32 1.0, %v1224
  %v1226 = vmul.f32 %v1223, %v1225
  %v1227 = vadd.f32 %v1223, %v1226
  %vm1228 = vweird.f32 %v1051
  %vm1229 = vweird.f32 %v1223
  %vm1230 = vmor %vm1228, %vm1229
  %v1231 = vsel %vm1230, %v1223, %v1227
  %v1232 = vand.u32 2147483647, %v1051
  %vm1233 = vcmp.eq.f32.partialorder %v1232, 8.507059e+37
  %v1234 = vand.u32 %v1051, 2147483648
  %v1235 = vor.u32 1.1754944e-38, %v1234
  %v1236 = vsel %vm1233, %v1235, %v1231
  %v1237 = vmul.f32 1.0, %v1236
  %v1238 = vrcp.pop %v1052
  %v1239 = vmul.f32 %v1052, %v1238
  %v1240 = vsub.f32 1.0, %v1239
  %v1241 = vmul.f32 %v1238, %v1240
  %v1242 = vadd.f32 %v1238, %v1241
  %vm1243 = vweird.f32 %v1052
  %vm1244 = vweird.f32 %v1238
  %vm1245 = vmor %vm1243, %vm1244
  %v1246 = vsel %vm1245, %v1238, %v1242
  %v1247 = vand.u32 2147483647, %v1052
  %vm1248 = vcmp.eq.f32.partialorder %v1247, 8.507059e+37
  %v1249 = vand.u32 %v1052, 2147483648
  %v1250 = vor.u32 1.1754944e-38, %v1249
  %v1251 = vsel %vm1248, %v1250, %v1246
  %v1252 = vmul.f32 1.0, %v1251
  %v1253 = vrcp.pop %v1053
  %v1254 = vmul.f32 %v1053, %v1253
  %v1255 = vsub.f32 1.0, %v1254
  %v1256 = vmul.f32 %v1253, %v1255
  %v1257 = vadd.f32 %v1253, %v1256
  %vm1258 = vweird.f32 %v1053
  %vm1259 = vweird.f32 %v1253
  %vm1260 = vmor %vm1258, %vm1259
  %v1261 = vsel %vm1260, %v1253, %v1257
  %v1262 = vand.u32 2147483647, %v1053
  %vm1263 = vcmp.eq.f32.partialorder %v1262, 8.507059e+37
  %v1264 = vand.u32 %v1053, 2147483648
  %v1265 = vor.u32 1.1754944e-38, %v1264
  %v1266 = vsel %vm1263, %v1265, %v1261
  %v1267 = vmul.f32 1.0, %v1266
  %v1268 = vrcp.pop %v1054
  %v1269 = vmul.f32 %v1054, %v1268
  %v1270 = vsub.f32 1.0, %v1269
  %v1271 = vmul.f32 %v1268, %v1270
  %v1272 = vadd.f32 %v1268, %v1271
  %vm1273 = vweird.f32 %v1054
  %vm1274 = vweird.f32 %v1268
  %vm1275 = vmor %vm1273, %vm1274
  %v1276 = vsel %vm1275, %v1268, %v1272
  %v1277 = vand.u32 2147483647, %v1054
  %vm1278 = vcmp.eq.f32.partialorder %v1277, 8.507059e+37
  %v1279 = vand.u32 %v1054, 2147483648
  %v1280 = vor.u32 1.1754944e-38, %v1279
  %v1281 = vsel %vm1278, %v1280, %v1276
  %v1282 = vmul.f32 1.0, %v1281
  %v1283 = vrcp.pop %v1055
  %v1284 = vmul.f32 %v1055, %v1283
  %v1285 = vsub.f32 1.0, %v1284
  %v1286 = vmul.f32 %v1283, %v1285
  %v1287 = vadd.f32 %v1283, %v1286
  %vm1288 = vweird.f32 %v1055
  %vm1289 = vweird.f32 %v1283
  %vm1290 = vmor %vm1288, %vm1289
  %v1291 = vsel %vm1290, %v1283, %v1287
  %v1292 = vand.u32 2147483647, %v1055
  %vm1293 = vcmp.eq.f32.partialorder %v1292, 8.507059e+37
  %v1294 = vand.u32 %v1055, 2147483648
  %v1295 = vor.u32 1.1754944e-38, %v1294
  %v1296 = vsel %vm1293, %v1295, %v1291
  %v1297 = vmul.f32 1.0, %v1296
  %v1298 = vrcp.pop %v1056
  %v1299 = vmul.f32 %v1056, %v1298
  %v1300 = vsub.f32 1.0, %v1299
  %v1301 = vmul.f32 %v1298, %v1300
  %v1302 = vadd.f32 %v1298, %v1301
  %vm1303 = vweird.f32 %v1056
  %vm1304 = vweird.f32 %v1298
  %vm1305 = vmor %vm1303, %vm1304
  %v1306 = vsel %vm1305, %v1298, %v1302
  %v1307 = vand.u32 2147483647, %v1056
  %vm1308 = vcmp.eq.f32.partialorder %v1307, 8.507059e+37
  %v1309 = vand.u32 %v1056, 2147483648
  %v1310 = vor.u32 1.1754944e-38, %v1309
  %v1311 = vsel %vm1308, %v1310, %v1306
  %v1312 = vmul.f32 1.0, %v1311
  %v1313 = vrcp.pop %v1057
  %v1314 = vmul.f32 %v1057, %v1313
  %v1315 = vsub.f32 1.0, %v1314
  %v1316 = vmul.f32 %v1313, %v1315
  %v1317 = vadd.f32 %v1313, %v1316
  %vm1318 = vweird.f32 %v1057
  %vm1319 = vweird.f32 %v1313
  %vm1320 = vmor %vm1318, %vm1319
  %v1321 = vsel %vm1320, %v1313, %v1317
  %v1322 = vand.u32 2147483647, %v1057
  %vm1323 = vcmp.eq.f32.partialorder %v1322, 8.507059e+37
  %v1324 = vand.u32 %v1057, 2147483648
  %v1325 = vor.u32 1.1754944e-38, %v1324
  %v1326 = vsel %vm1323, %v1325, %v1321
  %v1327 = vmul.f32 1.0, %v1326
  %v1328 = vrcp.pop %v1058
  %v1329 = vmul.f32 %v1058, %v1328
  %v1330 = vsub.f32 1.0, %v1329
  %v1331 = vmul.f32 %v1328, %v1330
  %v1332 = vadd.f32 %v1328, %v1331
  %vm1333 = vweird.f32 %v1058
  %vm1334 = vweird.f32 %v1328
  %vm1335 = vmor %vm1333, %vm1334
  %v1336 = vsel %vm1335, %v1328, %v1332
  %v1337 = vand.u32 2147483647, %v1058
  %vm1338 = vcmp.eq.f32.partialorder %v1337, 8.507059e+37
  %v1339 = vand.u32 %v1058, 2147483648
  %v1340 = vor.u32 1.1754944e-38, %v1339
  %v1341 = vsel %vm1338, %v1340, %v1336
  %v1342 = vmul.f32 1.0, %v1341
  %v1343 = vrcp.pop %v1059
  %v1344 = vmul.f32 %v1059, %v1343
  %v1345 = vsub.f32 1.0, %v1344
  %v1346 = vmul.f32 %v1343, %v1345
  %v1347 = vadd.f32 %v1343, %v1346
  %vm1348 = vweird.f32 %v1059
  %vm1349 = vweird.f32 %v1343
  %vm1350 = vmor %vm1348, %vm1349
  %v1351 = vsel %vm1350, %v1343, %v1347
  %v1352 = vand.u32 2147483647, %v1059
  %vm1353 = vcmp.eq.f32.partialorder %v1352, 8.507059e+37
  %v1354 = vand.u32 %v1059, 2147483648
  %v1355 = vor.u32 1.1754944e-38, %v1354
  %v1356 = vsel %vm1353, %v1355, %v1351
  %v1357 = vmul.f32 1.0, %v1356
  %v1358 = vrcp.pop %v1060
  %v1359 = vmul.f32 %v1060, %v1358
  %v1360 = vsub.f32 1.0, %v1359
  %v1361 = vmul.f32 %v1358, %v1360
  %v1362 = vadd.f32 %v1358, %v1361
  %vm1363 = vweird.f32 %v1060
  %vm1364 = vweird.f32 %v1358
  %vm1365 = vmor %vm1363, %vm1364
  %v1366 = vsel %vm1365, %v1358, %v1362
  %v1367 = vand.u32 2147483647, %v1060
  %vm1368 = vcmp.eq.f32.partialorder %v1367, 8.507059e+37
  %v1369 = vand.u32 %v1060, 2147483648
  %v1370 = vor.u32 1.1754944e-38, %v1369
  %v1371 = vsel %vm1368, %v1370, %v1366
  %v1372 = vmul.f32 1.0, %v1371
  %v1373 = vrcp.pop %v1061
  %v1374 = vmul.f32 %v1061, %v1373
  %v1375 = vsub.f32 1.0, %v1374
  %v1376 = vmul.f32 %v1373, %v1375
  %v1377 = vadd.f32 %v1373, %v1376
  %vm1378 = vweird.f32 %v1061
  %vm1379 = vweird.f32 %v1373
  %vm1380 = vmor %vm1378, %vm1379
  %v1381 = vsel %vm1380, %v1373, %v1377
  %v1382 = vand.u32 2147483647, %v1061
  %vm1383 = vcmp.eq.f32.partialorder %v1382, 8.507059e+37
  %v1384 = vand.u32 %v1061, 2147483648
  %v1385 = vor.u32 1.1754944e-38, %v1384
  %v1386 = vsel %vm1383, %v1385, %v1381
  %v1387 = vmul.f32 1.0, %v1386
  %v1388 = vrcp.pop %v1062
  %v1389 = vmul.f32 %v1062, %v1388
  %v1390 = vsub.f32 1.0, %v1389
  %v1391 = vmul.f32 %v1388, %v1390
  %v1392 = vadd.f32 %v1388, %v1391
  %vm1393 = vweird.f32 %v1062
  %vm1394 = vweird.f32 %v1388
  %vm1395 = vmor %vm1393, %vm1394
  %v1396 = vsel %vm1395, %v1388, %v1392
  %v1397 = vand.u32 2147483647, %v1062
  %vm1398 = vcmp.eq.f32.partialorder %v1397, 8.507059e+37
  %v1399 = vand.u32 %v1062, 2147483648
  %v1400 = vor.u32 1.1754944e-38, %v1399
  %v1401 = vsel %vm1398, %v1400, %v1396
  %v1402 = vmul.f32 1.0, %v1401
  %v1403 = vrcp.pop %v1063
  %v1404 = vmul.f32 %v1063, %v1403
  %v1405 = vsub.f32 1.0, %v1404
  %v1406 = vmul.f32 %v1403, %v1405
  %v1407 = vadd.f32 %v1403, %v1406
  %vm1408 = vweird.f32 %v1063
  %vm1409 = vweird.f32 %v1403
  %vm1410 = vmor %vm1408, %vm1409
  %v1411 = vsel %vm1410, %v1403, %v1407
  %v1412 = vand.u32 2147483647, %v1063
  %vm1413 = vcmp.eq.f32.partialorder %v1412, 8.507059e+37
  %v1414 = vand.u32 %v1063, 2147483648
  %v1415 = vor.u32 1.1754944e-38, %v1414
  %v1416 = vsel %vm1413, %v1415, %v1411
  %v1417 = vmul.f32 1.0, %v1416
  %v1418 = vrcp.pop %v1064
  %v1419 = vmul.f32 %v1064, %v1418
  %v1420 = vsub.f32 1.0, %v1419
  %v1421 = vmul.f32 %v1418, %v1420
  %v1422 = vadd.f32 %v1418, %v1421
  %vm1423 = vweird.f32 %v1064
  %vm1424 = vweird.f32 %v1418
  %vm1425 = vmor %vm1423, %vm1424
  %v1426 = vsel %vm1425, %v1418, %v1422
  %v1427 = vand.u32 2147483647, %v1064
  %vm1428 = vcmp.eq.f32.partialorder %v1427, 8.507059e+37
  %v1429 = vand.u32 %v1064, 2147483648
  %v1430 = vor.u32 1.1754944e-38, %v1429
  %v1431 = vsel %vm1428, %v1430, %v1426
  %v1432 = vmul.f32 1.0, %v1431
  %v1433 = vrcp.pop %v1065
  %v1434 = vmul.f32 %v1065, %v1433
  %v1435 = vsub.f32 1.0, %v1434
  %v1436 = vmul.f32 %v1433, %v1435
  %v1437 = vadd.f32 %v1433, %v1436
  %vm1438 = vweird.f32 %v1065
  %vm1439 = vweird.f32 %v1433
  %vm1440 = vmor %vm1438, %vm1439
  %v1441 = vsel %vm1440, %v1433, %v1437
  %v1442 = vand.u32 2147483647, %v1065
  %vm1443 = vcmp.eq.f32.partialorder %v1442, 8.507059e+37
  %v1444 = vand.u32 %v1065, 2147483648
  %v1445 = vor.u32 1.1754944e-38, %v1444
  %v1446 = vsel %vm1443, %v1445, %v1441
  %v1447 = vmul.f32 1.0, %v1446
  %v1448 = vrcp.pop %v1066
  %v1449 = vmul.f32 %v1066, %v1448
  %v1450 = vsub.f32 1.0, %v1449
  %v1451 = vmul.f32 %v1448, %v1450
  %v1452 = vadd.f32 %v1448, %v1451
  %vm1453 = vweird.f32 %v1066
  %vm1454 = vweird.f32 %v1448
  %vm1455 = vmor %vm1453, %vm1454
  %v1456 = vsel %vm1455, %v1448, %v1452
  %v1457 = vand.u32 2147483647, %v1066
  %vm1458 = vcmp.eq.f32.partialorder %v1457, 8.507059e+37
  %v1459 = vand.u32 %v1066, 2147483648
  %v1460 = vor.u32 1.1754944e-38, %v1459
  %v1461 = vsel %vm1458, %v1460, %v1456
  %v1462 = vmul.f32 1.0, %v1461
  %v1463 = vrcp.pop %v1067
  %v1464 = vmul.f32 %v1067, %v1463
  %v1465 = vsub.f32 1.0, %v1464
  %v1466 = vmul.f32 %v1463, %v1465
  %v1467 = vadd.f32 %v1463, %v1466
  %vm1468 = vweird.f32 %v1067
  %vm1469 = vweird.f32 %v1463
  %vm1470 = vmor %vm1468, %vm1469
  %v1471 = vsel %vm1470, %v1463, %v1467
  %v1472 = vand.u32 2147483647, %v1067
  %vm1473 = vcmp.eq.f32.partialorder %v1472, 8.507059e+37
  %v1474 = vand.u32 %v1067, 2147483648
  %v1475 = vor.u32 1.1754944e-38, %v1474
  %v1476 = vsel %vm1473, %v1475, %v1471
  %v1477 = vmul.f32 1.0, %v1476
  %v1478 = vrcp.pop %v1068
  %v1479 = vmul.f32 %v1068, %v1478
  %v1480 = vsub.f32 1.0, %v1479
  %v1481 = vmul.f32 %v1478, %v1480
  %v1482 = vadd.f32 %v1478, %v1481
  %vm1483 = vweird.f32 %v1068
  %vm1484 = vweird.f32 %v1478
  %vm1485 = vmor %vm1483, %vm1484
  %v1486 = vsel %vm1485, %v1478, %v1482
  %v1487 = vand.u32 2147483647, %v1068
  %vm1488 = vcmp.eq.f32.partialorder %v1487, 8.507059e+37
  %v1489 = vand.u32 %v1068, 2147483648
  %v1490 = vor.u32 1.1754944e-38, %v1489
  %v1491 = vsel %vm1488, %v1490, %v1486
  %v1492 = vmul.f32 1.0, %v1491
  %v1493 = vrcp.pop %v1069
  %v1494 = vmul.f32 %v1069, %v1493
  %v1495 = vsub.f32 1.0, %v1494
  %v1496 = vmul.f32 %v1493, %v1495
  %v1497 = vadd.f32 %v1493, %v1496
  %vm1498 = vweird.f32 %v1069
  %vm1499 = vweird.f32 %v1493
  %vm1500 = vmor %vm1498, %vm1499
  %v1501 = vsel %vm1500, %v1493, %v1497
  %v1502 = vand.u32 2147483647, %v1069
  %vm1503 = vcmp.eq.f32.partialorder %v1502, 8.507059e+37
  %v1504 = vand.u32 %v1069, 2147483648
  %v1505 = vor.u32 1.1754944e-38, %v1504
  %v1506 = vsel %vm1503, %v1505, %v1501
  %v1507 = vmul.f32 1.0, %v1506
  %v1508 = vrcp.pop %v1070
  %v1509 = vmul.f32 %v1070, %v1508
  %v1510 = vsub.f32 1.0, %v1509
  %v1511 = vmul.f32 %v1508, %v1510
  %v1512 = vadd.f32 %v1508, %v1511
  %vm1513 = vweird.f32 %v1070
  %vm1514 = vweird.f32 %v1508
  %vm1515 = vmor %vm1513, %vm1514
  %v1516 = vsel %vm1515, %v1508, %v1512
  %v1517 = vand.u32 2147483647, %v1070
  %vm1518 = vcmp.eq.f32.partialorder %v1517, 8.507059e+37
  %v1519 = vand.u32 %v1070, 2147483648
  %v1520 = vor.u32 1.1754944e-38, %v1519
  %v1521 = vsel %vm1518, %v1520, %v1516
  %v1522 = vmul.f32 1.0, %v1521
  %v1523 = vrcp.pop %v1071
  %v1524 = vmul.f32 %v1071, %v1523
  %v1525 = vsub.f32 1.0, %v1524
  %v1526 = vmul.f32 %v1523, %v1525
  %v1527 = vadd.f32 %v1523, %v1526
  %vm1528 = vweird.f32 %v1071
  %vm1529 = vweird.f32 %v1523
  %vm1530 = vmor %vm1528, %vm1529
  %v1531 = vsel %vm1530, %v1523, %v1527
  %v1532 = vand.u32 2147483647, %v1071
  %vm1533 = vcmp.eq.f32.partialorder %v1532, 8.507059e+37
  %v1534 = vand.u32 %v1071, 2147483648
  %v1535 = vor.u32 1.1754944e-38, %v1534
  %v1536 = vsel %vm1533, %v1535, %v1531
  %v1537 = vmul.f32 1.0, %v1536
  %v1538 = vrcp.pop %v1072
  %v1539 = vmul.f32 %v1072, %v1538
  %v1540 = vsub.f32 1.0, %v1539
  %v1541 = vmul.f32 %v1538, %v1540
  %v1542 = vadd.f32 %v1538, %v1541
  %vm1543 = vweird.f32 %v1072
  %vm1544 = vweird.f32 %v1538
  %vm1545 = vmor %vm1543, %vm1544
  %v1546 = vsel %vm1545, %v1538, %v1542
  %v1547 = vand.u32 2147483647, %v1072
  %vm1548 = vcmp.eq.f32.partialorder %v1547, 8.507059e+37
  %v1549 = vand.u32 %v1072, 2147483648
  %v1550 = vor.u32 1.1754944e-38, %v1549
  %v1551 = vsel %vm1548, %v1550, %v1546
  %v1552 = vmul.f32 1.0, %v1551
  %v1553 = vadd.f32 %v478, %v745
  %v1554 = vadd.f32 %v480, %v747
  %v1555 = vadd.f32 %v483, %v750
  %v1556 = vadd.f32 %v485, %v752
  %v1557 = vadd.f32 %v488, %v755
  %v1558 = vadd.f32 %v490, %v757
  %v1559 = vadd.f32 %v493, %v760
  %v1560 = vadd.f32 %v495, %v762
  %v1561 = vadd.f32 %v498, %v765
  %v1562 = vadd.f32 %v500, %v767
  %v1563 = vadd.f32 %v503, %v770
  %v1564 = vadd.f32 %v505, %v772
  %v1565 = vadd.f32 %v508, %v775
  %v1566 = vadd.f32 %v510, %v777
  %v1567 = vadd.f32 %v513, %v780
  %v1568 = vadd.f32 %v515, %v782
  %v1569 = vadd.f32 %v518, %v785
  %v1570 = vadd.f32 %v520, %v787
  %v1571 = vadd.f32 %v523, %v790
  %v1572 = vadd.f32 %v525, %v792
  %v1573 = vadd.f32 %v528, %v795
  %v1574 = vadd.f32 %v530, %v797
  %v1575 = vadd.f32 %v533, %v800
  %v1576 = vadd.f32 %v535, %v802
  %v1577 = vadd.f32 %v538, %v805
  %v1578 = vadd.f32 %v540, %v807
  %v1579 = vadd.f32 %v543, %v810
  %v1580 = vadd.f32 %v545, %v812
  %v1581 = vadd.f32 %v548, %v815
  %v1582 = vadd.f32 %v550, %v817
  %v1583 = vadd.f32 %v553, %v820
  %v1584 = vadd.f32 %v555, %v822
  %v1585 = vxor.u32 %v1553, 2147483648
  %v1586 = vxor.u32 %v1554, 2147483648
  %v1587 = vxor.u32 %v1555, 2147483648
  %v1588 = vxor.u32 %v1556, 2147483648
  %v1589 = vxor.u32 %v1557, 2147483648
  %v1590 = vxor.u32 %v1558, 2147483648
  %v1591 = vxor.u32 %v1559, 2147483648
  %v1592 = vxor.u32 %v1560, 2147483648
  %v1593 = vxor.u32 %v1561, 2147483648
  %v1594 = vxor.u32 %v1562, 2147483648
  %v1595 = vxor.u32 %v1563, 2147483648
  %v1596 = vxor.u32 %v1564, 2147483648
  %v1597 = vxor.u32 %v1565, 2147483648
  %v1598 = vxor.u32 %v1566, 2147483648
  %v1599 = vxor.u32 %v1567, 2147483648
  %v1600 = vxor.u32 %v1568, 2147483648
  %v1601 = vxor.u32 %v1569, 2147483648
  %v1602 = vxor.u32 %v1570, 2147483648
  %v1603 = vxor.u32 %v1571, 2147483648
  %v1604 = vxor.u32 %v1572, 2147483648
  %v1605 = vxor.u32 %v1573, 2147483648
  %v1606 = vxor.u32 %v1574, 2147483648
  %v1607 = vxor.u32 %v1575, 2147483648
  %v1608 = vxor.u32 %v1576, 2147483648
  %v1609 = vxor.u32 %v1577, 2147483648
  %v1610 = vxor.u32 %v1578, 2147483648
  %v1611 = vxor.u32 %v1579, 2147483648
  %v1612 = vxor.u32 %v1580, 2147483648
  %v1613 = vxor.u32 %v1581, 2147483648
  %v1614 = vxor.u32 %v1582, 2147483648
  %v1615 = vxor.u32 %v1583, 2147483648
  %v1616 = vxor.u32 %v1584, 2147483648
  %v1617 = vmul.f32 %v1585, 1.442695
  %v1618 = vpow.pop %v1617
  %v1619 = vmul.f32 %v1586, 1.442695
  %v1620 = vpow.pop %v1619
  %v1621 = vmul.f32 %v1587, 1.442695
  %v1622 = vpow.pop %v1621
  %v1623 = vmul.f32 %v1588, 1.442695
  %v1624 = vpow.pop %v1623
  %v1625 = vmul.f32 %v1589, 1.442695
  %v1626 = vpow.pop %v1625
  %v1627 = vmul.f32 %v1590, 1.442695
  %v1628 = vpow.pop %v1627
  %v1629 = vmul.f32 %v1591, 1.442695
  %v1630 = vpow.pop %v1629
  %v1631 = vmul.f32 %v1592, 1.442695
  %v1632 = vpow.pop %v1631
  %v1633 = vmul.f32 %v1593, 1.442695
  %v1634 = vpow.pop %v1633
  %v1635 = vmul.f32 %v1594, 1.442695
  %v1636 = vpow.pop %v1635
  %v1637 = vmul.f32 %v1595, 1.442695
  %v1638 = vpow.pop %v1637
  %v1639 = vmul.f32 %v1596, 1.442695
  %v1640 = vpow.pop %v1639
  %v1641 = vmul.f32 %v1597, 1.442695
  %v1642 = vpow.pop %v1641
  %v1643 = vmul.f32 %v1598, 1.442695
  %v1644 = vpow.pop %v1643
  %v1645 = vmul.f32 %v1599, 1.442695
  %v1646 = vpow.pop %v1645
  %v1647 = vmul.f32 %v1600, 1.442695
  %v1648 = vpow.pop %v1647
  %v1649 = vmul.f32 %v1601, 1.442695
  %v1650 = vpow.pop %v1649
  %v1651 = vmul.f32 %v1602, 1.442695
  %v1652 = vpow.pop %v1651
  %v1653 = vmul.f32 %v1603, 1.442695
  %v1654 = vpow.pop %v1653
  %v1655 = vmul.f32 %v1604, 1.442695
  %v1656 = vpow.pop %v1655
  %v1657 = vmul.f32 %v1605, 1.442695
  %v1658 = vpow.pop %v1657
  %v1659 = vmul.f32 %v1606, 1.442695
  %v1660 = vpow.pop %v1659
  %v1661 = vmul.f32 %v1607, 1.442695
  %v1662 = vpow.pop %v1661
  %v1663 = vmul.f32 %v1608, 1.442695
  %v1664 = vpow.pop %v1663
  %v1665 = vmul.f32 %v1609, 1.442695
  %v1666 = vpow.pop %v1665
  %v1667 = vmul.f32 %v1610, 1.442695
  %v1668 = vpow.pop %v1667
  %v1669 = vmul.f32 %v1611, 1.442695
  %v1670 = vpow.pop %v1669
  %v1671 = vmul.f32 %v1612, 1.442695
  %v1672 = vpow.pop %v1671
  %v1673 = vmul.f32 %v1613, 1.442695
  %v1674 = vpow.pop %v1673
  %v1675 = vmul.f32 %v1614, 1.442695
  %v1676 = vpow.pop %v1675
  %v1677 = vmul.f32 %v1615, 1.442695
  %v1678 = vpow.pop %v1677
  %v1679 = vmul.f32 %v1616, 1.442695
  %v1680 = vpow.pop %v1679
  %v1681 = vadd.f32 %v1618, 1.0
  %v1682 = vadd.f32 %v1620, 1.0
  %v1683 = vadd.f32 %v1622, 1.0
  %v1684 = vadd.f32 %v1624, 1.0
  %v1685 = vadd.f32 %v1626, 1.0
  %v1686 = vadd.f32 %v1628, 1.0
  %v1687 = vadd.f32 %v1630, 1.0
  %v1688 = vadd.f32 %v1632, 1.0
  %v1689 = vadd.f32 %v1634, 1.0
  %v1690 = vadd.f32 %v1636, 1.0
  %v1691 = vadd.f32 %v1638, 1.0
  %v1692 = vadd.f32 %v1640, 1.0
  %v1693 = vadd.f32 %v1642, 1.0
  %v1694 = vadd.f32 %v1644, 1.0
  %v1695 = vadd.f32 %v1646, 1.0
  %v1696 = vadd.f32 %v1648, 1.0
  %v1697 = vadd.f32 %v1650, 1.0
  %v1698 = vadd.f32 %v1652, 1.0
  %v1699 = vadd.f32 %v1654, 1.0
  %v1700 = vadd.f32 %v1656, 1.0
  %v1701 = vadd.f32 %v1658, 1.0
  %v1702 = vadd.f32 %v1660, 1.0
  %v1703 = vadd.f32 %v1662, 1.0
  %v1704 = vadd.f32 %v1664, 1.0
  %v1705 = vadd.f32 %v1666, 1.0
  %v1706 = vadd.f32 %v1668, 1.0
  %v1707 = vadd.f32 %v1670, 1.0
  %v1708 = vadd.f32 %v1672, 1.0
  %v1709 = vadd.f32 %v1674, 1.0
  %v1710 = vadd.f32 %v1676, 1.0
  %v1711 = vadd.f32 %v1678, 1.0
  %v1712 = vadd.f32 %v1680, 1.0
  %v1713 = vrcp.pop %v1681
  %v1714 = vmul.f32 %v1681, %v1713
  %v1715 = vsub.f32 1.0, %v1714
  %v1716 = vmul.f32 %v1713, %v1715
  %v1717 = vadd.f32 %v1713, %v1716
  %vm1718 = vweird.f32 %v1681
  %vm1719 = vweird.f32 %v1713
  %vm1720 = vmor %vm1718, %vm1719
  %v1721 = vsel %vm1720, %v1713, %v1717
  %v1722 = vand.u32 2147483647, %v1681
  %vm1723 = vcmp.eq.f32.partialorder %v1722, 8.507059e+37
  %v1724 = vand.u32 %v1681, 2147483648
  %v1725 = vor.u32 1.1754944e-38, %v1724
  %v1726 = vsel %vm1723, %v1725, %v1721
  %v1727 = vmul.f32 1.0, %v1726
  %v1728 = vrcp.pop %v1682
  %v1729 = vmul.f32 %v1682, %v1728
  %v1730 = vsub.f32 1.0, %v1729
  %v1731 = vmul.f32 %v1728, %v1730
  %v1732 = vadd.f32 %v1728, %v1731
  %vm1733 = vweird.f32 %v1682
  %vm1734 = vweird.f32 %v1728
  %vm1735 = vmor %vm1733, %vm1734
  %v1736 = vsel %vm1735, %v1728, %v1732
  %v1737 = vand.u32 2147483647, %v1682
  %vm1738 = vcmp.eq.f32.partialorder %v1737, 8.507059e+37
  %v1739 = vand.u32 %v1682, 2147483648
  %v1740 = vor.u32 1.1754944e-38, %v1739
  %v1741 = vsel %vm1738, %v1740, %v1736
  %v1742 = vmul.f32 1.0, %v1741
  %v1743 = vrcp.pop %v1683
  %v1744 = vmul.f32 %v1683, %v1743
  %v1745 = vsub.f32 1.0, %v1744
  %v1746 = vmul.f32 %v1743, %v1745
  %v1747 = vadd.f32 %v1743, %v1746
  %vm1748 = vweird.f32 %v1683
  %vm1749 = vweird.f32 %v1743
  %vm1750 = vmor %vm1748, %vm1749
  %v1751 = vsel %vm1750, %v1743, %v1747
  %v1752 = vand.u32 2147483647, %v1683
  %vm1753 = vcmp.eq.f32.partialorder %v1752, 8.507059e+37
  %v1754 = vand.u32 %v1683, 2147483648
  %v1755 = vor.u32 1.1754944e-38, %v1754
  %v1756 = vsel %vm1753, %v1755, %v1751
  %v1757 = vmul.f32 1.0, %v1756
  %v1758 = vrcp.pop %v1684
  %v1759 = vmul.f32 %v1684, %v1758
  %v1760 = vsub.f32 1.0, %v1759
  %v1761 = vmul.f32 %v1758, %v1760
  %v1762 = vadd.f32 %v1758, %v1761
  %vm1763 = vweird.f32 %v1684
  %vm1764 = vweird.f32 %v1758
  %vm1765 = vmor %vm1763, %vm1764
  %v1766 = vsel %vm1765, %v1758, %v1762
  %v1767 = vand.u32 2147483647, %v1684
  %vm1768 = vcmp.eq.f32.partialorder %v1767, 8.507059e+37
  %v1769 = vand.u32 %v1684, 2147483648
  %v1770 = vor.u32 1.1754944e-38, %v1769
  %v1771 = vsel %vm1768, %v1770, %v1766
  %v1772 = vmul.f32 1.0, %v1771
  %v1773 = vrcp.pop %v1685
  %v1774 = vmul.f32 %v1685, %v1773
  %v1775 = vsub.f32 1.0, %v1774
  %v1776 = vmul.f32 %v1773, %v1775
  %v1777 = vadd.f32 %v1773, %v1776
  %vm1778 = vweird.f32 %v1685
  %vm1779 = vweird.f32 %v1773
  %vm1780 = vmor %vm1778, %vm1779
  %v1781 = vsel %vm1780, %v1773, %v1777
  %v1782 = vand.u32 2147483647, %v1685
  %vm1783 = vcmp.eq.f32.partialorder %v1782, 8.507059e+37
  %v1784 = vand.u32 %v1685, 2147483648
  %v1785 = vor.u32 1.1754944e-38, %v1784
  %v1786 = vsel %vm1783, %v1785, %v1781
  %v1787 = vmul.f32 1.0, %v1786
  %v1788 = vrcp.pop %v1686
  %v1789 = vmul.f32 %v1686, %v1788
  %v1790 = vsub.f32 1.0, %v1789
  %v1791 = vmul.f32 %v1788, %v1790
  %v1792 = vadd.f32 %v1788, %v1791
  %vm1793 = vweird.f32 %v1686
  %vm1794 = vweird.f32 %v1788
  %vm1795 = vmor %vm1793, %vm1794
  %v1796 = vsel %vm1795, %v1788, %v1792
  %v1797 = vand.u32 2147483647, %v1686
  %vm1798 = vcmp.eq.f32.partialorder %v1797, 8.507059e+37
  %v1799 = vand.u32 %v1686, 2147483648
  %v1800 = vor.u32 1.1754944e-38, %v1799
  %v1801 = vsel %vm1798, %v1800, %v1796
  %v1802 = vmul.f32 1.0, %v1801
  %v1803 = vrcp.pop %v1687
  %v1804 = vmul.f32 %v1687, %v1803
  %v1805 = vsub.f32 1.0, %v1804
  %v1806 = vmul.f32 %v1803, %v1805
  %v1807 = vadd.f32 %v1803, %v1806
  %vm1808 = vweird.f32 %v1687
  %vm1809 = vweird.f32 %v1803
  %vm1810 = vmor %vm1808, %vm1809
  %v1811 = vsel %vm1810, %v1803, %v1807
  %v1812 = vand.u32 2147483647, %v1687
  %vm1813 = vcmp.eq.f32.partialorder %v1812, 8.507059e+37
  %v1814 = vand.u32 %v1687, 2147483648
  %v1815 = vor.u32 1.1754944e-38, %v1814
  %v1816 = vsel %vm1813, %v1815, %v1811
  %v1817 = vmul.f32 1.0, %v1816
  %v1818 = vrcp.pop %v1688
  %v1819 = vmul.f32 %v1688, %v1818
  %v1820 = vsub.f32 1.0, %v1819
  %v1821 = vmul.f32 %v1818, %v1820
  %v1822 = vadd.f32 %v1818, %v1821
  %vm1823 = vweird.f32 %v1688
  %vm1824 = vweird.f32 %v1818
  %vm1825 = vmor %vm1823, %vm1824
  %v1826 = vsel %vm1825, %v1818, %v1822
  %v1827 = vand.u32 2147483647, %v1688
  %vm1828 = vcmp.eq.f32.partialorder %v1827, 8.507059e+37
  %v1829 = vand.u32 %v1688, 2147483648
  %v1830 = vor.u32 1.1754944e-38, %v1829
  %v1831 = vsel %vm1828, %v1830, %v1826
  %v1832 = vmul.f32 1.0, %v1831
  %v1833 = vrcp.pop %v1689
  %v1834 = vmul.f32 %v1689, %v1833
  %v1835 = vsub.f32 1.0, %v1834
  %v1836 = vmul.f32 %v1833, %v1835
  %v1837 = vadd.f32 %v1833, %v1836
  %vm1838 = vweird.f32 %v1689
  %vm1839 = vweird.f32 %v1833
  %vm1840 = vmor %vm1838, %vm1839
  %v1841 = vsel %vm1840, %v1833, %v1837
  %v1842 = vand.u32 2147483647, %v1689
  %vm1843 = vcmp.eq.f32.partialorder %v1842, 8.507059e+37
  %v1844 = vand.u32 %v1689, 2147483648
  %v1845 = vor.u32 1.1754944e-38, %v1844
  %v1846 = vsel %vm1843, %v1845, %v1841
  %v1847 = vmul.f32 1.0, %v1846
  %v1848 = vrcp.pop %v1690
  %v1849 = vmul.f32 %v1690, %v1848
  %v1850 = vsub.f32 1.0, %v1849
  %v1851 = vmul.f32 %v1848, %v1850
  %v1852 = vadd.f32 %v1848, %v1851
  %vm1853 = vweird.f32 %v1690
  %vm1854 = vweird.f32 %v1848
  %vm1855 = vmor %vm1853, %vm1854
  %v1856 = vsel %vm1855, %v1848, %v1852
  %v1857 = vand.u32 2147483647, %v1690
  %vm1858 = vcmp.eq.f32.partialorder %v1857, 8.507059e+37
  %v1859 = vand.u32 %v1690, 2147483648
  %v1860 = vor.u32 1.1754944e-38, %v1859
  %v1861 = vsel %vm1858, %v1860, %v1856
  %v1862 = vmul.f32 1.0, %v1861
  %v1863 = vrcp.pop %v1691
  %v1864 = vmul.f32 %v1691, %v1863
  %v1865 = vsub.f32 1.0, %v1864
  %v1866 = vmul.f32 %v1863, %v1865
  %v1867 = vadd.f32 %v1863, %v1866
  %vm1868 = vweird.f32 %v1691
  %vm1869 = vweird.f32 %v1863
  %vm1870 = vmor %vm1868, %vm1869
  %v1871 = vsel %vm1870, %v1863, %v1867
  %v1872 = vand.u32 2147483647, %v1691
  %vm1873 = vcmp.eq.f32.partialorder %v1872, 8.507059e+37
  %v1874 = vand.u32 %v1691, 2147483648
  %v1875 = vor.u32 1.1754944e-38, %v1874
  %v1876 = vsel %vm1873, %v1875, %v1871
  %v1877 = vmul.f32 1.0, %v1876
  %v1878 = vrcp.pop %v1692
  %v1879 = vmul.f32 %v1692, %v1878
  %v1880 = vsub.f32 1.0, %v1879
  %v1881 = vmul.f32 %v1878, %v1880
  %v1882 = vadd.f32 %v1878, %v1881
  %vm1883 = vweird.f32 %v1692
  %vm1884 = vweird.f32 %v1878
  %vm1885 = vmor %vm1883, %vm1884
  %v1886 = vsel %vm1885, %v1878, %v1882
  %v1887 = vand.u32 2147483647, %v1692
  %vm1888 = vcmp.eq.f32.partialorder %v1887, 8.507059e+37
  %v1889 = vand.u32 %v1692, 2147483648
  %v1890 = vor.u32 1.1754944e-38, %v1889
  %v1891 = vsel %vm1888, %v1890, %v1886
  %v1892 = vmul.f32 1.0, %v1891
  %v1893 = vrcp.pop %v1693
  %v1894 = vmul.f32 %v1693, %v1893
  %v1895 = vsub.f32 1.0, %v1894
  %v1896 = vmul.f32 %v1893, %v1895
  %v1897 = vadd.f32 %v1893, %v1896
  %vm1898 = vweird.f32 %v1693
  %vm1899 = vweird.f32 %v1893
  %vm1900 = vmor %vm1898, %vm1899
  %v1901 = vsel %vm1900, %v1893, %v1897
  %v1902 = vand.u32 2147483647, %v1693
  %vm1903 = vcmp.eq.f32.partialorder %v1902, 8.507059e+37
  %v1904 = vand.u32 %v1693, 2147483648
  %v1905 = vor.u32 1.1754944e-38, %v1904
  %v1906 = vsel %vm1903, %v1905, %v1901
  %v1907 = vmul.f32 1.0, %v1906
  %v1908 = vrcp.pop %v1694
  %v1909 = vmul.f32 %v1694, %v1908
  %v1910 = vsub.f32 1.0, %v1909
  %v1911 = vmul.f32 %v1908, %v1910
  %v1912 = vadd.f32 %v1908, %v1911
  %vm1913 = vweird.f32 %v1694
  %vm1914 = vweird.f32 %v1908
  %vm1915 = vmor %vm1913, %vm1914
  %v1916 = vsel %vm1915, %v1908, %v1912
  %v1917 = vand.u32 2147483647, %v1694
  %vm1918 = vcmp.eq.f32.partialorder %v1917, 8.507059e+37
  %v1919 = vand.u32 %v1694, 2147483648
  %v1920 = vor.u32 1.1754944e-38, %v1919
  %v1921 = vsel %vm1918, %v1920, %v1916
  %v1922 = vmul.f32 1.0, %v1921
  %v1923 = vrcp.pop %v1695
  %v1924 = vmul.f32 %v1695, %v1923
  %v1925 = vsub.f32 1.0, %v1924
  %v1926 = vmul.f32 %v1923, %v1925
  %v1927 = vadd.f32 %v1923, %v1926
  %vm1928 = vweird.f32 %v1695
  %vm1929 = vweird.f32 %v1923
  %vm1930 = vmor %vm1928, %vm1929
  %v1931 = vsel %vm1930, %v1923, %v1927
  %v1932 = vand.u32 2147483647, %v1695
  %vm1933 = vcmp.eq.f32.partialorder %v1932, 8.507059e+37
  %v1934 = vand.u32 %v1695, 2147483648
  %v1935 = vor.u32 1.1754944e-38, %v1934
  %v1936 = vsel %vm1933, %v1935, %v1931
  %v1937 = vmul.f32 1.0, %v1936
  %v1938 = vrcp.pop %v1696
  %v1939 = vmul.f32 %v1696, %v1938
  %v1940 = vsub.f32 1.0, %v1939
  %v1941 = vmul.f32 %v1938, %v1940
  %v1942 = vadd.f32 %v1938, %v1941
  %vm1943 = vweird.f32 %v1696
  %vm1944 = vweird.f32 %v1938
  %vm1945 = vmor %vm1943, %vm1944
  %v1946 = vsel %vm1945, %v1938, %v1942
  %v1947 = vand.u32 2147483647, %v1696
  %vm1948 = vcmp.eq.f32.partialorder %v1947, 8.507059e+37
  %v1949 = vand.u32 %v1696, 2147483648
  %v1950 = vor.u32 1.1754944e-38, %v1949
  %v1951 = vsel %vm1948, %v1950, %v1946
  %v1952 = vmul.f32 1.0, %v1951
  %v1953 = vrcp.pop %v1697
  %v1954 = vmul.f32 %v1697, %v1953
  %v1955 = vsub.f32 1.0, %v1954
  %v1956 = vmul.f32 %v1953, %v1955
  %v1957 = vadd.f32 %v1953, %v1956
  %vm1958 = vweird.f32 %v1697
  %vm1959 = vweird.f32 %v1953
  %vm1960 = vmor %vm1958, %vm1959
  %v1961 = vsel %vm1960, %v1953, %v1957
  %v1962 = vand.u32 2147483647, %v1697
  %vm1963 = vcmp.eq.f32.partialorder %v1962, 8.507059e+37
  %v1964 = vand.u32 %v1697, 2147483648
  %v1965 = vor.u32 1.1754944e-38, %v1964
  %v1966 = vsel %vm1963, %v1965, %v1961
  %v1967 = vmul.f32 1.0, %v1966
  %v1968 = vrcp.pop %v1698
  %v1969 = vmul.f32 %v1698, %v1968
  %v1970 = vsub.f32 1.0, %v1969
  %v1971 = vmul.f32 %v1968, %v1970
  %v1972 = vadd.f32 %v1968, %v1971
  %vm1973 = vweird.f32 %v1698
  %vm1974 = vweird.f32 %v1968
  %vm1975 = vmor %vm1973, %vm1974
  %v1976 = vsel %vm1975, %v1968, %v1972
  %v1977 = vand.u32 2147483647, %v1698
  %vm1978 = vcmp.eq.f32.partialorder %v1977, 8.507059e+37
  %v1979 = vand.u32 %v1698, 2147483648
  %v1980 = vor.u32 1.1754944e-38, %v1979
  %v1981 = vsel %vm1978, %v1980, %v1976
  %v1982 = vmul.f32 1.0, %v1981
  %v1983 = vrcp.pop %v1699
  %v1984 = vmul.f32 %v1699, %v1983
  %v1985 = vsub.f32 1.0, %v1984
  %v1986 = vmul.f32 %v1983, %v1985
  %v1987 = vadd.f32 %v1983, %v1986
  %vm1988 = vweird.f32 %v1699
  %vm1989 = vweird.f32 %v1983
  %vm1990 = vmor %vm1988, %vm1989
  %v1991 = vsel %vm1990, %v1983, %v1987
  %v1992 = vand.u32 2147483647, %v1699
  %vm1993 = vcmp.eq.f32.partialorder %v1992, 8.507059e+37
  %v1994 = vand.u32 %v1699, 2147483648
  %v1995 = vor.u32 1.1754944e-38, %v1994
  %v1996 = vsel %vm1993, %v1995, %v1991
  %v1997 = vmul.f32 1.0, %v1996
  %v1998 = vrcp.pop %v1700
  %v1999 = vmul.f32 %v1700, %v1998
  %v2000 = vsub.f32 1.0, %v1999
  %v2001 = vmul.f32 %v1998, %v2000
  %v2002 = vadd.f32 %v1998, %v2001
  %vm2003 = vweird.f32 %v1700
  %vm2004 = vweird.f32 %v1998
  %vm2005 = vmor %vm2003, %vm2004
  %v2006 = vsel %vm2005, %v1998, %v2002
  %v2007 = vand.u32 2147483647, %v1700
  %vm2008 = vcmp.eq.f32.partialorder %v2007, 8.507059e+37
  %v2009 = vand.u32 %v1700, 2147483648
  %v2010 = vor.u32 1.1754944e-38, %v2009
  %v2011 = vsel %vm2008, %v2010, %v2006
  %v2012 = vmul.f32 1.0, %v2011
  %v2013 = vrcp.pop %v1701
  %v2014 = vmul.f32 %v1701, %v2013
  %v2015 = vsub.f32 1.0, %v2014
  %v2016 = vmul.f32 %v2013, %v2015
  %v2017 = vadd.f32 %v2013, %v2016
  %vm2018 = vweird.f32 %v1701
  %vm2019 = vweird.f32 %v2013
  %vm2020 = vmor %vm2018, %vm2019
  %v2021 = vsel %vm2020, %v2013, %v2017
  %v2022 = vand.u32 2147483647, %v1701
  %vm2023 = vcmp.eq.f32.partialorder %v2022, 8.507059e+37
  %v2024 = vand.u32 %v1701, 2147483648
  %v2025 = vor.u32 1.1754944e-38, %v2024
  %v2026 = vsel %vm2023, %v2025, %v2021
  %v2027 = vmul.f32 1.0, %v2026
  %v2028 = vrcp.pop %v1702
  %v2029 = vmul.f32 %v1702, %v2028
  %v2030 = vsub.f32 1.0, %v2029
  %v2031 = vmul.f32 %v2028, %v2030
  %v2032 = vadd.f32 %v2028, %v2031
  %vm2033 = vweird.f32 %v1702
  %vm2034 = vweird.f32 %v2028
  %vm2035 = vmor %vm2033, %vm2034
  %v2036 = vsel %vm2035, %v2028, %v2032
  %v2037 = vand.u32 2147483647, %v1702
  %vm2038 = vcmp.eq.f32.partialorder %v2037, 8.507059e+37
  %v2039 = vand.u32 %v1702, 2147483648
  %v2040 = vor.u32 1.1754944e-38, %v2039
  %v2041 = vsel %vm2038, %v2040, %v2036
  %v2042 = vmul.f32 1.0, %v2041
  %v2043 = vrcp.pop %v1703
  %v2044 = vmul.f32 %v1703, %v2043
  %v2045 = vsub.f32 1.0, %v2044
  %v2046 = vmul.f32 %v2043, %v2045
  %v2047 = vadd.f32 %v2043, %v2046
  %vm2048 = vweird.f32 %v1703
  %vm2049 = vweird.f32 %v2043
  %vm2050 = vmor %vm2048, %vm2049
  %v2051 = vsel %vm2050, %v2043, %v2047
  %v2052 = vand.u32 2147483647, %v1703
  %vm2053 = vcmp.eq.f32.partialorder %v2052, 8.507059e+37
  %v2054 = vand.u32 %v1703, 2147483648
  %v2055 = vor.u32 1.1754944e-38, %v2054
  %v2056 = vsel %vm2053, %v2055, %v2051
  %v2057 = vmul.f32 1.0, %v2056
  %v2058 = vrcp.pop %v1704
  %v2059 = vmul.f32 %v1704, %v2058
  %v2060 = vsub.f32 1.0, %v2059
  %v2061 = vmul.f32 %v2058, %v2060
  %v2062 = vadd.f32 %v2058, %v2061
  %vm2063 = vweird.f32 %v1704
  %vm2064 = vweird.f32 %v2058
  %vm2065 = vmor %vm2063, %vm2064
  %v2066 = vsel %vm2065, %v2058, %v2062
  %v2067 = vand.u32 2147483647, %v1704
  %vm2068 = vcmp.eq.f32.partialorder %v2067, 8.507059e+37
  %v2069 = vand.u32 %v1704, 2147483648
  %v2070 = vor.u32 1.1754944e-38, %v2069
  %v2071 = vsel %vm2068, %v2070, %v2066
  %v2072 = vmul.f32 1.0, %v2071
  %v2073 = vrcp.pop %v1705
  %v2074 = vmul.f32 %v1705, %v2073
  %v2075 = vsub.f32 1.0, %v2074
  %v2076 = vmul.f32 %v2073, %v2075
  %v2077 = vadd.f32 %v2073, %v2076
  %vm2078 = vweird.f32 %v1705
  %vm2079 = vweird.f32 %v2073
  %vm2080 = vmor %vm2078, %vm2079
  %v2081 = vsel %vm2080, %v2073, %v2077
  %v2082 = vand.u32 2147483647, %v1705
  %vm2083 = vcmp.eq.f32.partialorder %v2082, 8.507059e+37
  %v2084 = vand.u32 %v1705, 2147483648
  %v2085 = vor.u32 1.1754944e-38, %v2084
  %v2086 = vsel %vm2083, %v2085, %v2081
  %v2087 = vmul.f32 1.0, %v2086
  %v2088 = vrcp.pop %v1706
  %v2089 = vmul.f32 %v1706, %v2088
  %v2090 = vsub.f32 1.0, %v2089
  %v2091 = vmul.f32 %v2088, %v2090
  %v2092 = vadd.f32 %v2088, %v2091
  %vm2093 = vweird.f32 %v1706
  %vm2094 = vweird.f32 %v2088
  %vm2095 = vmor %vm2093, %vm2094
  %v2096 = vsel %vm2095, %v2088, %v2092
  %v2097 = vand.u32 2147483647, %v1706
  %vm2098 = vcmp.eq.f32.partialorder %v2097, 8.507059e+37
  %v2099 = vand.u32 %v1706, 2147483648
  %v2100 = vor.u32 1.1754944e-38, %v2099
  %v2101 = vsel %vm2098, %v2100, %v2096
  %v2102 = vmul.f32 1.0, %v2101
  %v2103 = vrcp.pop %v1707
  %v2104 = vmul.f32 %v1707, %v2103
  %v2105 = vsub.f32 1.0, %v2104
  %v2106 = vmul.f32 %v2103, %v2105
  %v2107 = vadd.f32 %v2103, %v2106
  %vm2108 = vweird.f32 %v1707
  %vm2109 = vweird.f32 %v2103
  %vm2110 = vmor %vm2108, %vm2109
  %v2111 = vsel %vm2110, %v2103, %v2107
  %v2112 = vand.u32 2147483647, %v1707
  %vm2113 = vcmp.eq.f32.partialorder %v2112, 8.507059e+37
  %v2114 = vand.u32 %v1707, 2147483648
  %v2115 = vor.u32 1.1754944e-38, %v2114
  %v2116 = vsel %vm2113, %v2115, %v2111
  %v2117 = vmul.f32 1.0, %v2116
  %v2118 = vrcp.pop %v1708
  %v2119 = vmul.f32 %v1708, %v2118
  %v2120 = vsub.f32 1.0, %v2119
  %v2121 = vmul.f32 %v2118, %v2120
  %v2122 = vadd.f32 %v2118, %v2121
  %vm2123 = vweird.f32 %v1708
  %vm2124 = vweird.f32 %v2118
  %vm2125 = vmor %vm2123, %vm2124
  %v2126 = vsel %vm2125, %v2118, %v2122
  %v2127 = vand.u32 2147483647, %v1708
  %vm2128 = vcmp.eq.f32.partialorder %v2127, 8.507059e+37
  %v2129 = vand.u32 %v1708, 2147483648
  %v2130 = vor.u32 1.1754944e-38, %v2129
  %v2131 = vsel %vm2128, %v2130, %v2126
  %v2132 = vmul.f32 1.0, %v2131
  %v2133 = vrcp.pop %v1709
  %v2134 = vmul.f32 %v1709, %v2133
  %v2135 = vsub.f32 1.0, %v2134
  %v2136 = vmul.f32 %v2133, %v2135
  %v2137 = vadd.f32 %v2133, %v2136
  %vm2138 = vweird.f32 %v1709
  %vm2139 = vweird.f32 %v2133
  %vm2140 = vmor %vm2138, %vm2139
  %v2141 = vsel %vm2140, %v2133, %v2137
  %v2142 = vand.u32 2147483647, %v1709
  %vm2143 = vcmp.eq.f32.partialorder %v2142, 8.507059e+37
  %v2144 = vand.u32 %v1709, 2147483648
  %v2145 = vor.u32 1.1754944e-38, %v2144
  %v2146 = vsel %vm2143, %v2145, %v2141
  %v2147 = vmul.f32 1.0, %v2146
  %v2148 = vrcp.pop %v1710
  %v2149 = vmul.f32 %v1710, %v2148
  %v2150 = vsub.f32 1.0, %v2149
  %v2151 = vmul.f32 %v2148, %v2150
  %v2152 = vadd.f32 %v2148, %v2151
  %vm2153 = vweird.f32 %v1710
  %vm2154 = vweird.f32 %v2148
  %vm2155 = vmor %vm2153, %vm2154
  %v2156 = vsel %vm2155, %v2148, %v2152
  %v2157 = vand.u32 2147483647, %v1710
  %vm2158 = vcmp.eq.f32.partialorder %v2157, 8.507059e+37
  %v2159 = vand.u32 %v1710, 2147483648
  %v2160 = vor.u32 1.1754944e-38, %v2159
  %v2161 = vsel %vm2158, %v2160, %v2156
  %v2162 = vmul.f32 1.0, %v2161
  %v2163 = vrcp.pop %v1711
  %v2164 = vmul.f32 %v1711, %v2163
  %v2165 = vsub.f32 1.0, %v2164
  %v2166 = vmul.f32 %v2163, %v2165
  %v2167 = vadd.f32 %v2163, %v2166
  %vm2168 = vweird.f32 %v1711
  %vm2169 = vweird.f32 %v2163
  %vm2170 = vmor %vm2168, %vm2169
  %v2171 = vsel %vm2170, %v2163, %v2167
  %v2172 = vand.u32 2147483647, %v1711
  %vm2173 = vcmp.eq.f32.partialorder %v2172, 8.507059e+37
  %v2174 = vand.u32 %v1711, 2147483648
  %v2175 = vor.u32 1.1754944e-38, %v2174
  %v2176 = vsel %vm2173, %v2175, %v2171
  %v2177 = vmul.f32 1.0, %v2176
  %v2178 = vrcp.pop %v1712
  %v2179 = vmul.f32 %v1712, %v2178
  %v2180 = vsub.f32 1.0, %v2179
  %v2181 = vmul.f32 %v2178, %v2180
  %v2182 = vadd.f32 %v2178, %v2181
  %vm2183 = vweird.f32 %v1712
  %vm2184 = vweird.f32 %v2178
  %vm2185 = vmor %vm2183, %vm2184
  %v2186 = vsel %vm2185, %v2178, %v2182
  %v2187 = vand.u32 2147483647, %v1712
  %vm2188 = vcmp.eq.f32.partialorder %v2187, 8.507059e+37
  %v2189 = vand.u32 %v1712, 2147483648
  %v2190 = vor.u32 1.1754944e-38, %v2189
  %v2191 = vsel %vm2188, %v2190, %v2186
  %v2192 = vmul.f32 1.0, %v2191
  %v2193 = vmul.f32 %v1087, %v834
  %v2194 = vmul.f32 %v1102, %v836
  %v2195 = vmul.f32 %v1117, %v839
  %v2196 = vmul.f32 %v1132, %v841
  %v2197 = vmul.f32 %v1147, %v844
  %v2198 = vmul.f32 %v1162, %v846
  %v2199 = vmul.f32 %v1177, %v849
  %v2200 = vmul.f32 %v1192, %v851
  %v2201 = vmul.f32 %v1207, %v854
  %v2202 = vmul.f32 %v1222, %v856
  %v2203 = vmul.f32 %v1237, %v859
  %v2204 = vmul.f32 %v1252, %v861
  %v2205 = vmul.f32 %v1267, %v864
  %v2206 = vmul.f32 %v1282, %v866
  %v2207 = vmul.f32 %v1297, %v869
  %v2208 = vmul.f32 %v1312, %v871
  %v2209 = vmul.f32 %v1327, %v874
  %v2210 = vmul.f32 %v1342, %v876
  %v2211 = vmul.f32 %v1357, %v879
  %v2212 = vmul.f32 %v1372, %v881
  %v2213 = vmul.f32 %v1387, %v884
  %v2214 = vmul.f32 %v1402, %v886
  %v2215 = vmul.f32 %v1417, %v889
  %v2216 = vmul.f32 %v1432, %v891
  %v2217 = vmul.f32 %v1447, %v894
  %v2218 = vmul.f32 %v1462, %v896
  %v2219 = vmul.f32 %v1477, %v899
  %v2220 = vmul.f32 %v1492, %v901
  %v2221 = vmul.f32 %v1507, %v904
  %v2222 = vmul.f32 %v1522, %v906
  %v2223 = vmul.f32 %v1537, %v909
  %v2224 = vmul.f32 %v1552, %v911
  %v2225 = vadd.f32 %v567, %v2193
  %v2226 = vadd.f32 %v569, %v2194
  %v2227 = vadd.f32 %v572, %v2195
  %v2228 = vadd.f32 %v574, %v2196
  %v2229 = vadd.f32 %v577, %v2197
  %v2230 = vadd.f32 %v579, %v2198
  %v2231 = vadd.f32 %v582, %v2199
  %v2232 = vadd.f32 %v584, %v2200
  %v2233 = vadd.f32 %v587, %v2201
  %v2234 = vadd.f32 %v589, %v2202
  %v2235 = vadd.f32 %v592, %v2203
  %v2236 = vadd.f32 %v594, %v2204
  %v2237 = vadd.f32 %v597, %v2205
  %v2238 = vadd.f32 %v599, %v2206
  %v2239 = vadd.f32 %v602, %v2207
  %v2240 = vadd.f32 %v604, %v2208
  %v2241 = vadd.f32 %v607, %v2209
  %v2242 = vadd.f32 %v609, %v2210
  %v2243 = vadd.f32 %v612, %v2211
  %v2244 = vadd.f32 %v614, %v2212
  %v2245 = vadd.f32 %v617, %v2213
  %v2246 = vadd.f32 %v619, %v2214
  %v2247 = vadd.f32 %v622, %v2215
  %v2248 = vadd.f32 %v624, %v2216
  %v2249 = vadd.f32 %v627, %v2217
  %v2250 = vadd.f32 %v629, %v2218
  %v2251 = vadd.f32 %v632, %v2219
  %v2252 = vadd.f32 %v634, %v2220
  %v2253 = vadd.f32 %v637, %v2221
  %v2254 = vadd.f32 %v639, %v2222
  %v2255 = vadd.f32 %v642, %v2223
  %v2256 = vadd.f32 %v644, %v2224
  %v2257 = vtanh.pop %v2225
  %v2258 = vtanh.pop %v2226
  %v2259 = vtanh.pop %v2227
  %v2260 = vtanh.pop %v2228
  %v2261 = vtanh.pop %v2229
  %v2262 = vtanh.pop %v2230
  %v2263 = vtanh.pop %v2231
  %v2264 = vtanh.pop %v2232
  %v2265 = vtanh.pop %v2233
  %v2266 = vtanh.pop %v2234
  %v2267 = vtanh.pop %v2235
  %v2268 = vtanh.pop %v2236
  %v2269 = vtanh.pop %v2237
  %v2270 = vtanh.pop %v2238
  %v2271 = vtanh.pop %v2239
  %v2272 = vtanh.pop %v2240
  %v2273 = vtanh.pop %v2241
  %v2274 = vtanh.pop %v2242
  %v2275 = vtanh.pop %v2243
  %v2276 = vtanh.pop %v2244
  %v2277 = vtanh.pop %v2245
  %v2278 = vtanh.pop %v2246
  %v2279 = vtanh.pop %v2247
  %v2280 = vtanh.pop %v2248
  %v2281 = vtanh.pop %v2249
  %v2282 = vtanh.pop %v2250
  %v2283 = vtanh.pop %v2251
  %v2284 = vtanh.pop %v2252
  %v2285 = vtanh.pop %v2253
  %v2286 = vtanh.pop %v2254
  %v2287 = vtanh.pop %v2255
  %v2288 = vtanh.pop %v2256
  %v2289 = vsub.f32 1.0, %v1727
  %v2290 = vsub.f32 1.0, %v1742
  %v2291 = vsub.f32 1.0, %v1757
  %v2292 = vsub.f32 1.0, %v1772
  %v2293 = vsub.f32 1.0, %v1787
  %v2294 = vsub.f32 1.0, %v1802
  %v2295 = vsub.f32 1.0, %v1817
  %v2296 = vsub.f32 1.0, %v1832
  %v2297 = vsub.f32 1.0, %v1847
  %v2298 = vsub.f32 1.0, %v1862
  %v2299 = vsub.f32 1.0, %v1877
  %v2300 = vsub.f32 1.0, %v1892
  %v2301 = vsub.f32 1.0, %v1907
  %v2302 = vsub.f32 1.0, %v1922
  %v2303 = vsub.f32 1.0, %v1937
  %v2304 = vsub.f32 1.0, %v1952
  %v2305 = vsub.f32 1.0, %v1967
  %v2306 = vsub.f32 1.0, %v1982
  %v2307 = vsub.f32 1.0, %v1997
  %v2308 = vsub.f32 1.0, %v2012
  %v2309 = vsub.f32 1.0, %v2027
  %v2310 = vsub.f32 1.0, %v2042
  %v2311 = vsub.f32 1.0, %v2057
  %v2312 = vsub.f32 1.0, %v2072
  %v2313 = vsub.f32 1.0, %v2087
  %v2314 = vsub.f32 1.0, %v2102
  %v2315 = vsub.f32 1.0, %v2117
  %v2316 = vsub.f32 1.0, %v2132
  %v2317 = vsub.f32 1.0, %v2147
  %v2318 = vsub.f32 1.0, %v2162
  %v2319 = vsub.f32 1.0, %v2177
  %v2320 = vsub.f32 1.0, %v2192
  %v2321 = vmul.f32 %v2289, %v2257
  %v2322 = vmul.f32 %v2290, %v2258
  %v2323 = vmul.f32 %v2291, %v2259
  %v2324 = vmul.f32 %v2292, %v2260
  %v2325 = vmul.f32 %v2293, %v2261
  %v2326 = vmul.f32 %v2294, %v2262
  %v2327 = vmul.f32 %v2295, %v2263
  %v2328 = vmul.f32 %v2296, %v2264
  %v2329 = vmul.f32 %v2297, %v2265
  %v2330 = vmul.f32 %v2298, %v2266
  %v2331 = vmul.f32 %v2299, %v2267
  %v2332 = vmul.f32 %v2300, %v2268
  %v2333 = vmul.f32 %v2301, %v2269
  %v2334 = vmul.f32 %v2302, %v2270
  %v2335 = vmul.f32 %v2303, %v2271
  %v2336 = vmul.f32 %v2304, %v2272
  %v2337 = vmul.f32 %v2305, %v2273
  %v2338 = vmul.f32 %v2306, %v2274
  %v2339 = vmul.f32 %v2307, %v2275
  %v2340 = vmul.f32 %v2308, %v2276
  %v2341 = vmul.f32 %v2309, %v2277
  %v2342 = vmul.f32 %v2310, %v2278
  %v2343 = vmul.f32 %v2311, %v2279
  %v2344 = vmul.f32 %v2312, %v2280
  %v2345 = vmul.f32 %v2313, %v2281
  %v2346 = vmul.f32 %v2314, %v2282
  %v2347 = vmul.f32 %v2315, %v2283
  %v2348 = vmul.f32 %v2316, %v2284
  %v2349 = vmul.f32 %v2317, %v2285
  %v2350 = vmul.f32 %v2318, %v2286
  %v2351 = vmul.f32 %v2319, %v2287
  %v2352 = vmul.f32 %v2320, %v2288
  %v2353 = vmul.f32 %v1727, %v29
  %v2354 = vmul.f32 %v1742, %v30
  %v2355 = vmul.f32 %v1757, %v31
  %v2356 = vmul.f32 %v1772, %v32
  %v2357 = vmul.f32 %v1787, %v33
  %v2358 = vmul.f32 %v1802, %v34
  %v2359 = vmul.f32 %v1817, %v35
  %v2360 = vmul.f32 %v1832, %v36
  %v2361 = vmul.f32 %v1847, %v37
  %v2362 = vmul.f32 %v1862, %v38
  %v2363 = vmul.f32 %v1877, %v39
  %v2364 = vmul.f32 %v1892, %v40
  %v2365 = vmul.f32 %v1907, %v41
  %v2366 = vmul.f32 %v1922, %v42
  %v2367 = vmul.f32 %v1937, %v43
  %v2368 = vmul.f32 %v1952, %v44
  %v2369 = vmul.f32 %v1967, %v45
  %v2370 = vmul.f32 %v1982, %v46
  %v2371 = vmul.f32 %v1997, %v47
  %v2372 = vmul.f32 %v2012, %v48
  %v2373 = vmul.f32 %v2027, %v49
  %v2374 = vmul.f32 %v2042, %v50
  %v2375 = vmul.f32 %v2057, %v51
  %v2376 = vmul.f32 %v2072, %v52
  %v2377 = vmul.f32 %v2087, %v53
  %v2378 = vmul.f32 %v2102, %v54
  %v2379 = vmul.f32 %v2117, %v55
  %v2380 = vmul.f32 %v2132, %v56
  %v2381 = vmul.f32 %v2147, %v57
  %v2382 = vmul.f32 %v2162, %v58
  %v2383 = vmul.f32 %v2177, %v59
  %v2384 = vmul.f32 %v2192, %v60
  %v2385 = vadd.f32 %v2321, %v2353
  %v2386 = vadd.f32 %v2322, %v2354
  %v2387 = vadd.f32 %v2323, %v2355
  %v2388 = vadd.f32 %v2324, %v2356
  %v2389 = vadd.f32 %v2325, %v2357
  %v2390 = vadd.f32 %v2326, %v2358
  %v2391 = vadd.f32 %v2327, %v2359
  %v2392 = vadd.f32 %v2328, %v2360
  %v2393 = vadd.f32 %v2329, %v2361
  %v2394 = vadd.f32 %v2330, %v2362
  %v2395 = vadd.f32 %v2331, %v2363
  %v2396 = vadd.f32 %v2332, %v2364
  %v2397 = vadd.f32 %v2333, %v2365
  %v2398 = vadd.f32 %v2334, %v2366
  %v2399 = vadd.f32 %v2335, %v2367
  %v2400 = vadd.f32 %v2336, %v2368
  %v2401 = vadd.f32 %v2337, %v2369
  %v2402 = vadd.f32 %v2338, %v2370
  %v2403 = vadd.f32 %v2339, %v2371
  %v2404 = vadd.f32 %v2340, %v2372
  %v2405 = vadd.f32 %v2341, %v2373
  %v2406 = vadd.f32 %v2342, %v2374
  %v2407 = vadd.f32 %v2343, %v2375
  %v2408 = vadd.f32 %v2344, %v2376
  %v2409 = vadd.f32 %v2345, %v2377
  %v2410 = vadd.f32 %v2346, %v2378
  %v2411 = vadd.f32 %v2347, %v2379
  %v2412 = vadd.f32 %v2348, %v2380
  %v2413 = vadd.f32 %v2349, %v2381
  %v2414 = vadd.f32 %v2350, %v2382
  %v2415 = vadd.f32 %v2351, %v2383
  %v2416 = vadd.f32 %v2352, %v2384
  %v2417 = vpack.c.bf16 %v2386, %v2385
  %v2418 = vpack.c.bf16 %v2388, %v2387
  %v2419 = vpack.c.bf16 %v2390, %v2389
  %v2420 = vpack.c.bf16 %v2392, %v2391
  %v2421 = vpack.c.bf16 %v2394, %v2393
  %v2422 = vpack.c.bf16 %v2396, %v2395
  %v2423 = vpack.c.bf16 %v2398, %v2397
  %v2424 = vpack.c.bf16 %v2400, %v2399
  %v2425 = vpack.c.bf16 %v2402, %v2401
  %v2426 = vpack.c.bf16 %v2404, %v2403
  %v2427 = vpack.c.bf16 %v2406, %v2405
  %v2428 = vpack.c.bf16 %v2408, %v2407
  %v2429 = vpack.c.bf16 %v2410, %v2409
  %v2430 = vpack.c.bf16 %v2412, %v2411
  %v2431 = vpack.c.bf16 %v2414, %v2413
  %v2432 = vpack.c.bf16 %v2416, %v2415
  %s2433 = scalar_lea.vmem %s2, 384
  %v2434 = vld [vmem:[%s2433] sm:$0xff]
  %v2435 = vld [vmem:[%s2433 + $0x8] sm:$0xff]
  %v2436 = vld [vmem:[%s2433 + $0x10] sm:$0xff]
  %v2437 = vld [vmem:[%s2433 + $0x18] sm:$0xff]
  %v2438 = vld [vmem:[%s2433 + $0x20] sm:$0xff]
  %v2439 = vld [vmem:[%s2433 + $0x28] sm:$0xff]
  %v2440 = vld [vmem:[%s2433 + $0x30] sm:$0xff]
  %v2441 = vld [vmem:[%s2433 + $0x38] sm:$0xff]
  %v2442 = vld [vmem:[%s2433 + $0x40] sm:$0xff]
  %v2443 = vld [vmem:[%s2433 + $0x48] sm:$0xff]
  %v2444 = vld [vmem:[%s2433 + $0x50] sm:$0xff]
  %v2445 = vld [vmem:[%s2433 + $0x58] sm:$0xff]
  %v2446 = vld [vmem:[%s2433 + $0x60] sm:$0xff]
  %v2447 = vld [vmem:[%s2433 + $0x68] sm:$0xff]
  %v2448 = vld [vmem:[%s2433 + $0x70] sm:$0xff]
  %v2449 = vld [vmem:[%s2433 + $0x78] sm:$0xff]
  %v2450 = vld [vmem:[%s2433 + $0x80] sm:$0xff]
  %v2451 = vld [vmem:[%s2433 + $0x88] sm:$0xff]
  %v2452 = vld [vmem:[%s2433 + $0x90] sm:$0xff]
  %v2453 = vld [vmem:[%s2433 + $0x98] sm:$0xff]
  %v2454 = vld [vmem:[%s2433 + $0xa0] sm:$0xff]
  %v2455 = vld [vmem:[%s2433 + $0xa8] sm:$0xff]
  %v2456 = vld [vmem:[%s2433 + $0xb0] sm:$0xff]
  %v2457 = vld [vmem:[%s2433 + $0xb8] sm:$0xff]
  %v2458 = vld [vmem:[%s2433 + $0xc0] sm:$0xff]
  %v2459 = vld [vmem:[%s2433 + $0xc8] sm:$0xff]
  %v2460 = vld [vmem:[%s2433 + $0xd0] sm:$0xff]
  %v2461 = vld [vmem:[%s2433 + $0xd8] sm:$0xff]
  %v2462 = vld [vmem:[%s2433 + $0xe0] sm:$0xff]
  %v2463 = vld [vmem:[%s2433 + $0xe8] sm:$0xff]
  %v2464 = vld [vmem:[%s2433 + $0xf0] sm:$0xff]
  %v2465 = vld [vmem:[%s2433 + $0xf8] sm:$0xff]
  %v2466 = vld [vmem:[%s2433 + $0x100] sm:$0xff]
  %v2467 = vld [vmem:[%s2433 + $0x108] sm:$0xff]
  %v2468 = vld [vmem:[%s2433 + $0x110] sm:$0xff]
  %v2469 = vld [vmem:[%s2433 + $0x118] sm:$0xff]
  %v2470 = vld [vmem:[%s2433 + $0x120] sm:$0xff]
  %v2471 = vld [vmem:[%s2433 + $0x128] sm:$0xff]
  %v2472 = vld [vmem:[%s2433 + $0x130] sm:$0xff]
  %v2473 = vld [vmem:[%s2433 + $0x138] sm:$0xff]
  %v2474 = vld [vmem:[%s2433 + $0x140] sm:$0xff]
  %v2475 = vld [vmem:[%s2433 + $0x148] sm:$0xff]
  %v2476 = vld [vmem:[%s2433 + $0x150] sm:$0xff]
  %v2477 = vld [vmem:[%s2433 + $0x158] sm:$0xff]
  %v2478 = vld [vmem:[%s2433 + $0x160] sm:$0xff]
  %v2479 = vld [vmem:[%s2433 + $0x168] sm:$0xff]
  %v2480 = vld [vmem:[%s2433 + $0x170] sm:$0xff]
  %v2481 = vld [vmem:[%s2433 + $0x178] sm:$0xff]
  %v2530 = vunpack.c.l.b16 %v2434
  %v2531 = vunpack.c.h.b16 %v2434
  %v2532 = vunpack.c.l.b16 %v2435
  %v2533 = vunpack.c.h.b16 %v2435
  %v2534 = vunpack.c.l.b16 %v2436
  %v2535 = vunpack.c.h.b16 %v2436
  %v2536 = vunpack.c.l.b16 %v2437
  %v2537 = vunpack.c.h.b16 %v2437
  %v2538 = vunpack.c.l.b16 %v2438
  %v2539 = vunpack.c.h.b16 %v2438
  %v2540 = vunpack.c.l.b16 %v2439
  %v2541 = vunpack.c.h.b16 %v2439
  %v2542 = vunpack.c.l.b16 %v2440
  %v2543 = vunpack.c.h.b16 %v2440
  %v2544 = vunpack.c.l.b16 %v2441
  %v2545 = vunpack.c.h.b16 %v2441
  %v2546 = vunpack.c.l.b16 %v2442
  %v2547 = vunpack.c.h.b16 %v2442
  %v2548 = vunpack.c.l.b16 %v2443
  %v2549 = vunpack.c.h.b16 %v2443
  %v2550 = vunpack.c.l.b16 %v2444
  %v2551 = vunpack.c.h.b16 %v2444
  %v2552 = vunpack.c.l.b16 %v2445
  %v2553 = vunpack.c.h.b16 %v2445
  %v2554 = vunpack.c.l.b16 %v2446
  %v2555 = vunpack.c.h.b16 %v2446
  %v2556 = vunpack.c.l.b16 %v2447
  %v2557 = vunpack.c.h.b16 %v2447
  %v2558 = vunpack.c.l.b16 %v2448
  %v2559 = vunpack.c.h.b16 %v2448
  %v2560 = vunpack.c.l.b16 %v2449
  %v2561 = vunpack.c.h.b16 %v2449
  %v2562 = vunpack.c.l.b16 %v2450
  %v2563 = vunpack.c.h.b16 %v2450
  %v2564 = vunpack.c.l.b16 %v2451
  %v2565 = vunpack.c.h.b16 %v2451
  %v2566 = vunpack.c.l.b16 %v2452
  %v2567 = vunpack.c.h.b16 %v2452
  %v2568 = vunpack.c.l.b16 %v2453
  %v2569 = vunpack.c.h.b16 %v2453
  %v2570 = vunpack.c.l.b16 %v2454
  %v2571 = vunpack.c.h.b16 %v2454
  %v2572 = vunpack.c.l.b16 %v2455
  %v2573 = vunpack.c.h.b16 %v2455
  %v2574 = vunpack.c.l.b16 %v2456
  %v2575 = vunpack.c.h.b16 %v2456
  %v2576 = vunpack.c.l.b16 %v2457
  %v2577 = vunpack.c.h.b16 %v2457
  %v2578 = vunpack.c.l.b16 %v2458
  %v2579 = vunpack.c.h.b16 %v2458
  %v2580 = vunpack.c.l.b16 %v2459
  %v2581 = vunpack.c.h.b16 %v2459
  %v2582 = vunpack.c.l.b16 %v2460
  %v2583 = vunpack.c.h.b16 %v2460
  %v2584 = vunpack.c.l.b16 %v2461
  %v2585 = vunpack.c.h.b16 %v2461
  %v2586 = vunpack.c.l.b16 %v2462
  %v2587 = vunpack.c.h.b16 %v2462
  %v2588 = vunpack.c.l.b16 %v2463
  %v2589 = vunpack.c.h.b16 %v2463
  %v2590 = vunpack.c.l.b16 %v2464
  %v2591 = vunpack.c.h.b16 %v2464
  %v2592 = vunpack.c.l.b16 %v2465
  %v2593 = vunpack.c.h.b16 %v2465
  %v2594 = vunpack.c.l.b16 %v2466
  %v2595 = vunpack.c.h.b16 %v2466
  %v2596 = vunpack.c.l.b16 %v2467
  %v2597 = vunpack.c.h.b16 %v2467
  %v2598 = vunpack.c.l.b16 %v2468
  %v2599 = vunpack.c.h.b16 %v2468
  %v2600 = vunpack.c.l.b16 %v2469
  %v2601 = vunpack.c.h.b16 %v2469
  %v2602 = vunpack.c.l.b16 %v2470
  %v2603 = vunpack.c.h.b16 %v2470
  %v2604 = vunpack.c.l.b16 %v2471
  %v2605 = vunpack.c.h.b16 %v2471
  %v2606 = vunpack.c.l.b16 %v2472
  %v2607 = vunpack.c.h.b16 %v2472
  %v2608 = vunpack.c.l.b16 %v2473
  %v2609 = vunpack.c.h.b16 %v2473
  %v2610 = vunpack.c.l.b16 %v2474
  %v2611 = vunpack.c.h.b16 %v2474
  %v2612 = vunpack.c.l.b16 %v2475
  %v2613 = vunpack.c.h.b16 %v2475
  %v2614 = vunpack.c.l.b16 %v2476
  %v2615 = vunpack.c.h.b16 %v2476
  %v2616 = vunpack.c.l.b16 %v2477
  %v2617 = vunpack.c.h.b16 %v2477
  %v2618 = vunpack.c.l.b16 %v2478
  %v2619 = vunpack.c.h.b16 %v2478
  %v2620 = vunpack.c.l.b16 %v2479
  %v2621 = vunpack.c.h.b16 %v2479
  %v2622 = vunpack.c.l.b16 %v2480
  %v2623 = vunpack.c.h.b16 %v2480
  %v2624 = vunpack.c.l.b16 %v2481
  %v2625 = vunpack.c.h.b16 %v2481
  %v2626 = vpack.c.b16 %v2536, %v2530
  %v2627 = vpack.c.b16 %v2537, %v2531
  %v2628 = vpack.c.b16 %v2538, %v2532
  %v2629 = vpack.c.b16 %v2539, %v2533
  %v2630 = vpack.c.b16 %v2540, %v2534
  %v2631 = vpack.c.b16 %v2541, %v2535
  %v2632 = vpack.c.b16 %v2548, %v2542
  %v2633 = vpack.c.b16 %v2549, %v2543
  %v2634 = vpack.c.b16 %v2550, %v2544
  %v2635 = vpack.c.b16 %v2551, %v2545
  %v2636 = vpack.c.b16 %v2552, %v2546
  %v2637 = vpack.c.b16 %v2553, %v2547
  %v2638 = vpack.c.b16 %v2560, %v2554
  %v2639 = vpack.c.b16 %v2561, %v2555
  %v2640 = vpack.c.b16 %v2562, %v2556
  %v2641 = vpack.c.b16 %v2563, %v2557
  %v2642 = vpack.c.b16 %v2564, %v2558
  %v2643 = vpack.c.b16 %v2565, %v2559
  %v2644 = vpack.c.b16 %v2572, %v2566
  %v2645 = vpack.c.b16 %v2573, %v2567
  %v2646 = vpack.c.b16 %v2574, %v2568
  %v2647 = vpack.c.b16 %v2575, %v2569
  %v2648 = vpack.c.b16 %v2576, %v2570
  %v2649 = vpack.c.b16 %v2577, %v2571
  %v2650 = vpack.c.b16 %v2584, %v2578
  %v2651 = vpack.c.b16 %v2585, %v2579
  %v2652 = vpack.c.b16 %v2586, %v2580
  %v2653 = vpack.c.b16 %v2587, %v2581
  %v2654 = vpack.c.b16 %v2588, %v2582
  %v2655 = vpack.c.b16 %v2589, %v2583
  %v2656 = vpack.c.b16 %v2596, %v2590
  %v2657 = vpack.c.b16 %v2597, %v2591
  %v2658 = vpack.c.b16 %v2598, %v2592
  %v2659 = vpack.c.b16 %v2599, %v2593
  %v2660 = vpack.c.b16 %v2600, %v2594
  %v2661 = vpack.c.b16 %v2601, %v2595
  %v2662 = vpack.c.b16 %v2608, %v2602
  %v2663 = vpack.c.b16 %v2609, %v2603
  %v2664 = vpack.c.b16 %v2610, %v2604
  %v2665 = vpack.c.b16 %v2611, %v2605
  %v2666 = vpack.c.b16 %v2612, %v2606
  %v2667 = vpack.c.b16 %v2613, %v2607
  %v2668 = vpack.c.b16 %v2620, %v2614
  %v2669 = vpack.c.b16 %v2621, %v2615
  %v2670 = vpack.c.b16 %v2622, %v2616
  %v2671 = vpack.c.b16 %v2623, %v2617
  %v2672 = vpack.c.b16 %v2624, %v2618
  %v2673 = vpack.c.b16 %v2625, %v2619
  %2722 = vmatpush.bf16.msra.mxu0 %v2668
  %2723 = vmatpush.bf16.msra.mxu0 %v2662
  %2724 = vmatpush.bf16.msra.mxu0 %v2656
  %2725 = vmatpush.bf16.msra.mxu0 %v2650
  %2726 = vmatpush.bf16.msra.mxu0 %v2644
  %2727 = vmatpush.bf16.msra.mxu0 %v2638
  %2728 = vmatpush.bf16.msra.mxu0 %v2632
  %2729 = vmatpush.bf16.msra.mxu0 %v2626
  %2730 = vmatmul.bf16.gmra.mxu0 %v2417
  %v2731 = vpop.f32.mrf.mxu0
  %v2732 = vadd.f32 %v127, %v2731
  %v2733 = vpop.f32.mrf.mxu0
  %v2734 = vadd.f32 %v127, %v2733
  %2735 = vmatmul.bf16.gmra.mxu0 %v2418
  %v2736 = vpop.f32.mrf.mxu0
  %v2737 = vadd.f32 %v127, %v2736
  %v2738 = vpop.f32.mrf.mxu0
  %v2739 = vadd.f32 %v127, %v2738
  %2740 = vmatmul.bf16.gmra.mxu0 %v2419
  %v2741 = vpop.f32.mrf.mxu0
  %v2742 = vadd.f32 %v127, %v2741
  %v2743 = vpop.f32.mrf.mxu0
  %v2744 = vadd.f32 %v127, %v2743
  %2745 = vmatmul.bf16.gmra.mxu0 %v2420
  %v2746 = vpop.f32.mrf.mxu0
  %v2747 = vadd.f32 %v127, %v2746
  %v2748 = vpop.f32.mrf.mxu0
  %v2749 = vadd.f32 %v127, %v2748
  %2750 = vmatmul.bf16.gmra.mxu0 %v2421
  %v2751 = vpop.f32.mrf.mxu0
  %v2752 = vadd.f32 %v127, %v2751
  %v2753 = vpop.f32.mrf.mxu0
  %v2754 = vadd.f32 %v127, %v2753
  %2755 = vmatmul.bf16.gmra.mxu0 %v2422
  %v2756 = vpop.f32.mrf.mxu0
  %v2757 = vadd.f32 %v127, %v2756
  %v2758 = vpop.f32.mrf.mxu0
  %v2759 = vadd.f32 %v127, %v2758
  %2760 = vmatmul.bf16.gmra.mxu0 %v2423
  %v2761 = vpop.f32.mrf.mxu0
  %v2762 = vadd.f32 %v127, %v2761
  %v2763 = vpop.f32.mrf.mxu0
  %v2764 = vadd.f32 %v127, %v2763
  %2765 = vmatmul.bf16.gmra.mxu0 %v2424
  %v2766 = vpop.f32.mrf.mxu0
  %v2767 = vadd.f32 %v127, %v2766
  %v2768 = vpop.f32.mrf.mxu0
  %v2769 = vadd.f32 %v127, %v2768
  %2770 = vmatmul.bf16.gmra.mxu0 %v2425
  %v2771 = vpop.f32.mrf.mxu0
  %v2772 = vadd.f32 %v127, %v2771
  %v2773 = vpop.f32.mrf.mxu0
  %v2774 = vadd.f32 %v127, %v2773
  %2775 = vmatmul.bf16.gmra.mxu0 %v2426
  %v2776 = vpop.f32.mrf.mxu0
  %v2777 = vadd.f32 %v127, %v2776
  %v2778 = vpop.f32.mrf.mxu0
  %v2779 = vadd.f32 %v127, %v2778
  %2780 = vmatmul.bf16.gmra.mxu0 %v2427
  %v2781 = vpop.f32.mrf.mxu0
  %v2782 = vadd.f32 %v127, %v2781
  %v2783 = vpop.f32.mrf.mxu0
  %v2784 = vadd.f32 %v127, %v2783
  %2785 = vmatmul.bf16.gmra.mxu0 %v2428
  %v2786 = vpop.f32.mrf.mxu0
  %v2787 = vadd.f32 %v127, %v2786
  %v2788 = vpop.f32.mrf.mxu0
  %v2789 = vadd.f32 %v127, %v2788
  %2790 = vmatmul.bf16.gmra.mxu0 %v2429
  %v2791 = vpop.f32.mrf.mxu0
  %v2792 = vadd.f32 %v127, %v2791
  %v2793 = vpop.f32.mrf.mxu0
  %v2794 = vadd.f32 %v127, %v2793
  %2795 = vmatmul.bf16.gmra.mxu0 %v2430
  %v2796 = vpop.f32.mrf.mxu0
  %v2797 = vadd.f32 %v127, %v2796
  %v2798 = vpop.f32.mrf.mxu0
  %v2799 = vadd.f32 %v127, %v2798
  %2800 = vmatmul.bf16.gmra.mxu0 %v2431
  %v2801 = vpop.f32.mrf.mxu0
  %v2802 = vadd.f32 %v127, %v2801
  %v2803 = vpop.f32.mrf.mxu0
  %v2804 = vadd.f32 %v127, %v2803
  %2805 = vmatmul.bf16.gmra.mxu0 %v2432
  %v2806 = vpop.f32.mrf.mxu0
  %v2807 = vadd.f32 %v127, %v2806
  %v2808 = vpop.f32.mrf.mxu0
  %v2809 = vadd.f32 %v127, %v2808
  %2810 = vdwg.mxu0
  %2811 = vmatpush.bf16.msra.mxu0 %v2669
  %2812 = vmatpush.bf16.msra.mxu0 %v2663
  %2813 = vmatpush.bf16.msra.mxu0 %v2657
  %2814 = vmatpush.bf16.msra.mxu0 %v2651
  %2815 = vmatpush.bf16.msra.mxu0 %v2645
  %2816 = vmatpush.bf16.msra.mxu0 %v2639
  %2817 = vmatpush.bf16.msra.mxu0 %v2633
  %2818 = vmatpush.bf16.msra.mxu0 %v2627
  %2819 = vmatmul.bf16.gmra.mxu0 %v2417
  %v2820 = vpop.f32.mrf.mxu0
  %v2821 = vadd.f32 %v128, %v2820
  %v2822 = vpop.f32.mrf.mxu0
  %v2823 = vadd.f32 %v128, %v2822
  %2824 = vmatmul.bf16.gmra.mxu0 %v2418
  %v2825 = vpop.f32.mrf.mxu0
  %v2826 = vadd.f32 %v128, %v2825
  %v2827 = vpop.f32.mrf.mxu0
  %v2828 = vadd.f32 %v128, %v2827
  %2829 = vmatmul.bf16.gmra.mxu0 %v2419
  %v2830 = vpop.f32.mrf.mxu0
  %v2831 = vadd.f32 %v128, %v2830
  %v2832 = vpop.f32.mrf.mxu0
  %v2833 = vadd.f32 %v128, %v2832
  %2834 = vmatmul.bf16.gmra.mxu0 %v2420
  %v2835 = vpop.f32.mrf.mxu0
  %v2836 = vadd.f32 %v128, %v2835
  %v2837 = vpop.f32.mrf.mxu0
  %v2838 = vadd.f32 %v128, %v2837
  %2839 = vmatmul.bf16.gmra.mxu0 %v2421
  %v2840 = vpop.f32.mrf.mxu0
  %v2841 = vadd.f32 %v128, %v2840
  %v2842 = vpop.f32.mrf.mxu0
  %v2843 = vadd.f32 %v128, %v2842
  %2844 = vmatmul.bf16.gmra.mxu0 %v2422
  %v2845 = vpop.f32.mrf.mxu0
  %v2846 = vadd.f32 %v128, %v2845
  %v2847 = vpop.f32.mrf.mxu0
  %v2848 = vadd.f32 %v128, %v2847
  %2849 = vmatmul.bf16.gmra.mxu0 %v2423
  %v2850 = vpop.f32.mrf.mxu0
  %v2851 = vadd.f32 %v128, %v2850
  %v2852 = vpop.f32.mrf.mxu0
  %v2853 = vadd.f32 %v128, %v2852
  %2854 = vmatmul.bf16.gmra.mxu0 %v2424
  %v2855 = vpop.f32.mrf.mxu0
  %v2856 = vadd.f32 %v128, %v2855
  %v2857 = vpop.f32.mrf.mxu0
  %v2858 = vadd.f32 %v128, %v2857
  %2859 = vmatmul.bf16.gmra.mxu0 %v2425
  %v2860 = vpop.f32.mrf.mxu0
  %v2861 = vadd.f32 %v128, %v2860
  %v2862 = vpop.f32.mrf.mxu0
  %v2863 = vadd.f32 %v128, %v2862
  %2864 = vmatmul.bf16.gmra.mxu0 %v2426
  %v2865 = vpop.f32.mrf.mxu0
  %v2866 = vadd.f32 %v128, %v2865
  %v2867 = vpop.f32.mrf.mxu0
  %v2868 = vadd.f32 %v128, %v2867
  %2869 = vmatmul.bf16.gmra.mxu0 %v2427
  %v2870 = vpop.f32.mrf.mxu0
  %v2871 = vadd.f32 %v128, %v2870
  %v2872 = vpop.f32.mrf.mxu0
  %v2873 = vadd.f32 %v128, %v2872
  %2874 = vmatmul.bf16.gmra.mxu0 %v2428
  %v2875 = vpop.f32.mrf.mxu0
  %v2876 = vadd.f32 %v128, %v2875
  %v2877 = vpop.f32.mrf.mxu0
  %v2878 = vadd.f32 %v128, %v2877
  %2879 = vmatmul.bf16.gmra.mxu0 %v2429
  %v2880 = vpop.f32.mrf.mxu0
  %v2881 = vadd.f32 %v128, %v2880
  %v2882 = vpop.f32.mrf.mxu0
  %v2883 = vadd.f32 %v128, %v2882
  %2884 = vmatmul.bf16.gmra.mxu0 %v2430
  %v2885 = vpop.f32.mrf.mxu0
  %v2886 = vadd.f32 %v128, %v2885
  %v2887 = vpop.f32.mrf.mxu0
  %v2888 = vadd.f32 %v128, %v2887
  %2889 = vmatmul.bf16.gmra.mxu0 %v2431
  %v2890 = vpop.f32.mrf.mxu0
  %v2891 = vadd.f32 %v128, %v2890
  %v2892 = vpop.f32.mrf.mxu0
  %v2893 = vadd.f32 %v128, %v2892
  %2894 = vmatmul.bf16.gmra.mxu0 %v2432
  %v2895 = vpop.f32.mrf.mxu0
  %v2896 = vadd.f32 %v128, %v2895
  %v2897 = vpop.f32.mrf.mxu0
  %v2898 = vadd.f32 %v128, %v2897
  %2899 = vdwg.mxu0
  %2900 = vmatpush.bf16.msra.mxu0 %v2670
  %2901 = vmatpush.bf16.msra.mxu0 %v2664
  %2902 = vmatpush.bf16.msra.mxu0 %v2658
  %2903 = vmatpush.bf16.msra.mxu0 %v2652
  %2904 = vmatpush.bf16.msra.mxu0 %v2646
  %2905 = vmatpush.bf16.msra.mxu0 %v2640
  %2906 = vmatpush.bf16.msra.mxu0 %v2634
  %2907 = vmatpush.bf16.msra.mxu0 %v2628
  %2908 = vmatmul.bf16.gmra.mxu0 %v2417
  %v2909 = vpop.f32.mrf.mxu0
  %v2910 = vadd.f32 %v129, %v2909
  %v2911 = vpop.f32.mrf.mxu0
  %v2912 = vadd.f32 %v129, %v2911
  %2913 = vmatmul.bf16.gmra.mxu0 %v2418
  %v2914 = vpop.f32.mrf.mxu0
  %v2915 = vadd.f32 %v129, %v2914
  %v2916 = vpop.f32.mrf.mxu0
  %v2917 = vadd.f32 %v129, %v2916
  %2918 = vmatmul.bf16.gmra.mxu0 %v2419
  %v2919 = vpop.f32.mrf.mxu0
  %v2920 = vadd.f32 %v129, %v2919
  %v2921 = vpop.f32.mrf.mxu0
  %v2922 = vadd.f32 %v129, %v2921
  %2923 = vmatmul.bf16.gmra.mxu0 %v2420
  %v2924 = vpop.f32.mrf.mxu0
  %v2925 = vadd.f32 %v129, %v2924
  %v2926 = vpop.f32.mrf.mxu0
  %v2927 = vadd.f32 %v129, %v2926
  %2928 = vmatmul.bf16.gmra.mxu0 %v2421
  %v2929 = vpop.f32.mrf.mxu0
  %v2930 = vadd.f32 %v129, %v2929
  %v2931 = vpop.f32.mrf.mxu0
  %v2932 = vadd.f32 %v129, %v2931
  %2933 = vmatmul.bf16.gmra.mxu0 %v2422
  %v2934 = vpop.f32.mrf.mxu0
  %v2935 = vadd.f32 %v129, %v2934
  %v2936 = vpop.f32.mrf.mxu0
  %v2937 = vadd.f32 %v129, %v2936
  %2938 = vmatmul.bf16.gmra.mxu0 %v2423
  %v2939 = vpop.f32.mrf.mxu0
  %v2940 = vadd.f32 %v129, %v2939
  %v2941 = vpop.f32.mrf.mxu0
  %v2942 = vadd.f32 %v129, %v2941
  %2943 = vmatmul.bf16.gmra.mxu0 %v2424
  %v2944 = vpop.f32.mrf.mxu0
  %v2945 = vadd.f32 %v129, %v2944
  %v2946 = vpop.f32.mrf.mxu0
  %v2947 = vadd.f32 %v129, %v2946
  %2948 = vmatmul.bf16.gmra.mxu0 %v2425
  %v2949 = vpop.f32.mrf.mxu0
  %v2950 = vadd.f32 %v129, %v2949
  %v2951 = vpop.f32.mrf.mxu0
  %v2952 = vadd.f32 %v129, %v2951
  %2953 = vmatmul.bf16.gmra.mxu0 %v2426
  %v2954 = vpop.f32.mrf.mxu0
  %v2955 = vadd.f32 %v129, %v2954
  %v2956 = vpop.f32.mrf.mxu0
  %v2957 = vadd.f32 %v129, %v2956
  %2958 = vmatmul.bf16.gmra.mxu0 %v2427
  %v2959 = vpop.f32.mrf.mxu0
  %v2960 = vadd.f32 %v129, %v2959
  %v2961 = vpop.f32.mrf.mxu0
  %v2962 = vadd.f32 %v129, %v2961
  %2963 = vmatmul.bf16.gmra.mxu0 %v2428
  %v2964 = vpop.f32.mrf.mxu0
  %v2965 = vadd.f32 %v129, %v2964
  %v2966 = vpop.f32.mrf.mxu0
  %v2967 = vadd.f32 %v129, %v2966
  %2968 = vmatmul.bf16.gmra.mxu0 %v2429
  %v2969 = vpop.f32.mrf.mxu0
  %v2970 = vadd.f32 %v129, %v2969
  %v2971 = vpop.f32.mrf.mxu0
  %v2972 = vadd.f32 %v129, %v2971
  %2973 = vmatmul.bf16.gmra.mxu0 %v2430
  %v2974 = vpop.f32.mrf.mxu0
  %v2975 = vadd.f32 %v129, %v2974
  %v2976 = vpop.f32.mrf.mxu0
  %v2977 = vadd.f32 %v129, %v2976
  %2978 = vmatmul.bf16.gmra.mxu0 %v2431
  %v2979 = vpop.f32.mrf.mxu0
  %v2980 = vadd.f32 %v129, %v2979
  %v2981 = vpop.f32.mrf.mxu0
  %v2982 = vadd.f32 %v129, %v2981
  %2983 = vmatmul.bf16.gmra.mxu0 %v2432
  %v2984 = vpop.f32.mrf.mxu0
  %v2985 = vadd.f32 %v129, %v2984
  %v2986 = vpop.f32.mrf.mxu0
  %v2987 = vadd.f32 %v129, %v2986
  %2988 = vdwg.mxu0
  %2989 = vmatpush.bf16.msra.mxu0 %v2671
  %2990 = vmatpush.bf16.msra.mxu0 %v2665
  %2991 = vmatpush.bf16.msra.mxu0 %v2659
  %2992 = vmatpush.bf16.msra.mxu0 %v2653
  %2993 = vmatpush.bf16.msra.mxu0 %v2647
  %2994 = vmatpush.bf16.msra.mxu0 %v2641
  %2995 = vmatpush.bf16.msra.mxu0 %v2635
  %2996 = vmatpush.bf16.msra.mxu0 %v2629
  %2997 = vmatmul.bf16.gmra.mxu0 %v2417
  %v2998 = vpop.f32.mrf.mxu0
  %v2999 = vadd.f32 %v130, %v2998
  %v3000 = vpop.f32.mrf.mxu0
  %v3001 = vadd.f32 %v130, %v3000
  %3002 = vmatmul.bf16.gmra.mxu0 %v2418
  %v3003 = vpop.f32.mrf.mxu0
  %v3004 = vadd.f32 %v130, %v3003
  %v3005 = vpop.f32.mrf.mxu0
  %v3006 = vadd.f32 %v130, %v3005
  %3007 = vmatmul.bf16.gmra.mxu0 %v2419
  %v3008 = vpop.f32.mrf.mxu0
  %v3009 = vadd.f32 %v130, %v3008
  %v3010 = vpop.f32.mrf.mxu0
  %v3011 = vadd.f32 %v130, %v3010
  %3012 = vmatmul.bf16.gmra.mxu0 %v2420
  %v3013 = vpop.f32.mrf.mxu0
  %v3014 = vadd.f32 %v130, %v3013
  %v3015 = vpop.f32.mrf.mxu0
  %v3016 = vadd.f32 %v130, %v3015
  %3017 = vmatmul.bf16.gmra.mxu0 %v2421
  %v3018 = vpop.f32.mrf.mxu0
  %v3019 = vadd.f32 %v130, %v3018
  %v3020 = vpop.f32.mrf.mxu0
  %v3021 = vadd.f32 %v130, %v3020
  %3022 = vmatmul.bf16.gmra.mxu0 %v2422
  %v3023 = vpop.f32.mrf.mxu0
  %v3024 = vadd.f32 %v130, %v3023
  %v3025 = vpop.f32.mrf.mxu0
  %v3026 = vadd.f32 %v130, %v3025
  %3027 = vmatmul.bf16.gmra.mxu0 %v2423
  %v3028 = vpop.f32.mrf.mxu0
  %v3029 = vadd.f32 %v130, %v3028
  %v3030 = vpop.f32.mrf.mxu0
  %v3031 = vadd.f32 %v130, %v3030
  %3032 = vmatmul.bf16.gmra.mxu0 %v2424
  %v3033 = vpop.f32.mrf.mxu0
  %v3034 = vadd.f32 %v130, %v3033
  %v3035 = vpop.f32.mrf.mxu0
  %v3036 = vadd.f32 %v130, %v3035
  %3037 = vmatmul.bf16.gmra.mxu0 %v2425
  %v3038 = vpop.f32.mrf.mxu0
  %v3039 = vadd.f32 %v130, %v3038
  %v3040 = vpop.f32.mrf.mxu0
  %v3041 = vadd.f32 %v130, %v3040
  %3042 = vmatmul.bf16.gmra.mxu0 %v2426
  %v3043 = vpop.f32.mrf.mxu0
  %v3044 = vadd.f32 %v130, %v3043
  %v3045 = vpop.f32.mrf.mxu0
  %v3046 = vadd.f32 %v130, %v3045
  %3047 = vmatmul.bf16.gmra.mxu0 %v2427
  %v3048 = vpop.f32.mrf.mxu0
  %v3049 = vadd.f32 %v130, %v3048
  %v3050 = vpop.f32.mrf.mxu0
  %v3051 = vadd.f32 %v130, %v3050
  %3052 = vmatmul.bf16.gmra.mxu0 %v2428
  %v3053 = vpop.f32.mrf.mxu0
  %v3054 = vadd.f32 %v130, %v3053
  %v3055 = vpop.f32.mrf.mxu0
  %v3056 = vadd.f32 %v130, %v3055
  %3057 = vmatmul.bf16.gmra.mxu0 %v2429
  %v3058 = vpop.f32.mrf.mxu0
  %v3059 = vadd.f32 %v130, %v3058
  %v3060 = vpop.f32.mrf.mxu0
  %v3061 = vadd.f32 %v130, %v3060
  %3062 = vmatmul.bf16.gmra.mxu0 %v2430
  %v3063 = vpop.f32.mrf.mxu0
  %v3064 = vadd.f32 %v130, %v3063
  %v3065 = vpop.f32.mrf.mxu0
  %v3066 = vadd.f32 %v130, %v3065
  %3067 = vmatmul.bf16.gmra.mxu0 %v2431
  %v3068 = vpop.f32.mrf.mxu0
  %v3069 = vadd.f32 %v130, %v3068
  %v3070 = vpop.f32.mrf.mxu0
  %v3071 = vadd.f32 %v130, %v3070
  %3072 = vmatmul.bf16.gmra.mxu0 %v2432
  %v3073 = vpop.f32.mrf.mxu0
  %v3074 = vadd.f32 %v130, %v3073
  %v3075 = vpop.f32.mrf.mxu0
  %v3076 = vadd.f32 %v130, %v3075
  %3077 = vdwg.mxu0
  %3078 = vmatpush.bf16.msra.mxu0 %v2672
  %3079 = vmatpush.bf16.msra.mxu0 %v2666
  %3080 = vmatpush.bf16.msra.mxu0 %v2660
  %3081 = vmatpush.bf16.msra.mxu0 %v2654
  %3082 = vmatpush.bf16.msra.mxu0 %v2648
  %3083 = vmatpush.bf16.msra.mxu0 %v2642
  %3084 = vmatpush.bf16.msra.mxu0 %v2636
  %3085 = vmatpush.bf16.msra.mxu0 %v2630
  %3086 = vmatmul.bf16.gmra.mxu0 %v2417
  %v3087 = vpop.f32.mrf.mxu0
  %v3088 = vadd.f32 %v131, %v3087
  %v3089 = vpop.f32.mrf.mxu0
  %v3090 = vadd.f32 %v131, %v3089
  %3091 = vmatmul.bf16.gmra.mxu0 %v2418
  %v3092 = vpop.f32.mrf.mxu0
  %v3093 = vadd.f32 %v131, %v3092
  %v3094 = vpop.f32.mrf.mxu0
  %v3095 = vadd.f32 %v131, %v3094
  %3096 = vmatmul.bf16.gmra.mxu0 %v2419
  %v3097 = vpop.f32.mrf.mxu0
  %v3098 = vadd.f32 %v131, %v3097
  %v3099 = vpop.f32.mrf.mxu0
  %v3100 = vadd.f32 %v131, %v3099
  %3101 = vmatmul.bf16.gmra.mxu0 %v2420
  %v3102 = vpop.f32.mrf.mxu0
  %v3103 = vadd.f32 %v131, %v3102
  %v3104 = vpop.f32.mrf.mxu0
  %v3105 = vadd.f32 %v131, %v3104
  %3106 = vmatmul.bf16.gmra.mxu0 %v2421
  %v3107 = vpop.f32.mrf.mxu0
  %v3108 = vadd.f32 %v131, %v3107
  %v3109 = vpop.f32.mrf.mxu0
  %v3110 = vadd.f32 %v131, %v3109
  %3111 = vmatmul.bf16.gmra.mxu0 %v2422
  %v3112 = vpop.f32.mrf.mxu0
  %v3113 = vadd.f32 %v131, %v3112
  %v3114 = vpop.f32.mrf.mxu0
  %v3115 = vadd.f32 %v131, %v3114
  %3116 = vmatmul.bf16.gmra.mxu0 %v2423
  %v3117 = vpop.f32.mrf.mxu0
  %v3118 = vadd.f32 %v131, %v3117
  %v3119 = vpop.f32.mrf.mxu0
  %v3120 = vadd.f32 %v131, %v3119
  %3121 = vmatmul.bf16.gmra.mxu0 %v2424
  %v3122 = vpop.f32.mrf.mxu0
  %v3123 = vadd.f32 %v131, %v3122
  %v3124 = vpop.f32.mrf.mxu0
  %v3125 = vadd.f32 %v131, %v3124
  %3126 = vmatmul.bf16.gmra.mxu0 %v2425
  %v3127 = vpop.f32.mrf.mxu0
  %v3128 = vadd.f32 %v131, %v3127
  %v3129 = vpop.f32.mrf.mxu0
  %v3130 = vadd.f32 %v131, %v3129
  %3131 = vmatmul.bf16.gmra.mxu0 %v2426
  %v3132 = vpop.f32.mrf.mxu0
  %v3133 = vadd.f32 %v131, %v3132
  %v3134 = vpop.f32.mrf.mxu0
  %v3135 = vadd.f32 %v131, %v3134
  %3136 = vmatmul.bf16.gmra.mxu0 %v2427
  %v3137 = vpop.f32.mrf.mxu0
  %v3138 = vadd.f32 %v131, %v3137
  %v3139 = vpop.f32.mrf.mxu0
  %v3140 = vadd.f32 %v131, %v3139
  %3141 = vmatmul.bf16.gmra.mxu0 %v2428
  %v3142 = vpop.f32.mrf.mxu0
  %v3143 = vadd.f32 %v131, %v3142
  %v3144 = vpop.f32.mrf.mxu0
  %v3145 = vadd.f32 %v131, %v3144
  %3146 = vmatmul.bf16.gmra.mxu0 %v2429
  %v3147 = vpop.f32.mrf.mxu0
  %v3148 = vadd.f32 %v131, %v3147
  %v3149 = vpop.f32.mrf.mxu0
  %v3150 = vadd.f32 %v131, %v3149
  %3151 = vmatmul.bf16.gmra.mxu0 %v2430
  %v3152 = vpop.f32.mrf.mxu0
  %v3153 = vadd.f32 %v131, %v3152
  %v3154 = vpop.f32.mrf.mxu0
  %v3155 = vadd.f32 %v131, %v3154
  %3156 = vmatmul.bf16.gmra.mxu0 %v2431
  %v3157 = vpop.f32.mrf.mxu0
  %v3158 = vadd.f32 %v131, %v3157
  %v3159 = vpop.f32.mrf.mxu0
  %v3160 = vadd.f32 %v131, %v3159
  %3161 = vmatmul.bf16.gmra.mxu0 %v2432
  %v3162 = vpop.f32.mrf.mxu0
  %v3163 = vadd.f32 %v131, %v3162
  %v3164 = vpop.f32.mrf.mxu0
  %v3165 = vadd.f32 %v131, %v3164
  %3166 = vdwg.mxu0
  %3167 = vmatpush.bf16.msra.mxu0 %v2673
  %3168 = vmatpush.bf16.msra.mxu0 %v2667
  %3169 = vmatpush.bf16.msra.mxu0 %v2661
  %3170 = vmatpush.bf16.msra.mxu0 %v2655
  %3171 = vmatpush.bf16.msra.mxu0 %v2649
  %3172 = vmatpush.bf16.msra.mxu0 %v2643
  %3173 = vmatpush.bf16.msra.mxu0 %v2637
  %3174 = vmatpush.bf16.msra.mxu0 %v2631
  %3175 = vmatmul.bf16.gmra.mxu0 %v2417
  %v3176 = vpop.f32.mrf.mxu0
  %v3177 = vadd.f32 %v132, %v3176
  %v3178 = vpop.f32.mrf.mxu0
  %v3179 = vadd.f32 %v132, %v3178
  %3180 = vmatmul.bf16.gmra.mxu0 %v2418
  %v3181 = vpop.f32.mrf.mxu0
  %v3182 = vadd.f32 %v132, %v3181
  %v3183 = vpop.f32.mrf.mxu0
  %v3184 = vadd.f32 %v132, %v3183
  %3185 = vmatmul.bf16.gmra.mxu0 %v2419
  %v3186 = vpop.f32.mrf.mxu0
  %v3187 = vadd.f32 %v132, %v3186
  %v3188 = vpop.f32.mrf.mxu0
  %v3189 = vadd.f32 %v132, %v3188
  %3190 = vmatmul.bf16.gmra.mxu0 %v2420
  %v3191 = vpop.f32.mrf.mxu0
  %v3192 = vadd.f32 %v132, %v3191
  %v3193 = vpop.f32.mrf.mxu0
  %v3194 = vadd.f32 %v132, %v3193
  %3195 = vmatmul.bf16.gmra.mxu0 %v2421
  %v3196 = vpop.f32.mrf.mxu0
  %v3197 = vadd.f32 %v132, %v3196
  %v3198 = vpop.f32.mrf.mxu0
  %v3199 = vadd.f32 %v132, %v3198
  %3200 = vmatmul.bf16.gmra.mxu0 %v2422
  %v3201 = vpop.f32.mrf.mxu0
  %v3202 = vadd.f32 %v132, %v3201
  %v3203 = vpop.f32.mrf.mxu0
  %v3204 = vadd.f32 %v132, %v3203
  %3205 = vmatmul.bf16.gmra.mxu0 %v2423
  %v3206 = vpop.f32.mrf.mxu0
  %v3207 = vadd.f32 %v132, %v3206
  %v3208 = vpop.f32.mrf.mxu0
  %v3209 = vadd.f32 %v132, %v3208
  %3210 = vmatmul.bf16.gmra.mxu0 %v2424
  %v3211 = vpop.f32.mrf.mxu0
  %v3212 = vadd.f32 %v132, %v3211
  %v3213 = vpop.f32.mrf.mxu0
  %v3214 = vadd.f32 %v132, %v3213
  %3215 = vmatmul.bf16.gmra.mxu0 %v2425
  %v3216 = vpop.f32.mrf.mxu0
  %v3217 = vadd.f32 %v132, %v3216
  %v3218 = vpop.f32.mrf.mxu0
  %v3219 = vadd.f32 %v132, %v3218
  %3220 = vmatmul.bf16.gmra.mxu0 %v2426
  %v3221 = vpop.f32.mrf.mxu0
  %v3222 = vadd.f32 %v132, %v3221
  %v3223 = vpop.f32.mrf.mxu0
  %v3224 = vadd.f32 %v132, %v3223
  %3225 = vmatmul.bf16.gmra.mxu0 %v2427
  %v3226 = vpop.f32.mrf.mxu0
  %v3227 = vadd.f32 %v132, %v3226
  %v3228 = vpop.f32.mrf.mxu0
  %v3229 = vadd.f32 %v132, %v3228
  %3230 = vmatmul.bf16.gmra.mxu0 %v2428
  %v3231 = vpop.f32.mrf.mxu0
  %v3232 = vadd.f32 %v132, %v3231
  %v3233 = vpop.f32.mrf.mxu0
  %v3234 = vadd.f32 %v132, %v3233
  %3235 = vmatmul.bf16.gmra.mxu0 %v2429
  %v3236 = vpop.f32.mrf.mxu0
  %v3237 = vadd.f32 %v132, %v3236
  %v3238 = vpop.f32.mrf.mxu0
  %v3239 = vadd.f32 %v132, %v3238
  %3240 = vmatmul.bf16.gmra.mxu0 %v2430
  %v3241 = vpop.f32.mrf.mxu0
  %v3242 = vadd.f32 %v132, %v3241
  %v3243 = vpop.f32.mrf.mxu0
  %v3244 = vadd.f32 %v132, %v3243
  %3245 = vmatmul.bf16.gmra.mxu0 %v2431
  %v3246 = vpop.f32.mrf.mxu0
  %v3247 = vadd.f32 %v132, %v3246
  %v3248 = vpop.f32.mrf.mxu0
  %v3249 = vadd.f32 %v132, %v3248
  %3250 = vmatmul.bf16.gmra.mxu0 %v2432
  %v3251 = vpop.f32.mrf.mxu0
  %v3252 = vadd.f32 %v132, %v3251
  %v3253 = vpop.f32.mrf.mxu0
  %v3254 = vadd.f32 %v132, %v3253
  %3255 = vdwg.mxu0
  %v3256 = vadd.f32 %v2732, %v2999
  %v3257 = vadd.f32 %v2734, %v3001
  %v3258 = vadd.f32 %v2737, %v3004
  %v3259 = vadd.f32 %v2739, %v3006
  %v3260 = vadd.f32 %v2742, %v3009
  %v3261 = vadd.f32 %v2744, %v3011
  %v3262 = vadd.f32 %v2747, %v3014
  %v3263 = vadd.f32 %v2749, %v3016
  %v3264 = vadd.f32 %v2752, %v3019
  %v3265 = vadd.f32 %v2754, %v3021
  %v3266 = vadd.f32 %v2757, %v3024
  %v3267 = vadd.f32 %v2759, %v3026
  %v3268 = vadd.f32 %v2762, %v3029
  %v3269 = vadd.f32 %v2764, %v3031
  %v3270 = vadd.f32 %v2767, %v3034
  %v3271 = vadd.f32 %v2769, %v3036
  %v3272 = vadd.f32 %v2772, %v3039
  %v3273 = vadd.f32 %v2774, %v3041
  %v3274 = vadd.f32 %v2777, %v3044
  %v3275 = vadd.f32 %v2779, %v3046
  %v3276 = vadd.f32 %v2782, %v3049
  %v3277 = vadd.f32 %v2784, %v3051
  %v3278 = vadd.f32 %v2787, %v3054
  %v3279 = vadd.f32 %v2789, %v3056
  %v3280 = vadd.f32 %v2792, %v3059
  %v3281 = vadd.f32 %v2794, %v3061
  %v3282 = vadd.f32 %v2797, %v3064
  %v3283 = vadd.f32 %v2799, %v3066
  %v3284 = vadd.f32 %v2802, %v3069
  %v3285 = vadd.f32 %v2804, %v3071
  %v3286 = vadd.f32 %v2807, %v3074
  %v3287 = vadd.f32 %v2809, %v3076
  %v3288 = vxor.u32 %v3256, 2147483648
  %v3289 = vxor.u32 %v3257, 2147483648
  %v3290 = vxor.u32 %v3258, 2147483648
  %v3291 = vxor.u32 %v3259, 2147483648
  %v3292 = vxor.u32 %v3260, 2147483648
  %v3293 = vxor.u32 %v3261, 2147483648
  %v3294 = vxor.u32 %v3262, 2147483648
  %v3295 = vxor.u32 %v3263, 2147483648
  %v3296 = vxor.u32 %v3264, 2147483648
  %v3297 = vxor.u32 %v3265, 2147483648
  %v3298 = vxor.u32 %v3266, 2147483648
  %v3299 = vxor.u32 %v3267, 2147483648
  %v3300 = vxor.u32 %v3268, 2147483648
  %v3301 = vxor.u32 %v3269, 2147483648
  %v3302 = vxor.u32 %v3270, 2147483648
  %v3303 = vxor.u32 %v3271, 2147483648
  %v3304 = vxor.u32 %v3272, 2147483648
  %v3305 = vxor.u32 %v3273, 2147483648
  %v3306 = vxor.u32 %v3274, 2147483648
  %v3307 = vxor.u32 %v3275, 2147483648
  %v3308 = vxor.u32 %v3276, 2147483648
  %v3309 = vxor.u32 %v3277, 2147483648
  %v3310 = vxor.u32 %v3278, 2147483648
  %v3311 = vxor.u32 %v3279, 2147483648
  %v3312 = vxor.u32 %v3280, 2147483648
  %v3313 = vxor.u32 %v3281, 2147483648
  %v3314 = vxor.u32 %v3282, 2147483648
  %v3315 = vxor.u32 %v3283, 2147483648
  %v3316 = vxor.u32 %v3284, 2147483648
  %v3317 = vxor.u32 %v3285, 2147483648
  %v3318 = vxor.u32 %v3286, 2147483648
  %v3319 = vxor.u32 %v3287, 2147483648
  %v3320 = vmul.f32 %v3288, 1.442695
  %v3321 = vpow.pop %v3320
  %v3322 = vmul.f32 %v3289, 1.442695
  %v3323 = vpow.pop %v3322
  %v3324 = vmul.f32 %v3290, 1.442695
  %v3325 = vpow.pop %v3324
  %v3326 = vmul.f32 %v3291, 1.442695
  %v3327 = vpow.pop %v3326
  %v3328 = vmul.f32 %v3292, 1.442695
  %v3329 = vpow.pop %v3328
  %v3330 = vmul.f32 %v3293, 1.442695
  %v3331 = vpow.pop %v3330
  %v3332 = vmul.f32 %v3294, 1.442695
  %v3333 = vpow.pop %v3332
  %v3334 = vmul.f32 %v3295, 1.442695
  %v3335 = vpow.pop %v3334
  %v3336 = vmul.f32 %v3296, 1.442695
  %v3337 = vpow.pop %v3336
  %v3338 = vmul.f32 %v3297, 1.442695
  %v3339 = vpow.pop %v3338
  %v3340 = vmul.f32 %v3298, 1.442695
  %v3341 = vpow.pop %v3340
  %v3342 = vmul.f32 %v3299, 1.442695
  %v3343 = vpow.pop %v3342
  %v3344 = vmul.f32 %v3300, 1.442695
  %v3345 = vpow.pop %v3344
  %v3346 = vmul.f32 %v3301, 1.442695
  %v3347 = vpow.pop %v3346
  %v3348 = vmul.f32 %v3302, 1.442695
  %v3349 = vpow.pop %v3348
  %v3350 = vmul.f32 %v3303, 1.442695
  %v3351 = vpow.pop %v3350
  %v3352 = vmul.f32 %v3304, 1.442695
  %v3353 = vpow.pop %v3352
  %v3354 = vmul.f32 %v3305, 1.442695
  %v3355 = vpow.pop %v3354
  %v3356 = vmul.f32 %v3306, 1.442695
  %v3357 = vpow.pop %v3356
  %v3358 = vmul.f32 %v3307, 1.442695
  %v3359 = vpow.pop %v3358
  %v3360 = vmul.f32 %v3308, 1.442695
  %v3361 = vpow.pop %v3360
  %v3362 = vmul.f32 %v3309, 1.442695
  %v3363 = vpow.pop %v3362
  %v3364 = vmul.f32 %v3310, 1.442695
  %v3365 = vpow.pop %v3364
  %v3366 = vmul.f32 %v3311, 1.442695
  %v3367 = vpow.pop %v3366
  %v3368 = vmul.f32 %v3312, 1.442695
  %v3369 = vpow.pop %v3368
  %v3370 = vmul.f32 %v3313, 1.442695
  %v3371 = vpow.pop %v3370
  %v3372 = vmul.f32 %v3314, 1.442695
  %v3373 = vpow.pop %v3372
  %v3374 = vmul.f32 %v3315, 1.442695
  %v3375 = vpow.pop %v3374
  %v3376 = vmul.f32 %v3316, 1.442695
  %v3377 = vpow.pop %v3376
  %v3378 = vmul.f32 %v3317, 1.442695
  %v3379 = vpow.pop %v3378
  %v3380 = vmul.f32 %v3318, 1.442695
  %v3381 = vpow.pop %v3380
  %v3382 = vmul.f32 %v3319, 1.442695
  %v3383 = vpow.pop %v3382
  %v3384 = vadd.f32 %v3321, 1.0
  %v3385 = vadd.f32 %v3323, 1.0
  %v3386 = vadd.f32 %v3325, 1.0
  %v3387 = vadd.f32 %v3327, 1.0
  %v3388 = vadd.f32 %v3329, 1.0
  %v3389 = vadd.f32 %v3331, 1.0
  %v3390 = vadd.f32 %v3333, 1.0
  %v3391 = vadd.f32 %v3335, 1.0
  %v3392 = vadd.f32 %v3337, 1.0
  %v3393 = vadd.f32 %v3339, 1.0
  %v3394 = vadd.f32 %v3341, 1.0
  %v3395 = vadd.f32 %v3343, 1.0
  %v3396 = vadd.f32 %v3345, 1.0
  %v3397 = vadd.f32 %v3347, 1.0
  %v3398 = vadd.f32 %v3349, 1.0
  %v3399 = vadd.f32 %v3351, 1.0
  %v3400 = vadd.f32 %v3353, 1.0
  %v3401 = vadd.f32 %v3355, 1.0
  %v3402 = vadd.f32 %v3357, 1.0
  %v3403 = vadd.f32 %v3359, 1.0
  %v3404 = vadd.f32 %v3361, 1.0
  %v3405 = vadd.f32 %v3363, 1.0
  %v3406 = vadd.f32 %v3365, 1.0
  %v3407 = vadd.f32 %v3367, 1.0
  %v3408 = vadd.f32 %v3369, 1.0
  %v3409 = vadd.f32 %v3371, 1.0
  %v3410 = vadd.f32 %v3373, 1.0
  %v3411 = vadd.f32 %v3375, 1.0
  %v3412 = vadd.f32 %v3377, 1.0
  %v3413 = vadd.f32 %v3379, 1.0
  %v3414 = vadd.f32 %v3381, 1.0
  %v3415 = vadd.f32 %v3383, 1.0
  %v3416 = vrcp.pop %v3384
  %v3417 = vmul.f32 %v3384, %v3416
  %v3418 = vsub.f32 1.0, %v3417
  %v3419 = vmul.f32 %v3416, %v3418
  %v3420 = vadd.f32 %v3416, %v3419
  %vm3421 = vweird.f32 %v3384
  %vm3422 = vweird.f32 %v3416
  %vm3423 = vmor %vm3421, %vm3422
  %v3424 = vsel %vm3423, %v3416, %v3420
  %v3425 = vand.u32 2147483647, %v3384
  %vm3426 = vcmp.eq.f32.partialorder %v3425, 8.507059e+37
  %v3427 = vand.u32 %v3384, 2147483648
  %v3428 = vor.u32 1.1754944e-38, %v3427
  %v3429 = vsel %vm3426, %v3428, %v3424
  %v3430 = vmul.f32 1.0, %v3429
  %v3431 = vrcp.pop %v3385
  %v3432 = vmul.f32 %v3385, %v3431
  %v3433 = vsub.f32 1.0, %v3432
  %v3434 = vmul.f32 %v3431, %v3433
  %v3435 = vadd.f32 %v3431, %v3434
  %vm3436 = vweird.f32 %v3385
  %vm3437 = vweird.f32 %v3431
  %vm3438 = vmor %vm3436, %vm3437
  %v3439 = vsel %vm3438, %v3431, %v3435
  %v3440 = vand.u32 2147483647, %v3385
  %vm3441 = vcmp.eq.f32.partialorder %v3440, 8.507059e+37
  %v3442 = vand.u32 %v3385, 2147483648
  %v3443 = vor.u32 1.1754944e-38, %v3442
  %v3444 = vsel %vm3441, %v3443, %v3439
  %v3445 = vmul.f32 1.0, %v3444
  %v3446 = vrcp.pop %v3386
  %v3447 = vmul.f32 %v3386, %v3446
  %v3448 = vsub.f32 1.0, %v3447
  %v3449 = vmul.f32 %v3446, %v3448
  %v3450 = vadd.f32 %v3446, %v3449
  %vm3451 = vweird.f32 %v3386
  %vm3452 = vweird.f32 %v3446
  %vm3453 = vmor %vm3451, %vm3452
  %v3454 = vsel %vm3453, %v3446, %v3450
  %v3455 = vand.u32 2147483647, %v3386
  %vm3456 = vcmp.eq.f32.partialorder %v3455, 8.507059e+37
  %v3457 = vand.u32 %v3386, 2147483648
  %v3458 = vor.u32 1.1754944e-38, %v3457
  %v3459 = vsel %vm3456, %v3458, %v3454
  %v3460 = vmul.f32 1.0, %v3459
  %v3461 = vrcp.pop %v3387
  %v3462 = vmul.f32 %v3387, %v3461
  %v3463 = vsub.f32 1.0, %v3462
  %v3464 = vmul.f32 %v3461, %v3463
  %v3465 = vadd.f32 %v3461, %v3464
  %vm3466 = vweird.f32 %v3387
  %vm3467 = vweird.f32 %v3461
  %vm3468 = vmor %vm3466, %vm3467
  %v3469 = vsel %vm3468, %v3461, %v3465
  %v3470 = vand.u32 2147483647, %v3387
  %vm3471 = vcmp.eq.f32.partialorder %v3470, 8.507059e+37
  %v3472 = vand.u32 %v3387, 2147483648
  %v3473 = vor.u32 1.1754944e-38, %v3472
  %v3474 = vsel %vm3471, %v3473, %v3469
  %v3475 = vmul.f32 1.0, %v3474
  %v3476 = vrcp.pop %v3388
  %v3477 = vmul.f32 %v3388, %v3476
  %v3478 = vsub.f32 1.0, %v3477
  %v3479 = vmul.f32 %v3476, %v3478
  %v3480 = vadd.f32 %v3476, %v3479
  %vm3481 = vweird.f32 %v3388
  %vm3482 = vweird.f32 %v3476
  %vm3483 = vmor %vm3481, %vm3482
  %v3484 = vsel %vm3483, %v3476, %v3480
  %v3485 = vand.u32 2147483647, %v3388
  %vm3486 = vcmp.eq.f32.partialorder %v3485, 8.507059e+37
  %v3487 = vand.u32 %v3388, 2147483648
  %v3488 = vor.u32 1.1754944e-38, %v3487
  %v3489 = vsel %vm3486, %v3488, %v3484
  %v3490 = vmul.f32 1.0, %v3489
  %v3491 = vrcp.pop %v3389
  %v3492 = vmul.f32 %v3389, %v3491
  %v3493 = vsub.f32 1.0, %v3492
  %v3494 = vmul.f32 %v3491, %v3493
  %v3495 = vadd.f32 %v3491, %v3494
  %vm3496 = vweird.f32 %v3389
  %vm3497 = vweird.f32 %v3491
  %vm3498 = vmor %vm3496, %vm3497
  %v3499 = vsel %vm3498, %v3491, %v3495
  %v3500 = vand.u32 2147483647, %v3389
  %vm3501 = vcmp.eq.f32.partialorder %v3500, 8.507059e+37
  %v3502 = vand.u32 %v3389, 2147483648
  %v3503 = vor.u32 1.1754944e-38, %v3502
  %v3504 = vsel %vm3501, %v3503, %v3499
  %v3505 = vmul.f32 1.0, %v3504
  %v3506 = vrcp.pop %v3390
  %v3507 = vmul.f32 %v3390, %v3506
  %v3508 = vsub.f32 1.0, %v3507
  %v3509 = vmul.f32 %v3506, %v3508
  %v3510 = vadd.f32 %v3506, %v3509
  %vm3511 = vweird.f32 %v3390
  %vm3512 = vweird.f32 %v3506
  %vm3513 = vmor %vm3511, %vm3512
  %v3514 = vsel %vm3513, %v3506, %v3510
  %v3515 = vand.u32 2147483647, %v3390
  %vm3516 = vcmp.eq.f32.partialorder %v3515, 8.507059e+37
  %v3517 = vand.u32 %v3390, 2147483648
  %v3518 = vor.u32 1.1754944e-38, %v3517
  %v3519 = vsel %vm3516, %v3518, %v3514
  %v3520 = vmul.f32 1.0, %v3519
  %v3521 = vrcp.pop %v3391
  %v3522 = vmul.f32 %v3391, %v3521
  %v3523 = vsub.f32 1.0, %v3522
  %v3524 = vmul.f32 %v3521, %v3523
  %v3525 = vadd.f32 %v3521, %v3524
  %vm3526 = vweird.f32 %v3391
  %vm3527 = vweird.f32 %v3521
  %vm3528 = vmor %vm3526, %vm3527
  %v3529 = vsel %vm3528, %v3521, %v3525
  %v3530 = vand.u32 2147483647, %v3391
  %vm3531 = vcmp.eq.f32.partialorder %v3530, 8.507059e+37
  %v3532 = vand.u32 %v3391, 2147483648
  %v3533 = vor.u32 1.1754944e-38, %v3532
  %v3534 = vsel %vm3531, %v3533, %v3529
  %v3535 = vmul.f32 1.0, %v3534
  %v3536 = vrcp.pop %v3392
  %v3537 = vmul.f32 %v3392, %v3536
  %v3538 = vsub.f32 1.0, %v3537
  %v3539 = vmul.f32 %v3536, %v3538
  %v3540 = vadd.f32 %v3536, %v3539
  %vm3541 = vweird.f32 %v3392
  %vm3542 = vweird.f32 %v3536
  %vm3543 = vmor %vm3541, %vm3542
  %v3544 = vsel %vm3543, %v3536, %v3540
  %v3545 = vand.u32 2147483647, %v3392
  %vm3546 = vcmp.eq.f32.partialorder %v3545, 8.507059e+37
  %v3547 = vand.u32 %v3392, 2147483648
  %v3548 = vor.u32 1.1754944e-38, %v3547
  %v3549 = vsel %vm3546, %v3548, %v3544
  %v3550 = vmul.f32 1.0, %v3549
  %v3551 = vrcp.pop %v3393
  %v3552 = vmul.f32 %v3393, %v3551
  %v3553 = vsub.f32 1.0, %v3552
  %v3554 = vmul.f32 %v3551, %v3553
  %v3555 = vadd.f32 %v3551, %v3554
  %vm3556 = vweird.f32 %v3393
  %vm3557 = vweird.f32 %v3551
  %vm3558 = vmor %vm3556, %vm3557
  %v3559 = vsel %vm3558, %v3551, %v3555
  %v3560 = vand.u32 2147483647, %v3393
  %vm3561 = vcmp.eq.f32.partialorder %v3560, 8.507059e+37
  %v3562 = vand.u32 %v3393, 2147483648
  %v3563 = vor.u32 1.1754944e-38, %v3562
  %v3564 = vsel %vm3561, %v3563, %v3559
  %v3565 = vmul.f32 1.0, %v3564
  %v3566 = vrcp.pop %v3394
  %v3567 = vmul.f32 %v3394, %v3566
  %v3568 = vsub.f32 1.0, %v3567
  %v3569 = vmul.f32 %v3566, %v3568
  %v3570 = vadd.f32 %v3566, %v3569
  %vm3571 = vweird.f32 %v3394
  %vm3572 = vweird.f32 %v3566
  %vm3573 = vmor %vm3571, %vm3572
  %v3574 = vsel %vm3573, %v3566, %v3570
  %v3575 = vand.u32 2147483647, %v3394
  %vm3576 = vcmp.eq.f32.partialorder %v3575, 8.507059e+37
  %v3577 = vand.u32 %v3394, 2147483648
  %v3578 = vor.u32 1.1754944e-38, %v3577
  %v3579 = vsel %vm3576, %v3578, %v3574
  %v3580 = vmul.f32 1.0, %v3579
  %v3581 = vrcp.pop %v3395
  %v3582 = vmul.f32 %v3395, %v3581
  %v3583 = vsub.f32 1.0, %v3582
  %v3584 = vmul.f32 %v3581, %v3583
  %v3585 = vadd.f32 %v3581, %v3584
  %vm3586 = vweird.f32 %v3395
  %vm3587 = vweird.f32 %v3581
  %vm3588 = vmor %vm3586, %vm3587
  %v3589 = vsel %vm3588, %v3581, %v3585
  %v3590 = vand.u32 2147483647, %v3395
  %vm3591 = vcmp.eq.f32.partialorder %v3590, 8.507059e+37
  %v3592 = vand.u32 %v3395, 2147483648
  %v3593 = vor.u32 1.1754944e-38, %v3592
  %v3594 = vsel %vm3591, %v3593, %v3589
  %v3595 = vmul.f32 1.0, %v3594
  %v3596 = vrcp.pop %v3396
  %v3597 = vmul.f32 %v3396, %v3596
  %v3598 = vsub.f32 1.0, %v3597
  %v3599 = vmul.f32 %v3596, %v3598
  %v3600 = vadd.f32 %v3596, %v3599
  %vm3601 = vweird.f32 %v3396
  %vm3602 = vweird.f32 %v3596
  %vm3603 = vmor %vm3601, %vm3602
  %v3604 = vsel %vm3603, %v3596, %v3600
  %v3605 = vand.u32 2147483647, %v3396
  %vm3606 = vcmp.eq.f32.partialorder %v3605, 8.507059e+37
  %v3607 = vand.u32 %v3396, 2147483648
  %v3608 = vor.u32 1.1754944e-38, %v3607
  %v3609 = vsel %vm3606, %v3608, %v3604
  %v3610 = vmul.f32 1.0, %v3609
  %v3611 = vrcp.pop %v3397
  %v3612 = vmul.f32 %v3397, %v3611
  %v3613 = vsub.f32 1.0, %v3612
  %v3614 = vmul.f32 %v3611, %v3613
  %v3615 = vadd.f32 %v3611, %v3614
  %vm3616 = vweird.f32 %v3397
  %vm3617 = vweird.f32 %v3611
  %vm3618 = vmor %vm3616, %vm3617
  %v3619 = vsel %vm3618, %v3611, %v3615
  %v3620 = vand.u32 2147483647, %v3397
  %vm3621 = vcmp.eq.f32.partialorder %v3620, 8.507059e+37
  %v3622 = vand.u32 %v3397, 2147483648
  %v3623 = vor.u32 1.1754944e-38, %v3622
  %v3624 = vsel %vm3621, %v3623, %v3619
  %v3625 = vmul.f32 1.0, %v3624
  %v3626 = vrcp.pop %v3398
  %v3627 = vmul.f32 %v3398, %v3626
  %v3628 = vsub.f32 1.0, %v3627
  %v3629 = vmul.f32 %v3626, %v3628
  %v3630 = vadd.f32 %v3626, %v3629
  %vm3631 = vweird.f32 %v3398
  %vm3632 = vweird.f32 %v3626
  %vm3633 = vmor %vm3631, %vm3632
  %v3634 = vsel %vm3633, %v3626, %v3630
  %v3635 = vand.u32 2147483647, %v3398
  %vm3636 = vcmp.eq.f32.partialorder %v3635, 8.507059e+37
  %v3637 = vand.u32 %v3398, 2147483648
  %v3638 = vor.u32 1.1754944e-38, %v3637
  %v3639 = vsel %vm3636, %v3638, %v3634
  %v3640 = vmul.f32 1.0, %v3639
  %v3641 = vrcp.pop %v3399
  %v3642 = vmul.f32 %v3399, %v3641
  %v3643 = vsub.f32 1.0, %v3642
  %v3644 = vmul.f32 %v3641, %v3643
  %v3645 = vadd.f32 %v3641, %v3644
  %vm3646 = vweird.f32 %v3399
  %vm3647 = vweird.f32 %v3641
  %vm3648 = vmor %vm3646, %vm3647
  %v3649 = vsel %vm3648, %v3641, %v3645
  %v3650 = vand.u32 2147483647, %v3399
  %vm3651 = vcmp.eq.f32.partialorder %v3650, 8.507059e+37
  %v3652 = vand.u32 %v3399, 2147483648
  %v3653 = vor.u32 1.1754944e-38, %v3652
  %v3654 = vsel %vm3651, %v3653, %v3649
  %v3655 = vmul.f32 1.0, %v3654
  %v3656 = vrcp.pop %v3400
  %v3657 = vmul.f32 %v3400, %v3656
  %v3658 = vsub.f32 1.0, %v3657
  %v3659 = vmul.f32 %v3656, %v3658
  %v3660 = vadd.f32 %v3656, %v3659
  %vm3661 = vweird.f32 %v3400
  %vm3662 = vweird.f32 %v3656
  %vm3663 = vmor %vm3661, %vm3662
  %v3664 = vsel %vm3663, %v3656, %v3660
  %v3665 = vand.u32 2147483647, %v3400
  %vm3666 = vcmp.eq.f32.partialorder %v3665, 8.507059e+37
  %v3667 = vand.u32 %v3400, 2147483648
  %v3668 = vor.u32 1.1754944e-38, %v3667
  %v3669 = vsel %vm3666, %v3668, %v3664
  %v3670 = vmul.f32 1.0, %v3669
  %v3671 = vrcp.pop %v3401
  %v3672 = vmul.f32 %v3401, %v3671
  %v3673 = vsub.f32 1.0, %v3672
  %v3674 = vmul.f32 %v3671, %v3673
  %v3675 = vadd.f32 %v3671, %v3674
  %vm3676 = vweird.f32 %v3401
  %vm3677 = vweird.f32 %v3671
  %vm3678 = vmor %vm3676, %vm3677
  %v3679 = vsel %vm3678, %v3671, %v3675
  %v3680 = vand.u32 2147483647, %v3401
  %vm3681 = vcmp.eq.f32.partialorder %v3680, 8.507059e+37
  %v3682 = vand.u32 %v3401, 2147483648
  %v3683 = vor.u32 1.1754944e-38, %v3682
  %v3684 = vsel %vm3681, %v3683, %v3679
  %v3685 = vmul.f32 1.0, %v3684
  %v3686 = vrcp.pop %v3402
  %v3687 = vmul.f32 %v3402, %v3686
  %v3688 = vsub.f32 1.0, %v3687
  %v3689 = vmul.f32 %v3686, %v3688
  %v3690 = vadd.f32 %v3686, %v3689
  %vm3691 = vweird.f32 %v3402
  %vm3692 = vweird.f32 %v3686
  %vm3693 = vmor %vm3691, %vm3692
  %v3694 = vsel %vm3693, %v3686, %v3690
  %v3695 = vand.u32 2147483647, %v3402
  %vm3696 = vcmp.eq.f32.partialorder %v3695, 8.507059e+37
  %v3697 = vand.u32 %v3402, 2147483648
  %v3698 = vor.u32 1.1754944e-38, %v3697
  %v3699 = vsel %vm3696, %v3698, %v3694
  %v3700 = vmul.f32 1.0, %v3699
  %v3701 = vrcp.pop %v3403
  %v3702 = vmul.f32 %v3403, %v3701
  %v3703 = vsub.f32 1.0, %v3702
  %v3704 = vmul.f32 %v3701, %v3703
  %v3705 = vadd.f32 %v3701, %v3704
  %vm3706 = vweird.f32 %v3403
  %vm3707 = vweird.f32 %v3701
  %vm3708 = vmor %vm3706, %vm3707
  %v3709 = vsel %vm3708, %v3701, %v3705
  %v3710 = vand.u32 2147483647, %v3403
  %vm3711 = vcmp.eq.f32.partialorder %v3710, 8.507059e+37
  %v3712 = vand.u32 %v3403, 2147483648
  %v3713 = vor.u32 1.1754944e-38, %v3712
  %v3714 = vsel %vm3711, %v3713, %v3709
  %v3715 = vmul.f32 1.0, %v3714
  %v3716 = vrcp.pop %v3404
  %v3717 = vmul.f32 %v3404, %v3716
  %v3718 = vsub.f32 1.0, %v3717
  %v3719 = vmul.f32 %v3716, %v3718
  %v3720 = vadd.f32 %v3716, %v3719
  %vm3721 = vweird.f32 %v3404
  %vm3722 = vweird.f32 %v3716
  %vm3723 = vmor %vm3721, %vm3722
  %v3724 = vsel %vm3723, %v3716, %v3720
  %v3725 = vand.u32 2147483647, %v3404
  %vm3726 = vcmp.eq.f32.partialorder %v3725, 8.507059e+37
  %v3727 = vand.u32 %v3404, 2147483648
  %v3728 = vor.u32 1.1754944e-38, %v3727
  %v3729 = vsel %vm3726, %v3728, %v3724
  %v3730 = vmul.f32 1.0, %v3729
  %v3731 = vrcp.pop %v3405
  %v3732 = vmul.f32 %v3405, %v3731
  %v3733 = vsub.f32 1.0, %v3732
  %v3734 = vmul.f32 %v3731, %v3733
  %v3735 = vadd.f32 %v3731, %v3734
  %vm3736 = vweird.f32 %v3405
  %vm3737 = vweird.f32 %v3731
  %vm3738 = vmor %vm3736, %vm3737
  %v3739 = vsel %vm3738, %v3731, %v3735
  %v3740 = vand.u32 2147483647, %v3405
  %vm3741 = vcmp.eq.f32.partialorder %v3740, 8.507059e+37
  %v3742 = vand.u32 %v3405, 2147483648
  %v3743 = vor.u32 1.1754944e-38, %v3742
  %v3744 = vsel %vm3741, %v3743, %v3739
  %v3745 = vmul.f32 1.0, %v3744
  %v3746 = vrcp.pop %v3406
  %v3747 = vmul.f32 %v3406, %v3746
  %v3748 = vsub.f32 1.0, %v3747
  %v3749 = vmul.f32 %v3746, %v3748
  %v3750 = vadd.f32 %v3746, %v3749
  %vm3751 = vweird.f32 %v3406
  %vm3752 = vweird.f32 %v3746
  %vm3753 = vmor %vm3751, %vm3752
  %v3754 = vsel %vm3753, %v3746, %v3750
  %v3755 = vand.u32 2147483647, %v3406
  %vm3756 = vcmp.eq.f32.partialorder %v3755, 8.507059e+37
  %v3757 = vand.u32 %v3406, 2147483648
  %v3758 = vor.u32 1.1754944e-38, %v3757
  %v3759 = vsel %vm3756, %v3758, %v3754
  %v3760 = vmul.f32 1.0, %v3759
  %v3761 = vrcp.pop %v3407
  %v3762 = vmul.f32 %v3407, %v3761
  %v3763 = vsub.f32 1.0, %v3762
  %v3764 = vmul.f32 %v3761, %v3763
  %v3765 = vadd.f32 %v3761, %v3764
  %vm3766 = vweird.f32 %v3407
  %vm3767 = vweird.f32 %v3761
  %vm3768 = vmor %vm3766, %vm3767
  %v3769 = vsel %vm3768, %v3761, %v3765
  %v3770 = vand.u32 2147483647, %v3407
  %vm3771 = vcmp.eq.f32.partialorder %v3770, 8.507059e+37
  %v3772 = vand.u32 %v3407, 2147483648
  %v3773 = vor.u32 1.1754944e-38, %v3772
  %v3774 = vsel %vm3771, %v3773, %v3769
  %v3775 = vmul.f32 1.0, %v3774
  %v3776 = vrcp.pop %v3408
  %v3777 = vmul.f32 %v3408, %v3776
  %v3778 = vsub.f32 1.0, %v3777
  %v3779 = vmul.f32 %v3776, %v3778
  %v3780 = vadd.f32 %v3776, %v3779
  %vm3781 = vweird.f32 %v3408
  %vm3782 = vweird.f32 %v3776
  %vm3783 = vmor %vm3781, %vm3782
  %v3784 = vsel %vm3783, %v3776, %v3780
  %v3785 = vand.u32 2147483647, %v3408
  %vm3786 = vcmp.eq.f32.partialorder %v3785, 8.507059e+37
  %v3787 = vand.u32 %v3408, 2147483648
  %v3788 = vor.u32 1.1754944e-38, %v3787
  %v3789 = vsel %vm3786, %v3788, %v3784
  %v3790 = vmul.f32 1.0, %v3789
  %v3791 = vrcp.pop %v3409
  %v3792 = vmul.f32 %v3409, %v3791
  %v3793 = vsub.f32 1.0, %v3792
  %v3794 = vmul.f32 %v3791, %v3793
  %v3795 = vadd.f32 %v3791, %v3794
  %vm3796 = vweird.f32 %v3409
  %vm3797 = vweird.f32 %v3791
  %vm3798 = vmor %vm3796, %vm3797
  %v3799 = vsel %vm3798, %v3791, %v3795
  %v3800 = vand.u32 2147483647, %v3409
  %vm3801 = vcmp.eq.f32.partialorder %v3800, 8.507059e+37
  %v3802 = vand.u32 %v3409, 2147483648
  %v3803 = vor.u32 1.1754944e-38, %v3802
  %v3804 = vsel %vm3801, %v3803, %v3799
  %v3805 = vmul.f32 1.0, %v3804
  %v3806 = vrcp.pop %v3410
  %v3807 = vmul.f32 %v3410, %v3806
  %v3808 = vsub.f32 1.0, %v3807
  %v3809 = vmul.f32 %v3806, %v3808
  %v3810 = vadd.f32 %v3806, %v3809
  %vm3811 = vweird.f32 %v3410
  %vm3812 = vweird.f32 %v3806
  %vm3813 = vmor %vm3811, %vm3812
  %v3814 = vsel %vm3813, %v3806, %v3810
  %v3815 = vand.u32 2147483647, %v3410
  %vm3816 = vcmp.eq.f32.partialorder %v3815, 8.507059e+37
  %v3817 = vand.u32 %v3410, 2147483648
  %v3818 = vor.u32 1.1754944e-38, %v3817
  %v3819 = vsel %vm3816, %v3818, %v3814
  %v3820 = vmul.f32 1.0, %v3819
  %v3821 = vrcp.pop %v3411
  %v3822 = vmul.f32 %v3411, %v3821
  %v3823 = vsub.f32 1.0, %v3822
  %v3824 = vmul.f32 %v3821, %v3823
  %v3825 = vadd.f32 %v3821, %v3824
  %vm3826 = vweird.f32 %v3411
  %vm3827 = vweird.f32 %v3821
  %vm3828 = vmor %vm3826, %vm3827
  %v3829 = vsel %vm3828, %v3821, %v3825
  %v3830 = vand.u32 2147483647, %v3411
  %vm3831 = vcmp.eq.f32.partialorder %v3830, 8.507059e+37
  %v3832 = vand.u32 %v3411, 2147483648
  %v3833 = vor.u32 1.1754944e-38, %v3832
  %v3834 = vsel %vm3831, %v3833, %v3829
  %v3835 = vmul.f32 1.0, %v3834
  %v3836 = vrcp.pop %v3412
  %v3837 = vmul.f32 %v3412, %v3836
  %v3838 = vsub.f32 1.0, %v3837
  %v3839 = vmul.f32 %v3836, %v3838
  %v3840 = vadd.f32 %v3836, %v3839
  %vm3841 = vweird.f32 %v3412
  %vm3842 = vweird.f32 %v3836
  %vm3843 = vmor %vm3841, %vm3842
  %v3844 = vsel %vm3843, %v3836, %v3840
  %v3845 = vand.u32 2147483647, %v3412
  %vm3846 = vcmp.eq.f32.partialorder %v3845, 8.507059e+37
  %v3847 = vand.u32 %v3412, 2147483648
  %v3848 = vor.u32 1.1754944e-38, %v3847
  %v3849 = vsel %vm3846, %v3848, %v3844
  %v3850 = vmul.f32 1.0, %v3849
  %v3851 = vrcp.pop %v3413
  %v3852 = vmul.f32 %v3413, %v3851
  %v3853 = vsub.f32 1.0, %v3852
  %v3854 = vmul.f32 %v3851, %v3853
  %v3855 = vadd.f32 %v3851, %v3854
  %vm3856 = vweird.f32 %v3413
  %vm3857 = vweird.f32 %v3851
  %vm3858 = vmor %vm3856, %vm3857
  %v3859 = vsel %vm3858, %v3851, %v3855
  %v3860 = vand.u32 2147483647, %v3413
  %vm3861 = vcmp.eq.f32.partialorder %v3860, 8.507059e+37
  %v3862 = vand.u32 %v3413, 2147483648
  %v3863 = vor.u32 1.1754944e-38, %v3862
  %v3864 = vsel %vm3861, %v3863, %v3859
  %v3865 = vmul.f32 1.0, %v3864
  %v3866 = vrcp.pop %v3414
  %v3867 = vmul.f32 %v3414, %v3866
  %v3868 = vsub.f32 1.0, %v3867
  %v3869 = vmul.f32 %v3866, %v3868
  %v3870 = vadd.f32 %v3866, %v3869
  %vm3871 = vweird.f32 %v3414
  %vm3872 = vweird.f32 %v3866
  %vm3873 = vmor %vm3871, %vm3872
  %v3874 = vsel %vm3873, %v3866, %v3870
  %v3875 = vand.u32 2147483647, %v3414
  %vm3876 = vcmp.eq.f32.partialorder %v3875, 8.507059e+37
  %v3877 = vand.u32 %v3414, 2147483648
  %v3878 = vor.u32 1.1754944e-38, %v3877
  %v3879 = vsel %vm3876, %v3878, %v3874
  %v3880 = vmul.f32 1.0, %v3879
  %v3881 = vrcp.pop %v3415
  %v3882 = vmul.f32 %v3415, %v3881
  %v3883 = vsub.f32 1.0, %v3882
  %v3884 = vmul.f32 %v3881, %v3883
  %v3885 = vadd.f32 %v3881, %v3884
  %vm3886 = vweird.f32 %v3415
  %vm3887 = vweird.f32 %v3881
  %vm3888 = vmor %vm3886, %vm3887
  %v3889 = vsel %vm3888, %v3881, %v3885
  %v3890 = vand.u32 2147483647, %v3415
  %vm3891 = vcmp.eq.f32.partialorder %v3890, 8.507059e+37
  %v3892 = vand.u32 %v3415, 2147483648
  %v3893 = vor.u32 1.1754944e-38, %v3892
  %v3894 = vsel %vm3891, %v3893, %v3889
  %v3895 = vmul.f32 1.0, %v3894
  %v3896 = vadd.f32 %v2821, %v3088
  %v3897 = vadd.f32 %v2823, %v3090
  %v3898 = vadd.f32 %v2826, %v3093
  %v3899 = vadd.f32 %v2828, %v3095
  %v3900 = vadd.f32 %v2831, %v3098
  %v3901 = vadd.f32 %v2833, %v3100
  %v3902 = vadd.f32 %v2836, %v3103
  %v3903 = vadd.f32 %v2838, %v3105
  %v3904 = vadd.f32 %v2841, %v3108
  %v3905 = vadd.f32 %v2843, %v3110
  %v3906 = vadd.f32 %v2846, %v3113
  %v3907 = vadd.f32 %v2848, %v3115
  %v3908 = vadd.f32 %v2851, %v3118
  %v3909 = vadd.f32 %v2853, %v3120
  %v3910 = vadd.f32 %v2856, %v3123
  %v3911 = vadd.f32 %v2858, %v3125
  %v3912 = vadd.f32 %v2861, %v3128
  %v3913 = vadd.f32 %v2863, %v3130
  %v3914 = vadd.f32 %v2866, %v3133
  %v3915 = vadd.f32 %v2868, %v3135
  %v3916 = vadd.f32 %v2871, %v3138
  %v3917 = vadd.f32 %v2873, %v3140
  %v3918 = vadd.f32 %v2876, %v3143
  %v3919 = vadd.f32 %v2878, %v3145
  %v3920 = vadd.f32 %v2881, %v3148
  %v3921 = vadd.f32 %v2883, %v3150
  %v3922 = vadd.f32 %v2886, %v3153
  %v3923 = vadd.f32 %v2888, %v3155
  %v3924 = vadd.f32 %v2891, %v3158
  %v3925 = vadd.f32 %v2893, %v3160
  %v3926 = vadd.f32 %v2896, %v3163
  %v3927 = vadd.f32 %v2898, %v3165
  %v3928 = vxor.u32 %v3896, 2147483648
  %v3929 = vxor.u32 %v3897, 2147483648
  %v3930 = vxor.u32 %v3898, 2147483648
  %v3931 = vxor.u32 %v3899, 2147483648
  %v3932 = vxor.u32 %v3900, 2147483648
  %v3933 = vxor.u32 %v3901, 2147483648
  %v3934 = vxor.u32 %v3902, 2147483648
  %v3935 = vxor.u32 %v3903, 2147483648
  %v3936 = vxor.u32 %v3904, 2147483648
  %v3937 = vxor.u32 %v3905, 2147483648
  %v3938 = vxor.u32 %v3906, 2147483648
  %v3939 = vxor.u32 %v3907, 2147483648
  %v3940 = vxor.u32 %v3908, 2147483648
  %v3941 = vxor.u32 %v3909, 2147483648
  %v3942 = vxor.u32 %v3910, 2147483648
  %v3943 = vxor.u32 %v3911, 2147483648
  %v3944 = vxor.u32 %v3912, 2147483648
  %v3945 = vxor.u32 %v3913, 2147483648
  %v3946 = vxor.u32 %v3914, 2147483648
  %v3947 = vxor.u32 %v3915, 2147483648
  %v3948 = vxor.u32 %v3916, 2147483648
  %v3949 = vxor.u32 %v3917, 2147483648
  %v3950 = vxor.u32 %v3918, 2147483648
  %v3951 = vxor.u32 %v3919, 2147483648
  %v3952 = vxor.u32 %v3920, 2147483648
  %v3953 = vxor.u32 %v3921, 2147483648
  %v3954 = vxor.u32 %v3922, 2147483648
  %v3955 = vxor.u32 %v3923, 2147483648
  %v3956 = vxor.u32 %v3924, 2147483648
  %v3957 = vxor.u32 %v3925, 2147483648
  %v3958 = vxor.u32 %v3926, 2147483648
  %v3959 = vxor.u32 %v3927, 2147483648
  %v3960 = vmul.f32 %v3928, 1.442695
  %v3961 = vpow.pop %v3960
  %v3962 = vmul.f32 %v3929, 1.442695
  %v3963 = vpow.pop %v3962
  %v3964 = vmul.f32 %v3930, 1.442695
  %v3965 = vpow.pop %v3964
  %v3966 = vmul.f32 %v3931, 1.442695
  %v3967 = vpow.pop %v3966
  %v3968 = vmul.f32 %v3932, 1.442695
  %v3969 = vpow.pop %v3968
  %v3970 = vmul.f32 %v3933, 1.442695
  %v3971 = vpow.pop %v3970
  %v3972 = vmul.f32 %v3934, 1.442695
  %v3973 = vpow.pop %v3972
  %v3974 = vmul.f32 %v3935, 1.442695
  %v3975 = vpow.pop %v3974
  %v3976 = vmul.f32 %v3936, 1.442695
  %v3977 = vpow.pop %v3976
  %v3978 = vmul.f32 %v3937, 1.442695
  %v3979 = vpow.pop %v3978
  %v3980 = vmul.f32 %v3938, 1.442695
  %v3981 = vpow.pop %v3980
  %v3982 = vmul.f32 %v3939, 1.442695
  %v3983 = vpow.pop %v3982
  %v3984 = vmul.f32 %v3940, 1.442695
  %v3985 = vpow.pop %v3984
  %v3986 = vmul.f32 %v3941, 1.442695
  %v3987 = vpow.pop %v3986
  %v3988 = vmul.f32 %v3942, 1.442695
  %v3989 = vpow.pop %v3988
  %v3990 = vmul.f32 %v3943, 1.442695
  %v3991 = vpow.pop %v3990
  %v3992 = vmul.f32 %v3944, 1.442695
  %v3993 = vpow.pop %v3992
  %v3994 = vmul.f32 %v3945, 1.442695
  %v3995 = vpow.pop %v3994
  %v3996 = vmul.f32 %v3946, 1.442695
  %v3997 = vpow.pop %v3996
  %v3998 = vmul.f32 %v3947, 1.442695
  %v3999 = vpow.pop %v3998
  %v4000 = vmul.f32 %v3948, 1.442695
  %v4001 = vpow.pop %v4000
  %v4002 = vmul.f32 %v3949, 1.442695
  %v4003 = vpow.pop %v4002
  %v4004 = vmul.f32 %v3950, 1.442695
  %v4005 = vpow.pop %v4004
  %v4006 = vmul.f32 %v3951, 1.442695
  %v4007 = vpow.pop %v4006
  %v4008 = vmul.f32 %v3952, 1.442695
  %v4009 = vpow.pop %v4008
  %v4010 = vmul.f32 %v3953, 1.442695
  %v4011 = vpow.pop %v4010
  %v4012 = vmul.f32 %v3954, 1.442695
  %v4013 = vpow.pop %v4012
  %v4014 = vmul.f32 %v3955, 1.442695
  %v4015 = vpow.pop %v4014
  %v4016 = vmul.f32 %v3956, 1.442695
  %v4017 = vpow.pop %v4016
  %v4018 = vmul.f32 %v3957, 1.442695
  %v4019 = vpow.pop %v4018
  %v4020 = vmul.f32 %v3958, 1.442695
  %v4021 = vpow.pop %v4020
  %v4022 = vmul.f32 %v3959, 1.442695
  %v4023 = vpow.pop %v4022
  %v4024 = vadd.f32 %v3961, 1.0
  %v4025 = vadd.f32 %v3963, 1.0
  %v4026 = vadd.f32 %v3965, 1.0
  %v4027 = vadd.f32 %v3967, 1.0
  %v4028 = vadd.f32 %v3969, 1.0
  %v4029 = vadd.f32 %v3971, 1.0
  %v4030 = vadd.f32 %v3973, 1.0
  %v4031 = vadd.f32 %v3975, 1.0
  %v4032 = vadd.f32 %v3977, 1.0
  %v4033 = vadd.f32 %v3979, 1.0
  %v4034 = vadd.f32 %v3981, 1.0
  %v4035 = vadd.f32 %v3983, 1.0
  %v4036 = vadd.f32 %v3985, 1.0
  %v4037 = vadd.f32 %v3987, 1.0
  %v4038 = vadd.f32 %v3989, 1.0
  %v4039 = vadd.f32 %v3991, 1.0
  %v4040 = vadd.f32 %v3993, 1.0
  %v4041 = vadd.f32 %v3995, 1.0
  %v4042 = vadd.f32 %v3997, 1.0
  %v4043 = vadd.f32 %v3999, 1.0
  %v4044 = vadd.f32 %v4001, 1.0
  %v4045 = vadd.f32 %v4003, 1.0
  %v4046 = vadd.f32 %v4005, 1.0
  %v4047 = vadd.f32 %v4007, 1.0
  %v4048 = vadd.f32 %v4009, 1.0
  %v4049 = vadd.f32 %v4011, 1.0
  %v4050 = vadd.f32 %v4013, 1.0
  %v4051 = vadd.f32 %v4015, 1.0
  %v4052 = vadd.f32 %v4017, 1.0
  %v4053 = vadd.f32 %v4019, 1.0
  %v4054 = vadd.f32 %v4021, 1.0
  %v4055 = vadd.f32 %v4023, 1.0
  %v4056 = vrcp.pop %v4024
  %v4057 = vmul.f32 %v4024, %v4056
  %v4058 = vsub.f32 1.0, %v4057
  %v4059 = vmul.f32 %v4056, %v4058
  %v4060 = vadd.f32 %v4056, %v4059
  %vm4061 = vweird.f32 %v4024
  %vm4062 = vweird.f32 %v4056
  %vm4063 = vmor %vm4061, %vm4062
  %v4064 = vsel %vm4063, %v4056, %v4060
  %v4065 = vand.u32 2147483647, %v4024
  %vm4066 = vcmp.eq.f32.partialorder %v4065, 8.507059e+37
  %v4067 = vand.u32 %v4024, 2147483648
  %v4068 = vor.u32 1.1754944e-38, %v4067
  %v4069 = vsel %vm4066, %v4068, %v4064
  %v4070 = vmul.f32 1.0, %v4069
  %v4071 = vrcp.pop %v4025
  %v4072 = vmul.f32 %v4025, %v4071
  %v4073 = vsub.f32 1.0, %v4072
  %v4074 = vmul.f32 %v4071, %v4073
  %v4075 = vadd.f32 %v4071, %v4074
  %vm4076 = vweird.f32 %v4025
  %vm4077 = vweird.f32 %v4071
  %vm4078 = vmor %vm4076, %vm4077
  %v4079 = vsel %vm4078, %v4071, %v4075
  %v4080 = vand.u32 2147483647, %v4025
  %vm4081 = vcmp.eq.f32.partialorder %v4080, 8.507059e+37
  %v4082 = vand.u32 %v4025, 2147483648
  %v4083 = vor.u32 1.1754944e-38, %v4082
  %v4084 = vsel %vm4081, %v4083, %v4079
  %v4085 = vmul.f32 1.0, %v4084
  %v4086 = vrcp.pop %v4026
  %v4087 = vmul.f32 %v4026, %v4086
  %v4088 = vsub.f32 1.0, %v4087
  %v4089 = vmul.f32 %v4086, %v4088
  %v4090 = vadd.f32 %v4086, %v4089
  %vm4091 = vweird.f32 %v4026
  %vm4092 = vweird.f32 %v4086
  %vm4093 = vmor %vm4091, %vm4092
  %v4094 = vsel %vm4093, %v4086, %v4090
  %v4095 = vand.u32 2147483647, %v4026
  %vm4096 = vcmp.eq.f32.partialorder %v4095, 8.507059e+37
  %v4097 = vand.u32 %v4026, 2147483648
  %v4098 = vor.u32 1.1754944e-38, %v4097
  %v4099 = vsel %vm4096, %v4098, %v4094
  %v4100 = vmul.f32 1.0, %v4099
  %v4101 = vrcp.pop %v4027
  %v4102 = vmul.f32 %v4027, %v4101
  %v4103 = vsub.f32 1.0, %v4102
  %v4104 = vmul.f32 %v4101, %v4103
  %v4105 = vadd.f32 %v4101, %v4104
  %vm4106 = vweird.f32 %v4027
  %vm4107 = vweird.f32 %v4101
  %vm4108 = vmor %vm4106, %vm4107
  %v4109 = vsel %vm4108, %v4101, %v4105
  %v4110 = vand.u32 2147483647, %v4027
  %vm4111 = vcmp.eq.f32.partialorder %v4110, 8.507059e+37
  %v4112 = vand.u32 %v4027, 2147483648
  %v4113 = vor.u32 1.1754944e-38, %v4112
  %v4114 = vsel %vm4111, %v4113, %v4109
  %v4115 = vmul.f32 1.0, %v4114
  %v4116 = vrcp.pop %v4028
  %v4117 = vmul.f32 %v4028, %v4116
  %v4118 = vsub.f32 1.0, %v4117
  %v4119 = vmul.f32 %v4116, %v4118
  %v4120 = vadd.f32 %v4116, %v4119
  %vm4121 = vweird.f32 %v4028
  %vm4122 = vweird.f32 %v4116
  %vm4123 = vmor %vm4121, %vm4122
  %v4124 = vsel %vm4123, %v4116, %v4120
  %v4125 = vand.u32 2147483647, %v4028
  %vm4126 = vcmp.eq.f32.partialorder %v4125, 8.507059e+37
  %v4127 = vand.u32 %v4028, 2147483648
  %v4128 = vor.u32 1.1754944e-38, %v4127
  %v4129 = vsel %vm4126, %v4128, %v4124
  %v4130 = vmul.f32 1.0, %v4129
  %v4131 = vrcp.pop %v4029
  %v4132 = vmul.f32 %v4029, %v4131
  %v4133 = vsub.f32 1.0, %v4132
  %v4134 = vmul.f32 %v4131, %v4133
  %v4135 = vadd.f32 %v4131, %v4134
  %vm4136 = vweird.f32 %v4029
  %vm4137 = vweird.f32 %v4131
  %vm4138 = vmor %vm4136, %vm4137
  %v4139 = vsel %vm4138, %v4131, %v4135
  %v4140 = vand.u32 2147483647, %v4029
  %vm4141 = vcmp.eq.f32.partialorder %v4140, 8.507059e+37
  %v4142 = vand.u32 %v4029, 2147483648
  %v4143 = vor.u32 1.1754944e-38, %v4142
  %v4144 = vsel %vm4141, %v4143, %v4139
  %v4145 = vmul.f32 1.0, %v4144
  %v4146 = vrcp.pop %v4030
  %v4147 = vmul.f32 %v4030, %v4146
  %v4148 = vsub.f32 1.0, %v4147
  %v4149 = vmul.f32 %v4146, %v4148
  %v4150 = vadd.f32 %v4146, %v4149
  %vm4151 = vweird.f32 %v4030
  %vm4152 = vweird.f32 %v4146
  %vm4153 = vmor %vm4151, %vm4152
  %v4154 = vsel %vm4153, %v4146, %v4150
  %v4155 = vand.u32 2147483647, %v4030
  %vm4156 = vcmp.eq.f32.partialorder %v4155, 8.507059e+37
  %v4157 = vand.u32 %v4030, 2147483648
  %v4158 = vor.u32 1.1754944e-38, %v4157
  %v4159 = vsel %vm4156, %v4158, %v4154
  %v4160 = vmul.f32 1.0, %v4159
  %v4161 = vrcp.pop %v4031
  %v4162 = vmul.f32 %v4031, %v4161
  %v4163 = vsub.f32 1.0, %v4162
  %v4164 = vmul.f32 %v4161, %v4163
  %v4165 = vadd.f32 %v4161, %v4164
  %vm4166 = vweird.f32 %v4031
  %vm4167 = vweird.f32 %v4161
  %vm4168 = vmor %vm4166, %vm4167
  %v4169 = vsel %vm4168, %v4161, %v4165
  %v4170 = vand.u32 2147483647, %v4031
  %vm4171 = vcmp.eq.f32.partialorder %v4170, 8.507059e+37
  %v4172 = vand.u32 %v4031, 2147483648
  %v4173 = vor.u32 1.1754944e-38, %v4172
  %v4174 = vsel %vm4171, %v4173, %v4169
  %v4175 = vmul.f32 1.0, %v4174
  %v4176 = vrcp.pop %v4032
  %v4177 = vmul.f32 %v4032, %v4176
  %v4178 = vsub.f32 1.0, %v4177
  %v4179 = vmul.f32 %v4176, %v4178
  %v4180 = vadd.f32 %v4176, %v4179
  %vm4181 = vweird.f32 %v4032
  %vm4182 = vweird.f32 %v4176
  %vm4183 = vmor %vm4181, %vm4182
  %v4184 = vsel %vm4183, %v4176, %v4180
  %v4185 = vand.u32 2147483647, %v4032
  %vm4186 = vcmp.eq.f32.partialorder %v4185, 8.507059e+37
  %v4187 = vand.u32 %v4032, 2147483648
  %v4188 = vor.u32 1.1754944e-38, %v4187
  %v4189 = vsel %vm4186, %v4188, %v4184
  %v4190 = vmul.f32 1.0, %v4189
  %v4191 = vrcp.pop %v4033
  %v4192 = vmul.f32 %v4033, %v4191
  %v4193 = vsub.f32 1.0, %v4192
  %v4194 = vmul.f32 %v4191, %v4193
  %v4195 = vadd.f32 %v4191, %v4194
  %vm4196 = vweird.f32 %v4033
  %vm4197 = vweird.f32 %v4191
  %vm4198 = vmor %vm4196, %vm4197
  %v4199 = vsel %vm4198, %v4191, %v4195
  %v4200 = vand.u32 2147483647, %v4033
  %vm4201 = vcmp.eq.f32.partialorder %v4200, 8.507059e+37
  %v4202 = vand.u32 %v4033, 2147483648
  %v4203 = vor.u32 1.1754944e-38, %v4202
  %v4204 = vsel %vm4201, %v4203, %v4199
  %v4205 = vmul.f32 1.0, %v4204
  %v4206 = vrcp.pop %v4034
  %v4207 = vmul.f32 %v4034, %v4206
  %v4208 = vsub.f32 1.0, %v4207
  %v4209 = vmul.f32 %v4206, %v4208
  %v4210 = vadd.f32 %v4206, %v4209
  %vm4211 = vweird.f32 %v4034
  %vm4212 = vweird.f32 %v4206
  %vm4213 = vmor %vm4211, %vm4212
  %v4214 = vsel %vm4213, %v4206, %v4210
  %v4215 = vand.u32 2147483647, %v4034
  %vm4216 = vcmp.eq.f32.partialorder %v4215, 8.507059e+37
  %v4217 = vand.u32 %v4034, 2147483648
  %v4218 = vor.u32 1.1754944e-38, %v4217
  %v4219 = vsel %vm4216, %v4218, %v4214
  %v4220 = vmul.f32 1.0, %v4219
  %v4221 = vrcp.pop %v4035
  %v4222 = vmul.f32 %v4035, %v4221
  %v4223 = vsub.f32 1.0, %v4222
  %v4224 = vmul.f32 %v4221, %v4223
  %v4225 = vadd.f32 %v4221, %v4224
  %vm4226 = vweird.f32 %v4035
  %vm4227 = vweird.f32 %v4221
  %vm4228 = vmor %vm4226, %vm4227
  %v4229 = vsel %vm4228, %v4221, %v4225
  %v4230 = vand.u32 2147483647, %v4035
  %vm4231 = vcmp.eq.f32.partialorder %v4230, 8.507059e+37
  %v4232 = vand.u32 %v4035, 2147483648
  %v4233 = vor.u32 1.1754944e-38, %v4232
  %v4234 = vsel %vm4231, %v4233, %v4229
  %v4235 = vmul.f32 1.0, %v4234
  %v4236 = vrcp.pop %v4036
  %v4237 = vmul.f32 %v4036, %v4236
  %v4238 = vsub.f32 1.0, %v4237
  %v4239 = vmul.f32 %v4236, %v4238
  %v4240 = vadd.f32 %v4236, %v4239
  %vm4241 = vweird.f32 %v4036
  %vm4242 = vweird.f32 %v4236
  %vm4243 = vmor %vm4241, %vm4242
  %v4244 = vsel %vm4243, %v4236, %v4240
  %v4245 = vand.u32 2147483647, %v4036
  %vm4246 = vcmp.eq.f32.partialorder %v4245, 8.507059e+37
  %v4247 = vand.u32 %v4036, 2147483648
  %v4248 = vor.u32 1.1754944e-38, %v4247
  %v4249 = vsel %vm4246, %v4248, %v4244
  %v4250 = vmul.f32 1.0, %v4249
  %v4251 = vrcp.pop %v4037
  %v4252 = vmul.f32 %v4037, %v4251
  %v4253 = vsub.f32 1.0, %v4252
  %v4254 = vmul.f32 %v4251, %v4253
  %v4255 = vadd.f32 %v4251, %v4254
  %vm4256 = vweird.f32 %v4037
  %vm4257 = vweird.f32 %v4251
  %vm4258 = vmor %vm4256, %vm4257
  %v4259 = vsel %vm4258, %v4251, %v4255
  %v4260 = vand.u32 2147483647, %v4037
  %vm4261 = vcmp.eq.f32.partialorder %v4260, 8.507059e+37
  %v4262 = vand.u32 %v4037, 2147483648
  %v4263 = vor.u32 1.1754944e-38, %v4262
  %v4264 = vsel %vm4261, %v4263, %v4259
  %v4265 = vmul.f32 1.0, %v4264
  %v4266 = vrcp.pop %v4038
  %v4267 = vmul.f32 %v4038, %v4266
  %v4268 = vsub.f32 1.0, %v4267
  %v4269 = vmul.f32 %v4266, %v4268
  %v4270 = vadd.f32 %v4266, %v4269
  %vm4271 = vweird.f32 %v4038
  %vm4272 = vweird.f32 %v4266
  %vm4273 = vmor %vm4271, %vm4272
  %v4274 = vsel %vm4273, %v4266, %v4270
  %v4275 = vand.u32 2147483647, %v4038
  %vm4276 = vcmp.eq.f32.partialorder %v4275, 8.507059e+37
  %v4277 = vand.u32 %v4038, 2147483648
  %v4278 = vor.u32 1.1754944e-38, %v4277
  %v4279 = vsel %vm4276, %v4278, %v4274
  %v4280 = vmul.f32 1.0, %v4279
  %v4281 = vrcp.pop %v4039
  %v4282 = vmul.f32 %v4039, %v4281
  %v4283 = vsub.f32 1.0, %v4282
  %v4284 = vmul.f32 %v4281, %v4283
  %v4285 = vadd.f32 %v4281, %v4284
  %vm4286 = vweird.f32 %v4039
  %vm4287 = vweird.f32 %v4281
  %vm4288 = vmor %vm4286, %vm4287
  %v4289 = vsel %vm4288, %v4281, %v4285
  %v4290 = vand.u32 2147483647, %v4039
  %vm4291 = vcmp.eq.f32.partialorder %v4290, 8.507059e+37
  %v4292 = vand.u32 %v4039, 2147483648
  %v4293 = vor.u32 1.1754944e-38, %v4292
  %v4294 = vsel %vm4291, %v4293, %v4289
  %v4295 = vmul.f32 1.0, %v4294
  %v4296 = vrcp.pop %v4040
  %v4297 = vmul.f32 %v4040, %v4296
  %v4298 = vsub.f32 1.0, %v4297
  %v4299 = vmul.f32 %v4296, %v4298
  %v4300 = vadd.f32 %v4296, %v4299
  %vm4301 = vweird.f32 %v4040
  %vm4302 = vweird.f32 %v4296
  %vm4303 = vmor %vm4301, %vm4302
  %v4304 = vsel %vm4303, %v4296, %v4300
  %v4305 = vand.u32 2147483647, %v4040
  %vm4306 = vcmp.eq.f32.partialorder %v4305, 8.507059e+37
  %v4307 = vand.u32 %v4040, 2147483648
  %v4308 = vor.u32 1.1754944e-38, %v4307
  %v4309 = vsel %vm4306, %v4308, %v4304
  %v4310 = vmul.f32 1.0, %v4309
  %v4311 = vrcp.pop %v4041
  %v4312 = vmul.f32 %v4041, %v4311
  %v4313 = vsub.f32 1.0, %v4312
  %v4314 = vmul.f32 %v4311, %v4313
  %v4315 = vadd.f32 %v4311, %v4314
  %vm4316 = vweird.f32 %v4041
  %vm4317 = vweird.f32 %v4311
  %vm4318 = vmor %vm4316, %vm4317
  %v4319 = vsel %vm4318, %v4311, %v4315
  %v4320 = vand.u32 2147483647, %v4041
  %vm4321 = vcmp.eq.f32.partialorder %v4320, 8.507059e+37
  %v4322 = vand.u32 %v4041, 2147483648
  %v4323 = vor.u32 1.1754944e-38, %v4322
  %v4324 = vsel %vm4321, %v4323, %v4319
  %v4325 = vmul.f32 1.0, %v4324
  %v4326 = vrcp.pop %v4042
  %v4327 = vmul.f32 %v4042, %v4326
  %v4328 = vsub.f32 1.0, %v4327
  %v4329 = vmul.f32 %v4326, %v4328
  %v4330 = vadd.f32 %v4326, %v4329
  %vm4331 = vweird.f32 %v4042
  %vm4332 = vweird.f32 %v4326
  %vm4333 = vmor %vm4331, %vm4332
  %v4334 = vsel %vm4333, %v4326, %v4330
  %v4335 = vand.u32 2147483647, %v4042
  %vm4336 = vcmp.eq.f32.partialorder %v4335, 8.507059e+37
  %v4337 = vand.u32 %v4042, 2147483648
  %v4338 = vor.u32 1.1754944e-38, %v4337
  %v4339 = vsel %vm4336, %v4338, %v4334
  %v4340 = vmul.f32 1.0, %v4339
  %v4341 = vrcp.pop %v4043
  %v4342 = vmul.f32 %v4043, %v4341
  %v4343 = vsub.f32 1.0, %v4342
  %v4344 = vmul.f32 %v4341, %v4343
  %v4345 = vadd.f32 %v4341, %v4344
  %vm4346 = vweird.f32 %v4043
  %vm4347 = vweird.f32 %v4341
  %vm4348 = vmor %vm4346, %vm4347
  %v4349 = vsel %vm4348, %v4341, %v4345
  %v4350 = vand.u32 2147483647, %v4043
  %vm4351 = vcmp.eq.f32.partialorder %v4350, 8.507059e+37
  %v4352 = vand.u32 %v4043, 2147483648
  %v4353 = vor.u32 1.1754944e-38, %v4352
  %v4354 = vsel %vm4351, %v4353, %v4349
  %v4355 = vmul.f32 1.0, %v4354
  %v4356 = vrcp.pop %v4044
  %v4357 = vmul.f32 %v4044, %v4356
  %v4358 = vsub.f32 1.0, %v4357
  %v4359 = vmul.f32 %v4356, %v4358
  %v4360 = vadd.f32 %v4356, %v4359
  %vm4361 = vweird.f32 %v4044
  %vm4362 = vweird.f32 %v4356
  %vm4363 = vmor %vm4361, %vm4362
  %v4364 = vsel %vm4363, %v4356, %v4360
  %v4365 = vand.u32 2147483647, %v4044
  %vm4366 = vcmp.eq.f32.partialorder %v4365, 8.507059e+37
  %v4367 = vand.u32 %v4044, 2147483648
  %v4368 = vor.u32 1.1754944e-38, %v4367
  %v4369 = vsel %vm4366, %v4368, %v4364
  %v4370 = vmul.f32 1.0, %v4369
  %v4371 = vrcp.pop %v4045
  %v4372 = vmul.f32 %v4045, %v4371
  %v4373 = vsub.f32 1.0, %v4372
  %v4374 = vmul.f32 %v4371, %v4373
  %v4375 = vadd.f32 %v4371, %v4374
  %vm4376 = vweird.f32 %v4045
  %vm4377 = vweird.f32 %v4371
  %vm4378 = vmor %vm4376, %vm4377
  %v4379 = vsel %vm4378, %v4371, %v4375
  %v4380 = vand.u32 2147483647, %v4045
  %vm4381 = vcmp.eq.f32.partialorder %v4380, 8.507059e+37
  %v4382 = vand.u32 %v4045, 2147483648
  %v4383 = vor.u32 1.1754944e-38, %v4382
  %v4384 = vsel %vm4381, %v4383, %v4379
  %v4385 = vmul.f32 1.0, %v4384
  %v4386 = vrcp.pop %v4046
  %v4387 = vmul.f32 %v4046, %v4386
  %v4388 = vsub.f32 1.0, %v4387
  %v4389 = vmul.f32 %v4386, %v4388
  %v4390 = vadd.f32 %v4386, %v4389
  %vm4391 = vweird.f32 %v4046
  %vm4392 = vweird.f32 %v4386
  %vm4393 = vmor %vm4391, %vm4392
  %v4394 = vsel %vm4393, %v4386, %v4390
  %v4395 = vand.u32 2147483647, %v4046
  %vm4396 = vcmp.eq.f32.partialorder %v4395, 8.507059e+37
  %v4397 = vand.u32 %v4046, 2147483648
  %v4398 = vor.u32 1.1754944e-38, %v4397
  %v4399 = vsel %vm4396, %v4398, %v4394
  %v4400 = vmul.f32 1.0, %v4399
  %v4401 = vrcp.pop %v4047
  %v4402 = vmul.f32 %v4047, %v4401
  %v4403 = vsub.f32 1.0, %v4402
  %v4404 = vmul.f32 %v4401, %v4403
  %v4405 = vadd.f32 %v4401, %v4404
  %vm4406 = vweird.f32 %v4047
  %vm4407 = vweird.f32 %v4401
  %vm4408 = vmor %vm4406, %vm4407
  %v4409 = vsel %vm4408, %v4401, %v4405
  %v4410 = vand.u32 2147483647, %v4047
  %vm4411 = vcmp.eq.f32.partialorder %v4410, 8.507059e+37
  %v4412 = vand.u32 %v4047, 2147483648
  %v4413 = vor.u32 1.1754944e-38, %v4412
  %v4414 = vsel %vm4411, %v4413, %v4409
  %v4415 = vmul.f32 1.0, %v4414
  %v4416 = vrcp.pop %v4048
  %v4417 = vmul.f32 %v4048, %v4416
  %v4418 = vsub.f32 1.0, %v4417
  %v4419 = vmul.f32 %v4416, %v4418
  %v4420 = vadd.f32 %v4416, %v4419
  %vm4421 = vweird.f32 %v4048
  %vm4422 = vweird.f32 %v4416
  %vm4423 = vmor %vm4421, %vm4422
  %v4424 = vsel %vm4423, %v4416, %v4420
  %v4425 = vand.u32 2147483647, %v4048
  %vm4426 = vcmp.eq.f32.partialorder %v4425, 8.507059e+37
  %v4427 = vand.u32 %v4048, 2147483648
  %v4428 = vor.u32 1.1754944e-38, %v4427
  %v4429 = vsel %vm4426, %v4428, %v4424
  %v4430 = vmul.f32 1.0, %v4429
  %v4431 = vrcp.pop %v4049
  %v4432 = vmul.f32 %v4049, %v4431
  %v4433 = vsub.f32 1.0, %v4432
  %v4434 = vmul.f32 %v4431, %v4433
  %v4435 = vadd.f32 %v4431, %v4434
  %vm4436 = vweird.f32 %v4049
  %vm4437 = vweird.f32 %v4431
  %vm4438 = vmor %vm4436, %vm4437
  %v4439 = vsel %vm4438, %v4431, %v4435
  %v4440 = vand.u32 2147483647, %v4049
  %vm4441 = vcmp.eq.f32.partialorder %v4440, 8.507059e+37
  %v4442 = vand.u32 %v4049, 2147483648
  %v4443 = vor.u32 1.1754944e-38, %v4442
  %v4444 = vsel %vm4441, %v4443, %v4439
  %v4445 = vmul.f32 1.0, %v4444
  %v4446 = vrcp.pop %v4050
  %v4447 = vmul.f32 %v4050, %v4446
  %v4448 = vsub.f32 1.0, %v4447
  %v4449 = vmul.f32 %v4446, %v4448
  %v4450 = vadd.f32 %v4446, %v4449
  %vm4451 = vweird.f32 %v4050
  %vm4452 = vweird.f32 %v4446
  %vm4453 = vmor %vm4451, %vm4452
  %v4454 = vsel %vm4453, %v4446, %v4450
  %v4455 = vand.u32 2147483647, %v4050
  %vm4456 = vcmp.eq.f32.partialorder %v4455, 8.507059e+37
  %v4457 = vand.u32 %v4050, 2147483648
  %v4458 = vor.u32 1.1754944e-38, %v4457
  %v4459 = vsel %vm4456, %v4458, %v4454
  %v4460 = vmul.f32 1.0, %v4459
  %v4461 = vrcp.pop %v4051
  %v4462 = vmul.f32 %v4051, %v4461
  %v4463 = vsub.f32 1.0, %v4462
  %v4464 = vmul.f32 %v4461, %v4463
  %v4465 = vadd.f32 %v4461, %v4464
  %vm4466 = vweird.f32 %v4051
  %vm4467 = vweird.f32 %v4461
  %vm4468 = vmor %vm4466, %vm4467
  %v4469 = vsel %vm4468, %v4461, %v4465
  %v4470 = vand.u32 2147483647, %v4051
  %vm4471 = vcmp.eq.f32.partialorder %v4470, 8.507059e+37
  %v4472 = vand.u32 %v4051, 2147483648
  %v4473 = vor.u32 1.1754944e-38, %v4472
  %v4474 = vsel %vm4471, %v4473, %v4469
  %v4475 = vmul.f32 1.0, %v4474
  %v4476 = vrcp.pop %v4052
  %v4477 = vmul.f32 %v4052, %v4476
  %v4478 = vsub.f32 1.0, %v4477
  %v4479 = vmul.f32 %v4476, %v4478
  %v4480 = vadd.f32 %v4476, %v4479
  %vm4481 = vweird.f32 %v4052
  %vm4482 = vweird.f32 %v4476
  %vm4483 = vmor %vm4481, %vm4482
  %v4484 = vsel %vm4483, %v4476, %v4480
  %v4485 = vand.u32 2147483647, %v4052
  %vm4486 = vcmp.eq.f32.partialorder %v4485, 8.507059e+37
  %v4487 = vand.u32 %v4052, 2147483648
  %v4488 = vor.u32 1.1754944e-38, %v4487
  %v4489 = vsel %vm4486, %v4488, %v4484
  %v4490 = vmul.f32 1.0, %v4489
  %v4491 = vrcp.pop %v4053
  %v4492 = vmul.f32 %v4053, %v4491
  %v4493 = vsub.f32 1.0, %v4492
  %v4494 = vmul.f32 %v4491, %v4493
  %v4495 = vadd.f32 %v4491, %v4494
  %vm4496 = vweird.f32 %v4053
  %vm4497 = vweird.f32 %v4491
  %vm4498 = vmor %vm4496, %vm4497
  %v4499 = vsel %vm4498, %v4491, %v4495
  %v4500 = vand.u32 2147483647, %v4053
  %vm4501 = vcmp.eq.f32.partialorder %v4500, 8.507059e+37
  %v4502 = vand.u32 %v4053, 2147483648
  %v4503 = vor.u32 1.1754944e-38, %v4502
  %v4504 = vsel %vm4501, %v4503, %v4499
  %v4505 = vmul.f32 1.0, %v4504
  %v4506 = vrcp.pop %v4054
  %v4507 = vmul.f32 %v4054, %v4506
  %v4508 = vsub.f32 1.0, %v4507
  %v4509 = vmul.f32 %v4506, %v4508
  %v4510 = vadd.f32 %v4506, %v4509
  %vm4511 = vweird.f32 %v4054
  %vm4512 = vweird.f32 %v4506
  %vm4513 = vmor %vm4511, %vm4512
  %v4514 = vsel %vm4513, %v4506, %v4510
  %v4515 = vand.u32 2147483647, %v4054
  %vm4516 = vcmp.eq.f32.partialorder %v4515, 8.507059e+37
  %v4517 = vand.u32 %v4054, 2147483648
  %v4518 = vor.u32 1.1754944e-38, %v4517
  %v4519 = vsel %vm4516, %v4518, %v4514
  %v4520 = vmul.f32 1.0, %v4519
  %v4521 = vrcp.pop %v4055
  %v4522 = vmul.f32 %v4055, %v4521
  %v4523 = vsub.f32 1.0, %v4522
  %v4524 = vmul.f32 %v4521, %v4523
  %v4525 = vadd.f32 %v4521, %v4524
  %vm4526 = vweird.f32 %v4055
  %vm4527 = vweird.f32 %v4521
  %vm4528 = vmor %vm4526, %vm4527
  %v4529 = vsel %vm4528, %v4521, %v4525
  %v4530 = vand.u32 2147483647, %v4055
  %vm4531 = vcmp.eq.f32.partialorder %v4530, 8.507059e+37
  %v4532 = vand.u32 %v4055, 2147483648
  %v4533 = vor.u32 1.1754944e-38, %v4532
  %v4534 = vsel %vm4531, %v4533, %v4529
  %v4535 = vmul.f32 1.0, %v4534
  %v4536 = vmul.f32 %v3430, %v3177
  %v4537 = vmul.f32 %v3445, %v3179
  %v4538 = vmul.f32 %v3460, %v3182
  %v4539 = vmul.f32 %v3475, %v3184
  %v4540 = vmul.f32 %v3490, %v3187
  %v4541 = vmul.f32 %v3505, %v3189
  %v4542 = vmul.f32 %v3520, %v3192
  %v4543 = vmul.f32 %v3535, %v3194
  %v4544 = vmul.f32 %v3550, %v3197
  %v4545 = vmul.f32 %v3565, %v3199
  %v4546 = vmul.f32 %v3580, %v3202
  %v4547 = vmul.f32 %v3595, %v3204
  %v4548 = vmul.f32 %v3610, %v3207
  %v4549 = vmul.f32 %v3625, %v3209
  %v4550 = vmul.f32 %v3640, %v3212
  %v4551 = vmul.f32 %v3655, %v3214
  %v4552 = vmul.f32 %v3670, %v3217
  %v4553 = vmul.f32 %v3685, %v3219
  %v4554 = vmul.f32 %v3700, %v3222
  %v4555 = vmul.f32 %v3715, %v3224
  %v4556 = vmul.f32 %v3730, %v3227
  %v4557 = vmul.f32 %v3745, %v3229
  %v4558 = vmul.f32 %v3760, %v3232
  %v4559 = vmul.f32 %v3775, %v3234
  %v4560 = vmul.f32 %v3790, %v3237
  %v4561 = vmul.f32 %v3805, %v3239
  %v4562 = vmul.f32 %v3820, %v3242
  %v4563 = vmul.f32 %v3835, %v3244
  %v4564 = vmul.f32 %v3850, %v3247
  %v4565 = vmul.f32 %v3865, %v3249
  %v4566 = vmul.f32 %v3880, %v3252
  %v4567 = vmul.f32 %v3895, %v3254
  %v4568 = vadd.f32 %v2910, %v4536
  %v4569 = vadd.f32 %v2912, %v4537
  %v4570 = vadd.f32 %v2915, %v4538
  %v4571 = vadd.f32 %v2917, %v4539
  %v4572 = vadd.f32 %v2920, %v4540
  %v4573 = vadd.f32 %v2922, %v4541
  %v4574 = vadd.f32 %v2925, %v4542
  %v4575 = vadd.f32 %v2927, %v4543
  %v4576 = vadd.f32 %v2930, %v4544
  %v4577 = vadd.f32 %v2932, %v4545
  %v4578 = vadd.f32 %v2935, %v4546
  %v4579 = vadd.f32 %v2937, %v4547
  %v4580 = vadd.f32 %v2940, %v4548
  %v4581 = vadd.f32 %v2942, %v4549
  %v4582 = vadd.f32 %v2945, %v4550
  %v4583 = vadd.f32 %v2947, %v4551
  %v4584 = vadd.f32 %v2950, %v4552
  %v4585 = vadd.f32 %v2952, %v4553
  %v4586 = vadd.f32 %v2955, %v4554
  %v4587 = vadd.f32 %v2957, %v4555
  %v4588 = vadd.f32 %v2960, %v4556
  %v4589 = vadd.f32 %v2962, %v4557
  %v4590 = vadd.f32 %v2965, %v4558
  %v4591 = vadd.f32 %v2967, %v4559
  %v4592 = vadd.f32 %v2970, %v4560
  %v4593 = vadd.f32 %v2972, %v4561
  %v4594 = vadd.f32 %v2975, %v4562
  %v4595 = vadd.f32 %v2977, %v4563
  %v4596 = vadd.f32 %v2980, %v4564
  %v4597 = vadd.f32 %v2982, %v4565
  %v4598 = vadd.f32 %v2985, %v4566
  %v4599 = vadd.f32 %v2987, %v4567
  %v4600 = vtanh.pop %v4568
  %v4601 = vtanh.pop %v4569
  %v4602 = vtanh.pop %v4570
  %v4603 = vtanh.pop %v4571
  %v4604 = vtanh.pop %v4572
  %v4605 = vtanh.pop %v4573
  %v4606 = vtanh.pop %v4574
  %v4607 = vtanh.pop %v4575
  %v4608 = vtanh.pop %v4576
  %v4609 = vtanh.pop %v4577
  %v4610 = vtanh.pop %v4578
  %v4611 = vtanh.pop %v4579
  %v4612 = vtanh.pop %v4580
  %v4613 = vtanh.pop %v4581
  %v4614 = vtanh.pop %v4582
  %v4615 = vtanh.pop %v4583
  %v4616 = vtanh.pop %v4584
  %v4617 = vtanh.pop %v4585
  %v4618 = vtanh.pop %v4586
  %v4619 = vtanh.pop %v4587
  %v4620 = vtanh.pop %v4588
  %v4621 = vtanh.pop %v4589
  %v4622 = vtanh.pop %v4590
  %v4623 = vtanh.pop %v4591
  %v4624 = vtanh.pop %v4592
  %v4625 = vtanh.pop %v4593
  %v4626 = vtanh.pop %v4594
  %v4627 = vtanh.pop %v4595
  %v4628 = vtanh.pop %v4596
  %v4629 = vtanh.pop %v4597
  %v4630 = vtanh.pop %v4598
  %v4631 = vtanh.pop %v4599
  %v4632 = vsub.f32 1.0, %v4070
  %v4633 = vsub.f32 1.0, %v4085
  %v4634 = vsub.f32 1.0, %v4100
  %v4635 = vsub.f32 1.0, %v4115
  %v4636 = vsub.f32 1.0, %v4130
  %v4637 = vsub.f32 1.0, %v4145
  %v4638 = vsub.f32 1.0, %v4160
  %v4639 = vsub.f32 1.0, %v4175
  %v4640 = vsub.f32 1.0, %v4190
  %v4641 = vsub.f32 1.0, %v4205
  %v4642 = vsub.f32 1.0, %v4220
  %v4643 = vsub.f32 1.0, %v4235
  %v4644 = vsub.f32 1.0, %v4250
  %v4645 = vsub.f32 1.0, %v4265
  %v4646 = vsub.f32 1.0, %v4280
  %v4647 = vsub.f32 1.0, %v4295
  %v4648 = vsub.f32 1.0, %v4310
  %v4649 = vsub.f32 1.0, %v4325
  %v4650 = vsub.f32 1.0, %v4340
  %v4651 = vsub.f32 1.0, %v4355
  %v4652 = vsub.f32 1.0, %v4370
  %v4653 = vsub.f32 1.0, %v4385
  %v4654 = vsub.f32 1.0, %v4400
  %v4655 = vsub.f32 1.0, %v4415
  %v4656 = vsub.f32 1.0, %v4430
  %v4657 = vsub.f32 1.0, %v4445
  %v4658 = vsub.f32 1.0, %v4460
  %v4659 = vsub.f32 1.0, %v4475
  %v4660 = vsub.f32 1.0, %v4490
  %v4661 = vsub.f32 1.0, %v4505
  %v4662 = vsub.f32 1.0, %v4520
  %v4663 = vsub.f32 1.0, %v4535
  %v4664 = vmul.f32 %v4632, %v4600
  %v4665 = vmul.f32 %v4633, %v4601
  %v4666 = vmul.f32 %v4634, %v4602
  %v4667 = vmul.f32 %v4635, %v4603
  %v4668 = vmul.f32 %v4636, %v4604
  %v4669 = vmul.f32 %v4637, %v4605
  %v4670 = vmul.f32 %v4638, %v4606
  %v4671 = vmul.f32 %v4639, %v4607
  %v4672 = vmul.f32 %v4640, %v4608
  %v4673 = vmul.f32 %v4641, %v4609
  %v4674 = vmul.f32 %v4642, %v4610
  %v4675 = vmul.f32 %v4643, %v4611
  %v4676 = vmul.f32 %v4644, %v4612
  %v4677 = vmul.f32 %v4645, %v4613
  %v4678 = vmul.f32 %v4646, %v4614
  %v4679 = vmul.f32 %v4647, %v4615
  %v4680 = vmul.f32 %v4648, %v4616
  %v4681 = vmul.f32 %v4649, %v4617
  %v4682 = vmul.f32 %v4650, %v4618
  %v4683 = vmul.f32 %v4651, %v4619
  %v4684 = vmul.f32 %v4652, %v4620
  %v4685 = vmul.f32 %v4653, %v4621
  %v4686 = vmul.f32 %v4654, %v4622
  %v4687 = vmul.f32 %v4655, %v4623
  %v4688 = vmul.f32 %v4656, %v4624
  %v4689 = vmul.f32 %v4657, %v4625
  %v4690 = vmul.f32 %v4658, %v4626
  %v4691 = vmul.f32 %v4659, %v4627
  %v4692 = vmul.f32 %v4660, %v4628
  %v4693 = vmul.f32 %v4661, %v4629
  %v4694 = vmul.f32 %v4662, %v4630
  %v4695 = vmul.f32 %v4663, %v4631
  %v4696 = vmul.f32 %v4070, %v2385
  %v4697 = vmul.f32 %v4085, %v2386
  %v4698 = vmul.f32 %v4100, %v2387
  %v4699 = vmul.f32 %v4115, %v2388
  %v4700 = vmul.f32 %v4130, %v2389
  %v4701 = vmul.f32 %v4145, %v2390
  %v4702 = vmul.f32 %v4160, %v2391
  %v4703 = vmul.f32 %v4175, %v2392
  %v4704 = vmul.f32 %v4190, %v2393
  %v4705 = vmul.f32 %v4205, %v2394
  %v4706 = vmul.f32 %v4220, %v2395
  %v4707 = vmul.f32 %v4235, %v2396
  %v4708 = vmul.f32 %v4250, %v2397
  %v4709 = vmul.f32 %v4265, %v2398
  %v4710 = vmul.f32 %v4280, %v2399
  %v4711 = vmul.f32 %v4295, %v2400
  %v4712 = vmul.f32 %v4310, %v2401
  %v4713 = vmul.f32 %v4325, %v2402
  %v4714 = vmul.f32 %v4340, %v2403
  %v4715 = vmul.f32 %v4355, %v2404
  %v4716 = vmul.f32 %v4370, %v2405
  %v4717 = vmul.f32 %v4385, %v2406
  %v4718 = vmul.f32 %v4400, %v2407
  %v4719 = vmul.f32 %v4415, %v2408
  %v4720 = vmul.f32 %v4430, %v2409
  %v4721 = vmul.f32 %v4445, %v2410
  %v4722 = vmul.f32 %v4460, %v2411
  %v4723 = vmul.f32 %v4475, %v2412
  %v4724 = vmul.f32 %v4490, %v2413
  %v4725 = vmul.f32 %v4505, %v2414
  %v4726 = vmul.f32 %v4520, %v2415
  %v4727 = vmul.f32 %v4535, %v2416
  %v4728 = vadd.f32 %v4664, %v4696
  %v4729 = vadd.f32 %v4665, %v4697
  %v4730 = vadd.f32 %v4666, %v4698
  %v4731 = vadd.f32 %v4667, %v4699
  %v4732 = vadd.f32 %v4668, %v4700
  %v4733 = vadd.f32 %v4669, %v4701
  %v4734 = vadd.f32 %v4670, %v4702
  %v4735 = vadd.f32 %v4671, %v4703
  %v4736 = vadd.f32 %v4672, %v4704
  %v4737 = vadd.f32 %v4673, %v4705
  %v4738 = vadd.f32 %v4674, %v4706
  %v4739 = vadd.f32 %v4675, %v4707
  %v4740 = vadd.f32 %v4676, %v4708
  %v4741 = vadd.f32 %v4677, %v4709
  %v4742 = vadd.f32 %v4678, %v4710
  %v4743 = vadd.f32 %v4679, %v4711
  %v4744 = vadd.f32 %v4680, %v4712
  %v4745 = vadd.f32 %v4681, %v4713
  %v4746 = vadd.f32 %v4682, %v4714
  %v4747 = vadd.f32 %v4683, %v4715
  %v4748 = vadd.f32 %v4684, %v4716
  %v4749 = vadd.f32 %v4685, %v4717
  %v4750 = vadd.f32 %v4686, %v4718
  %v4751 = vadd.f32 %v4687, %v4719
  %v4752 = vadd.f32 %v4688, %v4720
  %v4753 = vadd.f32 %v4689, %v4721
  %v4754 = vadd.f32 %v4690, %v4722
  %v4755 = vadd.f32 %v4691, %v4723
  %v4756 = vadd.f32 %v4692, %v4724
  %v4757 = vadd.f32 %v4693, %v4725
  %v4758 = vadd.f32 %v4694, %v4726
  %v4759 = vadd.f32 %v4695, %v4727
  %v4760 = vpack.c.bf16 %v4729, %v4728
  %v4761 = vpack.c.bf16 %v4731, %v4730
  %v4762 = vpack.c.bf16 %v4733, %v4732
  %v4763 = vpack.c.bf16 %v4735, %v4734
  %v4764 = vpack.c.bf16 %v4737, %v4736
  %v4765 = vpack.c.bf16 %v4739, %v4738
  %v4766 = vpack.c.bf16 %v4741, %v4740
  %v4767 = vpack.c.bf16 %v4743, %v4742
  %v4768 = vpack.c.bf16 %v4745, %v4744
  %v4769 = vpack.c.bf16 %v4747, %v4746
  %v4770 = vpack.c.bf16 %v4749, %v4748
  %v4771 = vpack.c.bf16 %v4751, %v4750
  %v4772 = vpack.c.bf16 %v4753, %v4752
  %v4773 = vpack.c.bf16 %v4755, %v4754
  %v4774 = vpack.c.bf16 %v4757, %v4756
  %v4775 = vpack.c.bf16 %v4759, %v4758
  %s4776 = scalar_lea.vmem %s2, 768
  %v4777 = vld [vmem:[%s4776] sm:$0xff]
  %v4778 = vld [vmem:[%s4776 + $0x8] sm:$0xff]
  %v4779 = vld [vmem:[%s4776 + $0x10] sm:$0xff]
  %v4780 = vld [vmem:[%s4776 + $0x18] sm:$0xff]
  %v4781 = vld [vmem:[%s4776 + $0x20] sm:$0xff]
  %v4782 = vld [vmem:[%s4776 + $0x28] sm:$0xff]
  %v4783 = vld [vmem:[%s4776 + $0x30] sm:$0xff]
  %v4784 = vld [vmem:[%s4776 + $0x38] sm:$0xff]
  %v4785 = vld [vmem:[%s4776 + $0x40] sm:$0xff]
  %v4786 = vld [vmem:[%s4776 + $0x48] sm:$0xff]
  %v4787 = vld [vmem:[%s4776 + $0x50] sm:$0xff]
  %v4788 = vld [vmem:[%s4776 + $0x58] sm:$0xff]
  %v4789 = vld [vmem:[%s4776 + $0x60] sm:$0xff]
  %v4790 = vld [vmem:[%s4776 + $0x68] sm:$0xff]
  %v4791 = vld [vmem:[%s4776 + $0x70] sm:$0xff]
  %v4792 = vld [vmem:[%s4776 + $0x78] sm:$0xff]
  %v4793 = vld [vmem:[%s4776 + $0x80] sm:$0xff]
  %v4794 = vld [vmem:[%s4776 + $0x88] sm:$0xff]
  %v4795 = vld [vmem:[%s4776 + $0x90] sm:$0xff]
  %v4796 = vld [vmem:[%s4776 + $0x98] sm:$0xff]
  %v4797 = vld [vmem:[%s4776 + $0xa0] sm:$0xff]
  %v4798 = vld [vmem:[%s4776 + $0xa8] sm:$0xff]
  %v4799 = vld [vmem:[%s4776 + $0xb0] sm:$0xff]
  %v4800 = vld [vmem:[%s4776 + $0xb8] sm:$0xff]
  %v4801 = vld [vmem:[%s4776 + $0xc0] sm:$0xff]
  %v4802 = vld [vmem:[%s4776 + $0xc8] sm:$0xff]
  %v4803 = vld [vmem:[%s4776 + $0xd0] sm:$0xff]
  %v4804 = vld [vmem:[%s4776 + $0xd8] sm:$0xff]
  %v4805 = vld [vmem:[%s4776 + $0xe0] sm:$0xff]
  %v4806 = vld [vmem:[%s4776 + $0xe8] sm:$0xff]
  %v4807 = vld [vmem:[%s4776 + $0xf0] sm:$0xff]
  %v4808 = vld [vmem:[%s4776 + $0xf8] sm:$0xff]
  %v4809 = vld [vmem:[%s4776 + $0x100] sm:$0xff]
  %v4810 = vld [vmem:[%s4776 + $0x108] sm:$0xff]
  %v4811 = vld [vmem:[%s4776 + $0x110] sm:$0xff]
  %v4812 = vld [vmem:[%s4776 + $0x118] sm:$0xff]
  %v4813 = vld [vmem:[%s4776 + $0x120] sm:$0xff]
  %v4814 = vld [vmem:[%s4776 + $0x128] sm:$0xff]
  %v4815 = vld [vmem:[%s4776 + $0x130] sm:$0xff]
  %v4816 = vld [vmem:[%s4776 + $0x138] sm:$0xff]
  %v4817 = vld [vmem:[%s4776 + $0x140] sm:$0xff]
  %v4818 = vld [vmem:[%s4776 + $0x148] sm:$0xff]
  %v4819 = vld [vmem:[%s4776 + $0x150] sm:$0xff]
  %v4820 = vld [vmem:[%s4776 + $0x158] sm:$0xff]
  %v4821 = vld [vmem:[%s4776 + $0x160] sm:$0xff]
  %v4822 = vld [vmem:[%s4776 + $0x168] sm:$0xff]
  %v4823 = vld [vmem:[%s4776 + $0x170] sm:$0xff]
  %v4824 = vld [vmem:[%s4776 + $0x178] sm:$0xff]
  %v4873 = vunpack.c.l.b16 %v4777
  %v4874 = vunpack.c.h.b16 %v4777
  %v4875 = vunpack.c.l.b16 %v4778
  %v4876 = vunpack.c.h.b16 %v4778
  %v4877 = vunpack.c.l.b16 %v4779
  %v4878 = vunpack.c.h.b16 %v4779
  %v4879 = vunpack.c.l.b16 %v4780
  %v4880 = vunpack.c.h.b16 %v4780
  %v4881 = vunpack.c.l.b16 %v4781
  %v4882 = vunpack.c.h.b16 %v4781
  %v4883 = vunpack.c.l.b16 %v4782
  %v4884 = vunpack.c.h.b16 %v4782
  %v4885 = vunpack.c.l.b16 %v4783
  %v4886 = vunpack.c.h.b16 %v4783
  %v4887 = vunpack.c.l.b16 %v4784
  %v4888 = vunpack.c.h.b16 %v4784
  %v4889 = vunpack.c.l.b16 %v4785
  %v4890 = vunpack.c.h.b16 %v4785
  %v4891 = vunpack.c.l.b16 %v4786
  %v4892 = vunpack.c.h.b16 %v4786
  %v4893 = vunpack.c.l.b16 %v4787
  %v4894 = vunpack.c.h.b16 %v4787
  %v4895 = vunpack.c.l.b16 %v4788
  %v4896 = vunpack.c.h.b16 %v4788
  %v4897 = vunpack.c.l.b16 %v4789
  %v4898 = vunpack.c.h.b16 %v4789
  %v4899 = vunpack.c.l.b16 %v4790
  %v4900 = vunpack.c.h.b16 %v4790
  %v4901 = vunpack.c.l.b16 %v4791
  %v4902 = vunpack.c.h.b16 %v4791
  %v4903 = vunpack.c.l.b16 %v4792
  %v4904 = vunpack.c.h.b16 %v4792
  %v4905 = vunpack.c.l.b16 %v4793
  %v4906 = vunpack.c.h.b16 %v4793
  %v4907 = vunpack.c.l.b16 %v4794
  %v4908 = vunpack.c.h.b16 %v4794
  %v4909 = vunpack.c.l.b16 %v4795
  %v4910 = vunpack.c.h.b16 %v4795
  %v4911 = vunpack.c.l.b16 %v4796
  %v4912 = vunpack.c.h.b16 %v4796
  %v4913 = vunpack.c.l.b16 %v4797
  %v4914 = vunpack.c.h.b16 %v4797
  %v4915 = vunpack.c.l.b16 %v4798
  %v4916 = vunpack.c.h.b16 %v4798
  %v4917 = vunpack.c.l.b16 %v4799
  %v4918 = vunpack.c.h.b16 %v4799
  %v4919 = vunpack.c.l.b16 %v4800
  %v4920 = vunpack.c.h.b16 %v4800
  %v4921 = vunpack.c.l.b16 %v4801
  %v4922 = vunpack.c.h.b16 %v4801
  %v4923 = vunpack.c.l.b16 %v4802
  %v4924 = vunpack.c.h.b16 %v4802
  %v4925 = vunpack.c.l.b16 %v4803
  %v4926 = vunpack.c.h.b16 %v4803
  %v4927 = vunpack.c.l.b16 %v4804
  %v4928 = vunpack.c.h.b16 %v4804
  %v4929 = vunpack.c.l.b16 %v4805
  %v4930 = vunpack.c.h.b16 %v4805
  %v4931 = vunpack.c.l.b16 %v4806
  %v4932 = vunpack.c.h.b16 %v4806
  %v4933 = vunpack.c.l.b16 %v4807
  %v4934 = vunpack.c.h.b16 %v4807
  %v4935 = vunpack.c.l.b16 %v4808
  %v4936 = vunpack.c.h.b16 %v4808
  %v4937 = vunpack.c.l.b16 %v4809
  %v4938 = vunpack.c.h.b16 %v4809
  %v4939 = vunpack.c.l.b16 %v4810
  %v4940 = vunpack.c.h.b16 %v4810
  %v4941 = vunpack.c.l.b16 %v4811
  %v4942 = vunpack.c.h.b16 %v4811
  %v4943 = vunpack.c.l.b16 %v4812
  %v4944 = vunpack.c.h.b16 %v4812
  %v4945 = vunpack.c.l.b16 %v4813
  %v4946 = vunpack.c.h.b16 %v4813
  %v4947 = vunpack.c.l.b16 %v4814
  %v4948 = vunpack.c.h.b16 %v4814
  %v4949 = vunpack.c.l.b16 %v4815
  %v4950 = vunpack.c.h.b16 %v4815
  %v4951 = vunpack.c.l.b16 %v4816
  %v4952 = vunpack.c.h.b16 %v4816
  %v4953 = vunpack.c.l.b16 %v4817
  %v4954 = vunpack.c.h.b16 %v4817
  %v4955 = vunpack.c.l.b16 %v4818
  %v4956 = vunpack.c.h.b16 %v4818
  %v4957 = vunpack.c.l.b16 %v4819
  %v4958 = vunpack.c.h.b16 %v4819
  %v4959 = vunpack.c.l.b16 %v4820
  %v4960 = vunpack.c.h.b16 %v4820
  %v4961 = vunpack.c.l.b16 %v4821
  %v4962 = vunpack.c.h.b16 %v4821
  %v4963 = vunpack.c.l.b16 %v4822
  %v4964 = vunpack.c.h.b16 %v4822
  %v4965 = vunpack.c.l.b16 %v4823
  %v4966 = vunpack.c.h.b16 %v4823
  %v4967 = vunpack.c.l.b16 %v4824
  %v4968 = vunpack.c.h.b16 %v4824
  %v4969 = vpack.c.b16 %v4879, %v4873
  %v4970 = vpack.c.b16 %v4880, %v4874
  %v4971 = vpack.c.b16 %v4881, %v4875
  %v4972 = vpack.c.b16 %v4882, %v4876
  %v4973 = vpack.c.b16 %v4883, %v4877
  %v4974 = vpack.c.b16 %v4884, %v4878
  %v4975 = vpack.c.b16 %v4891, %v4885
  %v4976 = vpack.c.b16 %v4892, %v4886
  %v4977 = vpack.c.b16 %v4893, %v4887
  %v4978 = vpack.c.b16 %v4894, %v4888
  %v4979 = vpack.c.b16 %v4895, %v4889
  %v4980 = vpack.c.b16 %v4896, %v4890
  %v4981 = vpack.c.b16 %v4903, %v4897
  %v4982 = vpack.c.b16 %v4904, %v4898
  %v4983 = vpack.c.b16 %v4905, %v4899
  %v4984 = vpack.c.b16 %v4906, %v4900
  %v4985 = vpack.c.b16 %v4907, %v4901
  %v4986 = vpack.c.b16 %v4908, %v4902
  %v4987 = vpack.c.b16 %v4915, %v4909
  %v4988 = vpack.c.b16 %v4916, %v4910
  %v4989 = vpack.c.b16 %v4917, %v4911
  %v4990 = vpack.c.b16 %v4918, %v4912
  %v4991 = vpack.c.b16 %v4919, %v4913
  %v4992 = vpack.c.b16 %v4920, %v4914
  %v4993 = vpack.c.b16 %v4927, %v4921
  %v4994 = vpack.c.b16 %v4928, %v4922
  %v4995 = vpack.c.b16 %v4929, %v4923
  %v4996 = vpack.c.b16 %v4930, %v4924
  %v4997 = vpack.c.b16 %v4931, %v4925
  %v4998 = vpack.c.b16 %v4932, %v4926
  %v4999 = vpack.c.b16 %v4939, %v4933
  %v5000 = vpack.c.b16 %v4940, %v4934
  %v5001 = vpack.c.b16 %v4941, %v4935
  %v5002 = vpack.c.b16 %v4942, %v4936
  %v5003 = vpack.c.b16 %v4943, %v4937
  %v5004 = vpack.c.b16 %v4944, %v4938
  %v5005 = vpack.c.b16 %v4951, %v4945
  %v5006 = vpack.c.b16 %v4952, %v4946
  %v5007 = vpack.c.b16 %v4953, %v4947
  %v5008 = vpack.c.b16 %v4954, %v4948
  %v5009 = vpack.c.b16 %v4955, %v4949
  %v5010 = vpack.c.b16 %v4956, %v4950
  %v5011 = vpack.c.b16 %v4963, %v4957
  %v5012 = vpack.c.b16 %v4964, %v4958
  %v5013 = vpack.c.b16 %v4965, %v4959
  %v5014 = vpack.c.b16 %v4966, %v4960
  %v5015 = vpack.c.b16 %v4967, %v4961
  %v5016 = vpack.c.b16 %v4968, %v4962
  %5065 = vmatpush.bf16.msra.mxu0 %v5011
  %5066 = vmatpush.bf16.msra.mxu0 %v5005
  %5067 = vmatpush.bf16.msra.mxu0 %v4999
  %5068 = vmatpush.bf16.msra.mxu0 %v4993
  %5069 = vmatpush.bf16.msra.mxu0 %v4987
  %5070 = vmatpush.bf16.msra.mxu0 %v4981
  %5071 = vmatpush.bf16.msra.mxu0 %v4975
  %5072 = vmatpush.bf16.msra.mxu0 %v4969
  %5073 = vmatmul.bf16.gmra.mxu0 %v4760
  %v5074 = vpop.f32.mrf.mxu0
  %v5075 = vadd.f32 %v127, %v5074
  %v5076 = vpop.f32.mrf.mxu0
  %v5077 = vadd.f32 %v127, %v5076
  %5078 = vmatmul.bf16.gmra.mxu0 %v4761
  %v5079 = vpop.f32.mrf.mxu0
  %v5080 = vadd.f32 %v127, %v5079
  %v5081 = vpop.f32.mrf.mxu0
  %v5082 = vadd.f32 %v127, %v5081
  %5083 = vmatmul.bf16.gmra.mxu0 %v4762
  %v5084 = vpop.f32.mrf.mxu0
  %v5085 = vadd.f32 %v127, %v5084
  %v5086 = vpop.f32.mrf.mxu0
  %v5087 = vadd.f32 %v127, %v5086
  %5088 = vmatmul.bf16.gmra.mxu0 %v4763
  %v5089 = vpop.f32.mrf.mxu0
  %v5090 = vadd.f32 %v127, %v5089
  %v5091 = vpop.f32.mrf.mxu0
  %v5092 = vadd.f32 %v127, %v5091
  %5093 = vmatmul.bf16.gmra.mxu0 %v4764
  %v5094 = vpop.f32.mrf.mxu0
  %v5095 = vadd.f32 %v127, %v5094
  %v5096 = vpop.f32.mrf.mxu0
  %v5097 = vadd.f32 %v127, %v5096
  %5098 = vmatmul.bf16.gmra.mxu0 %v4765
  %v5099 = vpop.f32.mrf.mxu0
  %v5100 = vadd.f32 %v127, %v5099
  %v5101 = vpop.f32.mrf.mxu0
  %v5102 = vadd.f32 %v127, %v5101
  %5103 = vmatmul.bf16.gmra.mxu0 %v4766
  %v5104 = vpop.f32.mrf.mxu0
  %v5105 = vadd.f32 %v127, %v5104
  %v5106 = vpop.f32.mrf.mxu0
  %v5107 = vadd.f32 %v127, %v5106
  %5108 = vmatmul.bf16.gmra.mxu0 %v4767
  %v5109 = vpop.f32.mrf.mxu0
  %v5110 = vadd.f32 %v127, %v5109
  %v5111 = vpop.f32.mrf.mxu0
  %v5112 = vadd.f32 %v127, %v5111
  %5113 = vmatmul.bf16.gmra.mxu0 %v4768
  %v5114 = vpop.f32.mrf.mxu0
  %v5115 = vadd.f32 %v127, %v5114
  %v5116 = vpop.f32.mrf.mxu0
  %v5117 = vadd.f32 %v127, %v5116
  %5118 = vmatmul.bf16.gmra.mxu0 %v4769
  %v5119 = vpop.f32.mrf.mxu0
  %v5120 = vadd.f32 %v127, %v5119
  %v5121 = vpop.f32.mrf.mxu0
  %v5122 = vadd.f32 %v127, %v5121
  %5123 = vmatmul.bf16.gmra.mxu0 %v4770
  %v5124 = vpop.f32.mrf.mxu0
  %v5125 = vadd.f32 %v127, %v5124
  %v5126 = vpop.f32.mrf.mxu0
  %v5127 = vadd.f32 %v127, %v5126
  %5128 = vmatmul.bf16.gmra.mxu0 %v4771
  %v5129 = vpop.f32.mrf.mxu0
  %v5130 = vadd.f32 %v127, %v5129
  %v5131 = vpop.f32.mrf.mxu0
  %v5132 = vadd.f32 %v127, %v5131
  %5133 = vmatmul.bf16.gmra.mxu0 %v4772
  %v5134 = vpop.f32.mrf.mxu0
  %v5135 = vadd.f32 %v127, %v5134
  %v5136 = vpop.f32.mrf.mxu0
  %v5137 = vadd.f32 %v127, %v5136
  %5138 = vmatmul.bf16.gmra.mxu0 %v4773
  %v5139 = vpop.f32.mrf.mxu0
  %v5140 = vadd.f32 %v127, %v5139
  %v5141 = vpop.f32.mrf.mxu0
  %v5142 = vadd.f32 %v127, %v5141
  %5143 = vmatmul.bf16.gmra.mxu0 %v4774
  %v5144 = vpop.f32.mrf.mxu0
  %v5145 = vadd.f32 %v127, %v5144
  %v5146 = vpop.f32.mrf.mxu0
  %v5147 = vadd.f32 %v127, %v5146
  %5148 = vmatmul.bf16.gmra.mxu0 %v4775
  %v5149 = vpop.f32.mrf.mxu0
  %v5150 = vadd.f32 %v127, %v5149
  %v5151 = vpop.f32.mrf.mxu0
  %v5152 = vadd.f32 %v127, %v5151
  %5153 = vdwg.mxu0
  %5154 = vmatpush.bf16.msra.mxu0 %v5012
  %5155 = vmatpush.bf16.msra.mxu0 %v5006
  %5156 = vmatpush.bf16.msra.mxu0 %v5000
  %5157 = vmatpush.bf16.msra.mxu0 %v4994
  %5158 = vmatpush.bf16.msra.mxu0 %v4988
  %5159 = vmatpush.bf16.msra.mxu0 %v4982
  %5160 = vmatpush.bf16.msra.mxu0 %v4976
  %5161 = vmatpush.bf16.msra.mxu0 %v4970
  %5162 = vmatmul.bf16.gmra.mxu0 %v4760
  %v5163 = vpop.f32.mrf.mxu0
  %v5164 = vadd.f32 %v128, %v5163
  %v5165 = vpop.f32.mrf.mxu0
  %v5166 = vadd.f32 %v128, %v5165
  %5167 = vmatmul.bf16.gmra.mxu0 %v4761
  %v5168 = vpop.f32.mrf.mxu0
  %v5169 = vadd.f32 %v128, %v5168
  %v5170 = vpop.f32.mrf.mxu0
  %v5171 = vadd.f32 %v128, %v5170
  %5172 = vmatmul.bf16.gmra.mxu0 %v4762
  %v5173 = vpop.f32.mrf.mxu0
  %v5174 = vadd.f32 %v128, %v5173
  %v5175 = vpop.f32.mrf.mxu0
  %v5176 = vadd.f32 %v128, %v5175
  %5177 = vmatmul.bf16.gmra.mxu0 %v4763
  %v5178 = vpop.f32.mrf.mxu0
  %v5179 = vadd.f32 %v128, %v5178
  %v5180 = vpop.f32.mrf.mxu0
  %v5181 = vadd.f32 %v128, %v5180
  %5182 = vmatmul.bf16.gmra.mxu0 %v4764
  %v5183 = vpop.f32.mrf.mxu0
  %v5184 = vadd.f32 %v128, %v5183
  %v5185 = vpop.f32.mrf.mxu0
  %v5186 = vadd.f32 %v128, %v5185
  %5187 = vmatmul.bf16.gmra.mxu0 %v4765
  %v5188 = vpop.f32.mrf.mxu0
  %v5189 = vadd.f32 %v128, %v5188
  %v5190 = vpop.f32.mrf.mxu0
  %v5191 = vadd.f32 %v128, %v5190
  %5192 = vmatmul.bf16.gmra.mxu0 %v4766
  %v5193 = vpop.f32.mrf.mxu0
  %v5194 = vadd.f32 %v128, %v5193
  %v5195 = vpop.f32.mrf.mxu0
  %v5196 = vadd.f32 %v128, %v5195
  %5197 = vmatmul.bf16.gmra.mxu0 %v4767
  %v5198 = vpop.f32.mrf.mxu0
  %v5199 = vadd.f32 %v128, %v5198
  %v5200 = vpop.f32.mrf.mxu0
  %v5201 = vadd.f32 %v128, %v5200
  %5202 = vmatmul.bf16.gmra.mxu0 %v4768
  %v5203 = vpop.f32.mrf.mxu0
  %v5204 = vadd.f32 %v128, %v5203
  %v5205 = vpop.f32.mrf.mxu0
  %v5206 = vadd.f32 %v128, %v5205
  %5207 = vmatmul.bf16.gmra.mxu0 %v4769
  %v5208 = vpop.f32.mrf.mxu0
  %v5209 = vadd.f32 %v128, %v5208
  %v5210 = vpop.f32.mrf.mxu0
  %v5211 = vadd.f32 %v128, %v5210
  %5212 = vmatmul.bf16.gmra.mxu0 %v4770
  %v5213 = vpop.f32.mrf.mxu0
  %v5214 = vadd.f32 %v128, %v5213
  %v5215 = vpop.f32.mrf.mxu0
  %v5216 = vadd.f32 %v128, %v5215
  %5217 = vmatmul.bf16.gmra.mxu0 %v4771
  %v5218 = vpop.f32.mrf.mxu0
  %v5219 = vadd.f32 %v128, %v5218
  %v5220 = vpop.f32.mrf.mxu0
  %v5221 = vadd.f32 %v128, %v5220
  %5222 = vmatmul.bf16.gmra.mxu0 %v4772
  %v5223 = vpop.f32.mrf.mxu0
  %v5224 = vadd.f32 %v128, %v5223
  %v5225 = vpop.f32.mrf.mxu0
  %v5226 = vadd.f32 %v128, %v5225
  %5227 = vmatmul.bf16.gmra.mxu0 %v4773
  %v5228 = vpop.f32.mrf.mxu0
  %v5229 = vadd.f32 %v128, %v5228
  %v5230 = vpop.f32.mrf.mxu0
  %v5231 = vadd.f32 %v128, %v5230
  %5232 = vmatmul.bf16.gmra.mxu0 %v4774
  %v5233 = vpop.f32.mrf.mxu0
  %v5234 = vadd.f32 %v128, %v5233
  %v5235 = vpop.f32.mrf.mxu0
  %v5236 = vadd.f32 %v128, %v5235
  %5237 = vmatmul.bf16.gmra.mxu0 %v4775
  %v5238 = vpop.f32.mrf.mxu0
  %v5239 = vadd.f32 %v128, %v5238
  %v5240 = vpop.f32.mrf.mxu0
  %v5241 = vadd.f32 %v128, %v5240
  %5242 = vdwg.mxu0
  %5243 = vmatpush.bf16.msra.mxu0 %v5013
  %5244 = vmatpush.bf16.msra.mxu0 %v5007
  %5245 = vmatpush.bf16.msra.mxu0 %v5001
  %5246 = vmatpush.bf16.msra.mxu0 %v4995
  %5247 = vmatpush.bf16.msra.mxu0 %v4989
  %5248 = vmatpush.bf16.msra.mxu0 %v4983
  %5249 = vmatpush.bf16.msra.mxu0 %v4977
  %5250 = vmatpush.bf16.msra.mxu0 %v4971
  %5251 = vmatmul.bf16.gmra.mxu0 %v4760
  %v5252 = vpop.f32.mrf.mxu0
  %v5253 = vadd.f32 %v129, %v5252
  %v5254 = vpop.f32.mrf.mxu0
  %v5255 = vadd.f32 %v129, %v5254
  %5256 = vmatmul.bf16.gmra.mxu0 %v4761
  %v5257 = vpop.f32.mrf.mxu0
  %v5258 = vadd.f32 %v129, %v5257
  %v5259 = vpop.f32.mrf.mxu0
  %v5260 = vadd.f32 %v129, %v5259
  %5261 = vmatmul.bf16.gmra.mxu0 %v4762
  %v5262 = vpop.f32.mrf.mxu0
  %v5263 = vadd.f32 %v129, %v5262
  %v5264 = vpop.f32.mrf.mxu0
  %v5265 = vadd.f32 %v129, %v5264
  %5266 = vmatmul.bf16.gmra.mxu0 %v4763
  %v5267 = vpop.f32.mrf.mxu0
  %v5268 = vadd.f32 %v129, %v5267
  %v5269 = vpop.f32.mrf.mxu0
  %v5270 = vadd.f32 %v129, %v5269
  %5271 = vmatmul.bf16.gmra.mxu0 %v4764
  %v5272 = vpop.f32.mrf.mxu0
  %v5273 = vadd.f32 %v129, %v5272
  %v5274 = vpop.f32.mrf.mxu0
  %v5275 = vadd.f32 %v129, %v5274
  %5276 = vmatmul.bf16.gmra.mxu0 %v4765
  %v5277 = vpop.f32.mrf.mxu0
  %v5278 = vadd.f32 %v129, %v5277
  %v5279 = vpop.f32.mrf.mxu0
  %v5280 = vadd.f32 %v129, %v5279
  %5281 = vmatmul.bf16.gmra.mxu0 %v4766
  %v5282 = vpop.f32.mrf.mxu0
  %v5283 = vadd.f32 %v129, %v5282
  %v5284 = vpop.f32.mrf.mxu0
  %v5285 = vadd.f32 %v129, %v5284
  %5286 = vmatmul.bf16.gmra.mxu0 %v4767
  %v5287 = vpop.f32.mrf.mxu0
  %v5288 = vadd.f32 %v129, %v5287
  %v5289 = vpop.f32.mrf.mxu0
  %v5290 = vadd.f32 %v129, %v5289
  %5291 = vmatmul.bf16.gmra.mxu0 %v4768
  %v5292 = vpop.f32.mrf.mxu0
  %v5293 = vadd.f32 %v129, %v5292
  %v5294 = vpop.f32.mrf.mxu0
  %v5295 = vadd.f32 %v129, %v5294
  %5296 = vmatmul.bf16.gmra.mxu0 %v4769
  %v5297 = vpop.f32.mrf.mxu0
  %v5298 = vadd.f32 %v129, %v5297
  %v5299 = vpop.f32.mrf.mxu0
  %v5300 = vadd.f32 %v129, %v5299
  %5301 = vmatmul.bf16.gmra.mxu0 %v4770
  %v5302 = vpop.f32.mrf.mxu0
  %v5303 = vadd.f32 %v129, %v5302
  %v5304 = vpop.f32.mrf.mxu0
  %v5305 = vadd.f32 %v129, %v5304
  %5306 = vmatmul.bf16.gmra.mxu0 %v4771
  %v5307 = vpop.f32.mrf.mxu0
  %v5308 = vadd.f32 %v129, %v5307
  %v5309 = vpop.f32.mrf.mxu0
  %v5310 = vadd.f32 %v129, %v5309
  %5311 = vmatmul.bf16.gmra.mxu0 %v4772
  %v5312 = vpop.f32.mrf.mxu0
  %v5313 = vadd.f32 %v129, %v5312
  %v5314 = vpop.f32.mrf.mxu0
  %v5315 = vadd.f32 %v129, %v5314
  %5316 = vmatmul.bf16.gmra.mxu0 %v4773
  %v5317 = vpop.f32.mrf.mxu0
  %v5318 = vadd.f32 %v129, %v5317
  %v5319 = vpop.f32.mrf.mxu0
  %v5320 = vadd.f32 %v129, %v5319
  %5321 = vmatmul.bf16.gmra.mxu0 %v4774
  %v5322 = vpop.f32.mrf.mxu0
  %v5323 = vadd.f32 %v129, %v5322
  %v5324 = vpop.f32.mrf.mxu0
  %v5325 = vadd.f32 %v129, %v5324
  %5326 = vmatmul.bf16.gmra.mxu0 %v4775
  %v5327 = vpop.f32.mrf.mxu0
  %v5328 = vadd.f32 %v129, %v5327
  %v5329 = vpop.f32.mrf.mxu0
  %v5330 = vadd.f32 %v129, %v5329
  %5331 = vdwg.mxu0
  %5332 = vmatpush.bf16.msra.mxu0 %v5014
  %5333 = vmatpush.bf16.msra.mxu0 %v5008
  %5334 = vmatpush.bf16.msra.mxu0 %v5002
  %5335 = vmatpush.bf16.msra.mxu0 %v4996
  %5336 = vmatpush.bf16.msra.mxu0 %v4990
  %5337 = vmatpush.bf16.msra.mxu0 %v4984
  %5338 = vmatpush.bf16.msra.mxu0 %v4978
  %5339 = vmatpush.bf16.msra.mxu0 %v4972
  %5340 = vmatmul.bf16.gmra.mxu0 %v4760
  %v5341 = vpop.f32.mrf.mxu0
  %v5342 = vadd.f32 %v130, %v5341
  %v5343 = vpop.f32.mrf.mxu0
  %v5344 = vadd.f32 %v130, %v5343
  %5345 = vmatmul.bf16.gmra.mxu0 %v4761
  %v5346 = vpop.f32.mrf.mxu0
  %v5347 = vadd.f32 %v130, %v5346
  %v5348 = vpop.f32.mrf.mxu0
  %v5349 = vadd.f32 %v130, %v5348
  %5350 = vmatmul.bf16.gmra.mxu0 %v4762
  %v5351 = vpop.f32.mrf.mxu0
  %v5352 = vadd.f32 %v130, %v5351
  %v5353 = vpop.f32.mrf.mxu0
  %v5354 = vadd.f32 %v130, %v5353
  %5355 = vmatmul.bf16.gmra.mxu0 %v4763
  %v5356 = vpop.f32.mrf.mxu0
  %v5357 = vadd.f32 %v130, %v5356
  %v5358 = vpop.f32.mrf.mxu0
  %v5359 = vadd.f32 %v130, %v5358
  %5360 = vmatmul.bf16.gmra.mxu0 %v4764
  %v5361 = vpop.f32.mrf.mxu0
  %v5362 = vadd.f32 %v130, %v5361
  %v5363 = vpop.f32.mrf.mxu0
  %v5364 = vadd.f32 %v130, %v5363
  %5365 = vmatmul.bf16.gmra.mxu0 %v4765
  %v5366 = vpop.f32.mrf.mxu0
  %v5367 = vadd.f32 %v130, %v5366
  %v5368 = vpop.f32.mrf.mxu0
  %v5369 = vadd.f32 %v130, %v5368
  %5370 = vmatmul.bf16.gmra.mxu0 %v4766
  %v5371 = vpop.f32.mrf.mxu0
  %v5372 = vadd.f32 %v130, %v5371
  %v5373 = vpop.f32.mrf.mxu0
  %v5374 = vadd.f32 %v130, %v5373
  %5375 = vmatmul.bf16.gmra.mxu0 %v4767
  %v5376 = vpop.f32.mrf.mxu0
  %v5377 = vadd.f32 %v130, %v5376
  %v5378 = vpop.f32.mrf.mxu0
  %v5379 = vadd.f32 %v130, %v5378
  %5380 = vmatmul.bf16.gmra.mxu0 %v4768
  %v5381 = vpop.f32.mrf.mxu0
  %v5382 = vadd.f32 %v130, %v5381
  %v5383 = vpop.f32.mrf.mxu0
  %v5384 = vadd.f32 %v130, %v5383
  %5385 = vmatmul.bf16.gmra.mxu0 %v4769
  %v5386 = vpop.f32.mrf.mxu0
  %v5387 = vadd.f32 %v130, %v5386
  %v5388 = vpop.f32.mrf.mxu0
  %v5389 = vadd.f32 %v130, %v5388
  %5390 = vmatmul.bf16.gmra.mxu0 %v4770
  %v5391 = vpop.f32.mrf.mxu0
  %v5392 = vadd.f32 %v130, %v5391
  %v5393 = vpop.f32.mrf.mxu0
  %v5394 = vadd.f32 %v130, %v5393
  %5395 = vmatmul.bf16.gmra.mxu0 %v4771
  %v5396 = vpop.f32.mrf.mxu0
  %v5397 = vadd.f32 %v130, %v5396
  %v5398 = vpop.f32.mrf.mxu0
  %v5399 = vadd.f32 %v130, %v5398
  %5400 = vmatmul.bf16.gmra.mxu0 %v4772
  %v5401 = vpop.f32.mrf.mxu0
  %v5402 = vadd.f32 %v130, %v5401
  %v5403 = vpop.f32.mrf.mxu0
  %v5404 = vadd.f32 %v130, %v5403
  %5405 = vmatmul.bf16.gmra.mxu0 %v4773
  %v5406 = vpop.f32.mrf.mxu0
  %v5407 = vadd.f32 %v130, %v5406
  %v5408 = vpop.f32.mrf.mxu0
  %v5409 = vadd.f32 %v130, %v5408
  %5410 = vmatmul.bf16.gmra.mxu0 %v4774
  %v5411 = vpop.f32.mrf.mxu0
  %v5412 = vadd.f32 %v130, %v5411
  %v5413 = vpop.f32.mrf.mxu0
  %v5414 = vadd.f32 %v130, %v5413
  %5415 = vmatmul.bf16.gmra.mxu0 %v4775
  %v5416 = vpop.f32.mrf.mxu0
  %v5417 = vadd.f32 %v130, %v5416
  %v5418 = vpop.f32.mrf.mxu0
  %v5419 = vadd.f32 %v130, %v5418
  %5420 = vdwg.mxu0
  %5421 = vmatpush.bf16.msra.mxu0 %v5015
  %5422 = vmatpush.bf16.msra.mxu0 %v5009
  %5423 = vmatpush.bf16.msra.mxu0 %v5003
  %5424 = vmatpush.bf16.msra.mxu0 %v4997
  %5425 = vmatpush.bf16.msra.mxu0 %v4991
  %5426 = vmatpush.bf16.msra.mxu0 %v4985
  %5427 = vmatpush.bf16.msra.mxu0 %v4979
  %5428 = vmatpush.bf16.msra.mxu0 %v4973
  %5429 = vmatmul.bf16.gmra.mxu0 %v4760
  %v5430 = vpop.f32.mrf.mxu0
  %v5431 = vadd.f32 %v131, %v5430
  %v5432 = vpop.f32.mrf.mxu0
  %v5433 = vadd.f32 %v131, %v5432
  %5434 = vmatmul.bf16.gmra.mxu0 %v4761
  %v5435 = vpop.f32.mrf.mxu0
  %v5436 = vadd.f32 %v131, %v5435
  %v5437 = vpop.f32.mrf.mxu0
  %v5438 = vadd.f32 %v131, %v5437
  %5439 = vmatmul.bf16.gmra.mxu0 %v4762
  %v5440 = vpop.f32.mrf.mxu0
  %v5441 = vadd.f32 %v131, %v5440
  %v5442 = vpop.f32.mrf.mxu0
  %v5443 = vadd.f32 %v131, %v5442
  %5444 = vmatmul.bf16.gmra.mxu0 %v4763
  %v5445 = vpop.f32.mrf.mxu0
  %v5446 = vadd.f32 %v131, %v5445
  %v5447 = vpop.f32.mrf.mxu0
  %v5448 = vadd.f32 %v131, %v5447
  %5449 = vmatmul.bf16.gmra.mxu0 %v4764
  %v5450 = vpop.f32.mrf.mxu0
  %v5451 = vadd.f32 %v131, %v5450
  %v5452 = vpop.f32.mrf.mxu0
  %v5453 = vadd.f32 %v131, %v5452
  %5454 = vmatmul.bf16.gmra.mxu0 %v4765
  %v5455 = vpop.f32.mrf.mxu0
  %v5456 = vadd.f32 %v131, %v5455
  %v5457 = vpop.f32.mrf.mxu0
  %v5458 = vadd.f32 %v131, %v5457
  %5459 = vmatmul.bf16.gmra.mxu0 %v4766
  %v5460 = vpop.f32.mrf.mxu0
  %v5461 = vadd.f32 %v131, %v5460
  %v5462 = vpop.f32.mrf.mxu0
  %v5463 = vadd.f32 %v131, %v5462
  %5464 = vmatmul.bf16.gmra.mxu0 %v4767
  %v5465 = vpop.f32.mrf.mxu0
  %v5466 = vadd.f32 %v131, %v5465
  %v5467 = vpop.f32.mrf.mxu0
  %v5468 = vadd.f32 %v131, %v5467
  %5469 = vmatmul.bf16.gmra.mxu0 %v4768
  %v5470 = vpop.f32.mrf.mxu0
  %v5471 = vadd.f32 %v131, %v5470
  %v5472 = vpop.f32.mrf.mxu0
  %v5473 = vadd.f32 %v131, %v5472
  %5474 = vmatmul.bf16.gmra.mxu0 %v4769
  %v5475 = vpop.f32.mrf.mxu0
  %v5476 = vadd.f32 %v131, %v5475
  %v5477 = vpop.f32.mrf.mxu0
  %v5478 = vadd.f32 %v131, %v5477
  %5479 = vmatmul.bf16.gmra.mxu0 %v4770
  %v5480 = vpop.f32.mrf.mxu0
  %v5481 = vadd.f32 %v131, %v5480
  %v5482 = vpop.f32.mrf.mxu0
  %v5483 = vadd.f32 %v131, %v5482
  %5484 = vmatmul.bf16.gmra.mxu0 %v4771
  %v5485 = vpop.f32.mrf.mxu0
  %v5486 = vadd.f32 %v131, %v5485
  %v5487 = vpop.f32.mrf.mxu0
  %v5488 = vadd.f32 %v131, %v5487
  %5489 = vmatmul.bf16.gmra.mxu0 %v4772
  %v5490 = vpop.f32.mrf.mxu0
  %v5491 = vadd.f32 %v131, %v5490
  %v5492 = vpop.f32.mrf.mxu0
  %v5493 = vadd.f32 %v131, %v5492
  %5494 = vmatmul.bf16.gmra.mxu0 %v4773
  %v5495 = vpop.f32.mrf.mxu0
  %v5496 = vadd.f32 %v131, %v5495
  %v5497 = vpop.f32.mrf.mxu0
  %v5498 = vadd.f32 %v131, %v5497
  %5499 = vmatmul.bf16.gmra.mxu0 %v4774
  %v5500 = vpop.f32.mrf.mxu0
  %v5501 = vadd.f32 %v131, %v5500
  %v5502 = vpop.f32.mrf.mxu0
  %v5503 = vadd.f32 %v131, %v5502
  %5504 = vmatmul.bf16.gmra.mxu0 %v4775
  %v5505 = vpop.f32.mrf.mxu0
  %v5506 = vadd.f32 %v131, %v5505
  %v5507 = vpop.f32.mrf.mxu0
  %v5508 = vadd.f32 %v131, %v5507
  %5509 = vdwg.mxu0
  %5510 = vmatpush.bf16.msra.mxu0 %v5016
  %5511 = vmatpush.bf16.msra.mxu0 %v5010
  %5512 = vmatpush.bf16.msra.mxu0 %v5004
  %5513 = vmatpush.bf16.msra.mxu0 %v4998
  %5514 = vmatpush.bf16.msra.mxu0 %v4992
  %5515 = vmatpush.bf16.msra.mxu0 %v4986
  %5516 = vmatpush.bf16.msra.mxu0 %v4980
  %5517 = vmatpush.bf16.msra.mxu0 %v4974
  %5518 = vmatmul.bf16.gmra.mxu0 %v4760
  %v5519 = vpop.f32.mrf.mxu0
  %v5520 = vadd.f32 %v132, %v5519
  %v5521 = vpop.f32.mrf.mxu0
  %v5522 = vadd.f32 %v132, %v5521
  %5523 = vmatmul.bf16.gmra.mxu0 %v4761
  %v5524 = vpop.f32.mrf.mxu0
  %v5525 = vadd.f32 %v132, %v5524
  %v5526 = vpop.f32.mrf.mxu0
  %v5527 = vadd.f32 %v132, %v5526
  %5528 = vmatmul.bf16.gmra.mxu0 %v4762
  %v5529 = vpop.f32.mrf.mxu0
  %v5530 = vadd.f32 %v132, %v5529
  %v5531 = vpop.f32.mrf.mxu0
  %v5532 = vadd.f32 %v132, %v5531
  %5533 = vmatmul.bf16.gmra.mxu0 %v4763
  %v5534 = vpop.f32.mrf.mxu0
  %v5535 = vadd.f32 %v132, %v5534
  %v5536 = vpop.f32.mrf.mxu0
  %v5537 = vadd.f32 %v132, %v5536
  %5538 = vmatmul.bf16.gmra.mxu0 %v4764
  %v5539 = vpop.f32.mrf.mxu0
  %v5540 = vadd.f32 %v132, %v5539
  %v5541 = vpop.f32.mrf.mxu0
  %v5542 = vadd.f32 %v132, %v5541
  %5543 = vmatmul.bf16.gmra.mxu0 %v4765
  %v5544 = vpop.f32.mrf.mxu0
  %v5545 = vadd.f32 %v132, %v5544
  %v5546 = vpop.f32.mrf.mxu0
  %v5547 = vadd.f32 %v132, %v5546
  %5548 = vmatmul.bf16.gmra.mxu0 %v4766
  %v5549 = vpop.f32.mrf.mxu0
  %v5550 = vadd.f32 %v132, %v5549
  %v5551 = vpop.f32.mrf.mxu0
  %v5552 = vadd.f32 %v132, %v5551
  %5553 = vmatmul.bf16.gmra.mxu0 %v4767
  %v5554 = vpop.f32.mrf.mxu0
  %v5555 = vadd.f32 %v132, %v5554
  %v5556 = vpop.f32.mrf.mxu0
  %v5557 = vadd.f32 %v132, %v5556
  %5558 = vmatmul.bf16.gmra.mxu0 %v4768
  %v5559 = vpop.f32.mrf.mxu0
  %v5560 = vadd.f32 %v132, %v5559
  %v5561 = vpop.f32.mrf.mxu0
  %v5562 = vadd.f32 %v132, %v5561
  %5563 = vmatmul.bf16.gmra.mxu0 %v4769
  %v5564 = vpop.f32.mrf.mxu0
  %v5565 = vadd.f32 %v132, %v5564
  %v5566 = vpop.f32.mrf.mxu0
  %v5567 = vadd.f32 %v132, %v5566
  %5568 = vmatmul.bf16.gmra.mxu0 %v4770
  %v5569 = vpop.f32.mrf.mxu0
  %v5570 = vadd.f32 %v132, %v5569
  %v5571 = vpop.f32.mrf.mxu0
  %v5572 = vadd.f32 %v132, %v5571
  %5573 = vmatmul.bf16.gmra.mxu0 %v4771
  %v5574 = vpop.f32.mrf.mxu0
  %v5575 = vadd.f32 %v132, %v5574
  %v5576 = vpop.f32.mrf.mxu0
  %v5577 = vadd.f32 %v132, %v5576
  %5578 = vmatmul.bf16.gmra.mxu0 %v4772
  %v5579 = vpop.f32.mrf.mxu0
  %v5580 = vadd.f32 %v132, %v5579
  %v5581 = vpop.f32.mrf.mxu0
  %v5582 = vadd.f32 %v132, %v5581
  %5583 = vmatmul.bf16.gmra.mxu0 %v4773
  %v5584 = vpop.f32.mrf.mxu0
  %v5585 = vadd.f32 %v132, %v5584
  %v5586 = vpop.f32.mrf.mxu0
  %v5587 = vadd.f32 %v132, %v5586
  %5588 = vmatmul.bf16.gmra.mxu0 %v4774
  %v5589 = vpop.f32.mrf.mxu0
  %v5590 = vadd.f32 %v132, %v5589
  %v5591 = vpop.f32.mrf.mxu0
  %v5592 = vadd.f32 %v132, %v5591
  %5593 = vmatmul.bf16.gmra.mxu0 %v4775
  %v5594 = vpop.f32.mrf.mxu0
  %v5595 = vadd.f32 %v132, %v5594
  %v5596 = vpop.f32.mrf.mxu0
  %v5597 = vadd.f32 %v132, %v5596
  %5598 = vdwg.mxu0
  %v5599 = vadd.f32 %v5075, %v5342
  %v5600 = vadd.f32 %v5077, %v5344
  %v5601 = vadd.f32 %v5080, %v5347
  %v5602 = vadd.f32 %v5082, %v5349
  %v5603 = vadd.f32 %v5085, %v5352
  %v5604 = vadd.f32 %v5087, %v5354
  %v5605 = vadd.f32 %v5090, %v5357
  %v5606 = vadd.f32 %v5092, %v5359
  %v5607 = vadd.f32 %v5095, %v5362
  %v5608 = vadd.f32 %v5097, %v5364
  %v5609 = vadd.f32 %v5100, %v5367
  %v5610 = vadd.f32 %v5102, %v5369
  %v5611 = vadd.f32 %v5105, %v5372
  %v5612 = vadd.f32 %v5107, %v5374
  %v5613 = vadd.f32 %v5110, %v5377
  %v5614 = vadd.f32 %v5112, %v5379
  %v5615 = vadd.f32 %v5115, %v5382
  %v5616 = vadd.f32 %v5117, %v5384
  %v5617 = vadd.f32 %v5120, %v5387
  %v5618 = vadd.f32 %v5122, %v5389
  %v5619 = vadd.f32 %v5125, %v5392
  %v5620 = vadd.f32 %v5127, %v5394
  %v5621 = vadd.f32 %v5130, %v5397
  %v5622 = vadd.f32 %v5132, %v5399
  %v5623 = vadd.f32 %v5135, %v5402
  %v5624 = vadd.f32 %v5137, %v5404
  %v5625 = vadd.f32 %v5140, %v5407
  %v5626 = vadd.f32 %v5142, %v5409
  %v5627 = vadd.f32 %v5145, %v5412
  %v5628 = vadd.f32 %v5147, %v5414
  %v5629 = vadd.f32 %v5150, %v5417
  %v5630 = vadd.f32 %v5152, %v5419
  %v5631 = vxor.u32 %v5599, 2147483648
  %v5632 = vxor.u32 %v5600, 2147483648
  %v5633 = vxor.u32 %v5601, 2147483648
  %v5634 = vxor.u32 %v5602, 2147483648
  %v5635 = vxor.u32 %v5603, 2147483648
  %v5636 = vxor.u32 %v5604, 2147483648
  %v5637 = vxor.u32 %v5605, 2147483648
  %v5638 = vxor.u32 %v5606, 2147483648
  %v5639 = vxor.u32 %v5607, 2147483648
  %v5640 = vxor.u32 %v5608, 2147483648
  %v5641 = vxor.u32 %v5609, 2147483648
  %v5642 = vxor.u32 %v5610, 2147483648
  %v5643 = vxor.u32 %v5611, 2147483648
  %v5644 = vxor.u32 %v5612, 2147483648
  %v5645 = vxor.u32 %v5613, 2147483648
  %v5646 = vxor.u32 %v5614, 2147483648
  %v5647 = vxor.u32 %v5615, 2147483648
  %v5648 = vxor.u32 %v5616, 2147483648
  %v5649 = vxor.u32 %v5617, 2147483648
  %v5650 = vxor.u32 %v5618, 2147483648
  %v5651 = vxor.u32 %v5619, 2147483648
  %v5652 = vxor.u32 %v5620, 2147483648
  %v5653 = vxor.u32 %v5621, 2147483648
  %v5654 = vxor.u32 %v5622, 2147483648
  %v5655 = vxor.u32 %v5623, 2147483648
  %v5656 = vxor.u32 %v5624, 2147483648
  %v5657 = vxor.u32 %v5625, 2147483648
  %v5658 = vxor.u32 %v5626, 2147483648
  %v5659 = vxor.u32 %v5627, 2147483648
  %v5660 = vxor.u32 %v5628, 2147483648
  %v5661 = vxor.u32 %v5629, 2147483648
  %v5662 = vxor.u32 %v5630, 2147483648
  %v5663 = vmul.f32 %v5631, 1.442695
  %v5664 = vpow.pop %v5663
  %v5665 = vmul.f32 %v5632, 1.442695
  %v5666 = vpow.pop %v5665
  %v5667 = vmul.f32 %v5633, 1.442695
  %v5668 = vpow.pop %v5667
  %v5669 = vmul.f32 %v5634, 1.442695
  %v5670 = vpow.pop %v5669
  %v5671 = vmul.f32 %v5635, 1.442695
  %v5672 = vpow.pop %v5671
  %v5673 = vmul.f32 %v5636, 1.442695
  %v5674 = vpow.pop %v5673
  %v5675 = vmul.f32 %v5637, 1.442695
  %v5676 = vpow.pop %v5675
  %v5677 = vmul.f32 %v5638, 1.442695
  %v5678 = vpow.pop %v5677
  %v5679 = vmul.f32 %v5639, 1.442695
  %v5680 = vpow.pop %v5679
  %v5681 = vmul.f32 %v5640, 1.442695
  %v5682 = vpow.pop %v5681
  %v5683 = vmul.f32 %v5641, 1.442695
  %v5684 = vpow.pop %v5683
  %v5685 = vmul.f32 %v5642, 1.442695
  %v5686 = vpow.pop %v5685
  %v5687 = vmul.f32 %v5643, 1.442695
  %v5688 = vpow.pop %v5687
  %v5689 = vmul.f32 %v5644, 1.442695
  %v5690 = vpow.pop %v5689
  %v5691 = vmul.f32 %v5645, 1.442695
  %v5692 = vpow.pop %v5691
  %v5693 = vmul.f32 %v5646, 1.442695
  %v5694 = vpow.pop %v5693
  %v5695 = vmul.f32 %v5647, 1.442695
  %v5696 = vpow.pop %v5695
  %v5697 = vmul.f32 %v5648, 1.442695
  %v5698 = vpow.pop %v5697
  %v5699 = vmul.f32 %v5649, 1.442695
  %v5700 = vpow.pop %v5699
  %v5701 = vmul.f32 %v5650, 1.442695
  %v5702 = vpow.pop %v5701
  %v5703 = vmul.f32 %v5651, 1.442695
  %v5704 = vpow.pop %v5703
  %v5705 = vmul.f32 %v5652, 1.442695
  %v5706 = vpow.pop %v5705
  %v5707 = vmul.f32 %v5653, 1.442695
  %v5708 = vpow.pop %v5707
  %v5709 = vmul.f32 %v5654, 1.442695
  %v5710 = vpow.pop %v5709
  %v5711 = vmul.f32 %v5655, 1.442695
  %v5712 = vpow.pop %v5711
  %v5713 = vmul.f32 %v5656, 1.442695
  %v5714 = vpow.pop %v5713
  %v5715 = vmul.f32 %v5657, 1.442695
  %v5716 = vpow.pop %v5715
  %v5717 = vmul.f32 %v5658, 1.442695
  %v5718 = vpow.pop %v5717
  %v5719 = vmul.f32 %v5659, 1.442695
  %v5720 = vpow.pop %v5719
  %v5721 = vmul.f32 %v5660, 1.442695
  %v5722 = vpow.pop %v5721
  %v5723 = vmul.f32 %v5661, 1.442695
  %v5724 = vpow.pop %v5723
  %v5725 = vmul.f32 %v5662, 1.442695
  %v5726 = vpow.pop %v5725
  %v5727 = vadd.f32 %v5664, 1.0
  %v5728 = vadd.f32 %v5666, 1.0
  %v5729 = vadd.f32 %v5668, 1.0
  %v5730 = vadd.f32 %v5670, 1.0
  %v5731 = vadd.f32 %v5672, 1.0
  %v5732 = vadd.f32 %v5674, 1.0
  %v5733 = vadd.f32 %v5676, 1.0
  %v5734 = vadd.f32 %v5678, 1.0
  %v5735 = vadd.f32 %v5680, 1.0
  %v5736 = vadd.f32 %v5682, 1.0
  %v5737 = vadd.f32 %v5684, 1.0
  %v5738 = vadd.f32 %v5686, 1.0
  %v5739 = vadd.f32 %v5688, 1.0
  %v5740 = vadd.f32 %v5690, 1.0
  %v5741 = vadd.f32 %v5692, 1.0
  %v5742 = vadd.f32 %v5694, 1.0
  %v5743 = vadd.f32 %v5696, 1.0
  %v5744 = vadd.f32 %v5698, 1.0
  %v5745 = vadd.f32 %v5700, 1.0
  %v5746 = vadd.f32 %v5702, 1.0
  %v5747 = vadd.f32 %v5704, 1.0
  %v5748 = vadd.f32 %v5706, 1.0
  %v5749 = vadd.f32 %v5708, 1.0
  %v5750 = vadd.f32 %v5710, 1.0
  %v5751 = vadd.f32 %v5712, 1.0
  %v5752 = vadd.f32 %v5714, 1.0
  %v5753 = vadd.f32 %v5716, 1.0
  %v5754 = vadd.f32 %v5718, 1.0
  %v5755 = vadd.f32 %v5720, 1.0
  %v5756 = vadd.f32 %v5722, 1.0
  %v5757 = vadd.f32 %v5724, 1.0
  %v5758 = vadd.f32 %v5726, 1.0
  %v5759 = vrcp.pop %v5727
  %v5760 = vmul.f32 %v5727, %v5759
  %v5761 = vsub.f32 1.0, %v5760
  %v5762 = vmul.f32 %v5759, %v5761
  %v5763 = vadd.f32 %v5759, %v5762
  %vm5764 = vweird.f32 %v5727
  %vm5765 = vweird.f32 %v5759
  %vm5766 = vmor %vm5764, %vm5765
  %v5767 = vsel %vm5766, %v5759, %v5763
  %v5768 = vand.u32 2147483647, %v5727
  %vm5769 = vcmp.eq.f32.partialorder %v5768, 8.507059e+37
  %v5770 = vand.u32 %v5727, 2147483648
  %v5771 = vor.u32 1.1754944e-38, %v5770
  %v5772 = vsel %vm5769, %v5771, %v5767
  %v5773 = vmul.f32 1.0, %v5772
  %v5774 = vrcp.pop %v5728
  %v5775 = vmul.f32 %v5728, %v5774
  %v5776 = vsub.f32 1.0, %v5775
  %v5777 = vmul.f32 %v5774, %v5776
  %v5778 = vadd.f32 %v5774, %v5777
  %vm5779 = vweird.f32 %v5728
  %vm5780 = vweird.f32 %v5774
  %vm5781 = vmor %vm5779, %vm5780
  %v5782 = vsel %vm5781, %v5774, %v5778
  %v5783 = vand.u32 2147483647, %v5728
  %vm5784 = vcmp.eq.f32.partialorder %v5783, 8.507059e+37
  %v5785 = vand.u32 %v5728, 2147483648
  %v5786 = vor.u32 1.1754944e-38, %v5785
  %v5787 = vsel %vm5784, %v5786, %v5782
  %v5788 = vmul.f32 1.0, %v5787
  %v5789 = vrcp.pop %v5729
  %v5790 = vmul.f32 %v5729, %v5789
  %v5791 = vsub.f32 1.0, %v5790
  %v5792 = vmul.f32 %v5789, %v5791
  %v5793 = vadd.f32 %v5789, %v5792
  %vm5794 = vweird.f32 %v5729
  %vm5795 = vweird.f32 %v5789
  %vm5796 = vmor %vm5794, %vm5795
  %v5797 = vsel %vm5796, %v5789, %v5793
  %v5798 = vand.u32 2147483647, %v5729
  %vm5799 = vcmp.eq.f32.partialorder %v5798, 8.507059e+37
  %v5800 = vand.u32 %v5729, 2147483648
  %v5801 = vor.u32 1.1754944e-38, %v5800
  %v5802 = vsel %vm5799, %v5801, %v5797
  %v5803 = vmul.f32 1.0, %v5802
  %v5804 = vrcp.pop %v5730
  %v5805 = vmul.f32 %v5730, %v5804
  %v5806 = vsub.f32 1.0, %v5805
  %v5807 = vmul.f32 %v5804, %v5806
  %v5808 = vadd.f32 %v5804, %v5807
  %vm5809 = vweird.f32 %v5730
  %vm5810 = vweird.f32 %v5804
  %vm5811 = vmor %vm5809, %vm5810
  %v5812 = vsel %vm5811, %v5804, %v5808
  %v5813 = vand.u32 2147483647, %v5730
  %vm5814 = vcmp.eq.f32.partialorder %v5813, 8.507059e+37
  %v5815 = vand.u32 %v5730, 2147483648
  %v5816 = vor.u32 1.1754944e-38, %v5815
  %v5817 = vsel %vm5814, %v5816, %v5812
  %v5818 = vmul.f32 1.0, %v5817
  %v5819 = vrcp.pop %v5731
  %v5820 = vmul.f32 %v5731, %v5819
  %v5821 = vsub.f32 1.0, %v5820
  %v5822 = vmul.f32 %v5819, %v5821
  %v5823 = vadd.f32 %v5819, %v5822
  %vm5824 = vweird.f32 %v5731
  %vm5825 = vweird.f32 %v5819
  %vm5826 = vmor %vm5824, %vm5825
  %v5827 = vsel %vm5826, %v5819, %v5823
  %v5828 = vand.u32 2147483647, %v5731
  %vm5829 = vcmp.eq.f32.partialorder %v5828, 8.507059e+37
  %v5830 = vand.u32 %v5731, 2147483648
  %v5831 = vor.u32 1.1754944e-38, %v5830
  %v5832 = vsel %vm5829, %v5831, %v5827
  %v5833 = vmul.f32 1.0, %v5832
  %v5834 = vrcp.pop %v5732
  %v5835 = vmul.f32 %v5732, %v5834
  %v5836 = vsub.f32 1.0, %v5835
  %v5837 = vmul.f32 %v5834, %v5836
  %v5838 = vadd.f32 %v5834, %v5837
  %vm5839 = vweird.f32 %v5732
  %vm5840 = vweird.f32 %v5834
  %vm5841 = vmor %vm5839, %vm5840
  %v5842 = vsel %vm5841, %v5834, %v5838
  %v5843 = vand.u32 2147483647, %v5732
  %vm5844 = vcmp.eq.f32.partialorder %v5843, 8.507059e+37
  %v5845 = vand.u32 %v5732, 2147483648
  %v5846 = vor.u32 1.1754944e-38, %v5845
  %v5847 = vsel %vm5844, %v5846, %v5842
  %v5848 = vmul.f32 1.0, %v5847
  %v5849 = vrcp.pop %v5733
  %v5850 = vmul.f32 %v5733, %v5849
  %v5851 = vsub.f32 1.0, %v5850
  %v5852 = vmul.f32 %v5849, %v5851
  %v5853 = vadd.f32 %v5849, %v5852
  %vm5854 = vweird.f32 %v5733
  %vm5855 = vweird.f32 %v5849
  %vm5856 = vmor %vm5854, %vm5855
  %v5857 = vsel %vm5856, %v5849, %v5853
  %v5858 = vand.u32 2147483647, %v5733
  %vm5859 = vcmp.eq.f32.partialorder %v5858, 8.507059e+37
  %v5860 = vand.u32 %v5733, 2147483648
  %v5861 = vor.u32 1.1754944e-38, %v5860
  %v5862 = vsel %vm5859, %v5861, %v5857
  %v5863 = vmul.f32 1.0, %v5862
  %v5864 = vrcp.pop %v5734
  %v5865 = vmul.f32 %v5734, %v5864
  %v5866 = vsub.f32 1.0, %v5865
  %v5867 = vmul.f32 %v5864, %v5866
  %v5868 = vadd.f32 %v5864, %v5867
  %vm5869 = vweird.f32 %v5734
  %vm5870 = vweird.f32 %v5864
  %vm5871 = vmor %vm5869, %vm5870
  %v5872 = vsel %vm5871, %v5864, %v5868
  %v5873 = vand.u32 2147483647, %v5734
  %vm5874 = vcmp.eq.f32.partialorder %v5873, 8.507059e+37
  %v5875 = vand.u32 %v5734, 2147483648
  %v5876 = vor.u32 1.1754944e-38, %v5875
  %v5877 = vsel %vm5874, %v5876, %v5872
  %v5878 = vmul.f32 1.0, %v5877
  %v5879 = vrcp.pop %v5735
  %v5880 = vmul.f32 %v5735, %v5879
  %v5881 = vsub.f32 1.0, %v5880
  %v5882 = vmul.f32 %v5879, %v5881
  %v5883 = vadd.f32 %v5879, %v5882
  %vm5884 = vweird.f32 %v5735
  %vm5885 = vweird.f32 %v5879
  %vm5886 = vmor %vm5884, %vm5885
  %v5887 = vsel %vm5886, %v5879, %v5883
  %v5888 = vand.u32 2147483647, %v5735
  %vm5889 = vcmp.eq.f32.partialorder %v5888, 8.507059e+37
  %v5890 = vand.u32 %v5735, 2147483648
  %v5891 = vor.u32 1.1754944e-38, %v5890
  %v5892 = vsel %vm5889, %v5891, %v5887
  %v5893 = vmul.f32 1.0, %v5892
  %v5894 = vrcp.pop %v5736
  %v5895 = vmul.f32 %v5736, %v5894
  %v5896 = vsub.f32 1.0, %v5895
  %v5897 = vmul.f32 %v5894, %v5896
  %v5898 = vadd.f32 %v5894, %v5897
  %vm5899 = vweird.f32 %v5736
  %vm5900 = vweird.f32 %v5894
  %vm5901 = vmor %vm5899, %vm5900
  %v5902 = vsel %vm5901, %v5894, %v5898
  %v5903 = vand.u32 2147483647, %v5736
  %vm5904 = vcmp.eq.f32.partialorder %v5903, 8.507059e+37
  %v5905 = vand.u32 %v5736, 2147483648
  %v5906 = vor.u32 1.1754944e-38, %v5905
  %v5907 = vsel %vm5904, %v5906, %v5902
  %v5908 = vmul.f32 1.0, %v5907
  %v5909 = vrcp.pop %v5737
  %v5910 = vmul.f32 %v5737, %v5909
  %v5911 = vsub.f32 1.0, %v5910
  %v5912 = vmul.f32 %v5909, %v5911
  %v5913 = vadd.f32 %v5909, %v5912
  %vm5914 = vweird.f32 %v5737
  %vm5915 = vweird.f32 %v5909
  %vm5916 = vmor %vm5914, %vm5915
  %v5917 = vsel %vm5916, %v5909, %v5913
  %v5918 = vand.u32 2147483647, %v5737
  %vm5919 = vcmp.eq.f32.partialorder %v5918, 8.507059e+37
  %v5920 = vand.u32 %v5737, 2147483648
  %v5921 = vor.u32 1.1754944e-38, %v5920
  %v5922 = vsel %vm5919, %v5921, %v5917
  %v5923 = vmul.f32 1.0, %v5922
  %v5924 = vrcp.pop %v5738
  %v5925 = vmul.f32 %v5738, %v5924
  %v5926 = vsub.f32 1.0, %v5925
  %v5927 = vmul.f32 %v5924, %v5926
  %v5928 = vadd.f32 %v5924, %v5927
  %vm5929 = vweird.f32 %v5738
  %vm5930 = vweird.f32 %v5924
  %vm5931 = vmor %vm5929, %vm5930
  %v5932 = vsel %vm5931, %v5924, %v5928
  %v5933 = vand.u32 2147483647, %v5738
  %vm5934 = vcmp.eq.f32.partialorder %v5933, 8.507059e+37
  %v5935 = vand.u32 %v5738, 2147483648
  %v5936 = vor.u32 1.1754944e-38, %v5935
  %v5937 = vsel %vm5934, %v5936, %v5932
  %v5938 = vmul.f32 1.0, %v5937
  %v5939 = vrcp.pop %v5739
  %v5940 = vmul.f32 %v5739, %v5939
  %v5941 = vsub.f32 1.0, %v5940
  %v5942 = vmul.f32 %v5939, %v5941
  %v5943 = vadd.f32 %v5939, %v5942
  %vm5944 = vweird.f32 %v5739
  %vm5945 = vweird.f32 %v5939
  %vm5946 = vmor %vm5944, %vm5945
  %v5947 = vsel %vm5946, %v5939, %v5943
  %v5948 = vand.u32 2147483647, %v5739
  %vm5949 = vcmp.eq.f32.partialorder %v5948, 8.507059e+37
  %v5950 = vand.u32 %v5739, 2147483648
  %v5951 = vor.u32 1.1754944e-38, %v5950
  %v5952 = vsel %vm5949, %v5951, %v5947
  %v5953 = vmul.f32 1.0, %v5952
  %v5954 = vrcp.pop %v5740
  %v5955 = vmul.f32 %v5740, %v5954
  %v5956 = vsub.f32 1.0, %v5955
  %v5957 = vmul.f32 %v5954, %v5956
  %v5958 = vadd.f32 %v5954, %v5957
  %vm5959 = vweird.f32 %v5740
  %vm5960 = vweird.f32 %v5954
  %vm5961 = vmor %vm5959, %vm5960
  %v5962 = vsel %vm5961, %v5954, %v5958
  %v5963 = vand.u32 2147483647, %v5740
  %vm5964 = vcmp.eq.f32.partialorder %v5963, 8.507059e+37
  %v5965 = vand.u32 %v5740, 2147483648
  %v5966 = vor.u32 1.1754944e-38, %v5965
  %v5967 = vsel %vm5964, %v5966, %v5962
  %v5968 = vmul.f32 1.0, %v5967
  %v5969 = vrcp.pop %v5741
  %v5970 = vmul.f32 %v5741, %v5969
  %v5971 = vsub.f32 1.0, %v5970
  %v5972 = vmul.f32 %v5969, %v5971
  %v5973 = vadd.f32 %v5969, %v5972
  %vm5974 = vweird.f32 %v5741
  %vm5975 = vweird.f32 %v5969
  %vm5976 = vmor %vm5974, %vm5975
  %v5977 = vsel %vm5976, %v5969, %v5973
  %v5978 = vand.u32 2147483647, %v5741
  %vm5979 = vcmp.eq.f32.partialorder %v5978, 8.507059e+37
  %v5980 = vand.u32 %v5741, 2147483648
  %v5981 = vor.u32 1.1754944e-38, %v5980
  %v5982 = vsel %vm5979, %v5981, %v5977
  %v5983 = vmul.f32 1.0, %v5982
  %v5984 = vrcp.pop %v5742
  %v5985 = vmul.f32 %v5742, %v5984
  %v5986 = vsub.f32 1.0, %v5985
  %v5987 = vmul.f32 %v5984, %v5986
  %v5988 = vadd.f32 %v5984, %v5987
  %vm5989 = vweird.f32 %v5742
  %vm5990 = vweird.f32 %v5984
  %vm5991 = vmor %vm5989, %vm5990
  %v5992 = vsel %vm5991, %v5984, %v5988
  %v5993 = vand.u32 2147483647, %v5742
  %vm5994 = vcmp.eq.f32.partialorder %v5993, 8.507059e+37
  %v5995 = vand.u32 %v5742, 2147483648
  %v5996 = vor.u32 1.1754944e-38, %v5995
  %v5997 = vsel %vm5994, %v5996, %v5992
  %v5998 = vmul.f32 1.0, %v5997
  %v5999 = vrcp.pop %v5743
  %v6000 = vmul.f32 %v5743, %v5999
  %v6001 = vsub.f32 1.0, %v6000
  %v6002 = vmul.f32 %v5999, %v6001
  %v6003 = vadd.f32 %v5999, %v6002
  %vm6004 = vweird.f32 %v5743
  %vm6005 = vweird.f32 %v5999
  %vm6006 = vmor %vm6004, %vm6005
  %v6007 = vsel %vm6006, %v5999, %v6003
  %v6008 = vand.u32 2147483647, %v5743
  %vm6009 = vcmp.eq.f32.partialorder %v6008, 8.507059e+37
  %v6010 = vand.u32 %v5743, 2147483648
  %v6011 = vor.u32 1.1754944e-38, %v6010
  %v6012 = vsel %vm6009, %v6011, %v6007
  %v6013 = vmul.f32 1.0, %v6012
  %v6014 = vrcp.pop %v5744
  %v6015 = vmul.f32 %v5744, %v6014
  %v6016 = vsub.f32 1.0, %v6015
  %v6017 = vmul.f32 %v6014, %v6016
  %v6018 = vadd.f32 %v6014, %v6017
  %vm6019 = vweird.f32 %v5744
  %vm6020 = vweird.f32 %v6014
  %vm6021 = vmor %vm6019, %vm6020
  %v6022 = vsel %vm6021, %v6014, %v6018
  %v6023 = vand.u32 2147483647, %v5744
  %vm6024 = vcmp.eq.f32.partialorder %v6023, 8.507059e+37
  %v6025 = vand.u32 %v5744, 2147483648
  %v6026 = vor.u32 1.1754944e-38, %v6025
  %v6027 = vsel %vm6024, %v6026, %v6022
  %v6028 = vmul.f32 1.0, %v6027
  %v6029 = vrcp.pop %v5745
  %v6030 = vmul.f32 %v5745, %v6029
  %v6031 = vsub.f32 1.0, %v6030
  %v6032 = vmul.f32 %v6029, %v6031
  %v6033 = vadd.f32 %v6029, %v6032
  %vm6034 = vweird.f32 %v5745
  %vm6035 = vweird.f32 %v6029
  %vm6036 = vmor %vm6034, %vm6035
  %v6037 = vsel %vm6036, %v6029, %v6033
  %v6038 = vand.u32 2147483647, %v5745
  %vm6039 = vcmp.eq.f32.partialorder %v6038, 8.507059e+37
  %v6040 = vand.u32 %v5745, 2147483648
  %v6041 = vor.u32 1.1754944e-38, %v6040
  %v6042 = vsel %vm6039, %v6041, %v6037
  %v6043 = vmul.f32 1.0, %v6042
  %v6044 = vrcp.pop %v5746
  %v6045 = vmul.f32 %v5746, %v6044
  %v6046 = vsub.f32 1.0, %v6045
  %v6047 = vmul.f32 %v6044, %v6046
  %v6048 = vadd.f32 %v6044, %v6047
  %vm6049 = vweird.f32 %v5746
  %vm6050 = vweird.f32 %v6044
  %vm6051 = vmor %vm6049, %vm6050
  %v6052 = vsel %vm6051, %v6044, %v6048
  %v6053 = vand.u32 2147483647, %v5746
  %vm6054 = vcmp.eq.f32.partialorder %v6053, 8.507059e+37
  %v6055 = vand.u32 %v5746, 2147483648
  %v6056 = vor.u32 1.1754944e-38, %v6055
  %v6057 = vsel %vm6054, %v6056, %v6052
  %v6058 = vmul.f32 1.0, %v6057
  %v6059 = vrcp.pop %v5747
  %v6060 = vmul.f32 %v5747, %v6059
  %v6061 = vsub.f32 1.0, %v6060
  %v6062 = vmul.f32 %v6059, %v6061
  %v6063 = vadd.f32 %v6059, %v6062
  %vm6064 = vweird.f32 %v5747
  %vm6065 = vweird.f32 %v6059
  %vm6066 = vmor %vm6064, %vm6065
  %v6067 = vsel %vm6066, %v6059, %v6063
  %v6068 = vand.u32 2147483647, %v5747
  %vm6069 = vcmp.eq.f32.partialorder %v6068, 8.507059e+37
  %v6070 = vand.u32 %v5747, 2147483648
  %v6071 = vor.u32 1.1754944e-38, %v6070
  %v6072 = vsel %vm6069, %v6071, %v6067
  %v6073 = vmul.f32 1.0, %v6072
  %v6074 = vrcp.pop %v5748
  %v6075 = vmul.f32 %v5748, %v6074
  %v6076 = vsub.f32 1.0, %v6075
  %v6077 = vmul.f32 %v6074, %v6076
  %v6078 = vadd.f32 %v6074, %v6077
  %vm6079 = vweird.f32 %v5748
  %vm6080 = vweird.f32 %v6074
  %vm6081 = vmor %vm6079, %vm6080
  %v6082 = vsel %vm6081, %v6074, %v6078
  %v6083 = vand.u32 2147483647, %v5748
  %vm6084 = vcmp.eq.f32.partialorder %v6083, 8.507059e+37
  %v6085 = vand.u32 %v5748, 2147483648
  %v6086 = vor.u32 1.1754944e-38, %v6085
  %v6087 = vsel %vm6084, %v6086, %v6082
  %v6088 = vmul.f32 1.0, %v6087
  %v6089 = vrcp.pop %v5749
  %v6090 = vmul.f32 %v5749, %v6089
  %v6091 = vsub.f32 1.0, %v6090
  %v6092 = vmul.f32 %v6089, %v6091
  %v6093 = vadd.f32 %v6089, %v6092
  %vm6094 = vweird.f32 %v5749
  %vm6095 = vweird.f32 %v6089
  %vm6096 = vmor %vm6094, %vm6095
  %v6097 = vsel %vm6096, %v6089, %v6093
  %v6098 = vand.u32 2147483647, %v5749
  %vm6099 = vcmp.eq.f32.partialorder %v6098, 8.507059e+37
  %v6100 = vand.u32 %v5749, 2147483648
  %v6101 = vor.u32 1.1754944e-38, %v6100
  %v6102 = vsel %vm6099, %v6101, %v6097
  %v6103 = vmul.f32 1.0, %v6102
  %v6104 = vrcp.pop %v5750
  %v6105 = vmul.f32 %v5750, %v6104
  %v6106 = vsub.f32 1.0, %v6105
  %v6107 = vmul.f32 %v6104, %v6106
  %v6108 = vadd.f32 %v6104, %v6107
  %vm6109 = vweird.f32 %v5750
  %vm6110 = vweird.f32 %v6104
  %vm6111 = vmor %vm6109, %vm6110
  %v6112 = vsel %vm6111, %v6104, %v6108
  %v6113 = vand.u32 2147483647, %v5750
  %vm6114 = vcmp.eq.f32.partialorder %v6113, 8.507059e+37
  %v6115 = vand.u32 %v5750, 2147483648
  %v6116 = vor.u32 1.1754944e-38, %v6115
  %v6117 = vsel %vm6114, %v6116, %v6112
  %v6118 = vmul.f32 1.0, %v6117
  %v6119 = vrcp.pop %v5751
  %v6120 = vmul.f32 %v5751, %v6119
  %v6121 = vsub.f32 1.0, %v6120
  %v6122 = vmul.f32 %v6119, %v6121
  %v6123 = vadd.f32 %v6119, %v6122
  %vm6124 = vweird.f32 %v5751
  %vm6125 = vweird.f32 %v6119
  %vm6126 = vmor %vm6124, %vm6125
  %v6127 = vsel %vm6126, %v6119, %v6123
  %v6128 = vand.u32 2147483647, %v5751
  %vm6129 = vcmp.eq.f32.partialorder %v6128, 8.507059e+37
  %v6130 = vand.u32 %v5751, 2147483648
  %v6131 = vor.u32 1.1754944e-38, %v6130
  %v6132 = vsel %vm6129, %v6131, %v6127
  %v6133 = vmul.f32 1.0, %v6132
  %v6134 = vrcp.pop %v5752
  %v6135 = vmul.f32 %v5752, %v6134
  %v6136 = vsub.f32 1.0, %v6135
  %v6137 = vmul.f32 %v6134, %v6136
  %v6138 = vadd.f32 %v6134, %v6137
  %vm6139 = vweird.f32 %v5752
  %vm6140 = vweird.f32 %v6134
  %vm6141 = vmor %vm6139, %vm6140
  %v6142 = vsel %vm6141, %v6134, %v6138
  %v6143 = vand.u32 2147483647, %v5752
  %vm6144 = vcmp.eq.f32.partialorder %v6143, 8.507059e+37
  %v6145 = vand.u32 %v5752, 2147483648
  %v6146 = vor.u32 1.1754944e-38, %v6145
  %v6147 = vsel %vm6144, %v6146, %v6142
  %v6148 = vmul.f32 1.0, %v6147
  %v6149 = vrcp.pop %v5753
  %v6150 = vmul.f32 %v5753, %v6149
  %v6151 = vsub.f32 1.0, %v6150
  %v6152 = vmul.f32 %v6149, %v6151
  %v6153 = vadd.f32 %v6149, %v6152
  %vm6154 = vweird.f32 %v5753
  %vm6155 = vweird.f32 %v6149
  %vm6156 = vmor %vm6154, %vm6155
  %v6157 = vsel %vm6156, %v6149, %v6153
  %v6158 = vand.u32 2147483647, %v5753
  %vm6159 = vcmp.eq.f32.partialorder %v6158, 8.507059e+37
  %v6160 = vand.u32 %v5753, 2147483648
  %v6161 = vor.u32 1.1754944e-38, %v6160
  %v6162 = vsel %vm6159, %v6161, %v6157
  %v6163 = vmul.f32 1.0, %v6162
  %v6164 = vrcp.pop %v5754
  %v6165 = vmul.f32 %v5754, %v6164
  %v6166 = vsub.f32 1.0, %v6165
  %v6167 = vmul.f32 %v6164, %v6166
  %v6168 = vadd.f32 %v6164, %v6167
  %vm6169 = vweird.f32 %v5754
  %vm6170 = vweird.f32 %v6164
  %vm6171 = vmor %vm6169, %vm6170
  %v6172 = vsel %vm6171, %v6164, %v6168
  %v6173 = vand.u32 2147483647, %v5754
  %vm6174 = vcmp.eq.f32.partialorder %v6173, 8.507059e+37
  %v6175 = vand.u32 %v5754, 2147483648
  %v6176 = vor.u32 1.1754944e-38, %v6175
  %v6177 = vsel %vm6174, %v6176, %v6172
  %v6178 = vmul.f32 1.0, %v6177
  %v6179 = vrcp.pop %v5755
  %v6180 = vmul.f32 %v5755, %v6179
  %v6181 = vsub.f32 1.0, %v6180
  %v6182 = vmul.f32 %v6179, %v6181
  %v6183 = vadd.f32 %v6179, %v6182
  %vm6184 = vweird.f32 %v5755
  %vm6185 = vweird.f32 %v6179
  %vm6186 = vmor %vm6184, %vm6185
  %v6187 = vsel %vm6186, %v6179, %v6183
  %v6188 = vand.u32 2147483647, %v5755
  %vm6189 = vcmp.eq.f32.partialorder %v6188, 8.507059e+37
  %v6190 = vand.u32 %v5755, 2147483648
  %v6191 = vor.u32 1.1754944e-38, %v6190
  %v6192 = vsel %vm6189, %v6191, %v6187
  %v6193 = vmul.f32 1.0, %v6192
  %v6194 = vrcp.pop %v5756
  %v6195 = vmul.f32 %v5756, %v6194
  %v6196 = vsub.f32 1.0, %v6195
  %v6197 = vmul.f32 %v6194, %v6196
  %v6198 = vadd.f32 %v6194, %v6197
  %vm6199 = vweird.f32 %v5756
  %vm6200 = vweird.f32 %v6194
  %vm6201 = vmor %vm6199, %vm6200
  %v6202 = vsel %vm6201, %v6194, %v6198
  %v6203 = vand.u32 2147483647, %v5756
  %vm6204 = vcmp.eq.f32.partialorder %v6203, 8.507059e+37
  %v6205 = vand.u32 %v5756, 2147483648
  %v6206 = vor.u32 1.1754944e-38, %v6205
  %v6207 = vsel %vm6204, %v6206, %v6202
  %v6208 = vmul.f32 1.0, %v6207
  %v6209 = vrcp.pop %v5757
  %v6210 = vmul.f32 %v5757, %v6209
  %v6211 = vsub.f32 1.0, %v6210
  %v6212 = vmul.f32 %v6209, %v6211
  %v6213 = vadd.f32 %v6209, %v6212
  %vm6214 = vweird.f32 %v5757
  %vm6215 = vweird.f32 %v6209
  %vm6216 = vmor %vm6214, %vm6215
  %v6217 = vsel %vm6216, %v6209, %v6213
  %v6218 = vand.u32 2147483647, %v5757
  %vm6219 = vcmp.eq.f32.partialorder %v6218, 8.507059e+37
  %v6220 = vand.u32 %v5757, 2147483648
  %v6221 = vor.u32 1.1754944e-38, %v6220
  %v6222 = vsel %vm6219, %v6221, %v6217
  %v6223 = vmul.f32 1.0, %v6222
  %v6224 = vrcp.pop %v5758
  %v6225 = vmul.f32 %v5758, %v6224
  %v6226 = vsub.f32 1.0, %v6225
  %v6227 = vmul.f32 %v6224, %v6226
  %v6228 = vadd.f32 %v6224, %v6227
  %vm6229 = vweird.f32 %v5758
  %vm6230 = vweird.f32 %v6224
  %vm6231 = vmor %vm6229, %vm6230
  %v6232 = vsel %vm6231, %v6224, %v6228
  %v6233 = vand.u32 2147483647, %v5758
  %vm6234 = vcmp.eq.f32.partialorder %v6233, 8.507059e+37
  %v6235 = vand.u32 %v5758, 2147483648
  %v6236 = vor.u32 1.1754944e-38, %v6235
  %v6237 = vsel %vm6234, %v6236, %v6232
  %v6238 = vmul.f32 1.0, %v6237
  %v6239 = vadd.f32 %v5164, %v5431
  %v6240 = vadd.f32 %v5166, %v5433
  %v6241 = vadd.f32 %v5169, %v5436
  %v6242 = vadd.f32 %v5171, %v5438
  %v6243 = vadd.f32 %v5174, %v5441
  %v6244 = vadd.f32 %v5176, %v5443
  %v6245 = vadd.f32 %v5179, %v5446
  %v6246 = vadd.f32 %v5181, %v5448
  %v6247 = vadd.f32 %v5184, %v5451
  %v6248 = vadd.f32 %v5186, %v5453
  %v6249 = vadd.f32 %v5189, %v5456
  %v6250 = vadd.f32 %v5191, %v5458
  %v6251 = vadd.f32 %v5194, %v5461
  %v6252 = vadd.f32 %v5196, %v5463
  %v6253 = vadd.f32 %v5199, %v5466
  %v6254 = vadd.f32 %v5201, %v5468
  %v6255 = vadd.f32 %v5204, %v5471
  %v6256 = vadd.f32 %v5206, %v5473
  %v6257 = vadd.f32 %v5209, %v5476
  %v6258 = vadd.f32 %v5211, %v5478
  %v6259 = vadd.f32 %v5214, %v5481
  %v6260 = vadd.f32 %v5216, %v5483
  %v6261 = vadd.f32 %v5219, %v5486
  %v6262 = vadd.f32 %v5221, %v5488
  %v6263 = vadd.f32 %v5224, %v5491
  %v6264 = vadd.f32 %v5226, %v5493
  %v6265 = vadd.f32 %v5229, %v5496
  %v6266 = vadd.f32 %v5231, %v5498
  %v6267 = vadd.f32 %v5234, %v5501
  %v6268 = vadd.f32 %v5236, %v5503
  %v6269 = vadd.f32 %v5239, %v5506
  %v6270 = vadd.f32 %v5241, %v5508
  %v6271 = vxor.u32 %v6239, 2147483648
  %v6272 = vxor.u32 %v6240, 2147483648
  %v6273 = vxor.u32 %v6241, 2147483648
  %v6274 = vxor.u32 %v6242, 2147483648
  %v6275 = vxor.u32 %v6243, 2147483648
  %v6276 = vxor.u32 %v6244, 2147483648
  %v6277 = vxor.u32 %v6245, 2147483648
  %v6278 = vxor.u32 %v6246, 2147483648
  %v6279 = vxor.u32 %v6247, 2147483648
  %v6280 = vxor.u32 %v6248, 2147483648
  %v6281 = vxor.u32 %v6249, 2147483648
  %v6282 = vxor.u32 %v6250, 2147483648
  %v6283 = vxor.u32 %v6251, 2147483648
  %v6284 = vxor.u32 %v6252, 2147483648
  %v6285 = vxor.u32 %v6253, 2147483648
  %v6286 = vxor.u32 %v6254, 2147483648
  %v6287 = vxor.u32 %v6255, 2147483648
  %v6288 = vxor.u32 %v6256, 2147483648
  %v6289 = vxor.u32 %v6257, 2147483648
  %v6290 = vxor.u32 %v6258, 2147483648
  %v6291 = vxor.u32 %v6259, 2147483648
  %v6292 = vxor.u32 %v6260, 2147483648
  %v6293 = vxor.u32 %v6261, 2147483648
  %v6294 = vxor.u32 %v6262, 2147483648
  %v6295 = vxor.u32 %v6263, 2147483648
  %v6296 = vxor.u32 %v6264, 2147483648
  %v6297 = vxor.u32 %v6265, 2147483648
  %v6298 = vxor.u32 %v6266, 2147483648
  %v6299 = vxor.u32 %v6267, 2147483648
  %v6300 = vxor.u32 %v6268, 2147483648
  %v6301 = vxor.u32 %v6269, 2147483648
  %v6302 = vxor.u32 %v6270, 2147483648
  %v6303 = vmul.f32 %v6271, 1.442695
  %v6304 = vpow.pop %v6303
  %v6305 = vmul.f32 %v6272, 1.442695
  %v6306 = vpow.pop %v6305
  %v6307 = vmul.f32 %v6273, 1.442695
  %v6308 = vpow.pop %v6307
  %v6309 = vmul.f32 %v6274, 1.442695
  %v6310 = vpow.pop %v6309
  %v6311 = vmul.f32 %v6275, 1.442695
  %v6312 = vpow.pop %v6311
  %v6313 = vmul.f32 %v6276, 1.442695
  %v6314 = vpow.pop %v6313
  %v6315 = vmul.f32 %v6277, 1.442695
  %v6316 = vpow.pop %v6315
  %v6317 = vmul.f32 %v6278, 1.442695
  %v6318 = vpow.pop %v6317
  %v6319 = vmul.f32 %v6279, 1.442695
  %v6320 = vpow.pop %v6319
  %v6321 = vmul.f32 %v6280, 1.442695
  %v6322 = vpow.pop %v6321
  %v6323 = vmul.f32 %v6281, 1.442695
  %v6324 = vpow.pop %v6323
  %v6325 = vmul.f32 %v6282, 1.442695
  %v6326 = vpow.pop %v6325
  %v6327 = vmul.f32 %v6283, 1.442695
  %v6328 = vpow.pop %v6327
  %v6329 = vmul.f32 %v6284, 1.442695
  %v6330 = vpow.pop %v6329
  %v6331 = vmul.f32 %v6285, 1.442695
  %v6332 = vpow.pop %v6331
  %v6333 = vmul.f32 %v6286, 1.442695
  %v6334 = vpow.pop %v6333
  %v6335 = vmul.f32 %v6287, 1.442695
  %v6336 = vpow.pop %v6335
  %v6337 = vmul.f32 %v6288, 1.442695
  %v6338 = vpow.pop %v6337
  %v6339 = vmul.f32 %v6289, 1.442695
  %v6340 = vpow.pop %v6339
  %v6341 = vmul.f32 %v6290, 1.442695
  %v6342 = vpow.pop %v6341
  %v6343 = vmul.f32 %v6291, 1.442695
  %v6344 = vpow.pop %v6343
  %v6345 = vmul.f32 %v6292, 1.442695
  %v6346 = vpow.pop %v6345
  %v6347 = vmul.f32 %v6293, 1.442695
  %v6348 = vpow.pop %v6347
  %v6349 = vmul.f32 %v6294, 1.442695
  %v6350 = vpow.pop %v6349
  %v6351 = vmul.f32 %v6295, 1.442695
  %v6352 = vpow.pop %v6351
  %v6353 = vmul.f32 %v6296, 1.442695
  %v6354 = vpow.pop %v6353
  %v6355 = vmul.f32 %v6297, 1.442695
  %v6356 = vpow.pop %v6355
  %v6357 = vmul.f32 %v6298, 1.442695
  %v6358 = vpow.pop %v6357
  %v6359 = vmul.f32 %v6299, 1.442695
  %v6360 = vpow.pop %v6359
  %v6361 = vmul.f32 %v6300, 1.442695
  %v6362 = vpow.pop %v6361
  %v6363 = vmul.f32 %v6301, 1.442695
  %v6364 = vpow.pop %v6363
  %v6365 = vmul.f32 %v6302, 1.442695
  %v6366 = vpow.pop %v6365
  %v6367 = vadd.f32 %v6304, 1.0
  %v6368 = vadd.f32 %v6306, 1.0
  %v6369 = vadd.f32 %v6308, 1.0
  %v6370 = vadd.f32 %v6310, 1.0
  %v6371 = vadd.f32 %v6312, 1.0
  %v6372 = vadd.f32 %v6314, 1.0
  %v6373 = vadd.f32 %v6316, 1.0
  %v6374 = vadd.f32 %v6318, 1.0
  %v6375 = vadd.f32 %v6320, 1.0
  %v6376 = vadd.f32 %v6322, 1.0
  %v6377 = vadd.f32 %v6324, 1.0
  %v6378 = vadd.f32 %v6326, 1.0
  %v6379 = vadd.f32 %v6328, 1.0
  %v6380 = vadd.f32 %v6330, 1.0
  %v6381 = vadd.f32 %v6332, 1.0
  %v6382 = vadd.f32 %v6334, 1.0
  %v6383 = vadd.f32 %v6336, 1.0
  %v6384 = vadd.f32 %v6338, 1.0
  %v6385 = vadd.f32 %v6340, 1.0
  %v6386 = vadd.f32 %v6342, 1.0
  %v6387 = vadd.f32 %v6344, 1.0
  %v6388 = vadd.f32 %v6346, 1.0
  %v6389 = vadd.f32 %v6348, 1.0
  %v6390 = vadd.f32 %v6350, 1.0
  %v6391 = vadd.f32 %v6352, 1.0
  %v6392 = vadd.f32 %v6354, 1.0
  %v6393 = vadd.f32 %v6356, 1.0
  %v6394 = vadd.f32 %v6358, 1.0
  %v6395 = vadd.f32 %v6360, 1.0
  %v6396 = vadd.f32 %v6362, 1.0
  %v6397 = vadd.f32 %v6364, 1.0
  %v6398 = vadd.f32 %v6366, 1.0
  %v6399 = vrcp.pop %v6367
  %v6400 = vmul.f32 %v6367, %v6399
  %v6401 = vsub.f32 1.0, %v6400
  %v6402 = vmul.f32 %v6399, %v6401
  %v6403 = vadd.f32 %v6399, %v6402
  %vm6404 = vweird.f32 %v6367
  %vm6405 = vweird.f32 %v6399
  %vm6406 = vmor %vm6404, %vm6405
  %v6407 = vsel %vm6406, %v6399, %v6403
  %v6408 = vand.u32 2147483647, %v6367
  %vm6409 = vcmp.eq.f32.partialorder %v6408, 8.507059e+37
  %v6410 = vand.u32 %v6367, 2147483648
  %v6411 = vor.u32 1.1754944e-38, %v6410
  %v6412 = vsel %vm6409, %v6411, %v6407
  %v6413 = vmul.f32 1.0, %v6412
  %v6414 = vrcp.pop %v6368
  %v6415 = vmul.f32 %v6368, %v6414
  %v6416 = vsub.f32 1.0, %v6415
  %v6417 = vmul.f32 %v6414, %v6416
  %v6418 = vadd.f32 %v6414, %v6417
  %vm6419 = vweird.f32 %v6368
  %vm6420 = vweird.f32 %v6414
  %vm6421 = vmor %vm6419, %vm6420
  %v6422 = vsel %vm6421, %v6414, %v6418
  %v6423 = vand.u32 2147483647, %v6368
  %vm6424 = vcmp.eq.f32.partialorder %v6423, 8.507059e+37
  %v6425 = vand.u32 %v6368, 2147483648
  %v6426 = vor.u32 1.1754944e-38, %v6425
  %v6427 = vsel %vm6424, %v6426, %v6422
  %v6428 = vmul.f32 1.0, %v6427
  %v6429 = vrcp.pop %v6369
  %v6430 = vmul.f32 %v6369, %v6429
  %v6431 = vsub.f32 1.0, %v6430
  %v6432 = vmul.f32 %v6429, %v6431
  %v6433 = vadd.f32 %v6429, %v6432
  %vm6434 = vweird.f32 %v6369
  %vm6435 = vweird.f32 %v6429
  %vm6436 = vmor %vm6434, %vm6435
  %v6437 = vsel %vm6436, %v6429, %v6433
  %v6438 = vand.u32 2147483647, %v6369
  %vm6439 = vcmp.eq.f32.partialorder %v6438, 8.507059e+37
  %v6440 = vand.u32 %v6369, 2147483648
  %v6441 = vor.u32 1.1754944e-38, %v6440
  %v6442 = vsel %vm6439, %v6441, %v6437
  %v6443 = vmul.f32 1.0, %v6442
  %v6444 = vrcp.pop %v6370
  %v6445 = vmul.f32 %v6370, %v6444
  %v6446 = vsub.f32 1.0, %v6445
  %v6447 = vmul.f32 %v6444, %v6446
  %v6448 = vadd.f32 %v6444, %v6447
  %vm6449 = vweird.f32 %v6370
  %vm6450 = vweird.f32 %v6444
  %vm6451 = vmor %vm6449, %vm6450
  %v6452 = vsel %vm6451, %v6444, %v6448
  %v6453 = vand.u32 2147483647, %v6370
  %vm6454 = vcmp.eq.f32.partialorder %v6453, 8.507059e+37
  %v6455 = vand.u32 %v6370, 2147483648
  %v6456 = vor.u32 1.1754944e-38, %v6455
  %v6457 = vsel %vm6454, %v6456, %v6452
  %v6458 = vmul.f32 1.0, %v6457
  %v6459 = vrcp.pop %v6371
  %v6460 = vmul.f32 %v6371, %v6459
  %v6461 = vsub.f32 1.0, %v6460
  %v6462 = vmul.f32 %v6459, %v6461
  %v6463 = vadd.f32 %v6459, %v6462
  %vm6464 = vweird.f32 %v6371
  %vm6465 = vweird.f32 %v6459
  %vm6466 = vmor %vm6464, %vm6465
  %v6467 = vsel %vm6466, %v6459, %v6463
  %v6468 = vand.u32 2147483647, %v6371
  %vm6469 = vcmp.eq.f32.partialorder %v6468, 8.507059e+37
  %v6470 = vand.u32 %v6371, 2147483648
  %v6471 = vor.u32 1.1754944e-38, %v6470
  %v6472 = vsel %vm6469, %v6471, %v6467
  %v6473 = vmul.f32 1.0, %v6472
  %v6474 = vrcp.pop %v6372
  %v6475 = vmul.f32 %v6372, %v6474
  %v6476 = vsub.f32 1.0, %v6475
  %v6477 = vmul.f32 %v6474, %v6476
  %v6478 = vadd.f32 %v6474, %v6477
  %vm6479 = vweird.f32 %v6372
  %vm6480 = vweird.f32 %v6474
  %vm6481 = vmor %vm6479, %vm6480
  %v6482 = vsel %vm6481, %v6474, %v6478
  %v6483 = vand.u32 2147483647, %v6372
  %vm6484 = vcmp.eq.f32.partialorder %v6483, 8.507059e+37
  %v6485 = vand.u32 %v6372, 2147483648
  %v6486 = vor.u32 1.1754944e-38, %v6485
  %v6487 = vsel %vm6484, %v6486, %v6482
  %v6488 = vmul.f32 1.0, %v6487
  %v6489 = vrcp.pop %v6373
  %v6490 = vmul.f32 %v6373, %v6489
  %v6491 = vsub.f32 1.0, %v6490
  %v6492 = vmul.f32 %v6489, %v6491
  %v6493 = vadd.f32 %v6489, %v6492
  %vm6494 = vweird.f32 %v6373
  %vm6495 = vweird.f32 %v6489
  %vm6496 = vmor %vm6494, %vm6495
  %v6497 = vsel %vm6496, %v6489, %v6493
  %v6498 = vand.u32 2147483647, %v6373
  %vm6499 = vcmp.eq.f32.partialorder %v6498, 8.507059e+37
  %v6500 = vand.u32 %v6373, 2147483648
  %v6501 = vor.u32 1.1754944e-38, %v6500
  %v6502 = vsel %vm6499, %v6501, %v6497
  %v6503 = vmul.f32 1.0, %v6502
  %v6504 = vrcp.pop %v6374
  %v6505 = vmul.f32 %v6374, %v6504
  %v6506 = vsub.f32 1.0, %v6505
  %v6507 = vmul.f32 %v6504, %v6506
  %v6508 = vadd.f32 %v6504, %v6507
  %vm6509 = vweird.f32 %v6374
  %vm6510 = vweird.f32 %v6504
  %vm6511 = vmor %vm6509, %vm6510
  %v6512 = vsel %vm6511, %v6504, %v6508
  %v6513 = vand.u32 2147483647, %v6374
  %vm6514 = vcmp.eq.f32.partialorder %v6513, 8.507059e+37
  %v6515 = vand.u32 %v6374, 2147483648
  %v6516 = vor.u32 1.1754944e-38, %v6515
  %v6517 = vsel %vm6514, %v6516, %v6512
  %v6518 = vmul.f32 1.0, %v6517
  %v6519 = vrcp.pop %v6375
  %v6520 = vmul.f32 %v6375, %v6519
  %v6521 = vsub.f32 1.0, %v6520
  %v6522 = vmul.f32 %v6519, %v6521
  %v6523 = vadd.f32 %v6519, %v6522
  %vm6524 = vweird.f32 %v6375
  %vm6525 = vweird.f32 %v6519
  %vm6526 = vmor %vm6524, %vm6525
  %v6527 = vsel %vm6526, %v6519, %v6523
  %v6528 = vand.u32 2147483647, %v6375
  %vm6529 = vcmp.eq.f32.partialorder %v6528, 8.507059e+37
  %v6530 = vand.u32 %v6375, 2147483648
  %v6531 = vor.u32 1.1754944e-38, %v6530
  %v6532 = vsel %vm6529, %v6531, %v6527
  %v6533 = vmul.f32 1.0, %v6532
  %v6534 = vrcp.pop %v6376
  %v6535 = vmul.f32 %v6376, %v6534
  %v6536 = vsub.f32 1.0, %v6535
  %v6537 = vmul.f32 %v6534, %v6536
  %v6538 = vadd.f32 %v6534, %v6537
  %vm6539 = vweird.f32 %v6376
  %vm6540 = vweird.f32 %v6534
  %vm6541 = vmor %vm6539, %vm6540
  %v6542 = vsel %vm6541, %v6534, %v6538
  %v6543 = vand.u32 2147483647, %v6376
  %vm6544 = vcmp.eq.f32.partialorder %v6543, 8.507059e+37
  %v6545 = vand.u32 %v6376, 2147483648
  %v6546 = vor.u32 1.1754944e-38, %v6545
  %v6547 = vsel %vm6544, %v6546, %v6542
  %v6548 = vmul.f32 1.0, %v6547
  %v6549 = vrcp.pop %v6377
  %v6550 = vmul.f32 %v6377, %v6549
  %v6551 = vsub.f32 1.0, %v6550
  %v6552 = vmul.f32 %v6549, %v6551
  %v6553 = vadd.f32 %v6549, %v6552
  %vm6554 = vweird.f32 %v6377
  %vm6555 = vweird.f32 %v6549
  %vm6556 = vmor %vm6554, %vm6555
  %v6557 = vsel %vm6556, %v6549, %v6553
  %v6558 = vand.u32 2147483647, %v6377
  %vm6559 = vcmp.eq.f32.partialorder %v6558, 8.507059e+37
  %v6560 = vand.u32 %v6377, 2147483648
  %v6561 = vor.u32 1.1754944e-38, %v6560
  %v6562 = vsel %vm6559, %v6561, %v6557
  %v6563 = vmul.f32 1.0, %v6562
  %v6564 = vrcp.pop %v6378
  %v6565 = vmul.f32 %v6378, %v6564
  %v6566 = vsub.f32 1.0, %v6565
  %v6567 = vmul.f32 %v6564, %v6566
  %v6568 = vadd.f32 %v6564, %v6567
  %vm6569 = vweird.f32 %v6378
  %vm6570 = vweird.f32 %v6564
  %vm6571 = vmor %vm6569, %vm6570
  %v6572 = vsel %vm6571, %v6564, %v6568
  %v6573 = vand.u32 2147483647, %v6378
  %vm6574 = vcmp.eq.f32.partialorder %v6573, 8.507059e+37
  %v6575 = vand.u32 %v6378, 2147483648
  %v6576 = vor.u32 1.1754944e-38, %v6575
  %v6577 = vsel %vm6574, %v6576, %v6572
  %v6578 = vmul.f32 1.0, %v6577
  %v6579 = vrcp.pop %v6379
  %v6580 = vmul.f32 %v6379, %v6579
  %v6581 = vsub.f32 1.0, %v6580
  %v6582 = vmul.f32 %v6579, %v6581
  %v6583 = vadd.f32 %v6579, %v6582
  %vm6584 = vweird.f32 %v6379
  %vm6585 = vweird.f32 %v6579
  %vm6586 = vmor %vm6584, %vm6585
  %v6587 = vsel %vm6586, %v6579, %v6583
  %v6588 = vand.u32 2147483647, %v6379
  %vm6589 = vcmp.eq.f32.partialorder %v6588, 8.507059e+37
  %v6590 = vand.u32 %v6379, 2147483648
  %v6591 = vor.u32 1.1754944e-38, %v6590
  %v6592 = vsel %vm6589, %v6591, %v6587
  %v6593 = vmul.f32 1.0, %v6592
  %v6594 = vrcp.pop %v6380
  %v6595 = vmul.f32 %v6380, %v6594
  %v6596 = vsub.f32 1.0, %v6595
  %v6597 = vmul.f32 %v6594, %v6596
  %v6598 = vadd.f32 %v6594, %v6597
  %vm6599 = vweird.f32 %v6380
  %vm6600 = vweird.f32 %v6594
  %vm6601 = vmor %vm6599, %vm6600
  %v6602 = vsel %vm6601, %v6594, %v6598
  %v6603 = vand.u32 2147483647, %v6380
  %vm6604 = vcmp.eq.f32.partialorder %v6603, 8.507059e+37
  %v6605 = vand.u32 %v6380, 2147483648
  %v6606 = vor.u32 1.1754944e-38, %v6605
  %v6607 = vsel %vm6604, %v6606, %v6602
  %v6608 = vmul.f32 1.0, %v6607
  %v6609 = vrcp.pop %v6381
  %v6610 = vmul.f32 %v6381, %v6609
  %v6611 = vsub.f32 1.0, %v6610
  %v6612 = vmul.f32 %v6609, %v6611
  %v6613 = vadd.f32 %v6609, %v6612
  %vm6614 = vweird.f32 %v6381
  %vm6615 = vweird.f32 %v6609
  %vm6616 = vmor %vm6614, %vm6615
  %v6617 = vsel %vm6616, %v6609, %v6613
  %v6618 = vand.u32 2147483647, %v6381
  %vm6619 = vcmp.eq.f32.partialorder %v6618, 8.507059e+37
  %v6620 = vand.u32 %v6381, 2147483648
  %v6621 = vor.u32 1.1754944e-38, %v6620
  %v6622 = vsel %vm6619, %v6621, %v6617
  %v6623 = vmul.f32 1.0, %v6622
  %v6624 = vrcp.pop %v6382
  %v6625 = vmul.f32 %v6382, %v6624
  %v6626 = vsub.f32 1.0, %v6625
  %v6627 = vmul.f32 %v6624, %v6626
  %v6628 = vadd.f32 %v6624, %v6627
  %vm6629 = vweird.f32 %v6382
  %vm6630 = vweird.f32 %v6624
  %vm6631 = vmor %vm6629, %vm6630
  %v6632 = vsel %vm6631, %v6624, %v6628
  %v6633 = vand.u32 2147483647, %v6382
  %vm6634 = vcmp.eq.f32.partialorder %v6633, 8.507059e+37
  %v6635 = vand.u32 %v6382, 2147483648
  %v6636 = vor.u32 1.1754944e-38, %v6635
  %v6637 = vsel %vm6634, %v6636, %v6632
  %v6638 = vmul.f32 1.0, %v6637
  %v6639 = vrcp.pop %v6383
  %v6640 = vmul.f32 %v6383, %v6639
  %v6641 = vsub.f32 1.0, %v6640
  %v6642 = vmul.f32 %v6639, %v6641
  %v6643 = vadd.f32 %v6639, %v6642
  %vm6644 = vweird.f32 %v6383
  %vm6645 = vweird.f32 %v6639
  %vm6646 = vmor %vm6644, %vm6645
  %v6647 = vsel %vm6646, %v6639, %v6643
  %v6648 = vand.u32 2147483647, %v6383
  %vm6649 = vcmp.eq.f32.partialorder %v6648, 8.507059e+37
  %v6650 = vand.u32 %v6383, 2147483648
  %v6651 = vor.u32 1.1754944e-38, %v6650
  %v6652 = vsel %vm6649, %v6651, %v6647
  %v6653 = vmul.f32 1.0, %v6652
  %v6654 = vrcp.pop %v6384
  %v6655 = vmul.f32 %v6384, %v6654
  %v6656 = vsub.f32 1.0, %v6655
  %v6657 = vmul.f32 %v6654, %v6656
  %v6658 = vadd.f32 %v6654, %v6657
  %vm6659 = vweird.f32 %v6384
  %vm6660 = vweird.f32 %v6654
  %vm6661 = vmor %vm6659, %vm6660
  %v6662 = vsel %vm6661, %v6654, %v6658
  %v6663 = vand.u32 2147483647, %v6384
  %vm6664 = vcmp.eq.f32.partialorder %v6663, 8.507059e+37
  %v6665 = vand.u32 %v6384, 2147483648
  %v6666 = vor.u32 1.1754944e-38, %v6665
  %v6667 = vsel %vm6664, %v6666, %v6662
  %v6668 = vmul.f32 1.0, %v6667
  %v6669 = vrcp.pop %v6385
  %v6670 = vmul.f32 %v6385, %v6669
  %v6671 = vsub.f32 1.0, %v6670
  %v6672 = vmul.f32 %v6669, %v6671
  %v6673 = vadd.f32 %v6669, %v6672
  %vm6674 = vweird.f32 %v6385
  %vm6675 = vweird.f32 %v6669
  %vm6676 = vmor %vm6674, %vm6675
  %v6677 = vsel %vm6676, %v6669, %v6673
  %v6678 = vand.u32 2147483647, %v6385
  %vm6679 = vcmp.eq.f32.partialorder %v6678, 8.507059e+37
  %v6680 = vand.u32 %v6385, 2147483648
  %v6681 = vor.u32 1.1754944e-38, %v6680
  %v6682 = vsel %vm6679, %v6681, %v6677
  %v6683 = vmul.f32 1.0, %v6682
  %v6684 = vrcp.pop %v6386
  %v6685 = vmul.f32 %v6386, %v6684
  %v6686 = vsub.f32 1.0, %v6685
  %v6687 = vmul.f32 %v6684, %v6686
  %v6688 = vadd.f32 %v6684, %v6687
  %vm6689 = vweird.f32 %v6386
  %vm6690 = vweird.f32 %v6684
  %vm6691 = vmor %vm6689, %vm6690
  %v6692 = vsel %vm6691, %v6684, %v6688
  %v6693 = vand.u32 2147483647, %v6386
  %vm6694 = vcmp.eq.f32.partialorder %v6693, 8.507059e+37
  %v6695 = vand.u32 %v6386, 2147483648
  %v6696 = vor.u32 1.1754944e-38, %v6695
  %v6697 = vsel %vm6694, %v6696, %v6692
  %v6698 = vmul.f32 1.0, %v6697
  %v6699 = vrcp.pop %v6387
  %v6700 = vmul.f32 %v6387, %v6699
  %v6701 = vsub.f32 1.0, %v6700
  %v6702 = vmul.f32 %v6699, %v6701
  %v6703 = vadd.f32 %v6699, %v6702
  %vm6704 = vweird.f32 %v6387
  %vm6705 = vweird.f32 %v6699
  %vm6706 = vmor %vm6704, %vm6705
  %v6707 = vsel %vm6706, %v6699, %v6703
  %v6708 = vand.u32 2147483647, %v6387
  %vm6709 = vcmp.eq.f32.partialorder %v6708, 8.507059e+37
  %v6710 = vand.u32 %v6387, 2147483648
  %v6711 = vor.u32 1.1754944e-38, %v6710
  %v6712 = vsel %vm6709, %v6711, %v6707
  %v6713 = vmul.f32 1.0, %v6712
  %v6714 = vrcp.pop %v6388
  %v6715 = vmul.f32 %v6388, %v6714
  %v6716 = vsub.f32 1.0, %v6715
  %v6717 = vmul.f32 %v6714, %v6716
  %v6718 = vadd.f32 %v6714, %v6717
  %vm6719 = vweird.f32 %v6388
  %vm6720 = vweird.f32 %v6714
  %vm6721 = vmor %vm6719, %vm6720
  %v6722 = vsel %vm6721, %v6714, %v6718
  %v6723 = vand.u32 2147483647, %v6388
  %vm6724 = vcmp.eq.f32.partialorder %v6723, 8.507059e+37
  %v6725 = vand.u32 %v6388, 2147483648
  %v6726 = vor.u32 1.1754944e-38, %v6725
  %v6727 = vsel %vm6724, %v6726, %v6722
  %v6728 = vmul.f32 1.0, %v6727
  %v6729 = vrcp.pop %v6389
  %v6730 = vmul.f32 %v6389, %v6729
  %v6731 = vsub.f32 1.0, %v6730
  %v6732 = vmul.f32 %v6729, %v6731
  %v6733 = vadd.f32 %v6729, %v6732
  %vm6734 = vweird.f32 %v6389
  %vm6735 = vweird.f32 %v6729
  %vm6736 = vmor %vm6734, %vm6735
  %v6737 = vsel %vm6736, %v6729, %v6733
  %v6738 = vand.u32 2147483647, %v6389
  %vm6739 = vcmp.eq.f32.partialorder %v6738, 8.507059e+37
  %v6740 = vand.u32 %v6389, 2147483648
  %v6741 = vor.u32 1.1754944e-38, %v6740
  %v6742 = vsel %vm6739, %v6741, %v6737
  %v6743 = vmul.f32 1.0, %v6742
  %v6744 = vrcp.pop %v6390
  %v6745 = vmul.f32 %v6390, %v6744
  %v6746 = vsub.f32 1.0, %v6745
  %v6747 = vmul.f32 %v6744, %v6746
  %v6748 = vadd.f32 %v6744, %v6747
  %vm6749 = vweird.f32 %v6390
  %vm6750 = vweird.f32 %v6744
  %vm6751 = vmor %vm6749, %vm6750
  %v6752 = vsel %vm6751, %v6744, %v6748
  %v6753 = vand.u32 2147483647, %v6390
  %vm6754 = vcmp.eq.f32.partialorder %v6753, 8.507059e+37
  %v6755 = vand.u32 %v6390, 2147483648
  %v6756 = vor.u32 1.1754944e-38, %v6755
  %v6757 = vsel %vm6754, %v6756, %v6752
  %v6758 = vmul.f32 1.0, %v6757
  %v6759 = vrcp.pop %v6391
  %v6760 = vmul.f32 %v6391, %v6759
  %v6761 = vsub.f32 1.0, %v6760
  %v6762 = vmul.f32 %v6759, %v6761
  %v6763 = vadd.f32 %v6759, %v6762
  %vm6764 = vweird.f32 %v6391
  %vm6765 = vweird.f32 %v6759
  %vm6766 = vmor %vm6764, %vm6765
  %v6767 = vsel %vm6766, %v6759, %v6763
  %v6768 = vand.u32 2147483647, %v6391
  %vm6769 = vcmp.eq.f32.partialorder %v6768, 8.507059e+37
  %v6770 = vand.u32 %v6391, 2147483648
  %v6771 = vor.u32 1.1754944e-38, %v6770
  %v6772 = vsel %vm6769, %v6771, %v6767
  %v6773 = vmul.f32 1.0, %v6772
  %v6774 = vrcp.pop %v6392
  %v6775 = vmul.f32 %v6392, %v6774
  %v6776 = vsub.f32 1.0, %v6775
  %v6777 = vmul.f32 %v6774, %v6776
  %v6778 = vadd.f32 %v6774, %v6777
  %vm6779 = vweird.f32 %v6392
  %vm6780 = vweird.f32 %v6774
  %vm6781 = vmor %vm6779, %vm6780
  %v6782 = vsel %vm6781, %v6774, %v6778
  %v6783 = vand.u32 2147483647, %v6392
  %vm6784 = vcmp.eq.f32.partialorder %v6783, 8.507059e+37
  %v6785 = vand.u32 %v6392, 2147483648
  %v6786 = vor.u32 1.1754944e-38, %v6785
  %v6787 = vsel %vm6784, %v6786, %v6782
  %v6788 = vmul.f32 1.0, %v6787
  %v6789 = vrcp.pop %v6393
  %v6790 = vmul.f32 %v6393, %v6789
  %v6791 = vsub.f32 1.0, %v6790
  %v6792 = vmul.f32 %v6789, %v6791
  %v6793 = vadd.f32 %v6789, %v6792
  %vm6794 = vweird.f32 %v6393
  %vm6795 = vweird.f32 %v6789
  %vm6796 = vmor %vm6794, %vm6795
  %v6797 = vsel %vm6796, %v6789, %v6793
  %v6798 = vand.u32 2147483647, %v6393
  %vm6799 = vcmp.eq.f32.partialorder %v6798, 8.507059e+37
  %v6800 = vand.u32 %v6393, 2147483648
  %v6801 = vor.u32 1.1754944e-38, %v6800
  %v6802 = vsel %vm6799, %v6801, %v6797
  %v6803 = vmul.f32 1.0, %v6802
  %v6804 = vrcp.pop %v6394
  %v6805 = vmul.f32 %v6394, %v6804
  %v6806 = vsub.f32 1.0, %v6805
  %v6807 = vmul.f32 %v6804, %v6806
  %v6808 = vadd.f32 %v6804, %v6807
  %vm6809 = vweird.f32 %v6394
  %vm6810 = vweird.f32 %v6804
  %vm6811 = vmor %vm6809, %vm6810
  %v6812 = vsel %vm6811, %v6804, %v6808
  %v6813 = vand.u32 2147483647, %v6394
  %vm6814 = vcmp.eq.f32.partialorder %v6813, 8.507059e+37
  %v6815 = vand.u32 %v6394, 2147483648
  %v6816 = vor.u32 1.1754944e-38, %v6815
  %v6817 = vsel %vm6814, %v6816, %v6812
  %v6818 = vmul.f32 1.0, %v6817
  %v6819 = vrcp.pop %v6395
  %v6820 = vmul.f32 %v6395, %v6819
  %v6821 = vsub.f32 1.0, %v6820
  %v6822 = vmul.f32 %v6819, %v6821
  %v6823 = vadd.f32 %v6819, %v6822
  %vm6824 = vweird.f32 %v6395
  %vm6825 = vweird.f32 %v6819
  %vm6826 = vmor %vm6824, %vm6825
  %v6827 = vsel %vm6826, %v6819, %v6823
  %v6828 = vand.u32 2147483647, %v6395
  %vm6829 = vcmp.eq.f32.partialorder %v6828, 8.507059e+37
  %v6830 = vand.u32 %v6395, 2147483648
  %v6831 = vor.u32 1.1754944e-38, %v6830
  %v6832 = vsel %vm6829, %v6831, %v6827
  %v6833 = vmul.f32 1.0, %v6832
  %v6834 = vrcp.pop %v6396
  %v6835 = vmul.f32 %v6396, %v6834
  %v6836 = vsub.f32 1.0, %v6835
  %v6837 = vmul.f32 %v6834, %v6836
  %v6838 = vadd.f32 %v6834, %v6837
  %vm6839 = vweird.f32 %v6396
  %vm6840 = vweird.f32 %v6834
  %vm6841 = vmor %vm6839, %vm6840
  %v6842 = vsel %vm6841, %v6834, %v6838
  %v6843 = vand.u32 2147483647, %v6396
  %vm6844 = vcmp.eq.f32.partialorder %v6843, 8.507059e+37
  %v6845 = vand.u32 %v6396, 2147483648
  %v6846 = vor.u32 1.1754944e-38, %v6845
  %v6847 = vsel %vm6844, %v6846, %v6842
  %v6848 = vmul.f32 1.0, %v6847
  %v6849 = vrcp.pop %v6397
  %v6850 = vmul.f32 %v6397, %v6849
  %v6851 = vsub.f32 1.0, %v6850
  %v6852 = vmul.f32 %v6849, %v6851
  %v6853 = vadd.f32 %v6849, %v6852
  %vm6854 = vweird.f32 %v6397
  %vm6855 = vweird.f32 %v6849
  %vm6856 = vmor %vm6854, %vm6855
  %v6857 = vsel %vm6856, %v6849, %v6853
  %v6858 = vand.u32 2147483647, %v6397
  %vm6859 = vcmp.eq.f32.partialorder %v6858, 8.507059e+37
  %v6860 = vand.u32 %v6397, 2147483648
  %v6861 = vor.u32 1.1754944e-38, %v6860
  %v6862 = vsel %vm6859, %v6861, %v6857
  %v6863 = vmul.f32 1.0, %v6862
  %v6864 = vrcp.pop %v6398
  %v6865 = vmul.f32 %v6398, %v6864
  %v6866 = vsub.f32 1.0, %v6865
  %v6867 = vmul.f32 %v6864, %v6866
  %v6868 = vadd.f32 %v6864, %v6867
  %vm6869 = vweird.f32 %v6398
  %vm6870 = vweird.f32 %v6864
  %vm6871 = vmor %vm6869, %vm6870
  %v6872 = vsel %vm6871, %v6864, %v6868
  %v6873 = vand.u32 2147483647, %v6398
  %vm6874 = vcmp.eq.f32.partialorder %v6873, 8.507059e+37
  %v6875 = vand.u32 %v6398, 2147483648
  %v6876 = vor.u32 1.1754944e-38, %v6875
  %v6877 = vsel %vm6874, %v6876, %v6872
  %v6878 = vmul.f32 1.0, %v6877
  %v6879 = vmul.f32 %v5773, %v5520
  %v6880 = vmul.f32 %v5788, %v5522
  %v6881 = vmul.f32 %v5803, %v5525
  %v6882 = vmul.f32 %v5818, %v5527
  %v6883 = vmul.f32 %v5833, %v5530
  %v6884 = vmul.f32 %v5848, %v5532
  %v6885 = vmul.f32 %v5863, %v5535
  %v6886 = vmul.f32 %v5878, %v5537
  %v6887 = vmul.f32 %v5893, %v5540
  %v6888 = vmul.f32 %v5908, %v5542
  %v6889 = vmul.f32 %v5923, %v5545
  %v6890 = vmul.f32 %v5938, %v5547
  %v6891 = vmul.f32 %v5953, %v5550
  %v6892 = vmul.f32 %v5968, %v5552
  %v6893 = vmul.f32 %v5983, %v5555
  %v6894 = vmul.f32 %v5998, %v5557
  %v6895 = vmul.f32 %v6013, %v5560
  %v6896 = vmul.f32 %v6028, %v5562
  %v6897 = vmul.f32 %v6043, %v5565
  %v6898 = vmul.f32 %v6058, %v5567
  %v6899 = vmul.f32 %v6073, %v5570
  %v6900 = vmul.f32 %v6088, %v5572
  %v6901 = vmul.f32 %v6103, %v5575
  %v6902 = vmul.f32 %v6118, %v5577
  %v6903 = vmul.f32 %v6133, %v5580
  %v6904 = vmul.f32 %v6148, %v5582
  %v6905 = vmul.f32 %v6163, %v5585
  %v6906 = vmul.f32 %v6178, %v5587
  %v6907 = vmul.f32 %v6193, %v5590
  %v6908 = vmul.f32 %v6208, %v5592
  %v6909 = vmul.f32 %v6223, %v5595
  %v6910 = vmul.f32 %v6238, %v5597
  %v6911 = vadd.f32 %v5253, %v6879
  %v6912 = vadd.f32 %v5255, %v6880
  %v6913 = vadd.f32 %v5258, %v6881
  %v6914 = vadd.f32 %v5260, %v6882
  %v6915 = vadd.f32 %v5263, %v6883
  %v6916 = vadd.f32 %v5265, %v6884
  %v6917 = vadd.f32 %v5268, %v6885
  %v6918 = vadd.f32 %v5270, %v6886
  %v6919 = vadd.f32 %v5273, %v6887
  %v6920 = vadd.f32 %v5275, %v6888
  %v6921 = vadd.f32 %v5278, %v6889
  %v6922 = vadd.f32 %v5280, %v6890
  %v6923 = vadd.f32 %v5283, %v6891
  %v6924 = vadd.f32 %v5285, %v6892
  %v6925 = vadd.f32 %v5288, %v6893
  %v6926 = vadd.f32 %v5290, %v6894
  %v6927 = vadd.f32 %v5293, %v6895
  %v6928 = vadd.f32 %v5295, %v6896
  %v6929 = vadd.f32 %v5298, %v6897
  %v6930 = vadd.f32 %v5300, %v6898
  %v6931 = vadd.f32 %v5303, %v6899
  %v6932 = vadd.f32 %v5305, %v6900
  %v6933 = vadd.f32 %v5308, %v6901
  %v6934 = vadd.f32 %v5310, %v6902
  %v6935 = vadd.f32 %v5313, %v6903
  %v6936 = vadd.f32 %v5315, %v6904
  %v6937 = vadd.f32 %v5318, %v6905
  %v6938 = vadd.f32 %v5320, %v6906
  %v6939 = vadd.f32 %v5323, %v6907
  %v6940 = vadd.f32 %v5325, %v6908
  %v6941 = vadd.f32 %v5328, %v6909
  %v6942 = vadd.f32 %v5330, %v6910
  %v6943 = vtanh.pop %v6911
  %v6944 = vtanh.pop %v6912
  %v6945 = vtanh.pop %v6913
  %v6946 = vtanh.pop %v6914
  %v6947 = vtanh.pop %v6915
  %v6948 = vtanh.pop %v6916
  %v6949 = vtanh.pop %v6917
  %v6950 = vtanh.pop %v6918
  %v6951 = vtanh.pop %v6919
  %v6952 = vtanh.pop %v6920
  %v6953 = vtanh.pop %v6921
  %v6954 = vtanh.pop %v6922
  %v6955 = vtanh.pop %v6923
  %v6956 = vtanh.pop %v6924
  %v6957 = vtanh.pop %v6925
  %v6958 = vtanh.pop %v6926
  %v6959 = vtanh.pop %v6927
  %v6960 = vtanh.pop %v6928
  %v6961 = vtanh.pop %v6929
  %v6962 = vtanh.pop %v6930
  %v6963 = vtanh.pop %v6931
  %v6964 = vtanh.pop %v6932
  %v6965 = vtanh.pop %v6933
  %v6966 = vtanh.pop %v6934
  %v6967 = vtanh.pop %v6935
  %v6968 = vtanh.pop %v6936
  %v6969 = vtanh.pop %v6937
  %v6970 = vtanh.pop %v6938
  %v6971 = vtanh.pop %v6939
  %v6972 = vtanh.pop %v6940
  %v6973 = vtanh.pop %v6941
  %v6974 = vtanh.pop %v6942
  %v6975 = vsub.f32 1.0, %v6413
  %v6976 = vsub.f32 1.0, %v6428
  %v6977 = vsub.f32 1.0, %v6443
  %v6978 = vsub.f32 1.0, %v6458
  %v6979 = vsub.f32 1.0, %v6473
  %v6980 = vsub.f32 1.0, %v6488
  %v6981 = vsub.f32 1.0, %v6503
  %v6982 = vsub.f32 1.0, %v6518
  %v6983 = vsub.f32 1.0, %v6533
  %v6984 = vsub.f32 1.0, %v6548
  %v6985 = vsub.f32 1.0, %v6563
  %v6986 = vsub.f32 1.0, %v6578
  %v6987 = vsub.f32 1.0, %v6593
  %v6988 = vsub.f32 1.0, %v6608
  %v6989 = vsub.f32 1.0, %v6623
  %v6990 = vsub.f32 1.0, %v6638
  %v6991 = vsub.f32 1.0, %v6653
  %v6992 = vsub.f32 1.0, %v6668
  %v6993 = vsub.f32 1.0, %v6683
  %v6994 = vsub.f32 1.0, %v6698
  %v6995 = vsub.f32 1.0, %v6713
  %v6996 = vsub.f32 1.0, %v6728
  %v6997 = vsub.f32 1.0, %v6743
  %v6998 = vsub.f32 1.0, %v6758
  %v6999 = vsub.f32 1.0, %v6773
  %v7000 = vsub.f32 1.0, %v6788
  %v7001 = vsub.f32 1.0, %v6803
  %v7002 = vsub.f32 1.0, %v6818
  %v7003 = vsub.f32 1.0, %v6833
  %v7004 = vsub.f32 1.0, %v6848
  %v7005 = vsub.f32 1.0, %v6863
  %v7006 = vsub.f32 1.0, %v6878
  %v7007 = vmul.f32 %v6975, %v6943
  %v7008 = vmul.f32 %v6976, %v6944
  %v7009 = vmul.f32 %v6977, %v6945
  %v7010 = vmul.f32 %v6978, %v6946
  %v7011 = vmul.f32 %v6979, %v6947
  %v7012 = vmul.f32 %v6980, %v6948
  %v7013 = vmul.f32 %v6981, %v6949
  %v7014 = vmul.f32 %v6982, %v6950
  %v7015 = vmul.f32 %v6983, %v6951
  %v7016 = vmul.f32 %v6984, %v6952
  %v7017 = vmul.f32 %v6985, %v6953
  %v7018 = vmul.f32 %v6986, %v6954
  %v7019 = vmul.f32 %v6987, %v6955
  %v7020 = vmul.f32 %v6988, %v6956
  %v7021 = vmul.f32 %v6989, %v6957
  %v7022 = vmul.f32 %v6990, %v6958
  %v7023 = vmul.f32 %v6991, %v6959
  %v7024 = vmul.f32 %v6992, %v6960
  %v7025 = vmul.f32 %v6993, %v6961
  %v7026 = vmul.f32 %v6994, %v6962
  %v7027 = vmul.f32 %v6995, %v6963
  %v7028 = vmul.f32 %v6996, %v6964
  %v7029 = vmul.f32 %v6997, %v6965
  %v7030 = vmul.f32 %v6998, %v6966
  %v7031 = vmul.f32 %v6999, %v6967
  %v7032 = vmul.f32 %v7000, %v6968
  %v7033 = vmul.f32 %v7001, %v6969
  %v7034 = vmul.f32 %v7002, %v6970
  %v7035 = vmul.f32 %v7003, %v6971
  %v7036 = vmul.f32 %v7004, %v6972
  %v7037 = vmul.f32 %v7005, %v6973
  %v7038 = vmul.f32 %v7006, %v6974
  %v7039 = vmul.f32 %v6413, %v4728
  %v7040 = vmul.f32 %v6428, %v4729
  %v7041 = vmul.f32 %v6443, %v4730
  %v7042 = vmul.f32 %v6458, %v4731
  %v7043 = vmul.f32 %v6473, %v4732
  %v7044 = vmul.f32 %v6488, %v4733
  %v7045 = vmul.f32 %v6503, %v4734
  %v7046 = vmul.f32 %v6518, %v4735
  %v7047 = vmul.f32 %v6533, %v4736
  %v7048 = vmul.f32 %v6548, %v4737
  %v7049 = vmul.f32 %v6563, %v4738
  %v7050 = vmul.f32 %v6578, %v4739
  %v7051 = vmul.f32 %v6593, %v4740
  %v7052 = vmul.f32 %v6608, %v4741
  %v7053 = vmul.f32 %v6623, %v4742
  %v7054 = vmul.f32 %v6638, %v4743
  %v7055 = vmul.f32 %v6653, %v4744
  %v7056 = vmul.f32 %v6668, %v4745
  %v7057 = vmul.f32 %v6683, %v4746
  %v7058 = vmul.f32 %v6698, %v4747
  %v7059 = vmul.f32 %v6713, %v4748
  %v7060 = vmul.f32 %v6728, %v4749
  %v7061 = vmul.f32 %v6743, %v4750
  %v7062 = vmul.f32 %v6758, %v4751
  %v7063 = vmul.f32 %v6773, %v4752
  %v7064 = vmul.f32 %v6788, %v4753
  %v7065 = vmul.f32 %v6803, %v4754
  %v7066 = vmul.f32 %v6818, %v4755
  %v7067 = vmul.f32 %v6833, %v4756
  %v7068 = vmul.f32 %v6848, %v4757
  %v7069 = vmul.f32 %v6863, %v4758
  %v7070 = vmul.f32 %v6878, %v4759
  %v7071 = vadd.f32 %v7007, %v7039
  %v7072 = vadd.f32 %v7008, %v7040
  %v7073 = vadd.f32 %v7009, %v7041
  %v7074 = vadd.f32 %v7010, %v7042
  %v7075 = vadd.f32 %v7011, %v7043
  %v7076 = vadd.f32 %v7012, %v7044
  %v7077 = vadd.f32 %v7013, %v7045
  %v7078 = vadd.f32 %v7014, %v7046
  %v7079 = vadd.f32 %v7015, %v7047
  %v7080 = vadd.f32 %v7016, %v7048
  %v7081 = vadd.f32 %v7017, %v7049
  %v7082 = vadd.f32 %v7018, %v7050
  %v7083 = vadd.f32 %v7019, %v7051
  %v7084 = vadd.f32 %v7020, %v7052
  %v7085 = vadd.f32 %v7021, %v7053
  %v7086 = vadd.f32 %v7022, %v7054
  %v7087 = vadd.f32 %v7023, %v7055
  %v7088 = vadd.f32 %v7024, %v7056
  %v7089 = vadd.f32 %v7025, %v7057
  %v7090 = vadd.f32 %v7026, %v7058
  %v7091 = vadd.f32 %v7027, %v7059
  %v7092 = vadd.f32 %v7028, %v7060
  %v7093 = vadd.f32 %v7029, %v7061
  %v7094 = vadd.f32 %v7030, %v7062
  %v7095 = vadd.f32 %v7031, %v7063
  %v7096 = vadd.f32 %v7032, %v7064
  %v7097 = vadd.f32 %v7033, %v7065
  %v7098 = vadd.f32 %v7034, %v7066
  %v7099 = vadd.f32 %v7035, %v7067
  %v7100 = vadd.f32 %v7036, %v7068
  %v7101 = vadd.f32 %v7037, %v7069
  %v7102 = vadd.f32 %v7038, %v7070
  %v7103 = vld [vmem:[%s1] sm:$0xff]
  %v7104 = vld [vmem:[%s1 + $0x8] sm:$0xff]
  %v7105 = vld [vmem:[%s1 + $0x10] sm:$0xff]
  %v7106 = vld [vmem:[%s1 + $0x18] sm:$0xff]
  %v7107 = vld [vmem:[%s1 + $0x20] sm:$0xff]
  %v7108 = vld [vmem:[%s1 + $0x28] sm:$0xff]
  %v7109 = vld [vmem:[%s1 + $0x30] sm:$0xff]
  %v7110 = vld [vmem:[%s1 + $0x38] sm:$0xff]
  %v7111 = vld [vmem:[%s1 + $0x40] sm:$0xff]
  %v7112 = vld [vmem:[%s1 + $0x48] sm:$0xff]
  %v7113 = vld [vmem:[%s1 + $0x50] sm:$0xff]
  %v7114 = vld [vmem:[%s1 + $0x58] sm:$0xff]
  %v7115 = vld [vmem:[%s1 + $0x60] sm:$0xff]
  %v7116 = vld [vmem:[%s1 + $0x68] sm:$0xff]
  %v7117 = vld [vmem:[%s1 + $0x70] sm:$0xff]
  %v7118 = vld [vmem:[%s1 + $0x78] sm:$0xff]
  %v7119 = vld [vmem:[%s1 + $0x80] sm:$0xff]
  %v7120 = vld [vmem:[%s1 + $0x88] sm:$0xff]
  %v7121 = vld [vmem:[%s1 + $0x90] sm:$0xff]
  %v7122 = vld [vmem:[%s1 + $0x98] sm:$0xff]
  %v7123 = vld [vmem:[%s1 + $0xa0] sm:$0xff]
  %v7124 = vld [vmem:[%s1 + $0xa8] sm:$0xff]
  %v7125 = vld [vmem:[%s1 + $0xb0] sm:$0xff]
  %v7126 = vld [vmem:[%s1 + $0xb8] sm:$0xff]
  %v7127 = vld [vmem:[%s1 + $0xc0] sm:$0xff]
  %v7128 = vld [vmem:[%s1 + $0xc8] sm:$0xff]
  %v7129 = vld [vmem:[%s1 + $0xd0] sm:$0xff]
  %v7130 = vld [vmem:[%s1 + $0xd8] sm:$0xff]
  %v7131 = vld [vmem:[%s1 + $0xe0] sm:$0xff]
  %v7132 = vld [vmem:[%s1 + $0xe8] sm:$0xff]
  %v7133 = vld [vmem:[%s1 + $0xf0] sm:$0xff]
  %v7134 = vld [vmem:[%s1 + $0xf8] sm:$0xff]
  %v7135 = vpack.c.bf16 %v7072, %v7071
  %v7136 = vpack.c.bf16 %v7104, %v7103
  %v7137 = vpack.c.bf16 %v7074, %v7073
  %v7138 = vpack.c.bf16 %v7106, %v7105
  %v7139 = vpack.c.bf16 %v7076, %v7075
  %v7140 = vpack.c.bf16 %v7108, %v7107
  %v7141 = vpack.c.bf16 %v7078, %v7077
  %v7142 = vpack.c.bf16 %v7110, %v7109
  %v7143 = vpack.c.bf16 %v7080, %v7079
  %v7144 = vpack.c.bf16 %v7112, %v7111
  %v7145 = vpack.c.bf16 %v7082, %v7081
  %v7146 = vpack.c.bf16 %v7114, %v7113
  %v7147 = vpack.c.bf16 %v7084, %v7083
  %v7148 = vpack.c.bf16 %v7116, %v7115
  %v7149 = vpack.c.bf16 %v7086, %v7085
  %v7150 = vpack.c.bf16 %v7118, %v7117
  %v7151 = vpack.c.bf16 %v7088, %v7087
  %v7152 = vpack.c.bf16 %v7120, %v7119
  %v7153 = vpack.c.bf16 %v7090, %v7089
  %v7154 = vpack.c.bf16 %v7122, %v7121
  %v7155 = vpack.c.bf16 %v7092, %v7091
  %v7156 = vpack.c.bf16 %v7124, %v7123
  %v7157 = vpack.c.bf16 %v7094, %v7093
  %v7158 = vpack.c.bf16 %v7126, %v7125
  %v7159 = vpack.c.bf16 %v7096, %v7095
  %v7160 = vpack.c.bf16 %v7128, %v7127
  %v7161 = vpack.c.bf16 %v7098, %v7097
  %v7162 = vpack.c.bf16 %v7130, %v7129
  %v7163 = vpack.c.bf16 %v7100, %v7099
  %v7164 = vpack.c.bf16 %v7132, %v7131
  %v7165 = vpack.c.bf16 %v7102, %v7101
  %v7166 = vpack.c.bf16 %v7134, %v7133
  %v7167 = vld [vmem:[%s4] sm:$0xff]
  %v7168 = vld [vmem:[%s4 + $0x8] sm:$0xff]
  %v7169 = vld [vmem:[%s4 + $0x10] sm:$0xff]
  %v7170 = vld [vmem:[%s4 + $0x18] sm:$0xff]
  %v7171 = vld [vmem:[%s4 + $0x20] sm:$0xff]
  %v7172 = vld [vmem:[%s4 + $0x28] sm:$0xff]
  %v7173 = vld [vmem:[%s4 + $0x30] sm:$0xff]
  %v7174 = vld [vmem:[%s4 + $0x38] sm:$0xff]
  %v7175 = vld [vmem:[%s4 + $0x40] sm:$0xff]
  %v7176 = vld [vmem:[%s4 + $0x48] sm:$0xff]
  %v7177 = vld [vmem:[%s4 + $0x50] sm:$0xff]
  %v7178 = vld [vmem:[%s4 + $0x58] sm:$0xff]
  %v7179 = vld [vmem:[%s4 + $0x60] sm:$0xff]
  %v7180 = vld [vmem:[%s4 + $0x68] sm:$0xff]
  %v7181 = vld [vmem:[%s4 + $0x70] sm:$0xff]
  %v7182 = vld [vmem:[%s4 + $0x78] sm:$0xff]
  %v7183 = vld [vmem:[%s4 + $0x80] sm:$0xff]
  %v7184 = vld [vmem:[%s4 + $0x88] sm:$0xff]
  %v7185 = vld [vmem:[%s4 + $0x90] sm:$0xff]
  %v7186 = vld [vmem:[%s4 + $0x98] sm:$0xff]
  %v7187 = vld [vmem:[%s4 + $0xa0] sm:$0xff]
  %v7188 = vld [vmem:[%s4 + $0xa8] sm:$0xff]
  %v7189 = vld [vmem:[%s4 + $0xb0] sm:$0xff]
  %v7190 = vld [vmem:[%s4 + $0xb8] sm:$0xff]
  %v7191 = vld [vmem:[%s4 + $0xc0] sm:$0xff]
  %v7192 = vld [vmem:[%s4 + $0xc8] sm:$0xff]
  %v7193 = vld [vmem:[%s4 + $0xd0] sm:$0xff]
  %v7194 = vld [vmem:[%s4 + $0xd8] sm:$0xff]
  %v7195 = vld [vmem:[%s4 + $0xe0] sm:$0xff]
  %v7196 = vld [vmem:[%s4 + $0xe8] sm:$0xff]
  %v7197 = vld [vmem:[%s4 + $0xf0] sm:$0xff]
  %v7198 = vld [vmem:[%s4 + $0xf8] sm:$0xff]
  %v7199 = vld [vmem:[%s4 + $0x100] sm:$0xff]
  %v7200 = vld [vmem:[%s4 + $0x108] sm:$0xff]
  %v7201 = vld [vmem:[%s4 + $0x110] sm:$0xff]
  %v7202 = vld [vmem:[%s4 + $0x118] sm:$0xff]
  %v7203 = vld [vmem:[%s4 + $0x120] sm:$0xff]
  %v7204 = vld [vmem:[%s4 + $0x128] sm:$0xff]
  %v7205 = vld [vmem:[%s4 + $0x130] sm:$0xff]
  %v7206 = vld [vmem:[%s4 + $0x138] sm:$0xff]
  %v7207 = vld [vmem:[%s4 + $0x140] sm:$0xff]
  %v7208 = vld [vmem:[%s4 + $0x148] sm:$0xff]
  %v7209 = vld [vmem:[%s4 + $0x150] sm:$0xff]
  %v7210 = vld [vmem:[%s4 + $0x158] sm:$0xff]
  %v7211 = vld [vmem:[%s4 + $0x160] sm:$0xff]
  %v7212 = vld [vmem:[%s4 + $0x168] sm:$0xff]
  %v7213 = vld [vmem:[%s4 + $0x170] sm:$0xff]
  %v7214 = vld [vmem:[%s4 + $0x178] sm:$0xff]
  %v7215 = vld [vmem:[%s4 + $0x180] sm:$0xff]
  %v7216 = vld [vmem:[%s4 + $0x188] sm:$0xff]
  %v7217 = vld [vmem:[%s4 + $0x190] sm:$0xff]
  %v7218 = vld [vmem:[%s4 + $0x198] sm:$0xff]
  %v7219 = vld [vmem:[%s4 + $0x1a0] sm:$0xff]
  %v7220 = vld [vmem:[%s4 + $0x1a8] sm:$0xff]
  %v7221 = vld [vmem:[%s4 + $0x1b0] sm:$0xff]
  %v7222 = vld [vmem:[%s4 + $0x1b8] sm:$0xff]
  %v7223 = vld [vmem:[%s4 + $0x1c0] sm:$0xff]
  %v7224 = vld [vmem:[%s4 + $0x1c8] sm:$0xff]
  %v7225 = vld [vmem:[%s4 + $0x1d0] sm:$0xff]
  %v7226 = vld [vmem:[%s4 + $0x1d8] sm:$0xff]
  %v7227 = vld [vmem:[%s4 + $0x1e0] sm:$0xff]
  %v7228 = vld [vmem:[%s4 + $0x1e8] sm:$0xff]
  %v7229 = vld [vmem:[%s4 + $0x1f0] sm:$0xff]
  %v7230 = vld [vmem:[%s4 + $0x1f8] sm:$0xff]
  %v7231 = vld [vmem:[%s4 + $0x200] sm:$0xff]
  %v7232 = vld [vmem:[%s4 + $0x208] sm:$0xff]
  %v7233 = vld [vmem:[%s4 + $0x210] sm:$0xff]
  %v7234 = vld [vmem:[%s4 + $0x218] sm:$0xff]
  %v7235 = vld [vmem:[%s4 + $0x220] sm:$0xff]
  %v7236 = vld [vmem:[%s4 + $0x228] sm:$0xff]
  %v7237 = vld [vmem:[%s4 + $0x230] sm:$0xff]
  %v7238 = vld [vmem:[%s4 + $0x238] sm:$0xff]
  %v7239 = vld [vmem:[%s4 + $0x240] sm:$0xff]
  %v7240 = vld [vmem:[%s4 + $0x248] sm:$0xff]
  %v7241 = vld [vmem:[%s4 + $0x250] sm:$0xff]
  %v7242 = vld [vmem:[%s4 + $0x258] sm:$0xff]
  %v7243 = vld [vmem:[%s4 + $0x260] sm:$0xff]
  %v7244 = vld [vmem:[%s4 + $0x268] sm:$0xff]
  %v7245 = vld [vmem:[%s4 + $0x270] sm:$0xff]
  %v7246 = vld [vmem:[%s4 + $0x278] sm:$0xff]
  %v7247 = vld [vmem:[%s4 + $0x280] sm:$0xff]
  %v7248 = vld [vmem:[%s4 + $0x288] sm:$0xff]
  %v7249 = vld [vmem:[%s4 + $0x290] sm:$0xff]
  %v7250 = vld [vmem:[%s4 + $0x298] sm:$0xff]
  %v7251 = vld [vmem:[%s4 + $0x2a0] sm:$0xff]
  %v7252 = vld [vmem:[%s4 + $0x2a8] sm:$0xff]
  %v7253 = vld [vmem:[%s4 + $0x2b0] sm:$0xff]
  %v7254 = vld [vmem:[%s4 + $0x2b8] sm:$0xff]
  %v7255 = vld [vmem:[%s4 + $0x2c0] sm:$0xff]
  %v7256 = vld [vmem:[%s4 + $0x2c8] sm:$0xff]
  %v7257 = vld [vmem:[%s4 + $0x2d0] sm:$0xff]
  %v7258 = vld [vmem:[%s4 + $0x2d8] sm:$0xff]
  %v7259 = vld [vmem:[%s4 + $0x2e0] sm:$0xff]
  %v7260 = vld [vmem:[%s4 + $0x2e8] sm:$0xff]
  %v7261 = vld [vmem:[%s4 + $0x2f0] sm:$0xff]
  %v7262 = vld [vmem:[%s4 + $0x2f8] sm:$0xff]
  %v7263 = vld [vmem:[%s4 + $0x300] sm:$0xff]
  %v7264 = vld [vmem:[%s4 + $0x308] sm:$0xff]
  %v7265 = vld [vmem:[%s4 + $0x310] sm:$0xff]
  %v7266 = vld [vmem:[%s4 + $0x318] sm:$0xff]
  %v7267 = vld [vmem:[%s4 + $0x320] sm:$0xff]
  %v7268 = vld [vmem:[%s4 + $0x328] sm:$0xff]
  %v7269 = vld [vmem:[%s4 + $0x330] sm:$0xff]
  %v7270 = vld [vmem:[%s4 + $0x338] sm:$0xff]
  %v7271 = vld [vmem:[%s4 + $0x340] sm:$0xff]
  %v7272 = vld [vmem:[%s4 + $0x348] sm:$0xff]
  %v7273 = vld [vmem:[%s4 + $0x350] sm:$0xff]
  %v7274 = vld [vmem:[%s4 + $0x358] sm:$0xff]
  %v7275 = vld [vmem:[%s4 + $0x360] sm:$0xff]
  %v7276 = vld [vmem:[%s4 + $0x368] sm:$0xff]
  %v7277 = vld [vmem:[%s4 + $0x370] sm:$0xff]
  %v7278 = vld [vmem:[%s4 + $0x378] sm:$0xff]
  %v7279 = vld [vmem:[%s4 + $0x380] sm:$0xff]
  %v7280 = vld [vmem:[%s4 + $0x388] sm:$0xff]
  %v7281 = vld [vmem:[%s4 + $0x390] sm:$0xff]
  %v7282 = vld [vmem:[%s4 + $0x398] sm:$0xff]
  %v7283 = vld [vmem:[%s4 + $0x3a0] sm:$0xff]
  %v7284 = vld [vmem:[%s4 + $0x3a8] sm:$0xff]
  %v7285 = vld [vmem:[%s4 + $0x3b0] sm:$0xff]
  %v7286 = vld [vmem:[%s4 + $0x3b8] sm:$0xff]
  %v7287 = vld [vmem:[%s4 + $0x3c0] sm:$0xff]
  %v7288 = vld [vmem:[%s4 + $0x3c8] sm:$0xff]
  %v7289 = vld [vmem:[%s4 + $0x3d0] sm:$0xff]
  %v7290 = vld [vmem:[%s4 + $0x3d8] sm:$0xff]
  %v7291 = vld [vmem:[%s4 + $0x3e0] sm:$0xff]
  %v7292 = vld [vmem:[%s4 + $0x3e8] sm:$0xff]
  %v7293 = vld [vmem:[%s4 + $0x3f0] sm:$0xff]
  %v7294 = vld [vmem:[%s4 + $0x3f8] sm:$0xff]
  %v7295 = vld [vmem:[%s5] sm:$0xff]
  %v7297 = vperm.slane %v7295, 0
  %v7298 = vperm.slane %v7295, 1
  %v7299 = vperm.slane %v7295, 2
  %v7300 = vperm.slane %v7295, 3
  %v7301 = vperm.slane %v7295, 4
  %v7302 = vperm.slane %v7295, 5
  %v7303 = vperm.slane %v7295, 6
  %v7304 = vperm.slane %v7295, 7
  %v7441 = vunpack.c.l.b16 %v7167
  %v7442 = vunpack.c.h.b16 %v7167
  %v7443 = vunpack.c.l.b16 %v7168
  %v7444 = vunpack.c.h.b16 %v7168
  %v7445 = vunpack.c.l.b16 %v7169
  %v7446 = vunpack.c.h.b16 %v7169
  %v7447 = vunpack.c.l.b16 %v7170
  %v7448 = vunpack.c.h.b16 %v7170
  %v7449 = vunpack.c.l.b16 %v7171
  %v7450 = vunpack.c.h.b16 %v7171
  %v7451 = vunpack.c.l.b16 %v7172
  %v7452 = vunpack.c.h.b16 %v7172
  %v7453 = vunpack.c.l.b16 %v7173
  %v7454 = vunpack.c.h.b16 %v7173
  %v7455 = vunpack.c.l.b16 %v7174
  %v7456 = vunpack.c.h.b16 %v7174
  %v7457 = vunpack.c.l.b16 %v7175
  %v7458 = vunpack.c.h.b16 %v7175
  %v7459 = vunpack.c.l.b16 %v7176
  %v7460 = vunpack.c.h.b16 %v7176
  %v7461 = vunpack.c.l.b16 %v7177
  %v7462 = vunpack.c.h.b16 %v7177
  %v7463 = vunpack.c.l.b16 %v7178
  %v7464 = vunpack.c.h.b16 %v7178
  %v7465 = vunpack.c.l.b16 %v7179
  %v7466 = vunpack.c.h.b16 %v7179
  %v7467 = vunpack.c.l.b16 %v7180
  %v7468 = vunpack.c.h.b16 %v7180
  %v7469 = vunpack.c.l.b16 %v7181
  %v7470 = vunpack.c.h.b16 %v7181
  %v7471 = vunpack.c.l.b16 %v7182
  %v7472 = vunpack.c.h.b16 %v7182
  %v7473 = vunpack.c.l.b16 %v7183
  %v7474 = vunpack.c.h.b16 %v7183
  %v7475 = vunpack.c.l.b16 %v7184
  %v7476 = vunpack.c.h.b16 %v7184
  %v7477 = vunpack.c.l.b16 %v7185
  %v7478 = vunpack.c.h.b16 %v7185
  %v7479 = vunpack.c.l.b16 %v7186
  %v7480 = vunpack.c.h.b16 %v7186
  %v7481 = vunpack.c.l.b16 %v7187
  %v7482 = vunpack.c.h.b16 %v7187
  %v7483 = vunpack.c.l.b16 %v7188
  %v7484 = vunpack.c.h.b16 %v7188
  %v7485 = vunpack.c.l.b16 %v7189
  %v7486 = vunpack.c.h.b16 %v7189
  %v7487 = vunpack.c.l.b16 %v7190
  %v7488 = vunpack.c.h.b16 %v7190
  %v7489 = vunpack.c.l.b16 %v7191
  %v7490 = vunpack.c.h.b16 %v7191
  %v7491 = vunpack.c.l.b16 %v7192
  %v7492 = vunpack.c.h.b16 %v7192
  %v7493 = vunpack.c.l.b16 %v7193
  %v7494 = vunpack.c.h.b16 %v7193
  %v7495 = vunpack.c.l.b16 %v7194
  %v7496 = vunpack.c.h.b16 %v7194
  %v7497 = vunpack.c.l.b16 %v7195
  %v7498 = vunpack.c.h.b16 %v7195
  %v7499 = vunpack.c.l.b16 %v7196
  %v7500 = vunpack.c.h.b16 %v7196
  %v7501 = vunpack.c.l.b16 %v7197
  %v7502 = vunpack.c.h.b16 %v7197
  %v7503 = vunpack.c.l.b16 %v7198
  %v7504 = vunpack.c.h.b16 %v7198
  %v7505 = vunpack.c.l.b16 %v7199
  %v7506 = vunpack.c.h.b16 %v7199
  %v7507 = vunpack.c.l.b16 %v7200
  %v7508 = vunpack.c.h.b16 %v7200
  %v7509 = vunpack.c.l.b16 %v7201
  %v7510 = vunpack.c.h.b16 %v7201
  %v7511 = vunpack.c.l.b16 %v7202
  %v7512 = vunpack.c.h.b16 %v7202
  %v7513 = vunpack.c.l.b16 %v7203
  %v7514 = vunpack.c.h.b16 %v7203
  %v7515 = vunpack.c.l.b16 %v7204
  %v7516 = vunpack.c.h.b16 %v7204
  %v7517 = vunpack.c.l.b16 %v7205
  %v7518 = vunpack.c.h.b16 %v7205
  %v7519 = vunpack.c.l.b16 %v7206
  %v7520 = vunpack.c.h.b16 %v7206
  %v7521 = vunpack.c.l.b16 %v7207
  %v7522 = vunpack.c.h.b16 %v7207
  %v7523 = vunpack.c.l.b16 %v7208
  %v7524 = vunpack.c.h.b16 %v7208
  %v7525 = vunpack.c.l.b16 %v7209
  %v7526 = vunpack.c.h.b16 %v7209
  %v7527 = vunpack.c.l.b16 %v7210
  %v7528 = vunpack.c.h.b16 %v7210
  %v7529 = vunpack.c.l.b16 %v7211
  %v7530 = vunpack.c.h.b16 %v7211
  %v7531 = vunpack.c.l.b16 %v7212
  %v7532 = vunpack.c.h.b16 %v7212
  %v7533 = vunpack.c.l.b16 %v7213
  %v7534 = vunpack.c.h.b16 %v7213
  %v7535 = vunpack.c.l.b16 %v7214
  %v7536 = vunpack.c.h.b16 %v7214
  %v7537 = vunpack.c.l.b16 %v7215
  %v7538 = vunpack.c.h.b16 %v7215
  %v7539 = vunpack.c.l.b16 %v7216
  %v7540 = vunpack.c.h.b16 %v7216
  %v7541 = vunpack.c.l.b16 %v7217
  %v7542 = vunpack.c.h.b16 %v7217
  %v7543 = vunpack.c.l.b16 %v7218
  %v7544 = vunpack.c.h.b16 %v7218
  %v7545 = vunpack.c.l.b16 %v7219
  %v7546 = vunpack.c.h.b16 %v7219
  %v7547 = vunpack.c.l.b16 %v7220
  %v7548 = vunpack.c.h.b16 %v7220
  %v7549 = vunpack.c.l.b16 %v7221
  %v7550 = vunpack.c.h.b16 %v7221
  %v7551 = vunpack.c.l.b16 %v7222
  %v7552 = vunpack.c.h.b16 %v7222
  %v7553 = vunpack.c.l.b16 %v7223
  %v7554 = vunpack.c.h.b16 %v7223
  %v7555 = vunpack.c.l.b16 %v7224
  %v7556 = vunpack.c.h.b16 %v7224
  %v7557 = vunpack.c.l.b16 %v7225
  %v7558 = vunpack.c.h.b16 %v7225
  %v7559 = vunpack.c.l.b16 %v7226
  %v7560 = vunpack.c.h.b16 %v7226
  %v7561 = vunpack.c.l.b16 %v7227
  %v7562 = vunpack.c.h.b16 %v7227
  %v7563 = vunpack.c.l.b16 %v7228
  %v7564 = vunpack.c.h.b16 %v7228
  %v7565 = vunpack.c.l.b16 %v7229
  %v7566 = vunpack.c.h.b16 %v7229
  %v7567 = vunpack.c.l.b16 %v7230
  %v7568 = vunpack.c.h.b16 %v7230
  %v7569 = vunpack.c.l.b16 %v7231
  %v7570 = vunpack.c.h.b16 %v7231
  %v7571 = vunpack.c.l.b16 %v7232
  %v7572 = vunpack.c.h.b16 %v7232
  %v7573 = vunpack.c.l.b16 %v7233
  %v7574 = vunpack.c.h.b16 %v7233
  %v7575 = vunpack.c.l.b16 %v7234
  %v7576 = vunpack.c.h.b16 %v7234
  %v7577 = vunpack.c.l.b16 %v7235
  %v7578 = vunpack.c.h.b16 %v7235
  %v7579 = vunpack.c.l.b16 %v7236
  %v7580 = vunpack.c.h.b16 %v7236
  %v7581 = vunpack.c.l.b16 %v7237
  %v7582 = vunpack.c.h.b16 %v7237
  %v7583 = vunpack.c.l.b16 %v7238
  %v7584 = vunpack.c.h.b16 %v7238
  %v7585 = vunpack.c.l.b16 %v7239
  %v7586 = vunpack.c.h.b16 %v7239
  %v7587 = vunpack.c.l.b16 %v7240
  %v7588 = vunpack.c.h.b16 %v7240
  %v7589 = vunpack.c.l.b16 %v7241
  %v7590 = vunpack.c.h.b16 %v7241
  %v7591 = vunpack.c.l.b16 %v7242
  %v7592 = vunpack.c.h.b16 %v7242
  %v7593 = vunpack.c.l.b16 %v7243
  %v7594 = vunpack.c.h.b16 %v7243
  %v7595 = vunpack.c.l.b16 %v7244
  %v7596 = vunpack.c.h.b16 %v7244
  %v7597 = vunpack.c.l.b16 %v7245
  %v7598 = vunpack.c.h.b16 %v7245
  %v7599 = vunpack.c.l.b16 %v7246
  %v7600 = vunpack.c.h.b16 %v7246
  %v7601 = vunpack.c.l.b16 %v7247
  %v7602 = vunpack.c.h.b16 %v7247
  %v7603 = vunpack.c.l.b16 %v7248
  %v7604 = vunpack.c.h.b16 %v7248
  %v7605 = vunpack.c.l.b16 %v7249
  %v7606 = vunpack.c.h.b16 %v7249
  %v7607 = vunpack.c.l.b16 %v7250
  %v7608 = vunpack.c.h.b16 %v7250
  %v7609 = vunpack.c.l.b16 %v7251
  %v7610 = vunpack.c.h.b16 %v7251
  %v7611 = vunpack.c.l.b16 %v7252
  %v7612 = vunpack.c.h.b16 %v7252
  %v7613 = vunpack.c.l.b16 %v7253
  %v7614 = vunpack.c.h.b16 %v7253
  %v7615 = vunpack.c.l.b16 %v7254
  %v7616 = vunpack.c.h.b16 %v7254
  %v7617 = vunpack.c.l.b16 %v7255
  %v7618 = vunpack.c.h.b16 %v7255
  %v7619 = vunpack.c.l.b16 %v7256
  %v7620 = vunpack.c.h.b16 %v7256
  %v7621 = vunpack.c.l.b16 %v7257
  %v7622 = vunpack.c.h.b16 %v7257
  %v7623 = vunpack.c.l.b16 %v7258
  %v7624 = vunpack.c.h.b16 %v7258
  %v7625 = vunpack.c.l.b16 %v7259
  %v7626 = vunpack.c.h.b16 %v7259
  %v7627 = vunpack.c.l.b16 %v7260
  %v7628 = vunpack.c.h.b16 %v7260
  %v7629 = vunpack.c.l.b16 %v7261
  %v7630 = vunpack.c.h.b16 %v7261
  %v7631 = vunpack.c.l.b16 %v7262
  %v7632 = vunpack.c.h.b16 %v7262
  %v7633 = vunpack.c.l.b16 %v7263
  %v7634 = vunpack.c.h.b16 %v7263
  %v7635 = vunpack.c.l.b16 %v7264
  %v7636 = vunpack.c.h.b16 %v7264
  %v7637 = vunpack.c.l.b16 %v7265
  %v7638 = vunpack.c.h.b16 %v7265
  %v7639 = vunpack.c.l.b16 %v7266
  %v7640 = vunpack.c.h.b16 %v7266
  %v7641 = vunpack.c.l.b16 %v7267
  %v7642 = vunpack.c.h.b16 %v7267
  %v7643 = vunpack.c.l.b16 %v7268
  %v7644 = vunpack.c.h.b16 %v7268
  %v7645 = vunpack.c.l.b16 %v7269
  %v7646 = vunpack.c.h.b16 %v7269
  %v7647 = vunpack.c.l.b16 %v7270
  %v7648 = vunpack.c.h.b16 %v7270
  %v7649 = vunpack.c.l.b16 %v7271
  %v7650 = vunpack.c.h.b16 %v7271
  %v7651 = vunpack.c.l.b16 %v7272
  %v7652 = vunpack.c.h.b16 %v7272
  %v7653 = vunpack.c.l.b16 %v7273
  %v7654 = vunpack.c.h.b16 %v7273
  %v7655 = vunpack.c.l.b16 %v7274
  %v7656 = vunpack.c.h.b16 %v7274
  %v7657 = vunpack.c.l.b16 %v7275
  %v7658 = vunpack.c.h.b16 %v7275
  %v7659 = vunpack.c.l.b16 %v7276
  %v7660 = vunpack.c.h.b16 %v7276
  %v7661 = vunpack.c.l.b16 %v7277
  %v7662 = vunpack.c.h.b16 %v7277
  %v7663 = vunpack.c.l.b16 %v7278
  %v7664 = vunpack.c.h.b16 %v7278
  %v7665 = vunpack.c.l.b16 %v7279
  %v7666 = vunpack.c.h.b16 %v7279
  %v7667 = vunpack.c.l.b16 %v7280
  %v7668 = vunpack.c.h.b16 %v7280
  %v7669 = vunpack.c.l.b16 %v7281
  %v7670 = vunpack.c.h.b16 %v7281
  %v7671 = vunpack.c.l.b16 %v7282
  %v7672 = vunpack.c.h.b16 %v7282
  %v7673 = vunpack.c.l.b16 %v7283
  %v7674 = vunpack.c.h.b16 %v7283
  %v7675 = vunpack.c.l.b16 %v7284
  %v7676 = vunpack.c.h.b16 %v7284
  %v7677 = vunpack.c.l.b16 %v7285
  %v7678 = vunpack.c.h.b16 %v7285
  %v7679 = vunpack.c.l.b16 %v7286
  %v7680 = vunpack.c.h.b16 %v7286
  %v7681 = vunpack.c.l.b16 %v7287
  %v7682 = vunpack.c.h.b16 %v7287
  %v7683 = vunpack.c.l.b16 %v7288
  %v7684 = vunpack.c.h.b16 %v7288
  %v7685 = vunpack.c.l.b16 %v7289
  %v7686 = vunpack.c.h.b16 %v7289
  %v7687 = vunpack.c.l.b16 %v7290
  %v7688 = vunpack.c.h.b16 %v7290
  %v7689 = vunpack.c.l.b16 %v7291
  %v7690 = vunpack.c.h.b16 %v7291
  %v7691 = vunpack.c.l.b16 %v7292
  %v7692 = vunpack.c.h.b16 %v7292
  %v7693 = vunpack.c.l.b16 %v7293
  %v7694 = vunpack.c.h.b16 %v7293
  %v7695 = vunpack.c.l.b16 %v7294
  %v7696 = vunpack.c.h.b16 %v7294
  %v7697 = vpack.c.b16 %v7449, %v7441
  %v7698 = vpack.c.b16 %v7450, %v7442
  %v7699 = vpack.c.b16 %v7451, %v7443
  %v7700 = vpack.c.b16 %v7452, %v7444
  %v7701 = vpack.c.b16 %v7453, %v7445
  %v7702 = vpack.c.b16 %v7454, %v7446
  %v7703 = vpack.c.b16 %v7455, %v7447
  %v7704 = vpack.c.b16 %v7456, %v7448
  %v7705 = vpack.c.b16 %v7465, %v7457
  %v7706 = vpack.c.b16 %v7466, %v7458
  %v7707 = vpack.c.b16 %v7467, %v7459
  %v7708 = vpack.c.b16 %v7468, %v7460
  %v7709 = vpack.c.b16 %v7469, %v7461
  %v7710 = vpack.c.b16 %v7470, %v7462
  %v7711 = vpack.c.b16 %v7471, %v7463
  %v7712 = vpack.c.b16 %v7472, %v7464
  %v7713 = vpack.c.b16 %v7481, %v7473
  %v7714 = vpack.c.b16 %v7482, %v7474
  %v7715 = vpack.c.b16 %v7483, %v7475
  %v7716 = vpack.c.b16 %v7484, %v7476
  %v7717 = vpack.c.b16 %v7485, %v7477
  %v7718 = vpack.c.b16 %v7486, %v7478
  %v7719 = vpack.c.b16 %v7487, %v7479
  %v7720 = vpack.c.b16 %v7488, %v7480
  %v7721 = vpack.c.b16 %v7497, %v7489
  %v7722 = vpack.c.b16 %v7498, %v7490
  %v7723 = vpack.c.b16 %v7499, %v7491
  %v7724 = vpack.c.b16 %v7500, %v7492
  %v7725 = vpack.c.b16 %v7501, %v7493
  %v7726 = vpack.c.b16 %v7502, %v7494
  %v7727 = vpack.c.b16 %v7503, %v7495
  %v7728 = vpack.c.b16 %v7504, %v7496
  %v7729 = vpack.c.b16 %v7513, %v7505
  %v7730 = vpack.c.b16 %v7514, %v7506
  %v7731 = vpack.c.b16 %v7515, %v7507
  %v7732 = vpack.c.b16 %v7516, %v7508
  %v7733 = vpack.c.b16 %v7517, %v7509
  %v7734 = vpack.c.b16 %v7518, %v7510
  %v7735 = vpack.c.b16 %v7519, %v7511
  %v7736 = vpack.c.b16 %v7520, %v7512
  %v7737 = vpack.c.b16 %v7529, %v7521
  %v7738 = vpack.c.b16 %v7530, %v7522
  %v7739 = vpack.c.b16 %v7531, %v7523
  %v7740 = vpack.c.b16 %v7532, %v7524
  %v7741 = vpack.c.b16 %v7533, %v7525
  %v7742 = vpack.c.b16 %v7534, %v7526
  %v7743 = vpack.c.b16 %v7535, %v7527
  %v7744 = vpack.c.b16 %v7536, %v7528
  %v7745 = vpack.c.b16 %v7545, %v7537
  %v7746 = vpack.c.b16 %v7546, %v7538
  %v7747 = vpack.c.b16 %v7547, %v7539
  %v7748 = vpack.c.b16 %v7548, %v7540
  %v7749 = vpack.c.b16 %v7549, %v7541
  %v7750 = vpack.c.b16 %v7550, %v7542
  %v7751 = vpack.c.b16 %v7551, %v7543
  %v7752 = vpack.c.b16 %v7552, %v7544
  %v7753 = vpack.c.b16 %v7561, %v7553
  %v7754 = vpack.c.b16 %v7562, %v7554
  %v7755 = vpack.c.b16 %v7563, %v7555
  %v7756 = vpack.c.b16 %v7564, %v7556
  %v7757 = vpack.c.b16 %v7565, %v7557
  %v7758 = vpack.c.b16 %v7566, %v7558
  %v7759 = vpack.c.b16 %v7567, %v7559
  %v7760 = vpack.c.b16 %v7568, %v7560
  %v7761 = vpack.c.b16 %v7577, %v7569
  %v7762 = vpack.c.b16 %v7578, %v7570
  %v7763 = vpack.c.b16 %v7579, %v7571
  %v7764 = vpack.c.b16 %v7580, %v7572
  %v7765 = vpack.c.b16 %v7581, %v7573
  %v7766 = vpack.c.b16 %v7582, %v7574
  %v7767 = vpack.c.b16 %v7583, %v7575
  %v7768 = vpack.c.b16 %v7584, %v7576
  %v7769 = vpack.c.b16 %v7593, %v7585
  %v7770 = vpack.c.b16 %v7594, %v7586
  %v7771 = vpack.c.b16 %v7595, %v7587
  %v7772 = vpack.c.b16 %v7596, %v7588
  %v7773 = vpack.c.b16 %v7597, %v7589
  %v7774 = vpack.c.b16 %v7598, %v7590
  %v7775 = vpack.c.b16 %v7599, %v7591
  %v7776 = vpack.c.b16 %v7600, %v7592
  %v7777 = vpack.c.b16 %v7609, %v7601
  %v7778 = vpack.c.b16 %v7610, %v7602
  %v7779 = vpack.c.b16 %v7611, %v7603
  %v7780 = vpack.c.b16 %v7612, %v7604
  %v7781 = vpack.c.b16 %v7613, %v7605
  %v7782 = vpack.c.b16 %v7614, %v7606
  %v7783 = vpack.c.b16 %v7615, %v7607
  %v7784 = vpack.c.b16 %v7616, %v7608
  %v7785 = vpack.c.b16 %v7625, %v7617
  %v7786 = vpack.c.b16 %v7626, %v7618
  %v7787 = vpack.c.b16 %v7627, %v7619
  %v7788 = vpack.c.b16 %v7628, %v7620
  %v7789 = vpack.c.b16 %v7629, %v7621
  %v7790 = vpack.c.b16 %v7630, %v7622
  %v7791 = vpack.c.b16 %v7631, %v7623
  %v7792 = vpack.c.b16 %v7632, %v7624
  %v7793 = vpack.c.b16 %v7641, %v7633
  %v7794 = vpack.c.b16 %v7642, %v7634
  %v7795 = vpack.c.b16 %v7643, %v7635
  %v7796 = vpack.c.b16 %v7644, %v7636
  %v7797 = vpack.c.b16 %v7645, %v7637
  %v7798 = vpack.c.b16 %v7646, %v7638
  %v7799 = vpack.c.b16 %v7647, %v7639
  %v7800 = vpack.c.b16 %v7648, %v7640
  %v7801 = vpack.c.b16 %v7657, %v7649
  %v7802 = vpack.c.b16 %v7658, %v7650
  %v7803 = vpack.c.b16 %v7659, %v7651
  %v7804 = vpack.c.b16 %v7660, %v7652
  %v7805 = vpack.c.b16 %v7661, %v7653
  %v7806 = vpack.c.b16 %v7662, %v7654
  %v7807 = vpack.c.b16 %v7663, %v7655
  %v7808 = vpack.c.b16 %v7664, %v7656
  %v7809 = vpack.c.b16 %v7673, %v7665
  %v7810 = vpack.c.b16 %v7674, %v7666
  %v7811 = vpack.c.b16 %v7675, %v7667
  %v7812 = vpack.c.b16 %v7676, %v7668
  %v7813 = vpack.c.b16 %v7677, %v7669
  %v7814 = vpack.c.b16 %v7678, %v7670
  %v7815 = vpack.c.b16 %v7679, %v7671
  %v7816 = vpack.c.b16 %v7680, %v7672
  %v7817 = vpack.c.b16 %v7689, %v7681
  %v7818 = vpack.c.b16 %v7690, %v7682
  %v7819 = vpack.c.b16 %v7691, %v7683
  %v7820 = vpack.c.b16 %v7692, %v7684
  %v7821 = vpack.c.b16 %v7693, %v7685
  %v7822 = vpack.c.b16 %v7694, %v7686
  %v7823 = vpack.c.b16 %v7695, %v7687
  %v7824 = vpack.c.b16 %v7696, %v7688
  %7953 = vmatpush.bf16.msra.mxu0 %v7753
  %7954 = vmatpush.bf16.msra.mxu0 %v7745
  %7955 = vmatpush.bf16.msra.mxu0 %v7737
  %7956 = vmatpush.bf16.msra.mxu0 %v7729
  %7957 = vmatpush.bf16.msra.mxu0 %v7721
  %7958 = vmatpush.bf16.msra.mxu0 %v7713
  %7959 = vmatpush.bf16.msra.mxu0 %v7705
  %7960 = vmatpush.bf16.msra.mxu0 %v7697
  %7961 = vmatmul.bf16.gmra.mxu0 %v7135
  %v7962 = vpop.f32.mrf.mxu0
  %v7963 = vadd.f32 %v7297, %v7962
  %v7964 = vpop.f32.mrf.mxu0
  %v7965 = vadd.f32 %v7297, %v7964
  %7966 = vmatmul.bf16.gmra.mxu0 %v7137
  %v7967 = vpop.f32.mrf.mxu0
  %v7968 = vadd.f32 %v7297, %v7967
  %v7969 = vpop.f32.mrf.mxu0
  %v7970 = vadd.f32 %v7297, %v7969
  %7971 = vmatmul.bf16.gmra.mxu0 %v7139
  %v7972 = vpop.f32.mrf.mxu0
  %v7973 = vadd.f32 %v7297, %v7972
  %v7974 = vpop.f32.mrf.mxu0
  %v7975 = vadd.f32 %v7297, %v7974
  %7976 = vmatmul.bf16.gmra.mxu0 %v7141
  %v7977 = vpop.f32.mrf.mxu0
  %v7978 = vadd.f32 %v7297, %v7977
  %v7979 = vpop.f32.mrf.mxu0
  %v7980 = vadd.f32 %v7297, %v7979
  %7981 = vmatmul.bf16.gmra.mxu0 %v7143
  %v7982 = vpop.f32.mrf.mxu0
  %v7983 = vadd.f32 %v7297, %v7982
  %v7984 = vpop.f32.mrf.mxu0
  %v7985 = vadd.f32 %v7297, %v7984
  %7986 = vmatmul.bf16.gmra.mxu0 %v7145
  %v7987 = vpop.f32.mrf.mxu0
  %v7988 = vadd.f32 %v7297, %v7987
  %v7989 = vpop.f32.mrf.mxu0
  %v7990 = vadd.f32 %v7297, %v7989
  %7991 = vmatmul.bf16.gmra.mxu0 %v7147
  %v7992 = vpop.f32.mrf.mxu0
  %v7993 = vadd.f32 %v7297, %v7992
  %v7994 = vpop.f32.mrf.mxu0
  %v7995 = vadd.f32 %v7297, %v7994
  %7996 = vmatmul.bf16.gmra.mxu0 %v7149
  %v7997 = vpop.f32.mrf.mxu0
  %v7998 = vadd.f32 %v7297, %v7997
  %v7999 = vpop.f32.mrf.mxu0
  %v8000 = vadd.f32 %v7297, %v7999
  %8001 = vmatmul.bf16.gmra.mxu0 %v7151
  %v8002 = vpop.f32.mrf.mxu0
  %v8003 = vadd.f32 %v7297, %v8002
  %v8004 = vpop.f32.mrf.mxu0
  %v8005 = vadd.f32 %v7297, %v8004
  %8006 = vmatmul.bf16.gmra.mxu0 %v7153
  %v8007 = vpop.f32.mrf.mxu0
  %v8008 = vadd.f32 %v7297, %v8007
  %v8009 = vpop.f32.mrf.mxu0
  %v8010 = vadd.f32 %v7297, %v8009
  %8011 = vmatmul.bf16.gmra.mxu0 %v7155
  %v8012 = vpop.f32.mrf.mxu0
  %v8013 = vadd.f32 %v7297, %v8012
  %v8014 = vpop.f32.mrf.mxu0
  %v8015 = vadd.f32 %v7297, %v8014
  %8016 = vmatmul.bf16.gmra.mxu0 %v7157
  %v8017 = vpop.f32.mrf.mxu0
  %v8018 = vadd.f32 %v7297, %v8017
  %v8019 = vpop.f32.mrf.mxu0
  %v8020 = vadd.f32 %v7297, %v8019
  %8021 = vmatmul.bf16.gmra.mxu0 %v7159
  %v8022 = vpop.f32.mrf.mxu0
  %v8023 = vadd.f32 %v7297, %v8022
  %v8024 = vpop.f32.mrf.mxu0
  %v8025 = vadd.f32 %v7297, %v8024
  %8026 = vmatmul.bf16.gmra.mxu0 %v7161
  %v8027 = vpop.f32.mrf.mxu0
  %v8028 = vadd.f32 %v7297, %v8027
  %v8029 = vpop.f32.mrf.mxu0
  %v8030 = vadd.f32 %v7297, %v8029
  %8031 = vmatmul.bf16.gmra.mxu0 %v7163
  %v8032 = vpop.f32.mrf.mxu0
  %v8033 = vadd.f32 %v7297, %v8032
  %v8034 = vpop.f32.mrf.mxu0
  %v8035 = vadd.f32 %v7297, %v8034
  %8036 = vmatmul.bf16.gmra.mxu0 %v7165
  %v8037 = vpop.f32.mrf.mxu0
  %v8038 = vadd.f32 %v7297, %v8037
  %v8039 = vpop.f32.mrf.mxu0
  %v8040 = vadd.f32 %v7297, %v8039
  %8041 = vdwg.mxu0
  %8042 = vmatpush.bf16.msra.mxu0 %v7817
  %8043 = vmatpush.bf16.msra.mxu0 %v7809
  %8044 = vmatpush.bf16.msra.mxu0 %v7801
  %8045 = vmatpush.bf16.msra.mxu0 %v7793
  %8046 = vmatpush.bf16.msra.mxu0 %v7785
  %8047 = vmatpush.bf16.msra.mxu0 %v7777
  %8048 = vmatpush.bf16.msra.mxu0 %v7769
  %8049 = vmatpush.bf16.msra.mxu0 %v7761
  %8050 = vmatmul.bf16.gmra.mxu0 %v7136
  %v8051 = vpop.f32.mrf.mxu0
  %v8052 = vadd.f32 %v7963, %v8051
  %v8053 = vpop.f32.mrf.mxu0
  %v8054 = vadd.f32 %v7965, %v8053
  %8055 = vmatmul.bf16.gmra.mxu0 %v7138
  %v8056 = vpop.f32.mrf.mxu0
  %v8057 = vadd.f32 %v7968, %v8056
  %v8058 = vpop.f32.mrf.mxu0
  %v8059 = vadd.f32 %v7970, %v8058
  %8060 = vmatmul.bf16.gmra.mxu0 %v7140
  %v8061 = vpop.f32.mrf.mxu0
  %v8062 = vadd.f32 %v7973, %v8061
  %v8063 = vpop.f32.mrf.mxu0
  %v8064 = vadd.f32 %v7975, %v8063
  %8065 = vmatmul.bf16.gmra.mxu0 %v7142
  %v8066 = vpop.f32.mrf.mxu0
  %v8067 = vadd.f32 %v7978, %v8066
  %v8068 = vpop.f32.mrf.mxu0
  %v8069 = vadd.f32 %v7980, %v8068
  %8070 = vmatmul.bf16.gmra.mxu0 %v7144
  %v8071 = vpop.f32.mrf.mxu0
  %v8072 = vadd.f32 %v7983, %v8071
  %v8073 = vpop.f32.mrf.mxu0
  %v8074 = vadd.f32 %v7985, %v8073
  %8075 = vmatmul.bf16.gmra.mxu0 %v7146
  %v8076 = vpop.f32.mrf.mxu0
  %v8077 = vadd.f32 %v7988, %v8076
  %v8078 = vpop.f32.mrf.mxu0
  %v8079 = vadd.f32 %v7990, %v8078
  %8080 = vmatmul.bf16.gmra.mxu0 %v7148
  %v8081 = vpop.f32.mrf.mxu0
  %v8082 = vadd.f32 %v7993, %v8081
  %v8083 = vpop.f32.mrf.mxu0
  %v8084 = vadd.f32 %v7995, %v8083
  %8085 = vmatmul.bf16.gmra.mxu0 %v7150
  %v8086 = vpop.f32.mrf.mxu0
  %v8087 = vadd.f32 %v7998, %v8086
  %v8088 = vpop.f32.mrf.mxu0
  %v8089 = vadd.f32 %v8000, %v8088
  %8090 = vmatmul.bf16.gmra.mxu0 %v7152
  %v8091 = vpop.f32.mrf.mxu0
  %v8092 = vadd.f32 %v8003, %v8091
  %v8093 = vpop.f32.mrf.mxu0
  %v8094 = vadd.f32 %v8005, %v8093
  %8095 = vmatmul.bf16.gmra.mxu0 %v7154
  %v8096 = vpop.f32.mrf.mxu0
  %v8097 = vadd.f32 %v8008, %v8096
  %v8098 = vpop.f32.mrf.mxu0
  %v8099 = vadd.f32 %v8010, %v8098
  %8100 = vmatmul.bf16.gmra.mxu0 %v7156
  %v8101 = vpop.f32.mrf.mxu0
  %v8102 = vadd.f32 %v8013, %v8101
  %v8103 = vpop.f32.mrf.mxu0
  %v8104 = vadd.f32 %v8015, %v8103
  %8105 = vmatmul.bf16.gmra.mxu0 %v7158
  %v8106 = vpop.f32.mrf.mxu0
  %v8107 = vadd.f32 %v8018, %v8106
  %v8108 = vpop.f32.mrf.mxu0
  %v8109 = vadd.f32 %v8020, %v8108
  %8110 = vmatmul.bf16.gmra.mxu0 %v7160
  %v8111 = vpop.f32.mrf.mxu0
  %v8112 = vadd.f32 %v8023, %v8111
  %v8113 = vpop.f32.mrf.mxu0
  %v8114 = vadd.f32 %v8025, %v8113
  %8115 = vmatmul.bf16.gmra.mxu0 %v7162
  %v8116 = vpop.f32.mrf.mxu0
  %v8117 = vadd.f32 %v8028, %v8116
  %v8118 = vpop.f32.mrf.mxu0
  %v8119 = vadd.f32 %v8030, %v8118
  %8120 = vmatmul.bf16.gmra.mxu0 %v7164
  %v8121 = vpop.f32.mrf.mxu0
  %v8122 = vadd.f32 %v8033, %v8121
  %v8123 = vpop.f32.mrf.mxu0
  %v8124 = vadd.f32 %v8035, %v8123
  %8125 = vmatmul.bf16.gmra.mxu0 %v7166
  %v8126 = vpop.f32.mrf.mxu0
  %v8127 = vadd.f32 %v8038, %v8126
  %v8128 = vpop.f32.mrf.mxu0
  %v8129 = vadd.f32 %v8040, %v8128
  %8130 = vdwg.mxu0
  %8131 = vmatpush.bf16.msra.mxu0 %v7754
  %8132 = vmatpush.bf16.msra.mxu0 %v7746
  %8133 = vmatpush.bf16.msra.mxu0 %v7738
  %8134 = vmatpush.bf16.msra.mxu0 %v7730
  %8135 = vmatpush.bf16.msra.mxu0 %v7722
  %8136 = vmatpush.bf16.msra.mxu0 %v7714
  %8137 = vmatpush.bf16.msra.mxu0 %v7706
  %8138 = vmatpush.bf16.msra.mxu0 %v7698
  %8139 = vmatmul.bf16.gmra.mxu0 %v7135
  %v8140 = vpop.f32.mrf.mxu0
  %v8141 = vadd.f32 %v7298, %v8140
  %v8142 = vpop.f32.mrf.mxu0
  %v8143 = vadd.f32 %v7298, %v8142
  %8144 = vmatmul.bf16.gmra.mxu0 %v7137
  %v8145 = vpop.f32.mrf.mxu0
  %v8146 = vadd.f32 %v7298, %v8145
  %v8147 = vpop.f32.mrf.mxu0
  %v8148 = vadd.f32 %v7298, %v8147
  %8149 = vmatmul.bf16.gmra.mxu0 %v7139
  %v8150 = vpop.f32.mrf.mxu0
  %v8151 = vadd.f32 %v7298, %v8150
  %v8152 = vpop.f32.mrf.mxu0
  %v8153 = vadd.f32 %v7298, %v8152
  %8154 = vmatmul.bf16.gmra.mxu0 %v7141
  %v8155 = vpop.f32.mrf.mxu0
  %v8156 = vadd.f32 %v7298, %v8155
  %v8157 = vpop.f32.mrf.mxu0
  %v8158 = vadd.f32 %v7298, %v8157
  %8159 = vmatmul.bf16.gmra.mxu0 %v7143
  %v8160 = vpop.f32.mrf.mxu0
  %v8161 = vadd.f32 %v7298, %v8160
  %v8162 = vpop.f32.mrf.mxu0
  %v8163 = vadd.f32 %v7298, %v8162
  %8164 = vmatmul.bf16.gmra.mxu0 %v7145
  %v8165 = vpop.f32.mrf.mxu0
  %v8166 = vadd.f32 %v7298, %v8165
  %v8167 = vpop.f32.mrf.mxu0
  %v8168 = vadd.f32 %v7298, %v8167
  %8169 = vmatmul.bf16.gmra.mxu0 %v7147
  %v8170 = vpop.f32.mrf.mxu0
  %v8171 = vadd.f32 %v7298, %v8170
  %v8172 = vpop.f32.mrf.mxu0
  %v8173 = vadd.f32 %v7298, %v8172
  %8174 = vmatmul.bf16.gmra.mxu0 %v7149
  %v8175 = vpop.f32.mrf.mxu0
  %v8176 = vadd.f32 %v7298, %v8175
  %v8177 = vpop.f32.mrf.mxu0
  %v8178 = vadd.f32 %v7298, %v8177
  %8179 = vmatmul.bf16.gmra.mxu0 %v7151
  %v8180 = vpop.f32.mrf.mxu0
  %v8181 = vadd.f32 %v7298, %v8180
  %v8182 = vpop.f32.mrf.mxu0
  %v8183 = vadd.f32 %v7298, %v8182
  %8184 = vmatmul.bf16.gmra.mxu0 %v7153
  %v8185 = vpop.f32.mrf.mxu0
  %v8186 = vadd.f32 %v7298, %v8185
  %v8187 = vpop.f32.mrf.mxu0
  %v8188 = vadd.f32 %v7298, %v8187
  %8189 = vmatmul.bf16.gmra.mxu0 %v7155
  %v8190 = vpop.f32.mrf.mxu0
  %v8191 = vadd.f32 %v7298, %v8190
  %v8192 = vpop.f32.mrf.mxu0
  %v8193 = vadd.f32 %v7298, %v8192
  %8194 = vmatmul.bf16.gmra.mxu0 %v7157
  %v8195 = vpop.f32.mrf.mxu0
  %v8196 = vadd.f32 %v7298, %v8195
  %v8197 = vpop.f32.mrf.mxu0
  %v8198 = vadd.f32 %v7298, %v8197
  %8199 = vmatmul.bf16.gmra.mxu0 %v7159
  %v8200 = vpop.f32.mrf.mxu0
  %v8201 = vadd.f32 %v7298, %v8200
  %v8202 = vpop.f32.mrf.mxu0
  %v8203 = vadd.f32 %v7298, %v8202
  %8204 = vmatmul.bf16.gmra.mxu0 %v7161
  %v8205 = vpop.f32.mrf.mxu0
  %v8206 = vadd.f32 %v7298, %v8205
  %v8207 = vpop.f32.mrf.mxu0
  %v8208 = vadd.f32 %v7298, %v8207
  %8209 = vmatmul.bf16.gmra.mxu0 %v7163
  %v8210 = vpop.f32.mrf.mxu0
  %v8211 = vadd.f32 %v7298, %v8210
  %v8212 = vpop.f32.mrf.mxu0
  %v8213 = vadd.f32 %v7298, %v8212
  %8214 = vmatmul.bf16.gmra.mxu0 %v7165
  %v8215 = vpop.f32.mrf.mxu0
  %v8216 = vadd.f32 %v7298, %v8215
  %v8217 = vpop.f32.mrf.mxu0
  %v8218 = vadd.f32 %v7298, %v8217
  %8219 = vdwg.mxu0
  %8220 = vmatpush.bf16.msra.mxu0 %v7818
  %8221 = vmatpush.bf16.msra.mxu0 %v7810
  %8222 = vmatpush.bf16.msra.mxu0 %v7802
  %8223 = vmatpush.bf16.msra.mxu0 %v7794
  %8224 = vmatpush.bf16.msra.mxu0 %v7786
  %8225 = vmatpush.bf16.msra.mxu0 %v7778
  %8226 = vmatpush.bf16.msra.mxu0 %v7770
  %8227 = vmatpush.bf16.msra.mxu0 %v7762
  %8228 = vmatmul.bf16.gmra.mxu0 %v7136
  %v8229 = vpop.f32.mrf.mxu0
  %v8230 = vadd.f32 %v8141, %v8229
  %v8231 = vpop.f32.mrf.mxu0
  %v8232 = vadd.f32 %v8143, %v8231
  %8233 = vmatmul.bf16.gmra.mxu0 %v7138
  %v8234 = vpop.f32.mrf.mxu0
  %v8235 = vadd.f32 %v8146, %v8234
  %v8236 = vpop.f32.mrf.mxu0
  %v8237 = vadd.f32 %v8148, %v8236
  %8238 = vmatmul.bf16.gmra.mxu0 %v7140
  %v8239 = vpop.f32.mrf.mxu0
  %v8240 = vadd.f32 %v8151, %v8239
  %v8241 = vpop.f32.mrf.mxu0
  %v8242 = vadd.f32 %v8153, %v8241
  %8243 = vmatmul.bf16.gmra.mxu0 %v7142
  %v8244 = vpop.f32.mrf.mxu0
  %v8245 = vadd.f32 %v8156, %v8244
  %v8246 = vpop.f32.mrf.mxu0
  %v8247 = vadd.f32 %v8158, %v8246
  %8248 = vmatmul.bf16.gmra.mxu0 %v7144
  %v8249 = vpop.f32.mrf.mxu0
  %v8250 = vadd.f32 %v8161, %v8249
  %v8251 = vpop.f32.mrf.mxu0
  %v8252 = vadd.f32 %v8163, %v8251
  %8253 = vmatmul.bf16.gmra.mxu0 %v7146
  %v8254 = vpop.f32.mrf.mxu0
  %v8255 = vadd.f32 %v8166, %v8254
  %v8256 = vpop.f32.mrf.mxu0
  %v8257 = vadd.f32 %v8168, %v8256
  %8258 = vmatmul.bf16.gmra.mxu0 %v7148
  %v8259 = vpop.f32.mrf.mxu0
  %v8260 = vadd.f32 %v8171, %v8259
  %v8261 = vpop.f32.mrf.mxu0
  %v8262 = vadd.f32 %v8173, %v8261
  %8263 = vmatmul.bf16.gmra.mxu0 %v7150
  %v8264 = vpop.f32.mrf.mxu0
  %v8265 = vadd.f32 %v8176, %v8264
  %v8266 = vpop.f32.mrf.mxu0
  %v8267 = vadd.f32 %v8178, %v8266
  %8268 = vmatmul.bf16.gmra.mxu0 %v7152
  %v8269 = vpop.f32.mrf.mxu0
  %v8270 = vadd.f32 %v8181, %v8269
  %v8271 = vpop.f32.mrf.mxu0
  %v8272 = vadd.f32 %v8183, %v8271
  %8273 = vmatmul.bf16.gmra.mxu0 %v7154
  %v8274 = vpop.f32.mrf.mxu0
  %v8275 = vadd.f32 %v8186, %v8274
  %v8276 = vpop.f32.mrf.mxu0
  %v8277 = vadd.f32 %v8188, %v8276
  %8278 = vmatmul.bf16.gmra.mxu0 %v7156
  %v8279 = vpop.f32.mrf.mxu0
  %v8280 = vadd.f32 %v8191, %v8279
  %v8281 = vpop.f32.mrf.mxu0
  %v8282 = vadd.f32 %v8193, %v8281
  %8283 = vmatmul.bf16.gmra.mxu0 %v7158
  %v8284 = vpop.f32.mrf.mxu0
  %v8285 = vadd.f32 %v8196, %v8284
  %v8286 = vpop.f32.mrf.mxu0
  %v8287 = vadd.f32 %v8198, %v8286
  %8288 = vmatmul.bf16.gmra.mxu0 %v7160
  %v8289 = vpop.f32.mrf.mxu0
  %v8290 = vadd.f32 %v8201, %v8289
  %v8291 = vpop.f32.mrf.mxu0
  %v8292 = vadd.f32 %v8203, %v8291
  %8293 = vmatmul.bf16.gmra.mxu0 %v7162
  %v8294 = vpop.f32.mrf.mxu0
  %v8295 = vadd.f32 %v8206, %v8294
  %v8296 = vpop.f32.mrf.mxu0
  %v8297 = vadd.f32 %v8208, %v8296
  %8298 = vmatmul.bf16.gmra.mxu0 %v7164
  %v8299 = vpop.f32.mrf.mxu0
  %v8300 = vadd.f32 %v8211, %v8299
  %v8301 = vpop.f32.mrf.mxu0
  %v8302 = vadd.f32 %v8213, %v8301
  %8303 = vmatmul.bf16.gmra.mxu0 %v7166
  %v8304 = vpop.f32.mrf.mxu0
  %v8305 = vadd.f32 %v8216, %v8304
  %v8306 = vpop.f32.mrf.mxu0
  %v8307 = vadd.f32 %v8218, %v8306
  %8308 = vdwg.mxu0
  %8309 = vmatpush.bf16.msra.mxu0 %v7755
  %8310 = vmatpush.bf16.msra.mxu0 %v7747
  %8311 = vmatpush.bf16.msra.mxu0 %v7739
  %8312 = vmatpush.bf16.msra.mxu0 %v7731
  %8313 = vmatpush.bf16.msra.mxu0 %v7723
  %8314 = vmatpush.bf16.msra.mxu0 %v7715
  %8315 = vmatpush.bf16.msra.mxu0 %v7707
  %8316 = vmatpush.bf16.msra.mxu0 %v7699
  %8317 = vmatmul.bf16.gmra.mxu0 %v7135
  %v8318 = vpop.f32.mrf.mxu0
  %v8319 = vadd.f32 %v7299, %v8318
  %v8320 = vpop.f32.mrf.mxu0
  %v8321 = vadd.f32 %v7299, %v8320
  %8322 = vmatmul.bf16.gmra.mxu0 %v7137
  %v8323 = vpop.f32.mrf.mxu0
  %v8324 = vadd.f32 %v7299, %v8323
  %v8325 = vpop.f32.mrf.mxu0
  %v8326 = vadd.f32 %v7299, %v8325
  %8327 = vmatmul.bf16.gmra.mxu0 %v7139
  %v8328 = vpop.f32.mrf.mxu0
  %v8329 = vadd.f32 %v7299, %v8328
  %v8330 = vpop.f32.mrf.mxu0
  %v8331 = vadd.f32 %v7299, %v8330
  %8332 = vmatmul.bf16.gmra.mxu0 %v7141
  %v8333 = vpop.f32.mrf.mxu0
  %v8334 = vadd.f32 %v7299, %v8333
  %v8335 = vpop.f32.mrf.mxu0
  %v8336 = vadd.f32 %v7299, %v8335
  %8337 = vmatmul.bf16.gmra.mxu0 %v7143
  %v8338 = vpop.f32.mrf.mxu0
  %v8339 = vadd.f32 %v7299, %v8338
  %v8340 = vpop.f32.mrf.mxu0
  %v8341 = vadd.f32 %v7299, %v8340
  %8342 = vmatmul.bf16.gmra.mxu0 %v7145
  %v8343 = vpop.f32.mrf.mxu0
  %v8344 = vadd.f32 %v7299, %v8343
  %v8345 = vpop.f32.mrf.mxu0
  %v8346 = vadd.f32 %v7299, %v8345
  %8347 = vmatmul.bf16.gmra.mxu0 %v7147
  %v8348 = vpop.f32.mrf.mxu0
  %v8349 = vadd.f32 %v7299, %v8348
  %v8350 = vpop.f32.mrf.mxu0
  %v8351 = vadd.f32 %v7299, %v8350
  %8352 = vmatmul.bf16.gmra.mxu0 %v7149
  %v8353 = vpop.f32.mrf.mxu0
  %v8354 = vadd.f32 %v7299, %v8353
  %v8355 = vpop.f32.mrf.mxu0
  %v8356 = vadd.f32 %v7299, %v8355
  %8357 = vmatmul.bf16.gmra.mxu0 %v7151
  %v8358 = vpop.f32.mrf.mxu0
  %v8359 = vadd.f32 %v7299, %v8358
  %v8360 = vpop.f32.mrf.mxu0
  %v8361 = vadd.f32 %v7299, %v8360
  %8362 = vmatmul.bf16.gmra.mxu0 %v7153
  %v8363 = vpop.f32.mrf.mxu0
  %v8364 = vadd.f32 %v7299, %v8363
  %v8365 = vpop.f32.mrf.mxu0
  %v8366 = vadd.f32 %v7299, %v8365
  %8367 = vmatmul.bf16.gmra.mxu0 %v7155
  %v8368 = vpop.f32.mrf.mxu0
  %v8369 = vadd.f32 %v7299, %v8368
  %v8370 = vpop.f32.mrf.mxu0
  %v8371 = vadd.f32 %v7299, %v8370
  %8372 = vmatmul.bf16.gmra.mxu0 %v7157
  %v8373 = vpop.f32.mrf.mxu0
  %v8374 = vadd.f32 %v7299, %v8373
  %v8375 = vpop.f32.mrf.mxu0
  %v8376 = vadd.f32 %v7299, %v8375
  %8377 = vmatmul.bf16.gmra.mxu0 %v7159
  %v8378 = vpop.f32.mrf.mxu0
  %v8379 = vadd.f32 %v7299, %v8378
  %v8380 = vpop.f32.mrf.mxu0
  %v8381 = vadd.f32 %v7299, %v8380
  %8382 = vmatmul.bf16.gmra.mxu0 %v7161
  %v8383 = vpop.f32.mrf.mxu0
  %v8384 = vadd.f32 %v7299, %v8383
  %v8385 = vpop.f32.mrf.mxu0
  %v8386 = vadd.f32 %v7299, %v8385
  %8387 = vmatmul.bf16.gmra.mxu0 %v7163
  %v8388 = vpop.f32.mrf.mxu0
  %v8389 = vadd.f32 %v7299, %v8388
  %v8390 = vpop.f32.mrf.mxu0
  %v8391 = vadd.f32 %v7299, %v8390
  %8392 = vmatmul.bf16.gmra.mxu0 %v7165
  %v8393 = vpop.f32.mrf.mxu0
  %v8394 = vadd.f32 %v7299, %v8393
  %v8395 = vpop.f32.mrf.mxu0
  %v8396 = vadd.f32 %v7299, %v8395
  %8397 = vdwg.mxu0
  %8398 = vmatpush.bf16.msra.mxu0 %v7819
  %8399 = vmatpush.bf16.msra.mxu0 %v7811
  %8400 = vmatpush.bf16.msra.mxu0 %v7803
  %8401 = vmatpush.bf16.msra.mxu0 %v7795
  %8402 = vmatpush.bf16.msra.mxu0 %v7787
  %8403 = vmatpush.bf16.msra.mxu0 %v7779
  %8404 = vmatpush.bf16.msra.mxu0 %v7771
  %8405 = vmatpush.bf16.msra.mxu0 %v7763
  %8406 = vmatmul.bf16.gmra.mxu0 %v7136
  %v8407 = vpop.f32.mrf.mxu0
  %v8408 = vadd.f32 %v8319, %v8407
  %v8409 = vpop.f32.mrf.mxu0
  %v8410 = vadd.f32 %v8321, %v8409
  %8411 = vmatmul.bf16.gmra.mxu0 %v7138
  %v8412 = vpop.f32.mrf.mxu0
  %v8413 = vadd.f32 %v8324, %v8412
  %v8414 = vpop.f32.mrf.mxu0
  %v8415 = vadd.f32 %v8326, %v8414
  %8416 = vmatmul.bf16.gmra.mxu0 %v7140
  %v8417 = vpop.f32.mrf.mxu0
  %v8418 = vadd.f32 %v8329, %v8417
  %v8419 = vpop.f32.mrf.mxu0
  %v8420 = vadd.f32 %v8331, %v8419
  %8421 = vmatmul.bf16.gmra.mxu0 %v7142
  %v8422 = vpop.f32.mrf.mxu0
  %v8423 = vadd.f32 %v8334, %v8422
  %v8424 = vpop.f32.mrf.mxu0
  %v8425 = vadd.f32 %v8336, %v8424
  %8426 = vmatmul.bf16.gmra.mxu0 %v7144
  %v8427 = vpop.f32.mrf.mxu0
  %v8428 = vadd.f32 %v8339, %v8427
  %v8429 = vpop.f32.mrf.mxu0
  %v8430 = vadd.f32 %v8341, %v8429
  %8431 = vmatmul.bf16.gmra.mxu0 %v7146
  %v8432 = vpop.f32.mrf.mxu0
  %v8433 = vadd.f32 %v8344, %v8432
  %v8434 = vpop.f32.mrf.mxu0
  %v8435 = vadd.f32 %v8346, %v8434
  %8436 = vmatmul.bf16.gmra.mxu0 %v7148
  %v8437 = vpop.f32.mrf.mxu0
  %v8438 = vadd.f32 %v8349, %v8437
  %v8439 = vpop.f32.mrf.mxu0
  %v8440 = vadd.f32 %v8351, %v8439
  %8441 = vmatmul.bf16.gmra.mxu0 %v7150
  %v8442 = vpop.f32.mrf.mxu0
  %v8443 = vadd.f32 %v8354, %v8442
  %v8444 = vpop.f32.mrf.mxu0
  %v8445 = vadd.f32 %v8356, %v8444
  %8446 = vmatmul.bf16.gmra.mxu0 %v7152
  %v8447 = vpop.f32.mrf.mxu0
  %v8448 = vadd.f32 %v8359, %v8447
  %v8449 = vpop.f32.mrf.mxu0
  %v8450 = vadd.f32 %v8361, %v8449
  %8451 = vmatmul.bf16.gmra.mxu0 %v7154
  %v8452 = vpop.f32.mrf.mxu0
  %v8453 = vadd.f32 %v8364, %v8452
  %v8454 = vpop.f32.mrf.mxu0
  %v8455 = vadd.f32 %v8366, %v8454
  %8456 = vmatmul.bf16.gmra.mxu0 %v7156
  %v8457 = vpop.f32.mrf.mxu0
  %v8458 = vadd.f32 %v8369, %v8457
  %v8459 = vpop.f32.mrf.mxu0
  %v8460 = vadd.f32 %v8371, %v8459
  %8461 = vmatmul.bf16.gmra.mxu0 %v7158
  %v8462 = vpop.f32.mrf.mxu0
  %v8463 = vadd.f32 %v8374, %v8462
  %v8464 = vpop.f32.mrf.mxu0
  %v8465 = vadd.f32 %v8376, %v8464
  %8466 = vmatmul.bf16.gmra.mxu0 %v7160
  %v8467 = vpop.f32.mrf.mxu0
  %v8468 = vadd.f32 %v8379, %v8467
  %v8469 = vpop.f32.mrf.mxu0
  %v8470 = vadd.f32 %v8381, %v8469
  %8471 = vmatmul.bf16.gmra.mxu0 %v7162
  %v8472 = vpop.f32.mrf.mxu0
  %v8473 = vadd.f32 %v8384, %v8472
  %v8474 = vpop.f32.mrf.mxu0
  %v8475 = vadd.f32 %v8386, %v8474
  %8476 = vmatmul.bf16.gmra.mxu0 %v7164
  %v8477 = vpop.f32.mrf.mxu0
  %v8478 = vadd.f32 %v8389, %v8477
  %v8479 = vpop.f32.mrf.mxu0
  %v8480 = vadd.f32 %v8391, %v8479
  %8481 = vmatmul.bf16.gmra.mxu0 %v7166
  %v8482 = vpop.f32.mrf.mxu0
  %v8483 = vadd.f32 %v8394, %v8482
  %v8484 = vpop.f32.mrf.mxu0
  %v8485 = vadd.f32 %v8396, %v8484
  %8486 = vdwg.mxu0
  %8487 = vmatpush.bf16.msra.mxu0 %v7756
  %8488 = vmatpush.bf16.msra.mxu0 %v7748
  %8489 = vmatpush.bf16.msra.mxu0 %v7740
  %8490 = vmatpush.bf16.msra.mxu0 %v7732
  %8491 = vmatpush.bf16.msra.mxu0 %v7724
  %8492 = vmatpush.bf16.msra.mxu0 %v7716
  %8493 = vmatpush.bf16.msra.mxu0 %v7708
  %8494 = vmatpush.bf16.msra.mxu0 %v7700
  %8495 = vmatmul.bf16.gmra.mxu0 %v7135
  %v8496 = vpop.f32.mrf.mxu0
  %v8497 = vadd.f32 %v7300, %v8496
  %v8498 = vpop.f32.mrf.mxu0
  %v8499 = vadd.f32 %v7300, %v8498
  %8500 = vmatmul.bf16.gmra.mxu0 %v7137
  %v8501 = vpop.f32.mrf.mxu0
  %v8502 = vadd.f32 %v7300, %v8501
  %v8503 = vpop.f32.mrf.mxu0
  %v8504 = vadd.f32 %v7300, %v8503
  %8505 = vmatmul.bf16.gmra.mxu0 %v7139
  %v8506 = vpop.f32.mrf.mxu0
  %v8507 = vadd.f32 %v7300, %v8506
  %v8508 = vpop.f32.mrf.mxu0
  %v8509 = vadd.f32 %v7300, %v8508
  %8510 = vmatmul.bf16.gmra.mxu0 %v7141
  %v8511 = vpop.f32.mrf.mxu0
  %v8512 = vadd.f32 %v7300, %v8511
  %v8513 = vpop.f32.mrf.mxu0
  %v8514 = vadd.f32 %v7300, %v8513
  %8515 = vmatmul.bf16.gmra.mxu0 %v7143
  %v8516 = vpop.f32.mrf.mxu0
  %v8517 = vadd.f32 %v7300, %v8516
  %v8518 = vpop.f32.mrf.mxu0
  %v8519 = vadd.f32 %v7300, %v8518
  %8520 = vmatmul.bf16.gmra.mxu0 %v7145
  %v8521 = vpop.f32.mrf.mxu0
  %v8522 = vadd.f32 %v7300, %v8521
  %v8523 = vpop.f32.mrf.mxu0
  %v8524 = vadd.f32 %v7300, %v8523
  %8525 = vmatmul.bf16.gmra.mxu0 %v7147
  %v8526 = vpop.f32.mrf.mxu0
  %v8527 = vadd.f32 %v7300, %v8526
  %v8528 = vpop.f32.mrf.mxu0
  %v8529 = vadd.f32 %v7300, %v8528
  %8530 = vmatmul.bf16.gmra.mxu0 %v7149
  %v8531 = vpop.f32.mrf.mxu0
  %v8532 = vadd.f32 %v7300, %v8531
  %v8533 = vpop.f32.mrf.mxu0
  %v8534 = vadd.f32 %v7300, %v8533
  %8535 = vmatmul.bf16.gmra.mxu0 %v7151
  %v8536 = vpop.f32.mrf.mxu0
  %v8537 = vadd.f32 %v7300, %v8536
  %v8538 = vpop.f32.mrf.mxu0
  %v8539 = vadd.f32 %v7300, %v8538
  %8540 = vmatmul.bf16.gmra.mxu0 %v7153
  %v8541 = vpop.f32.mrf.mxu0
  %v8542 = vadd.f32 %v7300, %v8541
  %v8543 = vpop.f32.mrf.mxu0
  %v8544 = vadd.f32 %v7300, %v8543
  %8545 = vmatmul.bf16.gmra.mxu0 %v7155
  %v8546 = vpop.f32.mrf.mxu0
  %v8547 = vadd.f32 %v7300, %v8546
  %v8548 = vpop.f32.mrf.mxu0
  %v8549 = vadd.f32 %v7300, %v8548
  %8550 = vmatmul.bf16.gmra.mxu0 %v7157
  %v8551 = vpop.f32.mrf.mxu0
  %v8552 = vadd.f32 %v7300, %v8551
  %v8553 = vpop.f32.mrf.mxu0
  %v8554 = vadd.f32 %v7300, %v8553
  %8555 = vmatmul.bf16.gmra.mxu0 %v7159
  %v8556 = vpop.f32.mrf.mxu0
  %v8557 = vadd.f32 %v7300, %v8556
  %v8558 = vpop.f32.mrf.mxu0
  %v8559 = vadd.f32 %v7300, %v8558
  %8560 = vmatmul.bf16.gmra.mxu0 %v7161
  %v8561 = vpop.f32.mrf.mxu0
  %v8562 = vadd.f32 %v7300, %v8561
  %v8563 = vpop.f32.mrf.mxu0
  %v8564 = vadd.f32 %v7300, %v8563
  %8565 = vmatmul.bf16.gmra.mxu0 %v7163
  %v8566 = vpop.f32.mrf.mxu0
  %v8567 = vadd.f32 %v7300, %v8566
  %v8568 = vpop.f32.mrf.mxu0
  %v8569 = vadd.f32 %v7300, %v8568
  %8570 = vmatmul.bf16.gmra.mxu0 %v7165
  %v8571 = vpop.f32.mrf.mxu0
  %v8572 = vadd.f32 %v7300, %v8571
  %v8573 = vpop.f32.mrf.mxu0
  %v8574 = vadd.f32 %v7300, %v8573
  %8575 = vdwg.mxu0
  %8576 = vmatpush.bf16.msra.mxu0 %v7820
  %8577 = vmatpush.bf16.msra.mxu0 %v7812
  %8578 = vmatpush.bf16.msra.mxu0 %v7804
  %8579 = vmatpush.bf16.msra.mxu0 %v7796
  %8580 = vmatpush.bf16.msra.mxu0 %v7788
  %8581 = vmatpush.bf16.msra.mxu0 %v7780
  %8582 = vmatpush.bf16.msra.mxu0 %v7772
  %8583 = vmatpush.bf16.msra.mxu0 %v7764
  %8584 = vmatmul.bf16.gmra.mxu0 %v7136
  %v8585 = vpop.f32.mrf.mxu0
  %v8586 = vadd.f32 %v8497, %v8585
  %v8587 = vpop.f32.mrf.mxu0
  %v8588 = vadd.f32 %v8499, %v8587
  %8589 = vmatmul.bf16.gmra.mxu0 %v7138
  %v8590 = vpop.f32.mrf.mxu0
  %v8591 = vadd.f32 %v8502, %v8590
  %v8592 = vpop.f32.mrf.mxu0
  %v8593 = vadd.f32 %v8504, %v8592
  %8594 = vmatmul.bf16.gmra.mxu0 %v7140
  %v8595 = vpop.f32.mrf.mxu0
  %v8596 = vadd.f32 %v8507, %v8595
  %v8597 = vpop.f32.mrf.mxu0
  %v8598 = vadd.f32 %v8509, %v8597
  %8599 = vmatmul.bf16.gmra.mxu0 %v7142
  %v8600 = vpop.f32.mrf.mxu0
  %v8601 = vadd.f32 %v8512, %v8600
  %v8602 = vpop.f32.mrf.mxu0
  %v8603 = vadd.f32 %v8514, %v8602
  %8604 = vmatmul.bf16.gmra.mxu0 %v7144
  %v8605 = vpop.f32.mrf.mxu0
  %v8606 = vadd.f32 %v8517, %v8605
  %v8607 = vpop.f32.mrf.mxu0
  %v8608 = vadd.f32 %v8519, %v8607
  %8609 = vmatmul.bf16.gmra.mxu0 %v7146
  %v8610 = vpop.f32.mrf.mxu0
  %v8611 = vadd.f32 %v8522, %v8610
  %v8612 = vpop.f32.mrf.mxu0
  %v8613 = vadd.f32 %v8524, %v8612
  %8614 = vmatmul.bf16.gmra.mxu0 %v7148
  %v8615 = vpop.f32.mrf.mxu0
  %v8616 = vadd.f32 %v8527, %v8615
  %v8617 = vpop.f32.mrf.mxu0
  %v8618 = vadd.f32 %v8529, %v8617
  %8619 = vmatmul.bf16.gmra.mxu0 %v7150
  %v8620 = vpop.f32.mrf.mxu0
  %v8621 = vadd.f32 %v8532, %v8620
  %v8622 = vpop.f32.mrf.mxu0
  %v8623 = vadd.f32 %v8534, %v8622
  %8624 = vmatmul.bf16.gmra.mxu0 %v7152
  %v8625 = vpop.f32.mrf.mxu0
  %v8626 = vadd.f32 %v8537, %v8625
  %v8627 = vpop.f32.mrf.mxu0
  %v8628 = vadd.f32 %v8539, %v8627
  %8629 = vmatmul.bf16.gmra.mxu0 %v7154
  %v8630 = vpop.f32.mrf.mxu0
  %v8631 = vadd.f32 %v8542, %v8630
  %v8632 = vpop.f32.mrf.mxu0
  %v8633 = vadd.f32 %v8544, %v8632
  %8634 = vmatmul.bf16.gmra.mxu0 %v7156
  %v8635 = vpop.f32.mrf.mxu0
  %v8636 = vadd.f32 %v8547, %v8635
  %v8637 = vpop.f32.mrf.mxu0
  %v8638 = vadd.f32 %v8549, %v8637
  %8639 = vmatmul.bf16.gmra.mxu0 %v7158
  %v8640 = vpop.f32.mrf.mxu0
  %v8641 = vadd.f32 %v8552, %v8640
  %v8642 = vpop.f32.mrf.mxu0
  %v8643 = vadd.f32 %v8554, %v8642
  %8644 = vmatmul.bf16.gmra.mxu0 %v7160
  %v8645 = vpop.f32.mrf.mxu0
  %v8646 = vadd.f32 %v8557, %v8645
  %v8647 = vpop.f32.mrf.mxu0
  %v8648 = vadd.f32 %v8559, %v8647
  %8649 = vmatmul.bf16.gmra.mxu0 %v7162
  %v8650 = vpop.f32.mrf.mxu0
  %v8651 = vadd.f32 %v8562, %v8650
  %v8652 = vpop.f32.mrf.mxu0
  %v8653 = vadd.f32 %v8564, %v8652
  %8654 = vmatmul.bf16.gmra.mxu0 %v7164
  %v8655 = vpop.f32.mrf.mxu0
  %v8656 = vadd.f32 %v8567, %v8655
  %v8657 = vpop.f32.mrf.mxu0
  %v8658 = vadd.f32 %v8569, %v8657
  %8659 = vmatmul.bf16.gmra.mxu0 %v7166
  %v8660 = vpop.f32.mrf.mxu0
  %v8661 = vadd.f32 %v8572, %v8660
  %v8662 = vpop.f32.mrf.mxu0
  %v8663 = vadd.f32 %v8574, %v8662
  %8664 = vdwg.mxu0
  %8665 = vmatpush.bf16.msra.mxu0 %v7757
  %8666 = vmatpush.bf16.msra.mxu0 %v7749
  %8667 = vmatpush.bf16.msra.mxu0 %v7741
  %8668 = vmatpush.bf16.msra.mxu0 %v7733
  %8669 = vmatpush.bf16.msra.mxu0 %v7725
  %8670 = vmatpush.bf16.msra.mxu0 %v7717
  %8671 = vmatpush.bf16.msra.mxu0 %v7709
  %8672 = vmatpush.bf16.msra.mxu0 %v7701
  %8673 = vmatmul.bf16.gmra.mxu0 %v7135
  %v8674 = vpop.f32.mrf.mxu0
  %v8675 = vadd.f32 %v7301, %v8674
  %v8676 = vpop.f32.mrf.mxu0
  %v8677 = vadd.f32 %v7301, %v8676
  %8678 = vmatmul.bf16.gmra.mxu0 %v7137
  %v8679 = vpop.f32.mrf.mxu0
  %v8680 = vadd.f32 %v7301, %v8679
  %v8681 = vpop.f32.mrf.mxu0
  %v8682 = vadd.f32 %v7301, %v8681
  %8683 = vmatmul.bf16.gmra.mxu0 %v7139
  %v8684 = vpop.f32.mrf.mxu0
  %v8685 = vadd.f32 %v7301, %v8684
  %v8686 = vpop.f32.mrf.mxu0
  %v8687 = vadd.f32 %v7301, %v8686
  %8688 = vmatmul.bf16.gmra.mxu0 %v7141
  %v8689 = vpop.f32.mrf.mxu0
  %v8690 = vadd.f32 %v7301, %v8689
  %v8691 = vpop.f32.mrf.mxu0
  %v8692 = vadd.f32 %v7301, %v8691
  %8693 = vmatmul.bf16.gmra.mxu0 %v7143
  %v8694 = vpop.f32.mrf.mxu0
  %v8695 = vadd.f32 %v7301, %v8694
  %v8696 = vpop.f32.mrf.mxu0
  %v8697 = vadd.f32 %v7301, %v8696
  %8698 = vmatmul.bf16.gmra.mxu0 %v7145
  %v8699 = vpop.f32.mrf.mxu0
  %v8700 = vadd.f32 %v7301, %v8699
  %v8701 = vpop.f32.mrf.mxu0
  %v8702 = vadd.f32 %v7301, %v8701
  %8703 = vmatmul.bf16.gmra.mxu0 %v7147
  %v8704 = vpop.f32.mrf.mxu0
  %v8705 = vadd.f32 %v7301, %v8704
  %v8706 = vpop.f32.mrf.mxu0
  %v8707 = vadd.f32 %v7301, %v8706
  %8708 = vmatmul.bf16.gmra.mxu0 %v7149
  %v8709 = vpop.f32.mrf.mxu0
  %v8710 = vadd.f32 %v7301, %v8709
  %v8711 = vpop.f32.mrf.mxu0
  %v8712 = vadd.f32 %v7301, %v8711
  %8713 = vmatmul.bf16.gmra.mxu0 %v7151
  %v8714 = vpop.f32.mrf.mxu0
  %v8715 = vadd.f32 %v7301, %v8714
  %v8716 = vpop.f32.mrf.mxu0
  %v8717 = vadd.f32 %v7301, %v8716
  %8718 = vmatmul.bf16.gmra.mxu0 %v7153
  %v8719 = vpop.f32.mrf.mxu0
  %v8720 = vadd.f32 %v7301, %v8719
  %v8721 = vpop.f32.mrf.mxu0
  %v8722 = vadd.f32 %v7301, %v8721
  %8723 = vmatmul.bf16.gmra.mxu0 %v7155
  %v8724 = vpop.f32.mrf.mxu0
  %v8725 = vadd.f32 %v7301, %v8724
  %v8726 = vpop.f32.mrf.mxu0
  %v8727 = vadd.f32 %v7301, %v8726
  %8728 = vmatmul.bf16.gmra.mxu0 %v7157
  %v8729 = vpop.f32.mrf.mxu0
  %v8730 = vadd.f32 %v7301, %v8729
  %v8731 = vpop.f32.mrf.mxu0
  %v8732 = vadd.f32 %v7301, %v8731
  %8733 = vmatmul.bf16.gmra.mxu0 %v7159
  %v8734 = vpop.f32.mrf.mxu0
  %v8735 = vadd.f32 %v7301, %v8734
  %v8736 = vpop.f32.mrf.mxu0
  %v8737 = vadd.f32 %v7301, %v8736
  %8738 = vmatmul.bf16.gmra.mxu0 %v7161
  %v8739 = vpop.f32.mrf.mxu0
  %v8740 = vadd.f32 %v7301, %v8739
  %v8741 = vpop.f32.mrf.mxu0
  %v8742 = vadd.f32 %v7301, %v8741
  %8743 = vmatmul.bf16.gmra.mxu0 %v7163
  %v8744 = vpop.f32.mrf.mxu0
  %v8745 = vadd.f32 %v7301, %v8744
  %v8746 = vpop.f32.mrf.mxu0
  %v8747 = vadd.f32 %v7301, %v8746
  %8748 = vmatmul.bf16.gmra.mxu0 %v7165
  %v8749 = vpop.f32.mrf.mxu0
  %v8750 = vadd.f32 %v7301, %v8749
  %v8751 = vpop.f32.mrf.mxu0
  %v8752 = vadd.f32 %v7301, %v8751
  %8753 = vdwg.mxu0
  %8754 = vmatpush.bf16.msra.mxu0 %v7821
  %8755 = vmatpush.bf16.msra.mxu0 %v7813
  %8756 = vmatpush.bf16.msra.mxu0 %v7805
  %8757 = vmatpush.bf16.msra.mxu0 %v7797
  %8758 = vmatpush.bf16.msra.mxu0 %v7789
  %8759 = vmatpush.bf16.msra.mxu0 %v7781
  %8760 = vmatpush.bf16.msra.mxu0 %v7773
  %8761 = vmatpush.bf16.msra.mxu0 %v7765
  %8762 = vmatmul.bf16.gmra.mxu0 %v7136
  %v8763 = vpop.f32.mrf.mxu0
  %v8764 = vadd.f32 %v8675, %v8763
  %v8765 = vpop.f32.mrf.mxu0
  %v8766 = vadd.f32 %v8677, %v8765
  %8767 = vmatmul.bf16.gmra.mxu0 %v7138
  %v8768 = vpop.f32.mrf.mxu0
  %v8769 = vadd.f32 %v8680, %v8768
  %v8770 = vpop.f32.mrf.mxu0
  %v8771 = vadd.f32 %v8682, %v8770
  %8772 = vmatmul.bf16.gmra.mxu0 %v7140
  %v8773 = vpop.f32.mrf.mxu0
  %v8774 = vadd.f32 %v8685, %v8773
  %v8775 = vpop.f32.mrf.mxu0
  %v8776 = vadd.f32 %v8687, %v8775
  %8777 = vmatmul.bf16.gmra.mxu0 %v7142
  %v8778 = vpop.f32.mrf.mxu0
  %v8779 = vadd.f32 %v8690, %v8778
  %v8780 = vpop.f32.mrf.mxu0
  %v8781 = vadd.f32 %v8692, %v8780
  %8782 = vmatmul.bf16.gmra.mxu0 %v7144
  %v8783 = vpop.f32.mrf.mxu0
  %v8784 = vadd.f32 %v8695, %v8783
  %v8785 = vpop.f32.mrf.mxu0
  %v8786 = vadd.f32 %v8697, %v8785
  %8787 = vmatmul.bf16.gmra.mxu0 %v7146
  %v8788 = vpop.f32.mrf.mxu0
  %v8789 = vadd.f32 %v8700, %v8788
  %v8790 = vpop.f32.mrf.mxu0
  %v8791 = vadd.f32 %v8702, %v8790
  %8792 = vmatmul.bf16.gmra.mxu0 %v7148
  %v8793 = vpop.f32.mrf.mxu0
  %v8794 = vadd.f32 %v8705, %v8793
  %v8795 = vpop.f32.mrf.mxu0
  %v8796 = vadd.f32 %v8707, %v8795
  %8797 = vmatmul.bf16.gmra.mxu0 %v7150
  %v8798 = vpop.f32.mrf.mxu0
  %v8799 = vadd.f32 %v8710, %v8798
  %v8800 = vpop.f32.mrf.mxu0
  %v8801 = vadd.f32 %v8712, %v8800
  %8802 = vmatmul.bf16.gmra.mxu0 %v7152
  %v8803 = vpop.f32.mrf.mxu0
  %v8804 = vadd.f32 %v8715, %v8803
  %v8805 = vpop.f32.mrf.mxu0
  %v8806 = vadd.f32 %v8717, %v8805
  %8807 = vmatmul.bf16.gmra.mxu0 %v7154
  %v8808 = vpop.f32.mrf.mxu0
  %v8809 = vadd.f32 %v8720, %v8808
  %v8810 = vpop.f32.mrf.mxu0
  %v8811 = vadd.f32 %v8722, %v8810
  %8812 = vmatmul.bf16.gmra.mxu0 %v7156
  %v8813 = vpop.f32.mrf.mxu0
  %v8814 = vadd.f32 %v8725, %v8813
  %v8815 = vpop.f32.mrf.mxu0
  %v8816 = vadd.f32 %v8727, %v8815
  %8817 = vmatmul.bf16.gmra.mxu0 %v7158
  %v8818 = vpop.f32.mrf.mxu0
  %v8819 = vadd.f32 %v8730, %v8818
  %v8820 = vpop.f32.mrf.mxu0
  %v8821 = vadd.f32 %v8732, %v8820
  %8822 = vmatmul.bf16.gmra.mxu0 %v7160
  %v8823 = vpop.f32.mrf.mxu0
  %v8824 = vadd.f32 %v8735, %v8823
  %v8825 = vpop.f32.mrf.mxu0
  %v8826 = vadd.f32 %v8737, %v8825
  %8827 = vmatmul.bf16.gmra.mxu0 %v7162
  %v8828 = vpop.f32.mrf.mxu0
  %v8829 = vadd.f32 %v8740, %v8828
  %v8830 = vpop.f32.mrf.mxu0
  %v8831 = vadd.f32 %v8742, %v8830
  %8832 = vmatmul.bf16.gmra.mxu0 %v7164
  %v8833 = vpop.f32.mrf.mxu0
  %v8834 = vadd.f32 %v8745, %v8833
  %v8835 = vpop.f32.mrf.mxu0
  %v8836 = vadd.f32 %v8747, %v8835
  %8837 = vmatmul.bf16.gmra.mxu0 %v7166
  %v8838 = vpop.f32.mrf.mxu0
  %v8839 = vadd.f32 %v8750, %v8838
  %v8840 = vpop.f32.mrf.mxu0
  %v8841 = vadd.f32 %v8752, %v8840
  %8842 = vdwg.mxu0
  %8843 = vmatpush.bf16.msra.mxu0 %v7758
  %8844 = vmatpush.bf16.msra.mxu0 %v7750
  %8845 = vmatpush.bf16.msra.mxu0 %v7742
  %8846 = vmatpush.bf16.msra.mxu0 %v7734
  %8847 = vmatpush.bf16.msra.mxu0 %v7726
  %8848 = vmatpush.bf16.msra.mxu0 %v7718
  %8849 = vmatpush.bf16.msra.mxu0 %v7710
  %8850 = vmatpush.bf16.msra.mxu0 %v7702
  %8851 = vmatmul.bf16.gmra.mxu0 %v7135
  %v8852 = vpop.f32.mrf.mxu0
  %v8853 = vadd.f32 %v7302, %v8852
  %v8854 = vpop.f32.mrf.mxu0
  %v8855 = vadd.f32 %v7302, %v8854
  %8856 = vmatmul.bf16.gmra.mxu0 %v7137
  %v8857 = vpop.f32.mrf.mxu0
  %v8858 = vadd.f32 %v7302, %v8857
  %v8859 = vpop.f32.mrf.mxu0
  %v8860 = vadd.f32 %v7302, %v8859
  %8861 = vmatmul.bf16.gmra.mxu0 %v7139
  %v8862 = vpop.f32.mrf.mxu0
  %v8863 = vadd.f32 %v7302, %v8862
  %v8864 = vpop.f32.mrf.mxu0
  %v8865 = vadd.f32 %v7302, %v8864
  %8866 = vmatmul.bf16.gmra.mxu0 %v7141
  %v8867 = vpop.f32.mrf.mxu0
  %v8868 = vadd.f32 %v7302, %v8867
  %v8869 = vpop.f32.mrf.mxu0
  %v8870 = vadd.f32 %v7302, %v8869
  %8871 = vmatmul.bf16.gmra.mxu0 %v7143
  %v8872 = vpop.f32.mrf.mxu0
  %v8873 = vadd.f32 %v7302, %v8872
  %v8874 = vpop.f32.mrf.mxu0
  %v8875 = vadd.f32 %v7302, %v8874
  %8876 = vmatmul.bf16.gmra.mxu0 %v7145
  %v8877 = vpop.f32.mrf.mxu0
  %v8878 = vadd.f32 %v7302, %v8877
  %v8879 = vpop.f32.mrf.mxu0
  %v8880 = vadd.f32 %v7302, %v8879
  %8881 = vmatmul.bf16.gmra.mxu0 %v7147
  %v8882 = vpop.f32.mrf.mxu0
  %v8883 = vadd.f32 %v7302, %v8882
  %v8884 = vpop.f32.mrf.mxu0
  %v8885 = vadd.f32 %v7302, %v8884
  %8886 = vmatmul.bf16.gmra.mxu0 %v7149
  %v8887 = vpop.f32.mrf.mxu0
  %v8888 = vadd.f32 %v7302, %v8887
  %v8889 = vpop.f32.mrf.mxu0
  %v8890 = vadd.f32 %v7302, %v8889
  %8891 = vmatmul.bf16.gmra.mxu0 %v7151
  %v8892 = vpop.f32.mrf.mxu0
  %v8893 = vadd.f32 %v7302, %v8892
  %v8894 = vpop.f32.mrf.mxu0
  %v8895 = vadd.f32 %v7302, %v8894
  %8896 = vmatmul.bf16.gmra.mxu0 %v7153
  %v8897 = vpop.f32.mrf.mxu0
  %v8898 = vadd.f32 %v7302, %v8897
  %v8899 = vpop.f32.mrf.mxu0
  %v8900 = vadd.f32 %v7302, %v8899
  %8901 = vmatmul.bf16.gmra.mxu0 %v7155
  %v8902 = vpop.f32.mrf.mxu0
  %v8903 = vadd.f32 %v7302, %v8902
  %v8904 = vpop.f32.mrf.mxu0
  %v8905 = vadd.f32 %v7302, %v8904
  %8906 = vmatmul.bf16.gmra.mxu0 %v7157
  %v8907 = vpop.f32.mrf.mxu0
  %v8908 = vadd.f32 %v7302, %v8907
  %v8909 = vpop.f32.mrf.mxu0
  %v8910 = vadd.f32 %v7302, %v8909
  %8911 = vmatmul.bf16.gmra.mxu0 %v7159
  %v8912 = vpop.f32.mrf.mxu0
  %v8913 = vadd.f32 %v7302, %v8912
  %v8914 = vpop.f32.mrf.mxu0
  %v8915 = vadd.f32 %v7302, %v8914
  %8916 = vmatmul.bf16.gmra.mxu0 %v7161
  %v8917 = vpop.f32.mrf.mxu0
  %v8918 = vadd.f32 %v7302, %v8917
  %v8919 = vpop.f32.mrf.mxu0
  %v8920 = vadd.f32 %v7302, %v8919
  %8921 = vmatmul.bf16.gmra.mxu0 %v7163
  %v8922 = vpop.f32.mrf.mxu0
  %v8923 = vadd.f32 %v7302, %v8922
  %v8924 = vpop.f32.mrf.mxu0
  %v8925 = vadd.f32 %v7302, %v8924
  %8926 = vmatmul.bf16.gmra.mxu0 %v7165
  %v8927 = vpop.f32.mrf.mxu0
  %v8928 = vadd.f32 %v7302, %v8927
  %v8929 = vpop.f32.mrf.mxu0
  %v8930 = vadd.f32 %v7302, %v8929
  %8931 = vdwg.mxu0
  %8932 = vmatpush.bf16.msra.mxu0 %v7822
  %8933 = vmatpush.bf16.msra.mxu0 %v7814
  %8934 = vmatpush.bf16.msra.mxu0 %v7806
  %8935 = vmatpush.bf16.msra.mxu0 %v7798
  %8936 = vmatpush.bf16.msra.mxu0 %v7790
  %8937 = vmatpush.bf16.msra.mxu0 %v7782
  %8938 = vmatpush.bf16.msra.mxu0 %v7774
  %8939 = vmatpush.bf16.msra.mxu0 %v7766
  %8940 = vmatmul.bf16.gmra.mxu0 %v7136
  %v8941 = vpop.f32.mrf.mxu0
  %v8942 = vadd.f32 %v8853, %v8941
  %v8943 = vpop.f32.mrf.mxu0
  %v8944 = vadd.f32 %v8855, %v8943
  %8945 = vmatmul.bf16.gmra.mxu0 %v7138
  %v8946 = vpop.f32.mrf.mxu0
  %v8947 = vadd.f32 %v8858, %v8946
  %v8948 = vpop.f32.mrf.mxu0
  %v8949 = vadd.f32 %v8860, %v8948
  %8950 = vmatmul.bf16.gmra.mxu0 %v7140
  %v8951 = vpop.f32.mrf.mxu0
  %v8952 = vadd.f32 %v8863, %v8951
  %v8953 = vpop.f32.mrf.mxu0
  %v8954 = vadd.f32 %v8865, %v8953
  %8955 = vmatmul.bf16.gmra.mxu0 %v7142
  %v8956 = vpop.f32.mrf.mxu0
  %v8957 = vadd.f32 %v8868, %v8956
  %v8958 = vpop.f32.mrf.mxu0
  %v8959 = vadd.f32 %v8870, %v8958
  %8960 = vmatmul.bf16.gmra.mxu0 %v7144
  %v8961 = vpop.f32.mrf.mxu0
  %v8962 = vadd.f32 %v8873, %v8961
  %v8963 = vpop.f32.mrf.mxu0
  %v8964 = vadd.f32 %v8875, %v8963
  %8965 = vmatmul.bf16.gmra.mxu0 %v7146
  %v8966 = vpop.f32.mrf.mxu0
  %v8967 = vadd.f32 %v8878, %v8966
  %v8968 = vpop.f32.mrf.mxu0
  %v8969 = vadd.f32 %v8880, %v8968
  %8970 = vmatmul.bf16.gmra.mxu0 %v7148
  %v8971 = vpop.f32.mrf.mxu0
  %v8972 = vadd.f32 %v8883, %v8971
  %v8973 = vpop.f32.mrf.mxu0
  %v8974 = vadd.f32 %v8885, %v8973
  %8975 = vmatmul.bf16.gmra.mxu0 %v7150
  %v8976 = vpop.f32.mrf.mxu0
  %v8977 = vadd.f32 %v8888, %v8976
  %v8978 = vpop.f32.mrf.mxu0
  %v8979 = vadd.f32 %v8890, %v8978
  %8980 = vmatmul.bf16.gmra.mxu0 %v7152
  %v8981 = vpop.f32.mrf.mxu0
  %v8982 = vadd.f32 %v8893, %v8981
  %v8983 = vpop.f32.mrf.mxu0
  %v8984 = vadd.f32 %v8895, %v8983
  %8985 = vmatmul.bf16.gmra.mxu0 %v7154
  %v8986 = vpop.f32.mrf.mxu0
  %v8987 = vadd.f32 %v8898, %v8986
  %v8988 = vpop.f32.mrf.mxu0
  %v8989 = vadd.f32 %v8900, %v8988
  %8990 = vmatmul.bf16.gmra.mxu0 %v7156
  %v8991 = vpop.f32.mrf.mxu0
  %v8992 = vadd.f32 %v8903, %v8991
  %v8993 = vpop.f32.mrf.mxu0
  %v8994 = vadd.f32 %v8905, %v8993
  %8995 = vmatmul.bf16.gmra.mxu0 %v7158
  %v8996 = vpop.f32.mrf.mxu0
  %v8997 = vadd.f32 %v8908, %v8996
  %v8998 = vpop.f32.mrf.mxu0
  %v8999 = vadd.f32 %v8910, %v8998
  %9000 = vmatmul.bf16.gmra.mxu0 %v7160
  %v9001 = vpop.f32.mrf.mxu0
  %v9002 = vadd.f32 %v8913, %v9001
  %v9003 = vpop.f32.mrf.mxu0
  %v9004 = vadd.f32 %v8915, %v9003
  %9005 = vmatmul.bf16.gmra.mxu0 %v7162
  %v9006 = vpop.f32.mrf.mxu0
  %v9007 = vadd.f32 %v8918, %v9006
  %v9008 = vpop.f32.mrf.mxu0
  %v9009 = vadd.f32 %v8920, %v9008
  %9010 = vmatmul.bf16.gmra.mxu0 %v7164
  %v9011 = vpop.f32.mrf.mxu0
  %v9012 = vadd.f32 %v8923, %v9011
  %v9013 = vpop.f32.mrf.mxu0
  %v9014 = vadd.f32 %v8925, %v9013
  %9015 = vmatmul.bf16.gmra.mxu0 %v7166
  %v9016 = vpop.f32.mrf.mxu0
  %v9017 = vadd.f32 %v8928, %v9016
  %v9018 = vpop.f32.mrf.mxu0
  %v9019 = vadd.f32 %v8930, %v9018
  %9020 = vdwg.mxu0
  %9021 = vmatpush.bf16.msra.mxu0 %v7759
  %9022 = vmatpush.bf16.msra.mxu0 %v7751
  %9023 = vmatpush.bf16.msra.mxu0 %v7743
  %9024 = vmatpush.bf16.msra.mxu0 %v7735
  %9025 = vmatpush.bf16.msra.mxu0 %v7727
  %9026 = vmatpush.bf16.msra.mxu0 %v7719
  %9027 = vmatpush.bf16.msra.mxu0 %v7711
  %9028 = vmatpush.bf16.msra.mxu0 %v7703
  %9029 = vmatmul.bf16.gmra.mxu0 %v7135
  %v9030 = vpop.f32.mrf.mxu0
  %v9031 = vadd.f32 %v7303, %v9030
  %v9032 = vpop.f32.mrf.mxu0
  %v9033 = vadd.f32 %v7303, %v9032
  %9034 = vmatmul.bf16.gmra.mxu0 %v7137
  %v9035 = vpop.f32.mrf.mxu0
  %v9036 = vadd.f32 %v7303, %v9035
  %v9037 = vpop.f32.mrf.mxu0
  %v9038 = vadd.f32 %v7303, %v9037
  %9039 = vmatmul.bf16.gmra.mxu0 %v7139
  %v9040 = vpop.f32.mrf.mxu0
  %v9041 = vadd.f32 %v7303, %v9040
  %v9042 = vpop.f32.mrf.mxu0
  %v9043 = vadd.f32 %v7303, %v9042
  %9044 = vmatmul.bf16.gmra.mxu0 %v7141
  %v9045 = vpop.f32.mrf.mxu0
  %v9046 = vadd.f32 %v7303, %v9045
  %v9047 = vpop.f32.mrf.mxu0
  %v9048 = vadd.f32 %v7303, %v9047
  %9049 = vmatmul.bf16.gmra.mxu0 %v7143
  %v9050 = vpop.f32.mrf.mxu0
  %v9051 = vadd.f32 %v7303, %v9050
  %v9052 = vpop.f32.mrf.mxu0
  %v9053 = vadd.f32 %v7303, %v9052
  %9054 = vmatmul.bf16.gmra.mxu0 %v7145
  %v9055 = vpop.f32.mrf.mxu0
  %v9056 = vadd.f32 %v7303, %v9055
  %v9057 = vpop.f32.mrf.mxu0
  %v9058 = vadd.f32 %v7303, %v9057
  %9059 = vmatmul.bf16.gmra.mxu0 %v7147
  %v9060 = vpop.f32.mrf.mxu0
  %v9061 = vadd.f32 %v7303, %v9060
  %v9062 = vpop.f32.mrf.mxu0
  %v9063 = vadd.f32 %v7303, %v9062
  %9064 = vmatmul.bf16.gmra.mxu0 %v7149
  %v9065 = vpop.f32.mrf.mxu0
  %v9066 = vadd.f32 %v7303, %v9065
  %v9067 = vpop.f32.mrf.mxu0
  %v9068 = vadd.f32 %v7303, %v9067
  %9069 = vmatmul.bf16.gmra.mxu0 %v7151
  %v9070 = vpop.f32.mrf.mxu0
  %v9071 = vadd.f32 %v7303, %v9070
  %v9072 = vpop.f32.mrf.mxu0
  %v9073 = vadd.f32 %v7303, %v9072
  %9074 = vmatmul.bf16.gmra.mxu0 %v7153
  %v9075 = vpop.f32.mrf.mxu0
  %v9076 = vadd.f32 %v7303, %v9075
  %v9077 = vpop.f32.mrf.mxu0
  %v9078 = vadd.f32 %v7303, %v9077
  %9079 = vmatmul.bf16.gmra.mxu0 %v7155
  %v9080 = vpop.f32.mrf.mxu0
  %v9081 = vadd.f32 %v7303, %v9080
  %v9082 = vpop.f32.mrf.mxu0
  %v9083 = vadd.f32 %v7303, %v9082
  %9084 = vmatmul.bf16.gmra.mxu0 %v7157
  %v9085 = vpop.f32.mrf.mxu0
  %v9086 = vadd.f32 %v7303, %v9085
  %v9087 = vpop.f32.mrf.mxu0
  %v9088 = vadd.f32 %v7303, %v9087
  %9089 = vmatmul.bf16.gmra.mxu0 %v7159
  %v9090 = vpop.f32.mrf.mxu0
  %v9091 = vadd.f32 %v7303, %v9090
  %v9092 = vpop.f32.mrf.mxu0
  %v9093 = vadd.f32 %v7303, %v9092
  %9094 = vmatmul.bf16.gmra.mxu0 %v7161
  %v9095 = vpop.f32.mrf.mxu0
  %v9096 = vadd.f32 %v7303, %v9095
  %v9097 = vpop.f32.mrf.mxu0
  %v9098 = vadd.f32 %v7303, %v9097
  %9099 = vmatmul.bf16.gmra.mxu0 %v7163
  %v9100 = vpop.f32.mrf.mxu0
  %v9101 = vadd.f32 %v7303, %v9100
  %v9102 = vpop.f32.mrf.mxu0
  %v9103 = vadd.f32 %v7303, %v9102
  %9104 = vmatmul.bf16.gmra.mxu0 %v7165
  %v9105 = vpop.f32.mrf.mxu0
  %v9106 = vadd.f32 %v7303, %v9105
  %v9107 = vpop.f32.mrf.mxu0
  %v9108 = vadd.f32 %v7303, %v9107
  %9109 = vdwg.mxu0
  %9110 = vmatpush.bf16.msra.mxu0 %v7823
  %9111 = vmatpush.bf16.msra.mxu0 %v7815
  %9112 = vmatpush.bf16.msra.mxu0 %v7807
  %9113 = vmatpush.bf16.msra.mxu0 %v7799
  %9114 = vmatpush.bf16.msra.mxu0 %v7791
  %9115 = vmatpush.bf16.msra.mxu0 %v7783
  %9116 = vmatpush.bf16.msra.mxu0 %v7775
  %9117 = vmatpush.bf16.msra.mxu0 %v7767
  %9118 = vmatmul.bf16.gmra.mxu0 %v7136
  %v9119 = vpop.f32.mrf.mxu0
  %v9120 = vadd.f32 %v9031, %v9119
  %v9121 = vpop.f32.mrf.mxu0
  %v9122 = vadd.f32 %v9033, %v9121
  %9123 = vmatmul.bf16.gmra.mxu0 %v7138
  %v9124 = vpop.f32.mrf.mxu0
  %v9125 = vadd.f32 %v9036, %v9124
  %v9126 = vpop.f32.mrf.mxu0
  %v9127 = vadd.f32 %v9038, %v9126
  %9128 = vmatmul.bf16.gmra.mxu0 %v7140
  %v9129 = vpop.f32.mrf.mxu0
  %v9130 = vadd.f32 %v9041, %v9129
  %v9131 = vpop.f32.mrf.mxu0
  %v9132 = vadd.f32 %v9043, %v9131
  %9133 = vmatmul.bf16.gmra.mxu0 %v7142
  %v9134 = vpop.f32.mrf.mxu0
  %v9135 = vadd.f32 %v9046, %v9134
  %v9136 = vpop.f32.mrf.mxu0
  %v9137 = vadd.f32 %v9048, %v9136
  %9138 = vmatmul.bf16.gmra.mxu0 %v7144
  %v9139 = vpop.f32.mrf.mxu0
  %v9140 = vadd.f32 %v9051, %v9139
  %v9141 = vpop.f32.mrf.mxu0
  %v9142 = vadd.f32 %v9053, %v9141
  %9143 = vmatmul.bf16.gmra.mxu0 %v7146
  %v9144 = vpop.f32.mrf.mxu0
  %v9145 = vadd.f32 %v9056, %v9144
  %v9146 = vpop.f32.mrf.mxu0
  %v9147 = vadd.f32 %v9058, %v9146
  %9148 = vmatmul.bf16.gmra.mxu0 %v7148
  %v9149 = vpop.f32.mrf.mxu0
  %v9150 = vadd.f32 %v9061, %v9149
  %v9151 = vpop.f32.mrf.mxu0
  %v9152 = vadd.f32 %v9063, %v9151
  %9153 = vmatmul.bf16.gmra.mxu0 %v7150
  %v9154 = vpop.f32.mrf.mxu0
  %v9155 = vadd.f32 %v9066, %v9154
  %v9156 = vpop.f32.mrf.mxu0
  %v9157 = vadd.f32 %v9068, %v9156
  %9158 = vmatmul.bf16.gmra.mxu0 %v7152
  %v9159 = vpop.f32.mrf.mxu0
  %v9160 = vadd.f32 %v9071, %v9159
  %v9161 = vpop.f32.mrf.mxu0
  %v9162 = vadd.f32 %v9073, %v9161
  %9163 = vmatmul.bf16.gmra.mxu0 %v7154
  %v9164 = vpop.f32.mrf.mxu0
  %v9165 = vadd.f32 %v9076, %v9164
  %v9166 = vpop.f32.mrf.mxu0
  %v9167 = vadd.f32 %v9078, %v9166
  %9168 = vmatmul.bf16.gmra.mxu0 %v7156
  %v9169 = vpop.f32.mrf.mxu0
  %v9170 = vadd.f32 %v9081, %v9169
  %v9171 = vpop.f32.mrf.mxu0
  %v9172 = vadd.f32 %v9083, %v9171
  %9173 = vmatmul.bf16.gmra.mxu0 %v7158
  %v9174 = vpop.f32.mrf.mxu0
  %v9175 = vadd.f32 %v9086, %v9174
  %v9176 = vpop.f32.mrf.mxu0
  %v9177 = vadd.f32 %v9088, %v9176
  %9178 = vmatmul.bf16.gmra.mxu0 %v7160
  %v9179 = vpop.f32.mrf.mxu0
  %v9180 = vadd.f32 %v9091, %v9179
  %v9181 = vpop.f32.mrf.mxu0
  %v9182 = vadd.f32 %v9093, %v9181
  %9183 = vmatmul.bf16.gmra.mxu0 %v7162
  %v9184 = vpop.f32.mrf.mxu0
  %v9185 = vadd.f32 %v9096, %v9184
  %v9186 = vpop.f32.mrf.mxu0
  %v9187 = vadd.f32 %v9098, %v9186
  %9188 = vmatmul.bf16.gmra.mxu0 %v7164
  %v9189 = vpop.f32.mrf.mxu0
  %v9190 = vadd.f32 %v9101, %v9189
  %v9191 = vpop.f32.mrf.mxu0
  %v9192 = vadd.f32 %v9103, %v9191
  %9193 = vmatmul.bf16.gmra.mxu0 %v7166
  %v9194 = vpop.f32.mrf.mxu0
  %v9195 = vadd.f32 %v9106, %v9194
  %v9196 = vpop.f32.mrf.mxu0
  %v9197 = vadd.f32 %v9108, %v9196
  %9198 = vdwg.mxu0
  %9199 = vmatpush.bf16.msra.mxu0 %v7760
  %9200 = vmatpush.bf16.msra.mxu0 %v7752
  %9201 = vmatpush.bf16.msra.mxu0 %v7744
  %9202 = vmatpush.bf16.msra.mxu0 %v7736
  %9203 = vmatpush.bf16.msra.mxu0 %v7728
  %9204 = vmatpush.bf16.msra.mxu0 %v7720
  %9205 = vmatpush.bf16.msra.mxu0 %v7712
  %9206 = vmatpush.bf16.msra.mxu0 %v7704
  %9207 = vmatmul.bf16.gmra.mxu0 %v7135
  %v9208 = vpop.f32.mrf.mxu0
  %v9209 = vadd.f32 %v7304, %v9208
  %v9210 = vpop.f32.mrf.mxu0
  %v9211 = vadd.f32 %v7304, %v9210
  %9212 = vmatmul.bf16.gmra.mxu0 %v7137
  %v9213 = vpop.f32.mrf.mxu0
  %v9214 = vadd.f32 %v7304, %v9213
  %v9215 = vpop.f32.mrf.mxu0
  %v9216 = vadd.f32 %v7304, %v9215
  %9217 = vmatmul.bf16.gmra.mxu0 %v7139
  %v9218 = vpop.f32.mrf.mxu0
  %v9219 = vadd.f32 %v7304, %v9218
  %v9220 = vpop.f32.mrf.mxu0
  %v9221 = vadd.f32 %v7304, %v9220
  %9222 = vmatmul.bf16.gmra.mxu0 %v7141
  %v9223 = vpop.f32.mrf.mxu0
  %v9224 = vadd.f32 %v7304, %v9223
  %v9225 = vpop.f32.mrf.mxu0
  %v9226 = vadd.f32 %v7304, %v9225
  %9227 = vmatmul.bf16.gmra.mxu0 %v7143
  %v9228 = vpop.f32.mrf.mxu0
  %v9229 = vadd.f32 %v7304, %v9228
  %v9230 = vpop.f32.mrf.mxu0
  %v9231 = vadd.f32 %v7304, %v9230
  %9232 = vmatmul.bf16.gmra.mxu0 %v7145
  %v9233 = vpop.f32.mrf.mxu0
  %v9234 = vadd.f32 %v7304, %v9233
  %v9235 = vpop.f32.mrf.mxu0
  %v9236 = vadd.f32 %v7304, %v9235
  %9237 = vmatmul.bf16.gmra.mxu0 %v7147
  %v9238 = vpop.f32.mrf.mxu0
  %v9239 = vadd.f32 %v7304, %v9238
  %v9240 = vpop.f32.mrf.mxu0
  %v9241 = vadd.f32 %v7304, %v9240
  %9242 = vmatmul.bf16.gmra.mxu0 %v7149
  %v9243 = vpop.f32.mrf.mxu0
  %v9244 = vadd.f32 %v7304, %v9243
  %v9245 = vpop.f32.mrf.mxu0
  %v9246 = vadd.f32 %v7304, %v9245
  %9247 = vmatmul.bf16.gmra.mxu0 %v7151
  %v9248 = vpop.f32.mrf.mxu0
  %v9249 = vadd.f32 %v7304, %v9248
  %v9250 = vpop.f32.mrf.mxu0
  %v9251 = vadd.f32 %v7304, %v9250
  %9252 = vmatmul.bf16.gmra.mxu0 %v7153
  %v9253 = vpop.f32.mrf.mxu0
  %v9254 = vadd.f32 %v7304, %v9253
  %v9255 = vpop.f32.mrf.mxu0
  %v9256 = vadd.f32 %v7304, %v9255
  %9257 = vmatmul.bf16.gmra.mxu0 %v7155
  %v9258 = vpop.f32.mrf.mxu0
  %v9259 = vadd.f32 %v7304, %v9258
  %v9260 = vpop.f32.mrf.mxu0
  %v9261 = vadd.f32 %v7304, %v9260
  %9262 = vmatmul.bf16.gmra.mxu0 %v7157
  %v9263 = vpop.f32.mrf.mxu0
  %v9264 = vadd.f32 %v7304, %v9263
  %v9265 = vpop.f32.mrf.mxu0
  %v9266 = vadd.f32 %v7304, %v9265
  %9267 = vmatmul.bf16.gmra.mxu0 %v7159
  %v9268 = vpop.f32.mrf.mxu0
  %v9269 = vadd.f32 %v7304, %v9268
  %v9270 = vpop.f32.mrf.mxu0
  %v9271 = vadd.f32 %v7304, %v9270
  %9272 = vmatmul.bf16.gmra.mxu0 %v7161
  %v9273 = vpop.f32.mrf.mxu0
  %v9274 = vadd.f32 %v7304, %v9273
  %v9275 = vpop.f32.mrf.mxu0
  %v9276 = vadd.f32 %v7304, %v9275
  %9277 = vmatmul.bf16.gmra.mxu0 %v7163
  %v9278 = vpop.f32.mrf.mxu0
  %v9279 = vadd.f32 %v7304, %v9278
  %v9280 = vpop.f32.mrf.mxu0
  %v9281 = vadd.f32 %v7304, %v9280
  %9282 = vmatmul.bf16.gmra.mxu0 %v7165
  %v9283 = vpop.f32.mrf.mxu0
  %v9284 = vadd.f32 %v7304, %v9283
  %v9285 = vpop.f32.mrf.mxu0
  %v9286 = vadd.f32 %v7304, %v9285
  %9287 = vdwg.mxu0
  %9288 = vmatpush.bf16.msra.mxu0 %v7824
  %9289 = vmatpush.bf16.msra.mxu0 %v7816
  %9290 = vmatpush.bf16.msra.mxu0 %v7808
  %9291 = vmatpush.bf16.msra.mxu0 %v7800
  %9292 = vmatpush.bf16.msra.mxu0 %v7792
  %9293 = vmatpush.bf16.msra.mxu0 %v7784
  %9294 = vmatpush.bf16.msra.mxu0 %v7776
  %9295 = vmatpush.bf16.msra.mxu0 %v7768
  %9296 = vmatmul.bf16.gmra.mxu0 %v7136
  %v9297 = vpop.f32.mrf.mxu0
  %v9298 = vadd.f32 %v9209, %v9297
  %v9299 = vpop.f32.mrf.mxu0
  %v9300 = vadd.f32 %v9211, %v9299
  %9301 = vmatmul.bf16.gmra.mxu0 %v7138
  %v9302 = vpop.f32.mrf.mxu0
  %v9303 = vadd.f32 %v9214, %v9302
  %v9304 = vpop.f32.mrf.mxu0
  %v9305 = vadd.f32 %v9216, %v9304
  %9306 = vmatmul.bf16.gmra.mxu0 %v7140
  %v9307 = vpop.f32.mrf.mxu0
  %v9308 = vadd.f32 %v9219, %v9307
  %v9309 = vpop.f32.mrf.mxu0
  %v9310 = vadd.f32 %v9221, %v9309
  %9311 = vmatmul.bf16.gmra.mxu0 %v7142
  %v9312 = vpop.f32.mrf.mxu0
  %v9313 = vadd.f32 %v9224, %v9312
  %v9314 = vpop.f32.mrf.mxu0
  %v9315 = vadd.f32 %v9226, %v9314
  %9316 = vmatmul.bf16.gmra.mxu0 %v7144
  %v9317 = vpop.f32.mrf.mxu0
  %v9318 = vadd.f32 %v9229, %v9317
  %v9319 = vpop.f32.mrf.mxu0
  %v9320 = vadd.f32 %v9231, %v9319
  %9321 = vmatmul.bf16.gmra.mxu0 %v7146
  %v9322 = vpop.f32.mrf.mxu0
  %v9323 = vadd.f32 %v9234, %v9322
  %v9324 = vpop.f32.mrf.mxu0
  %v9325 = vadd.f32 %v9236, %v9324
  %9326 = vmatmul.bf16.gmra.mxu0 %v7148
  %v9327 = vpop.f32.mrf.mxu0
  %v9328 = vadd.f32 %v9239, %v9327
  %v9329 = vpop.f32.mrf.mxu0
  %v9330 = vadd.f32 %v9241, %v9329
  %9331 = vmatmul.bf16.gmra.mxu0 %v7150
  %v9332 = vpop.f32.mrf.mxu0
  %v9333 = vadd.f32 %v9244, %v9332
  %v9334 = vpop.f32.mrf.mxu0
  %v9335 = vadd.f32 %v9246, %v9334
  %9336 = vmatmul.bf16.gmra.mxu0 %v7152
  %v9337 = vpop.f32.mrf.mxu0
  %v9338 = vadd.f32 %v9249, %v9337
  %v9339 = vpop.f32.mrf.mxu0
  %v9340 = vadd.f32 %v9251, %v9339
  %9341 = vmatmul.bf16.gmra.mxu0 %v7154
  %v9342 = vpop.f32.mrf.mxu0
  %v9343 = vadd.f32 %v9254, %v9342
  %v9344 = vpop.f32.mrf.mxu0
  %v9345 = vadd.f32 %v9256, %v9344
  %9346 = vmatmul.bf16.gmra.mxu0 %v7156
  %v9347 = vpop.f32.mrf.mxu0
  %v9348 = vadd.f32 %v9259, %v9347
  %v9349 = vpop.f32.mrf.mxu0
  %v9350 = vadd.f32 %v9261, %v9349
  %9351 = vmatmul.bf16.gmra.mxu0 %v7158
  %v9352 = vpop.f32.mrf.mxu0
  %v9353 = vadd.f32 %v9264, %v9352
  %v9354 = vpop.f32.mrf.mxu0
  %v9355 = vadd.f32 %v9266, %v9354
  %9356 = vmatmul.bf16.gmra.mxu0 %v7160
  %v9357 = vpop.f32.mrf.mxu0
  %v9358 = vadd.f32 %v9269, %v9357
  %v9359 = vpop.f32.mrf.mxu0
  %v9360 = vadd.f32 %v9271, %v9359
  %9361 = vmatmul.bf16.gmra.mxu0 %v7162
  %v9362 = vpop.f32.mrf.mxu0
  %v9363 = vadd.f32 %v9274, %v9362
  %v9364 = vpop.f32.mrf.mxu0
  %v9365 = vadd.f32 %v9276, %v9364
  %9366 = vmatmul.bf16.gmra.mxu0 %v7164
  %v9367 = vpop.f32.mrf.mxu0
  %v9368 = vadd.f32 %v9279, %v9367
  %v9369 = vpop.f32.mrf.mxu0
  %v9370 = vadd.f32 %v9281, %v9369
  %9371 = vmatmul.bf16.gmra.mxu0 %v7166
  %v9372 = vpop.f32.mrf.mxu0
  %v9373 = vadd.f32 %v9284, %v9372
  %v9374 = vpop.f32.mrf.mxu0
  %v9375 = vadd.f32 %v9286, %v9374
  %9376 = vdwg.mxu0
  %v9377 = vtanh.pop %v8052
  %v9378 = vtanh.pop %v8230
  %v9379 = vtanh.pop %v8408
  %v9380 = vtanh.pop %v8586
  %v9381 = vtanh.pop %v8764
  %v9382 = vtanh.pop %v8942
  %v9383 = vtanh.pop %v9120
  %v9384 = vtanh.pop %v9298
  %v9385 = vtanh.pop %v8054
  %v9386 = vtanh.pop %v8232
  %v9387 = vtanh.pop %v8410
  %v9388 = vtanh.pop %v8588
  %v9389 = vtanh.pop %v8766
  %v9390 = vtanh.pop %v8944
  %v9391 = vtanh.pop %v9122
  %v9392 = vtanh.pop %v9300
  %v9393 = vtanh.pop %v8057
  %v9394 = vtanh.pop %v8235
  %v9395 = vtanh.pop %v8413
  %v9396 = vtanh.pop %v8591
  %v9397 = vtanh.pop %v8769
  %v9398 = vtanh.pop %v8947
  %v9399 = vtanh.pop %v9125
  %v9400 = vtanh.pop %v9303
  %v9401 = vtanh.pop %v8059
  %v9402 = vtanh.pop %v8237
  %v9403 = vtanh.pop %v8415
  %v9404 = vtanh.pop %v8593
  %v9405 = vtanh.pop %v8771
  %v9406 = vtanh.pop %v8949
  %v9407 = vtanh.pop %v9127
  %v9408 = vtanh.pop %v9305
  %v9409 = vtanh.pop %v8062
  %v9410 = vtanh.pop %v8240
  %v9411 = vtanh.pop %v8418
  %v9412 = vtanh.pop %v8596
  %v9413 = vtanh.pop %v8774
  %v9414 = vtanh.pop %v8952
  %v9415 = vtanh.pop %v9130
  %v9416 = vtanh.pop %v9308
  %v9417 = vtanh.pop %v8064
  %v9418 = vtanh.pop %v8242
  %v9419 = vtanh.pop %v8420
  %v9420 = vtanh.pop %v8598
  %v9421 = vtanh.pop %v8776
  %v9422 = vtanh.pop %v8954
  %v9423 = vtanh.pop %v9132
  %v9424 = vtanh.pop %v9310
  %v9425 = vtanh.pop %v8067
  %v9426 = vtanh.pop %v8245
  %v9427 = vtanh.pop %v8423
  %v9428 = vtanh.pop %v8601
  %v9429 = vtanh.pop %v8779
  %v9430 = vtanh.pop %v8957
  %v9431 = vtanh.pop %v9135
  %v9432 = vtanh.pop %v9313
  %v9433 = vtanh.pop %v8069
  %v9434 = vtanh.pop %v8247
  %v9435 = vtanh.pop %v8425
  %v9436 = vtanh.pop %v8603
  %v9437 = vtanh.pop %v8781
  %v9438 = vtanh.pop %v8959
  %v9439 = vtanh.pop %v9137
  %v9440 = vtanh.pop %v9315
  %v9441 = vtanh.pop %v8072
  %v9442 = vtanh.pop %v8250
  %v9443 = vtanh.pop %v8428
  %v9444 = vtanh.pop %v8606
  %v9445 = vtanh.pop %v8784
  %v9446 = vtanh.pop %v8962
  %v9447 = vtanh.pop %v9140
  %v9448 = vtanh.pop %v9318
  %v9449 = vtanh.pop %v8074
  %v9450 = vtanh.pop %v8252
  %v9451 = vtanh.pop %v8430
  %v9452 = vtanh.pop %v8608
  %v9453 = vtanh.pop %v8786
  %v9454 = vtanh.pop %v8964
  %v9455 = vtanh.pop %v9142
  %v9456 = vtanh.pop %v9320
  %v9457 = vtanh.pop %v8077
  %v9458 = vtanh.pop %v8255
  %v9459 = vtanh.pop %v8433
  %v9460 = vtanh.pop %v8611
  %v9461 = vtanh.pop %v8789
  %v9462 = vtanh.pop %v8967
  %v9463 = vtanh.pop %v9145
  %v9464 = vtanh.pop %v9323
  %v9465 = vtanh.pop %v8079
  %v9466 = vtanh.pop %v8257
  %v9467 = vtanh.pop %v8435
  %v9468 = vtanh.pop %v8613
  %v9469 = vtanh.pop %v8791
  %v9470 = vtanh.pop %v8969
  %v9471 = vtanh.pop %v9147
  %v9472 = vtanh.pop %v9325
  %v9473 = vtanh.pop %v8082
  %v9474 = vtanh.pop %v8260
  %v9475 = vtanh.pop %v8438
  %v9476 = vtanh.pop %v8616
  %v9477 = vtanh.pop %v8794
  %v9478 = vtanh.pop %v8972
  %v9479 = vtanh.pop %v9150
  %v9480 = vtanh.pop %v9328
  %v9481 = vtanh.pop %v8084
  %v9482 = vtanh.pop %v8262
  %v9483 = vtanh.pop %v8440
  %v9484 = vtanh.pop %v8618
  %v9485 = vtanh.pop %v8796
  %v9486 = vtanh.pop %v8974
  %v9487 = vtanh.pop %v9152
  %v9488 = vtanh.pop %v9330
  %v9489 = vtanh.pop %v8087
  %v9490 = vtanh.pop %v8265
  %v9491 = vtanh.pop %v8443
  %v9492 = vtanh.pop %v8621
  %v9493 = vtanh.pop %v8799
  %v9494 = vtanh.pop %v8977
  %v9495 = vtanh.pop %v9155
  %v9496 = vtanh.pop %v9333
  %v9497 = vtanh.pop %v8089
  %v9498 = vtanh.pop %v8267
  %v9499 = vtanh.pop %v8445
  %v9500 = vtanh.pop %v8623
  %v9501 = vtanh.pop %v8801
  %v9502 = vtanh.pop %v8979
  %v9503 = vtanh.pop %v9157
  %v9504 = vtanh.pop %v9335
  %v9505 = vtanh.pop %v8092
  %v9506 = vtanh.pop %v8270
  %v9507 = vtanh.pop %v8448
  %v9508 = vtanh.pop %v8626
  %v9509 = vtanh.pop %v8804
  %v9510 = vtanh.pop %v8982
  %v9511 = vtanh.pop %v9160
  %v9512 = vtanh.pop %v9338
  %v9513 = vtanh.pop %v8094
  %v9514 = vtanh.pop %v8272
  %v9515 = vtanh.pop %v8450
  %v9516 = vtanh.pop %v8628
  %v9517 = vtanh.pop %v8806
  %v9518 = vtanh.pop %v8984
  %v9519 = vtanh.pop %v9162
  %v9520 = vtanh.pop %v9340
  %v9521 = vtanh.pop %v8097
  %v9522 = vtanh.pop %v8275
  %v9523 = vtanh.pop %v8453
  %v9524 = vtanh.pop %v8631
  %v9525 = vtanh.pop %v8809
  %v9526 = vtanh.pop %v8987
  %v9527 = vtanh.pop %v9165
  %v9528 = vtanh.pop %v9343
  %v9529 = vtanh.pop %v8099
  %v9530 = vtanh.pop %v8277
  %v9531 = vtanh.pop %v8455
  %v9532 = vtanh.pop %v8633
  %v9533 = vtanh.pop %v8811
  %v9534 = vtanh.pop %v8989
  %v9535 = vtanh.pop %v9167
  %v9536 = vtanh.pop %v9345
  %v9537 = vtanh.pop %v8102
  %v9538 = vtanh.pop %v8280
  %v9539 = vtanh.pop %v8458
  %v9540 = vtanh.pop %v8636
  %v9541 = vtanh.pop %v8814
  %v9542 = vtanh.pop %v8992
  %v9543 = vtanh.pop %v9170
  %v9544 = vtanh.pop %v9348
  %v9545 = vtanh.pop %v8104
  %v9546 = vtanh.pop %v8282
  %v9547 = vtanh.pop %v8460
  %v9548 = vtanh.pop %v8638
  %v9549 = vtanh.pop %v8816
  %v9550 = vtanh.pop %v8994
  %v9551 = vtanh.pop %v9172
  %v9552 = vtanh.pop %v9350
  %v9553 = vtanh.pop %v8107
  %v9554 = vtanh.pop %v8285
  %v9555 = vtanh.pop %v8463
  %v9556 = vtanh.pop %v8641
  %v9557 = vtanh.pop %v8819
  %v9558 = vtanh.pop %v8997
  %v9559 = vtanh.pop %v9175
  %v9560 = vtanh.pop %v9353
  %v9561 = vtanh.pop %v8109
  %v9562 = vtanh.pop %v8287
  %v9563 = vtanh.pop %v8465
  %v9564 = vtanh.pop %v8643
  %v9565 = vtanh.pop %v8821
  %v9566 = vtanh.pop %v8999
  %v9567 = vtanh.pop %v9177
  %v9568 = vtanh.pop %v9355
  %v9569 = vtanh.pop %v8112
  %v9570 = vtanh.pop %v8290
  %v9571 = vtanh.pop %v8468
  %v9572 = vtanh.pop %v8646
  %v9573 = vtanh.pop %v8824
  %v9574 = vtanh.pop %v9002
  %v9575 = vtanh.pop %v9180
  %v9576 = vtanh.pop %v9358
  %v9577 = vtanh.pop %v8114
  %v9578 = vtanh.pop %v8292
  %v9579 = vtanh.pop %v8470
  %v9580 = vtanh.pop %v8648
  %v9581 = vtanh.pop %v8826
  %v9582 = vtanh.pop %v9004
  %v9583 = vtanh.pop %v9182
  %v9584 = vtanh.pop %v9360
  %v9585 = vtanh.pop %v8117
  %v9586 = vtanh.pop %v8295
  %v9587 = vtanh.pop %v8473
  %v9588 = vtanh.pop %v8651
  %v9589 = vtanh.pop %v8829
  %v9590 = vtanh.pop %v9007
  %v9591 = vtanh.pop %v9185
  %v9592 = vtanh.pop %v9363
  %v9593 = vtanh.pop %v8119
  %v9594 = vtanh.pop %v8297
  %v9595 = vtanh.pop %v8475
  %v9596 = vtanh.pop %v8653
  %v9597 = vtanh.pop %v8831
  %v9598 = vtanh.pop %v9009
  %v9599 = vtanh.pop %v9187
  %v9600 = vtanh.pop %v9365
  %v9601 = vtanh.pop %v8122
  %v9602 = vtanh.pop %v8300
  %v9603 = vtanh.pop %v8478
  %v9604 = vtanh.pop %v8656
  %v9605 = vtanh.pop %v8834
  %v9606 = vtanh.pop %v9012
  %v9607 = vtanh.pop %v9190
  %v9608 = vtanh.pop %v9368
  %v9609 = vtanh.pop %v8124
  %v9610 = vtanh.pop %v8302
  %v9611 = vtanh.pop %v8480
  %v9612 = vtanh.pop %v8658
  %v9613 = vtanh.pop %v8836
  %v9614 = vtanh.pop %v9014
  %v9615 = vtanh.pop %v9192
  %v9616 = vtanh.pop %v9370
  %v9617 = vtanh.pop %v8127
  %v9618 = vtanh.pop %v8305
  %v9619 = vtanh.pop %v8483
  %v9620 = vtanh.pop %v8661
  %v9621 = vtanh.pop %v8839
  %v9622 = vtanh.pop %v9017
  %v9623 = vtanh.pop %v9195
  %v9624 = vtanh.pop %v9373
  %v9625 = vtanh.pop %v8129
  %v9626 = vtanh.pop %v8307
  %v9627 = vtanh.pop %v8485
  %v9628 = vtanh.pop %v8663
  %v9629 = vtanh.pop %v8841
  %v9630 = vtanh.pop %v9019
  %v9631 = vtanh.pop %v9197
  %v9632 = vtanh.pop %v9375
  %v9633 = vpack.c.bf16 %v9385, %v9377
  %v9634 = vpack.c.bf16 %v9386, %v9378
  %v9635 = vpack.c.bf16 %v9387, %v9379
  %v9636 = vpack.c.bf16 %v9388, %v9380
  %v9637 = vpack.c.bf16 %v9389, %v9381
  %v9638 = vpack.c.bf16 %v9390, %v9382
  %v9639 = vpack.c.bf16 %v9391, %v9383
  %v9640 = vpack.c.bf16 %v9392, %v9384
  %v9641 = vpack.c.bf16 %v9401, %v9393
  %v9642 = vpack.c.bf16 %v9402, %v9394
  %v9643 = vpack.c.bf16 %v9403, %v9395
  %v9644 = vpack.c.bf16 %v9404, %v9396
  %v9645 = vpack.c.bf16 %v9405, %v9397
  %v9646 = vpack.c.bf16 %v9406, %v9398
  %v9647 = vpack.c.bf16 %v9407, %v9399
  %v9648 = vpack.c.bf16 %v9408, %v9400
  %v9649 = vpack.c.bf16 %v9417, %v9409
  %v9650 = vpack.c.bf16 %v9418, %v9410
  %v9651 = vpack.c.bf16 %v9419, %v9411
  %v9652 = vpack.c.bf16 %v9420, %v9412
  %v9653 = vpack.c.bf16 %v9421, %v9413
  %v9654 = vpack.c.bf16 %v9422, %v9414
  %v9655 = vpack.c.bf16 %v9423, %v9415
  %v9656 = vpack.c.bf16 %v9424, %v9416
  %v9657 = vpack.c.bf16 %v9433, %v9425
  %v9658 = vpack.c.bf16 %v9434, %v9426
  %v9659 = vpack.c.bf16 %v9435, %v9427
  %v9660 = vpack.c.bf16 %v9436, %v9428
  %v9661 = vpack.c.bf16 %v9437, %v9429
  %v9662 = vpack.c.bf16 %v9438, %v9430
  %v9663 = vpack.c.bf16 %v9439, %v9431
  %v9664 = vpack.c.bf16 %v9440, %v9432
  %v9665 = vpack.c.bf16 %v9449, %v9441
  %v9666 = vpack.c.bf16 %v9450, %v9442
  %v9667 = vpack.c.bf16 %v9451, %v9443
  %v9668 = vpack.c.bf16 %v9452, %v9444
  %v9669 = vpack.c.bf16 %v9453, %v9445
  %v9670 = vpack.c.bf16 %v9454, %v9446
  %v9671 = vpack.c.bf16 %v9455, %v9447
  %v9672 = vpack.c.bf16 %v9456, %v9448
  %v9673 = vpack.c.bf16 %v9465, %v9457
  %v9674 = vpack.c.bf16 %v9466, %v9458
  %v9675 = vpack.c.bf16 %v9467, %v9459
  %v9676 = vpack.c.bf16 %v9468, %v9460
  %v9677 = vpack.c.bf16 %v9469, %v9461
  %v9678 = vpack.c.bf16 %v9470, %v9462
  %v9679 = vpack.c.bf16 %v9471, %v9463
  %v9680 = vpack.c.bf16 %v9472, %v9464
  %v9681 = vpack.c.bf16 %v9481, %v9473
  %v9682 = vpack.c.bf16 %v9482, %v9474
  %v9683 = vpack.c.bf16 %v9483, %v9475
  %v9684 = vpack.c.bf16 %v9484, %v9476
  %v9685 = vpack.c.bf16 %v9485, %v9477
  %v9686 = vpack.c.bf16 %v9486, %v9478
  %v9687 = vpack.c.bf16 %v9487, %v9479
  %v9688 = vpack.c.bf16 %v9488, %v9480
  %v9689 = vpack.c.bf16 %v9497, %v9489
  %v9690 = vpack.c.bf16 %v9498, %v9490
  %v9691 = vpack.c.bf16 %v9499, %v9491
  %v9692 = vpack.c.bf16 %v9500, %v9492
  %v9693 = vpack.c.bf16 %v9501, %v9493
  %v9694 = vpack.c.bf16 %v9502, %v9494
  %v9695 = vpack.c.bf16 %v9503, %v9495
  %v9696 = vpack.c.bf16 %v9504, %v9496
  %v9697 = vpack.c.bf16 %v9513, %v9505
  %v9698 = vpack.c.bf16 %v9514, %v9506
  %v9699 = vpack.c.bf16 %v9515, %v9507
  %v9700 = vpack.c.bf16 %v9516, %v9508
  %v9701 = vpack.c.bf16 %v9517, %v9509
  %v9702 = vpack.c.bf16 %v9518, %v9510
  %v9703 = vpack.c.bf16 %v9519, %v9511
  %v9704 = vpack.c.bf16 %v9520, %v9512
  %v9705 = vpack.c.bf16 %v9529, %v9521
  %v9706 = vpack.c.bf16 %v9530, %v9522
  %v9707 = vpack.c.bf16 %v9531, %v9523
  %v9708 = vpack.c.bf16 %v9532, %v9524
  %v9709 = vpack.c.bf16 %v9533, %v9525
  %v9710 = vpack.c.bf16 %v9534, %v9526
  %v9711 = vpack.c.bf16 %v9535, %v9527
  %v9712 = vpack.c.bf16 %v9536, %v9528
  %v9713 = vpack.c.bf16 %v9545, %v9537
  %v9714 = vpack.c.bf16 %v9546, %v9538
  %v9715 = vpack.c.bf16 %v9547, %v9539
  %v9716 = vpack.c.bf16 %v9548, %v9540
  %v9717 = vpack.c.bf16 %v9549, %v9541
  %v9718 = vpack.c.bf16 %v9550, %v9542
  %v9719 = vpack.c.bf16 %v9551, %v9543
  %v9720 = vpack.c.bf16 %v9552, %v9544
  %v9721 = vpack.c.bf16 %v9561, %v9553
  %v9722 = vpack.c.bf16 %v9562, %v9554
  %v9723 = vpack.c.bf16 %v9563, %v9555
  %v9724 = vpack.c.bf16 %v9564, %v9556
  %v9725 = vpack.c.bf16 %v9565, %v9557
  %v9726 = vpack.c.bf16 %v9566, %v9558
  %v9727 = vpack.c.bf16 %v9567, %v9559
  %v9728 = vpack.c.bf16 %v9568, %v9560
  %v9729 = vpack.c.bf16 %v9577, %v9569
  %v9730 = vpack.c.bf16 %v9578, %v9570
  %v9731 = vpack.c.bf16 %v9579, %v9571
  %v9732 = vpack.c.bf16 %v9580, %v9572
  %v9733 = vpack.c.bf16 %v9581, %v9573
  %v9734 = vpack.c.bf16 %v9582, %v9574
  %v9735 = vpack.c.bf16 %v9583, %v9575
  %v9736 = vpack.c.bf16 %v9584, %v9576
  %v9737 = vpack.c.bf16 %v9593, %v9585
  %v9738 = vpack.c.bf16 %v9594, %v9586
  %v9739 = vpack.c.bf16 %v9595, %v9587
  %v9740 = vpack.c.bf16 %v9596, %v9588
  %v9741 = vpack.c.bf16 %v9597, %v9589
  %v9742 = vpack.c.bf16 %v9598, %v9590
  %v9743 = vpack.c.bf16 %v9599, %v9591
  %v9744 = vpack.c.bf16 %v9600, %v9592
  %v9745 = vpack.c.bf16 %v9609, %v9601
  %v9746 = vpack.c.bf16 %v9610, %v9602
  %v9747 = vpack.c.bf16 %v9611, %v9603
  %v9748 = vpack.c.bf16 %v9612, %v9604
  %v9749 = vpack.c.bf16 %v9613, %v9605
  %v9750 = vpack.c.bf16 %v9614, %v9606
  %v9751 = vpack.c.bf16 %v9615, %v9607
  %v9752 = vpack.c.bf16 %v9616, %v9608
  %v9753 = vpack.c.bf16 %v9625, %v9617
  %v9754 = vpack.c.bf16 %v9626, %v9618
  %v9755 = vpack.c.bf16 %v9627, %v9619
  %v9756 = vpack.c.bf16 %v9628, %v9620
  %v9757 = vpack.c.bf16 %v9629, %v9621
  %v9758 = vpack.c.bf16 %v9630, %v9622
  %v9759 = vpack.c.bf16 %v9631, %v9623
  %v9760 = vpack.c.bf16 %v9632, %v9624
  %v9761 = vld [vmem:[%s6] sm:$0xf]
  %v9762 = vld [vmem:[%s6 + $0x4] sm:$0xf]
  %v9763 = vld [vmem:[%s6 + $0x8] sm:$0xf]
  %v9764 = vld [vmem:[%s6 + $0xc] sm:$0xf]
  %v9765 = vld [vmem:[%s6 + $0x10] sm:$0xf]
  %v9766 = vld [vmem:[%s6 + $0x14] sm:$0xf]
  %v9767 = vld [vmem:[%s6 + $0x18] sm:$0xf]
  %v9768 = vld [vmem:[%s6 + $0x1c] sm:$0xf]
  %v9769 = vld [vmem:[%s6 + $0x20] sm:$0xf]
  %v9770 = vld [vmem:[%s6 + $0x24] sm:$0xf]
  %v9771 = vld [vmem:[%s6 + $0x28] sm:$0xf]
  %v9772 = vld [vmem:[%s6 + $0x2c] sm:$0xf]
  %v9773 = vld [vmem:[%s6 + $0x30] sm:$0xf]
  %v9774 = vld [vmem:[%s6 + $0x34] sm:$0xf]
  %v9775 = vld [vmem:[%s6 + $0x38] sm:$0xf]
  %v9776 = vld [vmem:[%s6 + $0x3c] sm:$0xf]
  %v9777 = vld [vmem:[%s6 + $0x40] sm:$0xf]
  %v9778 = vld [vmem:[%s6 + $0x44] sm:$0xf]
  %v9779 = vld [vmem:[%s6 + $0x48] sm:$0xf]
  %v9780 = vld [vmem:[%s6 + $0x4c] sm:$0xf]
  %v9781 = vld [vmem:[%s6 + $0x50] sm:$0xf]
  %v9782 = vld [vmem:[%s6 + $0x54] sm:$0xf]
  %v9783 = vld [vmem:[%s6 + $0x58] sm:$0xf]
  %v9784 = vld [vmem:[%s6 + $0x5c] sm:$0xf]
  %v9785 = vld [vmem:[%s6 + $0x60] sm:$0xf]
  %v9786 = vld [vmem:[%s6 + $0x64] sm:$0xf]
  %v9787 = vld [vmem:[%s6 + $0x68] sm:$0xf]
  %v9788 = vld [vmem:[%s6 + $0x6c] sm:$0xf]
  %v9789 = vld [vmem:[%s6 + $0x70] sm:$0xf]
  %v9790 = vld [vmem:[%s6 + $0x74] sm:$0xf]
  %v9791 = vld [vmem:[%s6 + $0x78] sm:$0xf]
  %v9792 = vld [vmem:[%s6 + $0x7c] sm:$0xf]
  %v9793 = vld [vmem:[%s6 + $0x80] sm:$0xf]
  %v9794 = vld [vmem:[%s6 + $0x84] sm:$0xf]
  %v9795 = vld [vmem:[%s6 + $0x88] sm:$0xf]
  %v9796 = vld [vmem:[%s6 + $0x8c] sm:$0xf]
  %v9797 = vld [vmem:[%s6 + $0x90] sm:$0xf]
  %v9798 = vld [vmem:[%s6 + $0x94] sm:$0xf]
  %v9799 = vld [vmem:[%s6 + $0x98] sm:$0xf]
  %v9800 = vld [vmem:[%s6 + $0x9c] sm:$0xf]
  %v9801 = vld [vmem:[%s6 + $0xa0] sm:$0xf]
  %v9802 = vld [vmem:[%s6 + $0xa4] sm:$0xf]
  %v9803 = vld [vmem:[%s6 + $0xa8] sm:$0xf]
  %v9804 = vld [vmem:[%s6 + $0xac] sm:$0xf]
  %v9805 = vld [vmem:[%s6 + $0xb0] sm:$0xf]
  %v9806 = vld [vmem:[%s6 + $0xb4] sm:$0xf]
  %v9807 = vld [vmem:[%s6 + $0xb8] sm:$0xf]
  %v9808 = vld [vmem:[%s6 + $0xbc] sm:$0xf]
  %v9809 = vld [vmem:[%s6 + $0xc0] sm:$0xf]
  %v9810 = vld [vmem:[%s6 + $0xc4] sm:$0xf]
  %v9811 = vld [vmem:[%s6 + $0xc8] sm:$0xf]
  %v9812 = vld [vmem:[%s6 + $0xcc] sm:$0xf]
  %v9813 = vld [vmem:[%s6 + $0xd0] sm:$0xf]
  %v9814 = vld [vmem:[%s6 + $0xd4] sm:$0xf]
  %v9815 = vld [vmem:[%s6 + $0xd8] sm:$0xf]
  %v9816 = vld [vmem:[%s6 + $0xdc] sm:$0xf]
  %v9817 = vld [vmem:[%s6 + $0xe0] sm:$0xf]
  %v9818 = vld [vmem:[%s6 + $0xe4] sm:$0xf]
  %v9819 = vld [vmem:[%s6 + $0xe8] sm:$0xf]
  %v9820 = vld [vmem:[%s6 + $0xec] sm:$0xf]
  %v9821 = vld [vmem:[%s6 + $0xf0] sm:$0xf]
  %v9822 = vld [vmem:[%s6 + $0xf4] sm:$0xf]
  %v9823 = vld [vmem:[%s6 + $0xf8] sm:$0xf]
  %v9824 = vld [vmem:[%s6 + $0xfc] sm:$0xf]
  %v9825 = vld [vmem:[%s6 + $0x100] sm:$0xf]
  %v9826 = vld [vmem:[%s6 + $0x104] sm:$0xf]
  %v9827 = vld [vmem:[%s6 + $0x108] sm:$0xf]
  %v9828 = vld [vmem:[%s6 + $0x10c] sm:$0xf]
  %v9829 = vld [vmem:[%s6 + $0x110] sm:$0xf]
  %v9830 = vld [vmem:[%s6 + $0x114] sm:$0xf]
  %v9831 = vld [vmem:[%s6 + $0x118] sm:$0xf]
  %v9832 = vld [vmem:[%s6 + $0x11c] sm:$0xf]
  %v9833 = vld [vmem:[%s6 + $0x120] sm:$0xf]
  %v9834 = vld [vmem:[%s6 + $0x124] sm:$0xf]
  %v9835 = vld [vmem:[%s6 + $0x128] sm:$0xf]
  %v9836 = vld [vmem:[%s6 + $0x12c] sm:$0xf]
  %v9837 = vld [vmem:[%s6 + $0x130] sm:$0xf]
  %v9838 = vld [vmem:[%s6 + $0x134] sm:$0xf]
  %v9839 = vld [vmem:[%s6 + $0x138] sm:$0xf]
  %v9840 = vld [vmem:[%s6 + $0x13c] sm:$0xf]
  %v9841 = vld [vmem:[%s6 + $0x140] sm:$0xf]
  %v9842 = vld [vmem:[%s6 + $0x144] sm:$0xf]
  %v9843 = vld [vmem:[%s6 + $0x148] sm:$0xf]
  %v9844 = vld [vmem:[%s6 + $0x14c] sm:$0xf]
  %v9845 = vld [vmem:[%s6 + $0x150] sm:$0xf]
  %v9846 = vld [vmem:[%s6 + $0x154] sm:$0xf]
  %v9847 = vld [vmem:[%s6 + $0x158] sm:$0xf]
  %v9848 = vld [vmem:[%s6 + $0x15c] sm:$0xf]
  %v9849 = vld [vmem:[%s6 + $0x160] sm:$0xf]
  %v9850 = vld [vmem:[%s6 + $0x164] sm:$0xf]
  %v9851 = vld [vmem:[%s6 + $0x168] sm:$0xf]
  %v9852 = vld [vmem:[%s6 + $0x16c] sm:$0xf]
  %v9853 = vld [vmem:[%s6 + $0x170] sm:$0xf]
  %v9854 = vld [vmem:[%s6 + $0x174] sm:$0xf]
  %v9855 = vld [vmem:[%s6 + $0x178] sm:$0xf]
  %v9856 = vld [vmem:[%s6 + $0x17c] sm:$0xf]
  %v9857 = vld [vmem:[%s6 + $0x180] sm:$0xf]
  %v9858 = vld [vmem:[%s6 + $0x184] sm:$0xf]
  %v9859 = vld [vmem:[%s6 + $0x188] sm:$0xf]
  %v9860 = vld [vmem:[%s6 + $0x18c] sm:$0xf]
  %v9861 = vld [vmem:[%s6 + $0x190] sm:$0xf]
  %v9862 = vld [vmem:[%s6 + $0x194] sm:$0xf]
  %v9863 = vld [vmem:[%s6 + $0x198] sm:$0xf]
  %v9864 = vld [vmem:[%s6 + $0x19c] sm:$0xf]
  %v9865 = vld [vmem:[%s6 + $0x1a0] sm:$0xf]
  %v9866 = vld [vmem:[%s6 + $0x1a4] sm:$0xf]
  %v9867 = vld [vmem:[%s6 + $0x1a8] sm:$0xf]
  %v9868 = vld [vmem:[%s6 + $0x1ac] sm:$0xf]
  %v9869 = vld [vmem:[%s6 + $0x1b0] sm:$0xf]
  %v9870 = vld [vmem:[%s6 + $0x1b4] sm:$0xf]
  %v9871 = vld [vmem:[%s6 + $0x1b8] sm:$0xf]
  %v9872 = vld [vmem:[%s6 + $0x1bc] sm:$0xf]
  %v9873 = vld [vmem:[%s6 + $0x1c0] sm:$0xf]
  %v9874 = vld [vmem:[%s6 + $0x1c4] sm:$0xf]
  %v9875 = vld [vmem:[%s6 + $0x1c8] sm:$0xf]
  %v9876 = vld [vmem:[%s6 + $0x1cc] sm:$0xf]
  %v9877 = vld [vmem:[%s6 + $0x1d0] sm:$0xf]
  %v9878 = vld [vmem:[%s6 + $0x1d4] sm:$0xf]
  %v9879 = vld [vmem:[%s6 + $0x1d8] sm:$0xf]
  %v9880 = vld [vmem:[%s6 + $0x1dc] sm:$0xf]
  %v9881 = vld [vmem:[%s6 + $0x1e0] sm:$0xf]
  %v9882 = vld [vmem:[%s6 + $0x1e4] sm:$0xf]
  %v9883 = vld [vmem:[%s6 + $0x1e8] sm:$0xf]
  %v9884 = vld [vmem:[%s6 + $0x1ec] sm:$0xf]
  %v9885 = vld [vmem:[%s6 + $0x1f0] sm:$0xf]
  %v9886 = vld [vmem:[%s6 + $0x1f4] sm:$0xf]
  %v9887 = vld [vmem:[%s6 + $0x1f8] sm:$0xf]
  %v9888 = vld [vmem:[%s6 + $0x1fc] sm:$0xf]
  %v9889 = vld [vmem:[%s7] sm:$0x1]
  %v9891 = vperm.slane %v9889, 0
  %v10021 = vunpack.c.l.b16 %v9761
  %v10022 = vunpack.c.l.b16 %v9762
  %v10023 = vunpack.c.l.b16 %v9763
  %v10024 = vunpack.c.l.b16 %v9764
  %v10025 = vunpack.c.l.b16 %v9765
  %v10026 = vunpack.c.l.b16 %v9766
  %v10027 = vunpack.c.l.b16 %v9767
  %v10028 = vunpack.c.l.b16 %v9768
  %v10029 = vunpack.c.l.b16 %v9769
  %v10030 = vunpack.c.l.b16 %v9770
  %v10031 = vunpack.c.l.b16 %v9771
  %v10032 = vunpack.c.l.b16 %v9772
  %v10033 = vunpack.c.l.b16 %v9773
  %v10034 = vunpack.c.l.b16 %v9774
  %v10035 = vunpack.c.l.b16 %v9775
  %v10036 = vunpack.c.l.b16 %v9776
  %v10037 = vunpack.c.l.b16 %v9777
  %v10038 = vunpack.c.l.b16 %v9778
  %v10039 = vunpack.c.l.b16 %v9779
  %v10040 = vunpack.c.l.b16 %v9780
  %v10041 = vunpack.c.l.b16 %v9781
  %v10042 = vunpack.c.l.b16 %v9782
  %v10043 = vunpack.c.l.b16 %v9783
  %v10044 = vunpack.c.l.b16 %v9784
  %v10045 = vunpack.c.l.b16 %v9785
  %v10046 = vunpack.c.l.b16 %v9786
  %v10047 = vunpack.c.l.b16 %v9787
  %v10048 = vunpack.c.l.b16 %v9788
  %v10049 = vunpack.c.l.b16 %v9789
  %v10050 = vunpack.c.l.b16 %v9790
  %v10051 = vunpack.c.l.b16 %v9791
  %v10052 = vunpack.c.l.b16 %v9792
  %v10053 = vunpack.c.l.b16 %v9793
  %v10054 = vunpack.c.l.b16 %v9794
  %v10055 = vunpack.c.l.b16 %v9795
  %v10056 = vunpack.c.l.b16 %v9796
  %v10057 = vunpack.c.l.b16 %v9797
  %v10058 = vunpack.c.l.b16 %v9798
  %v10059 = vunpack.c.l.b16 %v9799
  %v10060 = vunpack.c.l.b16 %v9800
  %v10061 = vunpack.c.l.b16 %v9801
  %v10062 = vunpack.c.l.b16 %v9802
  %v10063 = vunpack.c.l.b16 %v9803
  %v10064 = vunpack.c.l.b16 %v9804
  %v10065 = vunpack.c.l.b16 %v9805
  %v10066 = vunpack.c.l.b16 %v9806
  %v10067 = vunpack.c.l.b16 %v9807
  %v10068 = vunpack.c.l.b16 %v9808
  %v10069 = vunpack.c.l.b16 %v9809
  %v10070 = vunpack.c.l.b16 %v9810
  %v10071 = vunpack.c.l.b16 %v9811
  %v10072 = vunpack.c.l.b16 %v9812
  %v10073 = vunpack.c.l.b16 %v9813
  %v10074 = vunpack.c.l.b16 %v9814
  %v10075 = vunpack.c.l.b16 %v9815
  %v10076 = vunpack.c.l.b16 %v9816
  %v10077 = vunpack.c.l.b16 %v9817
  %v10078 = vunpack.c.l.b16 %v9818
  %v10079 = vunpack.c.l.b16 %v9819
  %v10080 = vunpack.c.l.b16 %v9820
  %v10081 = vunpack.c.l.b16 %v9821
  %v10082 = vunpack.c.l.b16 %v9822
  %v10083 = vunpack.c.l.b16 %v9823
  %v10084 = vunpack.c.l.b16 %v9824
  %v10085 = vunpack.c.l.b16 %v9825
  %v10086 = vunpack.c.l.b16 %v9826
  %v10087 = vunpack.c.l.b16 %v9827
  %v10088 = vunpack.c.l.b16 %v9828
  %v10089 = vunpack.c.l.b16 %v9829
  %v10090 = vunpack.c.l.b16 %v9830
  %v10091 = vunpack.c.l.b16 %v9831
  %v10092 = vunpack.c.l.b16 %v9832
  %v10093 = vunpack.c.l.b16 %v9833
  %v10094 = vunpack.c.l.b16 %v9834
  %v10095 = vunpack.c.l.b16 %v9835
  %v10096 = vunpack.c.l.b16 %v9836
  %v10097 = vunpack.c.l.b16 %v9837
  %v10098 = vunpack.c.l.b16 %v9838
  %v10099 = vunpack.c.l.b16 %v9839
  %v10100 = vunpack.c.l.b16 %v9840
  %v10101 = vunpack.c.l.b16 %v9841
  %v10102 = vunpack.c.l.b16 %v9842
  %v10103 = vunpack.c.l.b16 %v9843
  %v10104 = vunpack.c.l.b16 %v9844
  %v10105 = vunpack.c.l.b16 %v9845
  %v10106 = vunpack.c.l.b16 %v9846
  %v10107 = vunpack.c.l.b16 %v9847
  %v10108 = vunpack.c.l.b16 %v9848
  %v10109 = vunpack.c.l.b16 %v9849
  %v10110 = vunpack.c.l.b16 %v9850
  %v10111 = vunpack.c.l.b16 %v9851
  %v10112 = vunpack.c.l.b16 %v9852
  %v10113 = vunpack.c.l.b16 %v9853
  %v10114 = vunpack.c.l.b16 %v9854
  %v10115 = vunpack.c.l.b16 %v9855
  %v10116 = vunpack.c.l.b16 %v9856
  %v10117 = vunpack.c.l.b16 %v9857
  %v10118 = vunpack.c.l.b16 %v9858
  %v10119 = vunpack.c.l.b16 %v9859
  %v10120 = vunpack.c.l.b16 %v9860
  %v10121 = vunpack.c.l.b16 %v9861
  %v10122 = vunpack.c.l.b16 %v9862
  %v10123 = vunpack.c.l.b16 %v9863
  %v10124 = vunpack.c.l.b16 %v9864
  %v10125 = vunpack.c.l.b16 %v9865
  %v10126 = vunpack.c.l.b16 %v9866
  %v10127 = vunpack.c.l.b16 %v9867
  %v10128 = vunpack.c.l.b16 %v9868
  %v10129 = vunpack.c.l.b16 %v9869
  %v10130 = vunpack.c.l.b16 %v9870
  %v10131 = vunpack.c.l.b16 %v9871
  %v10132 = vunpack.c.l.b16 %v9872
  %v10133 = vunpack.c.l.b16 %v9873
  %v10134 = vunpack.c.l.b16 %v9874
  %v10135 = vunpack.c.l.b16 %v9875
  %v10136 = vunpack.c.l.b16 %v9876
  %v10137 = vunpack.c.l.b16 %v9877
  %v10138 = vunpack.c.l.b16 %v9878
  %v10139 = vunpack.c.l.b16 %v9879
  %v10140 = vunpack.c.l.b16 %v9880
  %v10141 = vunpack.c.l.b16 %v9881
  %v10142 = vunpack.c.l.b16 %v9882
  %v10143 = vunpack.c.l.b16 %v9883
  %v10144 = vunpack.c.l.b16 %v9884
  %v10145 = vunpack.c.l.b16 %v9885
  %v10146 = vunpack.c.l.b16 %v9886
  %v10147 = vunpack.c.l.b16 %v9887
  %v10148 = vunpack.c.l.b16 %v9888
  %v10149 = vpack.c.b16 %v10022, %v10021
  %v10150 = vpack.c.b16 %v10024, %v10023
  %v10151 = vpack.c.b16 %v10026, %v10025
  %v10152 = vpack.c.b16 %v10028, %v10027
  %v10153 = vpack.c.b16 %v10030, %v10029
  %v10154 = vpack.c.b16 %v10032, %v10031
  %v10155 = vpack.c.b16 %v10034, %v10033
  %v10156 = vpack.c.b16 %v10036, %v10035
  %v10157 = vpack.c.b16 %v10038, %v10037
  %v10158 = vpack.c.b16 %v10040, %v10039
  %v10159 = vpack.c.b16 %v10042, %v10041
  %v10160 = vpack.c.b16 %v10044, %v10043
  %v10161 = vpack.c.b16 %v10046, %v10045
  %v10162 = vpack.c.b16 %v10048, %v10047
  %v10163 = vpack.c.b16 %v10050, %v10049
  %v10164 = vpack.c.b16 %v10052, %v10051
  %v10165 = vpack.c.b16 %v10054, %v10053
  %v10166 = vpack.c.b16 %v10056, %v10055
  %v10167 = vpack.c.b16 %v10058, %v10057
  %v10168 = vpack.c.b16 %v10060, %v10059
  %v10169 = vpack.c.b16 %v10062, %v10061
  %v10170 = vpack.c.b16 %v10064, %v10063
  %v10171 = vpack.c.b16 %v10066, %v10065
  %v10172 = vpack.c.b16 %v10068, %v10067
  %v10173 = vpack.c.b16 %v10070, %v10069
  %v10174 = vpack.c.b16 %v10072, %v10071
  %v10175 = vpack.c.b16 %v10074, %v10073
  %v10176 = vpack.c.b16 %v10076, %v10075
  %v10177 = vpack.c.b16 %v10078, %v10077
  %v10178 = vpack.c.b16 %v10080, %v10079
  %v10179 = vpack.c.b16 %v10082, %v10081
  %v10180 = vpack.c.b16 %v10084, %v10083
  %v10181 = vpack.c.b16 %v10086, %v10085
  %v10182 = vpack.c.b16 %v10088, %v10087
  %v10183 = vpack.c.b16 %v10090, %v10089
  %v10184 = vpack.c.b16 %v10092, %v10091
  %v10185 = vpack.c.b16 %v10094, %v10093
  %v10186 = vpack.c.b16 %v10096, %v10095
  %v10187 = vpack.c.b16 %v10098, %v10097
  %v10188 = vpack.c.b16 %v10100, %v10099
  %v10189 = vpack.c.b16 %v10102, %v10101
  %v10190 = vpack.c.b16 %v10104, %v10103
  %v10191 = vpack.c.b16 %v10106, %v10105
  %v10192 = vpack.c.b16 %v10108, %v10107
  %v10193 = vpack.c.b16 %v10110, %v10109
  %v10194 = vpack.c.b16 %v10112, %v10111
  %v10195 = vpack.c.b16 %v10114, %v10113
  %v10196 = vpack.c.b16 %v10116, %v10115
  %v10197 = vpack.c.b16 %v10118, %v10117
  %v10198 = vpack.c.b16 %v10120, %v10119
  %v10199 = vpack.c.b16 %v10122, %v10121
  %v10200 = vpack.c.b16 %v10124, %v10123
  %v10201 = vpack.c.b16 %v10126, %v10125
  %v10202 = vpack.c.b16 %v10128, %v10127
  %v10203 = vpack.c.b16 %v10130, %v10129
  %v10204 = vpack.c.b16 %v10132, %v10131
  %v10205 = vpack.c.b16 %v10134, %v10133
  %v10206 = vpack.c.b16 %v10136, %v10135
  %v10207 = vpack.c.b16 %v10138, %v10137
  %v10208 = vpack.c.b16 %v10140, %v10139
  %v10209 = vpack.c.b16 %v10142, %v10141
  %v10210 = vpack.c.b16 %v10144, %v10143
  %v10211 = vpack.c.b16 %v10146, %v10145
  %v10212 = vpack.c.b16 %v10148, %v10147
  %10277 = vmatpush.bf16.msra.mxu0 %v10156
  %10278 = vmatpush.bf16.msra.mxu0 %v10155
  %10279 = vmatpush.bf16.msra.mxu0 %v10154
  %10280 = vmatpush.bf16.msra.mxu0 %v10153
  %10281 = vmatpush.bf16.msra.mxu0 %v10152
  %10282 = vmatpush.bf16.msra.mxu0 %v10151
  %10283 = vmatpush.bf16.msra.mxu0 %v10150
  %10284 = vmatpush.bf16.msra.mxu0 %v10149
  %10285 = vmatmul.bf16.gmra.mxu0 %v9633
  %v10286 = vpop.f32.mrf.mxu0
  %v10287 = vadd.f32 %v9891, %v10286
  %v10288 = vpop.f32.mrf.mxu0
  %v10289 = vadd.f32 %v9891, %v10288
  %10290 = vmatmul.bf16.gmra.mxu0 %v9641
  %v10291 = vpop.f32.mrf.mxu0
  %v10292 = vadd.f32 %v9891, %v10291
  %v10293 = vpop.f32.mrf.mxu0
  %v10294 = vadd.f32 %v9891, %v10293
  %10295 = vmatmul.bf16.gmra.mxu0 %v9649
  %v10296 = vpop.f32.mrf.mxu0
  %v10297 = vadd.f32 %v9891, %v10296
  %v10298 = vpop.f32.mrf.mxu0
  %v10299 = vadd.f32 %v9891, %v10298
  %10300 = vmatmul.bf16.gmra.mxu0 %v9657
  %v10301 = vpop.f32.mrf.mxu0
  %v10302 = vadd.f32 %v9891, %v10301
  %v10303 = vpop.f32.mrf.mxu0
  %v10304 = vadd.f32 %v9891, %v10303
  %10305 = vmatmul.bf16.gmra.mxu0 %v9665
  %v10306 = vpop.f32.mrf.mxu0
  %v10307 = vadd.f32 %v9891, %v10306
  %v10308 = vpop.f32.mrf.mxu0
  %v10309 = vadd.f32 %v9891, %v10308
  %10310 = vmatmul.bf16.gmra.mxu0 %v9673
  %v10311 = vpop.f32.mrf.mxu0
  %v10312 = vadd.f32 %v9891, %v10311
  %v10313 = vpop.f32.mrf.mxu0
  %v10314 = vadd.f32 %v9891, %v10313
  %10315 = vmatmul.bf16.gmra.mxu0 %v9681
  %v10316 = vpop.f32.mrf.mxu0
  %v10317 = vadd.f32 %v9891, %v10316
  %v10318 = vpop.f32.mrf.mxu0
  %v10319 = vadd.f32 %v9891, %v10318
  %10320 = vmatmul.bf16.gmra.mxu0 %v9689
  %v10321 = vpop.f32.mrf.mxu0
  %v10322 = vadd.f32 %v9891, %v10321
  %v10323 = vpop.f32.mrf.mxu0
  %v10324 = vadd.f32 %v9891, %v10323
  %10325 = vmatmul.bf16.gmra.mxu0 %v9697
  %v10326 = vpop.f32.mrf.mxu0
  %v10327 = vadd.f32 %v9891, %v10326
  %v10328 = vpop.f32.mrf.mxu0
  %v10329 = vadd.f32 %v9891, %v10328
  %10330 = vmatmul.bf16.gmra.mxu0 %v9705
  %v10331 = vpop.f32.mrf.mxu0
  %v10332 = vadd.f32 %v9891, %v10331
  %v10333 = vpop.f32.mrf.mxu0
  %v10334 = vadd.f32 %v9891, %v10333
  %10335 = vmatmul.bf16.gmra.mxu0 %v9713
  %v10336 = vpop.f32.mrf.mxu0
  %v10337 = vadd.f32 %v9891, %v10336
  %v10338 = vpop.f32.mrf.mxu0
  %v10339 = vadd.f32 %v9891, %v10338
  %10340 = vmatmul.bf16.gmra.mxu0 %v9721
  %v10341 = vpop.f32.mrf.mxu0
  %v10342 = vadd.f32 %v9891, %v10341
  %v10343 = vpop.f32.mrf.mxu0
  %v10344 = vadd.f32 %v9891, %v10343
  %10345 = vmatmul.bf16.gmra.mxu0 %v9729
  %v10346 = vpop.f32.mrf.mxu0
  %v10347 = vadd.f32 %v9891, %v10346
  %v10348 = vpop.f32.mrf.mxu0
  %v10349 = vadd.f32 %v9891, %v10348
  %10350 = vmatmul.bf16.gmra.mxu0 %v9737
  %v10351 = vpop.f32.mrf.mxu0
  %v10352 = vadd.f32 %v9891, %v10351
  %v10353 = vpop.f32.mrf.mxu0
  %v10354 = vadd.f32 %v9891, %v10353
  %10355 = vmatmul.bf16.gmra.mxu0 %v9745
  %v10356 = vpop.f32.mrf.mxu0
  %v10357 = vadd.f32 %v9891, %v10356
  %v10358 = vpop.f32.mrf.mxu0
  %v10359 = vadd.f32 %v9891, %v10358
  %10360 = vmatmul.bf16.gmra.mxu0 %v9753
  %v10361 = vpop.f32.mrf.mxu0
  %v10362 = vadd.f32 %v9891, %v10361
  %v10363 = vpop.f32.mrf.mxu0
  %v10364 = vadd.f32 %v9891, %v10363
  %10365 = vdwg.mxu0
  %10366 = vmatpush.bf16.msra.mxu0 %v10164
  %10367 = vmatpush.bf16.msra.mxu0 %v10163
  %10368 = vmatpush.bf16.msra.mxu0 %v10162
  %10369 = vmatpush.bf16.msra.mxu0 %v10161
  %10370 = vmatpush.bf16.msra.mxu0 %v10160
  %10371 = vmatpush.bf16.msra.mxu0 %v10159
  %10372 = vmatpush.bf16.msra.mxu0 %v10158
  %10373 = vmatpush.bf16.msra.mxu0 %v10157
  %10374 = vmatmul.bf16.gmra.mxu0 %v9634
  %v10375 = vpop.f32.mrf.mxu0
  %v10376 = vadd.f32 %v10287, %v10375
  %v10377 = vpop.f32.mrf.mxu0
  %v10378 = vadd.f32 %v10289, %v10377
  %10379 = vmatmul.bf16.gmra.mxu0 %v9642
  %v10380 = vpop.f32.mrf.mxu0
  %v10381 = vadd.f32 %v10292, %v10380
  %v10382 = vpop.f32.mrf.mxu0
  %v10383 = vadd.f32 %v10294, %v10382
  %10384 = vmatmul.bf16.gmra.mxu0 %v9650
  %v10385 = vpop.f32.mrf.mxu0
  %v10386 = vadd.f32 %v10297, %v10385
  %v10387 = vpop.f32.mrf.mxu0
  %v10388 = vadd.f32 %v10299, %v10387
  %10389 = vmatmul.bf16.gmra.mxu0 %v9658
  %v10390 = vpop.f32.mrf.mxu0
  %v10391 = vadd.f32 %v10302, %v10390
  %v10392 = vpop.f32.mrf.mxu0
  %v10393 = vadd.f32 %v10304, %v10392
  %10394 = vmatmul.bf16.gmra.mxu0 %v9666
  %v10395 = vpop.f32.mrf.mxu0
  %v10396 = vadd.f32 %v10307, %v10395
  %v10397 = vpop.f32.mrf.mxu0
  %v10398 = vadd.f32 %v10309, %v10397
  %10399 = vmatmul.bf16.gmra.mxu0 %v9674
  %v10400 = vpop.f32.mrf.mxu0
  %v10401 = vadd.f32 %v10312, %v10400
  %v10402 = vpop.f32.mrf.mxu0
  %v10403 = vadd.f32 %v10314, %v10402
  %10404 = vmatmul.bf16.gmra.mxu0 %v9682
  %v10405 = vpop.f32.mrf.mxu0
  %v10406 = vadd.f32 %v10317, %v10405
  %v10407 = vpop.f32.mrf.mxu0
  %v10408 = vadd.f32 %v10319, %v10407
  %10409 = vmatmul.bf16.gmra.mxu0 %v9690
  %v10410 = vpop.f32.mrf.mxu0
  %v10411 = vadd.f32 %v10322, %v10410
  %v10412 = vpop.f32.mrf.mxu0
  %v10413 = vadd.f32 %v10324, %v10412
  %10414 = vmatmul.bf16.gmra.mxu0 %v9698
  %v10415 = vpop.f32.mrf.mxu0
  %v10416 = vadd.f32 %v10327, %v10415
  %v10417 = vpop.f32.mrf.mxu0
  %v10418 = vadd.f32 %v10329, %v10417
  %10419 = vmatmul.bf16.gmra.mxu0 %v9706
  %v10420 = vpop.f32.mrf.mxu0
  %v10421 = vadd.f32 %v10332, %v10420
  %v10422 = vpop.f32.mrf.mxu0
  %v10423 = vadd.f32 %v10334, %v10422
  %10424 = vmatmul.bf16.gmra.mxu0 %v9714
  %v10425 = vpop.f32.mrf.mxu0
  %v10426 = vadd.f32 %v10337, %v10425
  %v10427 = vpop.f32.mrf.mxu0
  %v10428 = vadd.f32 %v10339, %v10427
  %10429 = vmatmul.bf16.gmra.mxu0 %v9722
  %v10430 = vpop.f32.mrf.mxu0
  %v10431 = vadd.f32 %v10342, %v10430
  %v10432 = vpop.f32.mrf.mxu0
  %v10433 = vadd.f32 %v10344, %v10432
  %10434 = vmatmul.bf16.gmra.mxu0 %v9730
  %v10435 = vpop.f32.mrf.mxu0
  %v10436 = vadd.f32 %v10347, %v10435
  %v10437 = vpop.f32.mrf.mxu0
  %v10438 = vadd.f32 %v10349, %v10437
  %10439 = vmatmul.bf16.gmra.mxu0 %v9738
  %v10440 = vpop.f32.mrf.mxu0
  %v10441 = vadd.f32 %v10352, %v10440
  %v10442 = vpop.f32.mrf.mxu0
  %v10443 = vadd.f32 %v10354, %v10442
  %10444 = vmatmul.bf16.gmra.mxu0 %v9746
  %v10445 = vpop.f32.mrf.mxu0
  %v10446 = vadd.f32 %v10357, %v10445
  %v10447 = vpop.f32.mrf.mxu0
  %v10448 = vadd.f32 %v10359, %v10447
  %10449 = vmatmul.bf16.gmra.mxu0 %v9754
  %v10450 = vpop.f32.mrf.mxu0
  %v10451 = vadd.f32 %v10362, %v10450
  %v10452 = vpop.f32.mrf.mxu0
  %v10453 = vadd.f32 %v10364, %v10452
  %10454 = vdwg.mxu0
  %10455 = vmatpush.bf16.msra.mxu0 %v10172
  %10456 = vmatpush.bf16.msra.mxu0 %v10171
  %10457 = vmatpush.bf16.msra.mxu0 %v10170
  %10458 = vmatpush.bf16.msra.mxu0 %v10169
  %10459 = vmatpush.bf16.msra.mxu0 %v10168
  %10460 = vmatpush.bf16.msra.mxu0 %v10167
  %10461 = vmatpush.bf16.msra.mxu0 %v10166
  %10462 = vmatpush.bf16.msra.mxu0 %v10165
  %10463 = vmatmul.bf16.gmra.mxu0 %v9635
  %v10464 = vpop.f32.mrf.mxu0
  %v10465 = vadd.f32 %v10376, %v10464
  %v10466 = vpop.f32.mrf.mxu0
  %v10467 = vadd.f32 %v10378, %v10466
  %10468 = vmatmul.bf16.gmra.mxu0 %v9643
  %v10469 = vpop.f32.mrf.mxu0
  %v10470 = vadd.f32 %v10381, %v10469
  %v10471 = vpop.f32.mrf.mxu0
  %v10472 = vadd.f32 %v10383, %v10471
  %10473 = vmatmul.bf16.gmra.mxu0 %v9651
  %v10474 = vpop.f32.mrf.mxu0
  %v10475 = vadd.f32 %v10386, %v10474
  %v10476 = vpop.f32.mrf.mxu0
  %v10477 = vadd.f32 %v10388, %v10476
  %10478 = vmatmul.bf16.gmra.mxu0 %v9659
  %v10479 = vpop.f32.mrf.mxu0
  %v10480 = vadd.f32 %v10391, %v10479
  %v10481 = vpop.f32.mrf.mxu0
  %v10482 = vadd.f32 %v10393, %v10481
  %10483 = vmatmul.bf16.gmra.mxu0 %v9667
  %v10484 = vpop.f32.mrf.mxu0
  %v10485 = vadd.f32 %v10396, %v10484
  %v10486 = vpop.f32.mrf.mxu0
  %v10487 = vadd.f32 %v10398, %v10486
  %10488 = vmatmul.bf16.gmra.mxu0 %v9675
  %v10489 = vpop.f32.mrf.mxu0
  %v10490 = vadd.f32 %v10401, %v10489
  %v10491 = vpop.f32.mrf.mxu0
  %v10492 = vadd.f32 %v10403, %v10491
  %10493 = vmatmul.bf16.gmra.mxu0 %v9683
  %v10494 = vpop.f32.mrf.mxu0
  %v10495 = vadd.f32 %v10406, %v10494
  %v10496 = vpop.f32.mrf.mxu0
  %v10497 = vadd.f32 %v10408, %v10496
  %10498 = vmatmul.bf16.gmra.mxu0 %v9691
  %v10499 = vpop.f32.mrf.mxu0
  %v10500 = vadd.f32 %v10411, %v10499
  %v10501 = vpop.f32.mrf.mxu0
  %v10502 = vadd.f32 %v10413, %v10501
  %10503 = vmatmul.bf16.gmra.mxu0 %v9699
  %v10504 = vpop.f32.mrf.mxu0
  %v10505 = vadd.f32 %v10416, %v10504
  %v10506 = vpop.f32.mrf.mxu0
  %v10507 = vadd.f32 %v10418, %v10506
  %10508 = vmatmul.bf16.gmra.mxu0 %v9707
  %v10509 = vpop.f32.mrf.mxu0
  %v10510 = vadd.f32 %v10421, %v10509
  %v10511 = vpop.f32.mrf.mxu0
  %v10512 = vadd.f32 %v10423, %v10511
  %10513 = vmatmul.bf16.gmra.mxu0 %v9715
  %v10514 = vpop.f32.mrf.mxu0
  %v10515 = vadd.f32 %v10426, %v10514
  %v10516 = vpop.f32.mrf.mxu0
  %v10517 = vadd.f32 %v10428, %v10516
  %10518 = vmatmul.bf16.gmra.mxu0 %v9723
  %v10519 = vpop.f32.mrf.mxu0
  %v10520 = vadd.f32 %v10431, %v10519
  %v10521 = vpop.f32.mrf.mxu0
  %v10522 = vadd.f32 %v10433, %v10521
  %10523 = vmatmul.bf16.gmra.mxu0 %v9731
  %v10524 = vpop.f32.mrf.mxu0
  %v10525 = vadd.f32 %v10436, %v10524
  %v10526 = vpop.f32.mrf.mxu0
  %v10527 = vadd.f32 %v10438, %v10526
  %10528 = vmatmul.bf16.gmra.mxu0 %v9739
  %v10529 = vpop.f32.mrf.mxu0
  %v10530 = vadd.f32 %v10441, %v10529
  %v10531 = vpop.f32.mrf.mxu0
  %v10532 = vadd.f32 %v10443, %v10531
  %10533 = vmatmul.bf16.gmra.mxu0 %v9747
  %v10534 = vpop.f32.mrf.mxu0
  %v10535 = vadd.f32 %v10446, %v10534
  %v10536 = vpop.f32.mrf.mxu0
  %v10537 = vadd.f32 %v10448, %v10536
  %10538 = vmatmul.bf16.gmra.mxu0 %v9755
  %v10539 = vpop.f32.mrf.mxu0
  %v10540 = vadd.f32 %v10451, %v10539
  %v10541 = vpop.f32.mrf.mxu0
  %v10542 = vadd.f32 %v10453, %v10541
  %10543 = vdwg.mxu0
  %10544 = vmatpush.bf16.msra.mxu0 %v10180
  %10545 = vmatpush.bf16.msra.mxu0 %v10179
  %10546 = vmatpush.bf16.msra.mxu0 %v10178
  %10547 = vmatpush.bf16.msra.mxu0 %v10177
  %10548 = vmatpush.bf16.msra.mxu0 %v10176
  %10549 = vmatpush.bf16.msra.mxu0 %v10175
  %10550 = vmatpush.bf16.msra.mxu0 %v10174
  %10551 = vmatpush.bf16.msra.mxu0 %v10173
  %10552 = vmatmul.bf16.gmra.mxu0 %v9636
  %v10553 = vpop.f32.mrf.mxu0
  %v10554 = vadd.f32 %v10465, %v10553
  %v10555 = vpop.f32.mrf.mxu0
  %v10556 = vadd.f32 %v10467, %v10555
  %10557 = vmatmul.bf16.gmra.mxu0 %v9644
  %v10558 = vpop.f32.mrf.mxu0
  %v10559 = vadd.f32 %v10470, %v10558
  %v10560 = vpop.f32.mrf.mxu0
  %v10561 = vadd.f32 %v10472, %v10560
  %10562 = vmatmul.bf16.gmra.mxu0 %v9652
  %v10563 = vpop.f32.mrf.mxu0
  %v10564 = vadd.f32 %v10475, %v10563
  %v10565 = vpop.f32.mrf.mxu0
  %v10566 = vadd.f32 %v10477, %v10565
  %10567 = vmatmul.bf16.gmra.mxu0 %v9660
  %v10568 = vpop.f32.mrf.mxu0
  %v10569 = vadd.f32 %v10480, %v10568
  %v10570 = vpop.f32.mrf.mxu0
  %v10571 = vadd.f32 %v10482, %v10570
  %10572 = vmatmul.bf16.gmra.mxu0 %v9668
  %v10573 = vpop.f32.mrf.mxu0
  %v10574 = vadd.f32 %v10485, %v10573
  %v10575 = vpop.f32.mrf.mxu0
  %v10576 = vadd.f32 %v10487, %v10575
  %10577 = vmatmul.bf16.gmra.mxu0 %v9676
  %v10578 = vpop.f32.mrf.mxu0
  %v10579 = vadd.f32 %v10490, %v10578
  %v10580 = vpop.f32.mrf.mxu0
  %v10581 = vadd.f32 %v10492, %v10580
  %10582 = vmatmul.bf16.gmra.mxu0 %v9684
  %v10583 = vpop.f32.mrf.mxu0
  %v10584 = vadd.f32 %v10495, %v10583
  %v10585 = vpop.f32.mrf.mxu0
  %v10586 = vadd.f32 %v10497, %v10585
  %10587 = vmatmul.bf16.gmra.mxu0 %v9692
  %v10588 = vpop.f32.mrf.mxu0
  %v10589 = vadd.f32 %v10500, %v10588
  %v10590 = vpop.f32.mrf.mxu0
  %v10591 = vadd.f32 %v10502, %v10590
  %10592 = vmatmul.bf16.gmra.mxu0 %v9700
  %v10593 = vpop.f32.mrf.mxu0
  %v10594 = vadd.f32 %v10505, %v10593
  %v10595 = vpop.f32.mrf.mxu0
  %v10596 = vadd.f32 %v10507, %v10595
  %10597 = vmatmul.bf16.gmra.mxu0 %v9708
  %v10598 = vpop.f32.mrf.mxu0
  %v10599 = vadd.f32 %v10510, %v10598
  %v10600 = vpop.f32.mrf.mxu0
  %v10601 = vadd.f32 %v10512, %v10600
  %10602 = vmatmul.bf16.gmra.mxu0 %v9716
  %v10603 = vpop.f32.mrf.mxu0
  %v10604 = vadd.f32 %v10515, %v10603
  %v10605 = vpop.f32.mrf.mxu0
  %v10606 = vadd.f32 %v10517, %v10605
  %10607 = vmatmul.bf16.gmra.mxu0 %v9724
  %v10608 = vpop.f32.mrf.mxu0
  %v10609 = vadd.f32 %v10520, %v10608
  %v10610 = vpop.f32.mrf.mxu0
  %v10611 = vadd.f32 %v10522, %v10610
  %10612 = vmatmul.bf16.gmra.mxu0 %v9732
  %v10613 = vpop.f32.mrf.mxu0
  %v10614 = vadd.f32 %v10525, %v10613
  %v10615 = vpop.f32.mrf.mxu0
  %v10616 = vadd.f32 %v10527, %v10615
  %10617 = vmatmul.bf16.gmra.mxu0 %v9740
  %v10618 = vpop.f32.mrf.mxu0
  %v10619 = vadd.f32 %v10530, %v10618
  %v10620 = vpop.f32.mrf.mxu0
  %v10621 = vadd.f32 %v10532, %v10620
  %10622 = vmatmul.bf16.gmra.mxu0 %v9748
  %v10623 = vpop.f32.mrf.mxu0
  %v10624 = vadd.f32 %v10535, %v10623
  %v10625 = vpop.f32.mrf.mxu0
  %v10626 = vadd.f32 %v10537, %v10625
  %10627 = vmatmul.bf16.gmra.mxu0 %v9756
  %v10628 = vpop.f32.mrf.mxu0
  %v10629 = vadd.f32 %v10540, %v10628
  %v10630 = vpop.f32.mrf.mxu0
  %v10631 = vadd.f32 %v10542, %v10630
  %10632 = vdwg.mxu0
  %10633 = vmatpush.bf16.msra.mxu0 %v10188
  %10634 = vmatpush.bf16.msra.mxu0 %v10187
  %10635 = vmatpush.bf16.msra.mxu0 %v10186
  %10636 = vmatpush.bf16.msra.mxu0 %v10185
  %10637 = vmatpush.bf16.msra.mxu0 %v10184
  %10638 = vmatpush.bf16.msra.mxu0 %v10183
  %10639 = vmatpush.bf16.msra.mxu0 %v10182
  %10640 = vmatpush.bf16.msra.mxu0 %v10181
  %10641 = vmatmul.bf16.gmra.mxu0 %v9637
  %v10642 = vpop.f32.mrf.mxu0
  %v10643 = vadd.f32 %v10554, %v10642
  %v10644 = vpop.f32.mrf.mxu0
  %v10645 = vadd.f32 %v10556, %v10644
  %10646 = vmatmul.bf16.gmra.mxu0 %v9645
  %v10647 = vpop.f32.mrf.mxu0
  %v10648 = vadd.f32 %v10559, %v10647
  %v10649 = vpop.f32.mrf.mxu0
  %v10650 = vadd.f32 %v10561, %v10649
  %10651 = vmatmul.bf16.gmra.mxu0 %v9653
  %v10652 = vpop.f32.mrf.mxu0
  %v10653 = vadd.f32 %v10564, %v10652
  %v10654 = vpop.f32.mrf.mxu0
  %v10655 = vadd.f32 %v10566, %v10654
  %10656 = vmatmul.bf16.gmra.mxu0 %v9661
  %v10657 = vpop.f32.mrf.mxu0
  %v10658 = vadd.f32 %v10569, %v10657
  %v10659 = vpop.f32.mrf.mxu0
  %v10660 = vadd.f32 %v10571, %v10659
  %10661 = vmatmul.bf16.gmra.mxu0 %v9669
  %v10662 = vpop.f32.mrf.mxu0
  %v10663 = vadd.f32 %v10574, %v10662
  %v10664 = vpop.f32.mrf.mxu0
  %v10665 = vadd.f32 %v10576, %v10664
  %10666 = vmatmul.bf16.gmra.mxu0 %v9677
  %v10667 = vpop.f32.mrf.mxu0
  %v10668 = vadd.f32 %v10579, %v10667
  %v10669 = vpop.f32.mrf.mxu0
  %v10670 = vadd.f32 %v10581, %v10669
  %10671 = vmatmul.bf16.gmra.mxu0 %v9685
  %v10672 = vpop.f32.mrf.mxu0
  %v10673 = vadd.f32 %v10584, %v10672
  %v10674 = vpop.f32.mrf.mxu0
  %v10675 = vadd.f32 %v10586, %v10674
  %10676 = vmatmul.bf16.gmra.mxu0 %v9693
  %v10677 = vpop.f32.mrf.mxu0
  %v10678 = vadd.f32 %v10589, %v10677
  %v10679 = vpop.f32.mrf.mxu0
  %v10680 = vadd.f32 %v10591, %v10679
  %10681 = vmatmul.bf16.gmra.mxu0 %v9701
  %v10682 = vpop.f32.mrf.mxu0
  %v10683 = vadd.f32 %v10594, %v10682
  %v10684 = vpop.f32.mrf.mxu0
  %v10685 = vadd.f32 %v10596, %v10684
  %10686 = vmatmul.bf16.gmra.mxu0 %v9709
  %v10687 = vpop.f32.mrf.mxu0
  %v10688 = vadd.f32 %v10599, %v10687
  %v10689 = vpop.f32.mrf.mxu0
  %v10690 = vadd.f32 %v10601, %v10689
  %10691 = vmatmul.bf16.gmra.mxu0 %v9717
  %v10692 = vpop.f32.mrf.mxu0
  %v10693 = vadd.f32 %v10604, %v10692
  %v10694 = vpop.f32.mrf.mxu0
  %v10695 = vadd.f32 %v10606, %v10694
  %10696 = vmatmul.bf16.gmra.mxu0 %v9725
  %v10697 = vpop.f32.mrf.mxu0
  %v10698 = vadd.f32 %v10609, %v10697
  %v10699 = vpop.f32.mrf.mxu0
  %v10700 = vadd.f32 %v10611, %v10699
  %10701 = vmatmul.bf16.gmra.mxu0 %v9733
  %v10702 = vpop.f32.mrf.mxu0
  %v10703 = vadd.f32 %v10614, %v10702
  %v10704 = vpop.f32.mrf.mxu0
  %v10705 = vadd.f32 %v10616, %v10704
  %10706 = vmatmul.bf16.gmra.mxu0 %v9741
  %v10707 = vpop.f32.mrf.mxu0
  %v10708 = vadd.f32 %v10619, %v10707
  %v10709 = vpop.f32.mrf.mxu0
  %v10710 = vadd.f32 %v10621, %v10709
  %10711 = vmatmul.bf16.gmra.mxu0 %v9749
  %v10712 = vpop.f32.mrf.mxu0
  %v10713 = vadd.f32 %v10624, %v10712
  %v10714 = vpop.f32.mrf.mxu0
  %v10715 = vadd.f32 %v10626, %v10714
  %10716 = vmatmul.bf16.gmra.mxu0 %v9757
  %v10717 = vpop.f32.mrf.mxu0
  %v10718 = vadd.f32 %v10629, %v10717
  %v10719 = vpop.f32.mrf.mxu0
  %v10720 = vadd.f32 %v10631, %v10719
  %10721 = vdwg.mxu0
  %10722 = vmatpush.bf16.msra.mxu0 %v10196
  %10723 = vmatpush.bf16.msra.mxu0 %v10195
  %10724 = vmatpush.bf16.msra.mxu0 %v10194
  %10725 = vmatpush.bf16.msra.mxu0 %v10193
  %10726 = vmatpush.bf16.msra.mxu0 %v10192
  %10727 = vmatpush.bf16.msra.mxu0 %v10191
  %10728 = vmatpush.bf16.msra.mxu0 %v10190
  %10729 = vmatpush.bf16.msra.mxu0 %v10189
  %10730 = vmatmul.bf16.gmra.mxu0 %v9638
  %v10731 = vpop.f32.mrf.mxu0
  %v10732 = vadd.f32 %v10643, %v10731
  %v10733 = vpop.f32.mrf.mxu0
  %v10734 = vadd.f32 %v10645, %v10733
  %10735 = vmatmul.bf16.gmra.mxu0 %v9646
  %v10736 = vpop.f32.mrf.mxu0
  %v10737 = vadd.f32 %v10648, %v10736
  %v10738 = vpop.f32.mrf.mxu0
  %v10739 = vadd.f32 %v10650, %v10738
  %10740 = vmatmul.bf16.gmra.mxu0 %v9654
  %v10741 = vpop.f32.mrf.mxu0
  %v10742 = vadd.f32 %v10653, %v10741
  %v10743 = vpop.f32.mrf.mxu0
  %v10744 = vadd.f32 %v10655, %v10743
  %10745 = vmatmul.bf16.gmra.mxu0 %v9662
  %v10746 = vpop.f32.mrf.mxu0
  %v10747 = vadd.f32 %v10658, %v10746
  %v10748 = vpop.f32.mrf.mxu0
  %v10749 = vadd.f32 %v10660, %v10748
  %10750 = vmatmul.bf16.gmra.mxu0 %v9670
  %v10751 = vpop.f32.mrf.mxu0
  %v10752 = vadd.f32 %v10663, %v10751
  %v10753 = vpop.f32.mrf.mxu0
  %v10754 = vadd.f32 %v10665, %v10753
  %10755 = vmatmul.bf16.gmra.mxu0 %v9678
  %v10756 = vpop.f32.mrf.mxu0
  %v10757 = vadd.f32 %v10668, %v10756
  %v10758 = vpop.f32.mrf.mxu0
  %v10759 = vadd.f32 %v10670, %v10758
  %10760 = vmatmul.bf16.gmra.mxu0 %v9686
  %v10761 = vpop.f32.mrf.mxu0
  %v10762 = vadd.f32 %v10673, %v10761
  %v10763 = vpop.f32.mrf.mxu0
  %v10764 = vadd.f32 %v10675, %v10763
  %10765 = vmatmul.bf16.gmra.mxu0 %v9694
  %v10766 = vpop.f32.mrf.mxu0
  %v10767 = vadd.f32 %v10678, %v10766
  %v10768 = vpop.f32.mrf.mxu0
  %v10769 = vadd.f32 %v10680, %v10768
  %10770 = vmatmul.bf16.gmra.mxu0 %v9702
  %v10771 = vpop.f32.mrf.mxu0
  %v10772 = vadd.f32 %v10683, %v10771
  %v10773 = vpop.f32.mrf.mxu0
  %v10774 = vadd.f32 %v10685, %v10773
  %10775 = vmatmul.bf16.gmra.mxu0 %v9710
  %v10776 = vpop.f32.mrf.mxu0
  %v10777 = vadd.f32 %v10688, %v10776
  %v10778 = vpop.f32.mrf.mxu0
  %v10779 = vadd.f32 %v10690, %v10778
  %10780 = vmatmul.bf16.gmra.mxu0 %v9718
  %v10781 = vpop.f32.mrf.mxu0
  %v10782 = vadd.f32 %v10693, %v10781
  %v10783 = vpop.f32.mrf.mxu0
  %v10784 = vadd.f32 %v10695, %v10783
  %10785 = vmatmul.bf16.gmra.mxu0 %v9726
  %v10786 = vpop.f32.mrf.mxu0
  %v10787 = vadd.f32 %v10698, %v10786
  %v10788 = vpop.f32.mrf.mxu0
  %v10789 = vadd.f32 %v10700, %v10788
  %10790 = vmatmul.bf16.gmra.mxu0 %v9734
  %v10791 = vpop.f32.mrf.mxu0
  %v10792 = vadd.f32 %v10703, %v10791
  %v10793 = vpop.f32.mrf.mxu0
  %v10794 = vadd.f32 %v10705, %v10793
  %10795 = vmatmul.bf16.gmra.mxu0 %v9742
  %v10796 = vpop.f32.mrf.mxu0
  %v10797 = vadd.f32 %v10708, %v10796
  %v10798 = vpop.f32.mrf.mxu0
  %v10799 = vadd.f32 %v10710, %v10798
  %10800 = vmatmul.bf16.gmra.mxu0 %v9750
  %v10801 = vpop.f32.mrf.mxu0
  %v10802 = vadd.f32 %v10713, %v10801
  %v10803 = vpop.f32.mrf.mxu0
  %v10804 = vadd.f32 %v10715, %v10803
  %10805 = vmatmul.bf16.gmra.mxu0 %v9758
  %v10806 = vpop.f32.mrf.mxu0
  %v10807 = vadd.f32 %v10718, %v10806
  %v10808 = vpop.f32.mrf.mxu0
  %v10809 = vadd.f32 %v10720, %v10808
  %10810 = vdwg.mxu0
  %10811 = vmatpush.bf16.msra.mxu0 %v10204
  %10812 = vmatpush.bf16.msra.mxu0 %v10203
  %10813 = vmatpush.bf16.msra.mxu0 %v10202
  %10814 = vmatpush.bf16.msra.mxu0 %v10201
  %10815 = vmatpush.bf16.msra.mxu0 %v10200
  %10816 = vmatpush.bf16.msra.mxu0 %v10199
  %10817 = vmatpush.bf16.msra.mxu0 %v10198
  %10818 = vmatpush.bf16.msra.mxu0 %v10197
  %10819 = vmatmul.bf16.gmra.mxu0 %v9639
  %v10820 = vpop.f32.mrf.mxu0
  %v10821 = vadd.f32 %v10732, %v10820
  %v10822 = vpop.f32.mrf.mxu0
  %v10823 = vadd.f32 %v10734, %v10822
  %10824 = vmatmul.bf16.gmra.mxu0 %v9647
  %v10825 = vpop.f32.mrf.mxu0
  %v10826 = vadd.f32 %v10737, %v10825
  %v10827 = vpop.f32.mrf.mxu0
  %v10828 = vadd.f32 %v10739, %v10827
  %10829 = vmatmul.bf16.gmra.mxu0 %v9655
  %v10830 = vpop.f32.mrf.mxu0
  %v10831 = vadd.f32 %v10742, %v10830
  %v10832 = vpop.f32.mrf.mxu0
  %v10833 = vadd.f32 %v10744, %v10832
  %10834 = vmatmul.bf16.gmra.mxu0 %v9663
  %v10835 = vpop.f32.mrf.mxu0
  %v10836 = vadd.f32 %v10747, %v10835
  %v10837 = vpop.f32.mrf.mxu0
  %v10838 = vadd.f32 %v10749, %v10837
  %10839 = vmatmul.bf16.gmra.mxu0 %v9671
  %v10840 = vpop.f32.mrf.mxu0
  %v10841 = vadd.f32 %v10752, %v10840
  %v10842 = vpop.f32.mrf.mxu0
  %v10843 = vadd.f32 %v10754, %v10842
  %10844 = vmatmul.bf16.gmra.mxu0 %v9679
  %v10845 = vpop.f32.mrf.mxu0
  %v10846 = vadd.f32 %v10757, %v10845
  %v10847 = vpop.f32.mrf.mxu0
  %v10848 = vadd.f32 %v10759, %v10847
  %10849 = vmatmul.bf16.gmra.mxu0 %v9687
  %v10850 = vpop.f32.mrf.mxu0
  %v10851 = vadd.f32 %v10762, %v10850
  %v10852 = vpop.f32.mrf.mxu0
  %v10853 = vadd.f32 %v10764, %v10852
  %10854 = vmatmul.bf16.gmra.mxu0 %v9695
  %v10855 = vpop.f32.mrf.mxu0
  %v10856 = vadd.f32 %v10767, %v10855
  %v10857 = vpop.f32.mrf.mxu0
  %v10858 = vadd.f32 %v10769, %v10857
  %10859 = vmatmul.bf16.gmra.mxu0 %v9703
  %v10860 = vpop.f32.mrf.mxu0
  %v10861 = vadd.f32 %v10772, %v10860
  %v10862 = vpop.f32.mrf.mxu0
  %v10863 = vadd.f32 %v10774, %v10862
  %10864 = vmatmul.bf16.gmra.mxu0 %v9711
  %v10865 = vpop.f32.mrf.mxu0
  %v10866 = vadd.f32 %v10777, %v10865
  %v10867 = vpop.f32.mrf.mxu0
  %v10868 = vadd.f32 %v10779, %v10867
  %10869 = vmatmul.bf16.gmra.mxu0 %v9719
  %v10870 = vpop.f32.mrf.mxu0
  %v10871 = vadd.f32 %v10782, %v10870
  %v10872 = vpop.f32.mrf.mxu0
  %v10873 = vadd.f32 %v10784, %v10872
  %10874 = vmatmul.bf16.gmra.mxu0 %v9727
  %v10875 = vpop.f32.mrf.mxu0
  %v10876 = vadd.f32 %v10787, %v10875
  %v10877 = vpop.f32.mrf.mxu0
  %v10878 = vadd.f32 %v10789, %v10877
  %10879 = vmatmul.bf16.gmra.mxu0 %v9735
  %v10880 = vpop.f32.mrf.mxu0
  %v10881 = vadd.f32 %v10792, %v10880
  %v10882 = vpop.f32.mrf.mxu0
  %v10883 = vadd.f32 %v10794, %v10882
  %10884 = vmatmul.bf16.gmra.mxu0 %v9743
  %v10885 = vpop.f32.mrf.mxu0
  %v10886 = vadd.f32 %v10797, %v10885
  %v10887 = vpop.f32.mrf.mxu0
  %v10888 = vadd.f32 %v10799, %v10887
  %10889 = vmatmul.bf16.gmra.mxu0 %v9751
  %v10890 = vpop.f32.mrf.mxu0
  %v10891 = vadd.f32 %v10802, %v10890
  %v10892 = vpop.f32.mrf.mxu0
  %v10893 = vadd.f32 %v10804, %v10892
  %10894 = vmatmul.bf16.gmra.mxu0 %v9759
  %v10895 = vpop.f32.mrf.mxu0
  %v10896 = vadd.f32 %v10807, %v10895
  %v10897 = vpop.f32.mrf.mxu0
  %v10898 = vadd.f32 %v10809, %v10897
  %10899 = vdwg.mxu0
  %10900 = vmatpush.bf16.msra.mxu0 %v10212
  %10901 = vmatpush.bf16.msra.mxu0 %v10211
  %10902 = vmatpush.bf16.msra.mxu0 %v10210
  %10903 = vmatpush.bf16.msra.mxu0 %v10209
  %10904 = vmatpush.bf16.msra.mxu0 %v10208
  %10905 = vmatpush.bf16.msra.mxu0 %v10207
  %10906 = vmatpush.bf16.msra.mxu0 %v10206
  %10907 = vmatpush.bf16.msra.mxu0 %v10205
  %10908 = vmatmul.bf16.gmra.mxu0 %v9640
  %v10909 = vpop.f32.mrf.mxu0
  %v10910 = vadd.f32 %v10821, %v10909
  %v10911 = vpop.f32.mrf.mxu0
  %v10912 = vadd.f32 %v10823, %v10911
  %10913 = vmatmul.bf16.gmra.mxu0 %v9648
  %v10914 = vpop.f32.mrf.mxu0
  %v10915 = vadd.f32 %v10826, %v10914
  %v10916 = vpop.f32.mrf.mxu0
  %v10917 = vadd.f32 %v10828, %v10916
  %10918 = vmatmul.bf16.gmra.mxu0 %v9656
  %v10919 = vpop.f32.mrf.mxu0
  %v10920 = vadd.f32 %v10831, %v10919
  %v10921 = vpop.f32.mrf.mxu0
  %v10922 = vadd.f32 %v10833, %v10921
  %10923 = vmatmul.bf16.gmra.mxu0 %v9664
  %v10924 = vpop.f32.mrf.mxu0
  %v10925 = vadd.f32 %v10836, %v10924
  %v10926 = vpop.f32.mrf.mxu0
  %v10927 = vadd.f32 %v10838, %v10926
  %10928 = vmatmul.bf16.gmra.mxu0 %v9672
  %v10929 = vpop.f32.mrf.mxu0
  %v10930 = vadd.f32 %v10841, %v10929
  %v10931 = vpop.f32.mrf.mxu0
  %v10932 = vadd.f32 %v10843, %v10931
  %10933 = vmatmul.bf16.gmra.mxu0 %v9680
  %v10934 = vpop.f32.mrf.mxu0
  %v10935 = vadd.f32 %v10846, %v10934
  %v10936 = vpop.f32.mrf.mxu0
  %v10937 = vadd.f32 %v10848, %v10936
  %10938 = vmatmul.bf16.gmra.mxu0 %v9688
  %v10939 = vpop.f32.mrf.mxu0
  %v10940 = vadd.f32 %v10851, %v10939
  %v10941 = vpop.f32.mrf.mxu0
  %v10942 = vadd.f32 %v10853, %v10941
  %10943 = vmatmul.bf16.gmra.mxu0 %v9696
  %v10944 = vpop.f32.mrf.mxu0
  %v10945 = vadd.f32 %v10856, %v10944
  %v10946 = vpop.f32.mrf.mxu0
  %v10947 = vadd.f32 %v10858, %v10946
  %10948 = vmatmul.bf16.gmra.mxu0 %v9704
  %v10949 = vpop.f32.mrf.mxu0
  %v10950 = vadd.f32 %v10861, %v10949
  %v10951 = vpop.f32.mrf.mxu0
  %v10952 = vadd.f32 %v10863, %v10951
  %10953 = vmatmul.bf16.gmra.mxu0 %v9712
  %v10954 = vpop.f32.mrf.mxu0
  %v10955 = vadd.f32 %v10866, %v10954
  %v10956 = vpop.f32.mrf.mxu0
  %v10957 = vadd.f32 %v10868, %v10956
  %10958 = vmatmul.bf16.gmra.mxu0 %v9720
  %v10959 = vpop.f32.mrf.mxu0
  %v10960 = vadd.f32 %v10871, %v10959
  %v10961 = vpop.f32.mrf.mxu0
  %v10962 = vadd.f32 %v10873, %v10961
  %10963 = vmatmul.bf16.gmra.mxu0 %v9728
  %v10964 = vpop.f32.mrf.mxu0
  %v10965 = vadd.f32 %v10876, %v10964
  %v10966 = vpop.f32.mrf.mxu0
  %v10967 = vadd.f32 %v10878, %v10966
  %10968 = vmatmul.bf16.gmra.mxu0 %v9736
  %v10969 = vpop.f32.mrf.mxu0
  %v10970 = vadd.f32 %v10881, %v10969
  %v10971 = vpop.f32.mrf.mxu0
  %v10972 = vadd.f32 %v10883, %v10971
  %10973 = vmatmul.bf16.gmra.mxu0 %v9744
  %v10974 = vpop.f32.mrf.mxu0
  %v10975 = vadd.f32 %v10886, %v10974
  %v10976 = vpop.f32.mrf.mxu0
  %v10977 = vadd.f32 %v10888, %v10976
  %10978 = vmatmul.bf16.gmra.mxu0 %v9752
  %v10979 = vpop.f32.mrf.mxu0
  %v10980 = vadd.f32 %v10891, %v10979
  %v10981 = vpop.f32.mrf.mxu0
  %v10982 = vadd.f32 %v10893, %v10981
  %10983 = vmatmul.bf16.gmra.mxu0 %v9760
  %v10984 = vpop.f32.mrf.mxu0
  %v10985 = vadd.f32 %v10896, %v10984
  %v10986 = vpop.f32.mrf.mxu0
  %v10987 = vadd.f32 %v10898, %v10986
  %10988 = vdwg.mxu0
  %10989 = vst [vmem:[%s8] sm:$0xff] %v10910
  %10990 = vst [vmem:[%s8 + $0x8] sm:$0xff] %v10912
  %10991 = vst [vmem:[%s8 + $0x10] sm:$0xff] %v10915
  %10992 = vst [vmem:[%s8 + $0x18] sm:$0xff] %v10917
  %10993 = vst [vmem:[%s8 + $0x20] sm:$0xff] %v10920
  %10994 = vst [vmem:[%s8 + $0x28] sm:$0xff] %v10922
  %10995 = vst [vmem:[%s8 + $0x30] sm:$0xff] %v10925
  %10996 = vst [vmem:[%s8 + $0x38] sm:$0xff] %v10927
  %10997 = vst [vmem:[%s8 + $0x40] sm:$0xff] %v10930
  %10998 = vst [vmem:[%s8 + $0x48] sm:$0xff] %v10932
  %10999 = vst [vmem:[%s8 + $0x50] sm:$0xff] %v10935
  %11000 = vst [vmem:[%s8 + $0x58] sm:$0xff] %v10937
  %11001 = vst [vmem:[%s8 + $0x60] sm:$0xff] %v10940
  %11002 = vst [vmem:[%s8 + $0x68] sm:$0xff] %v10942
  %11003 = vst [vmem:[%s8 + $0x70] sm:$0xff] %v10945
  %11004 = vst [vmem:[%s8 + $0x78] sm:$0xff] %v10947
  %11005 = vst [vmem:[%s8 + $0x80] sm:$0xff] %v10950
  %11006 = vst [vmem:[%s8 + $0x88] sm:$0xff] %v10952
  %11007 = vst [vmem:[%s8 + $0x90] sm:$0xff] %v10955
  %11008 = vst [vmem:[%s8 + $0x98] sm:$0xff] %v10957
  %11009 = vst [vmem:[%s8 + $0xa0] sm:$0xff] %v10960
  %11010 = vst [vmem:[%s8 + $0xa8] sm:$0xff] %v10962
  %11011 = vst [vmem:[%s8 + $0xb0] sm:$0xff] %v10965
  %11012 = vst [vmem:[%s8 + $0xb8] sm:$0xff] %v10967
  %11013 = vst [vmem:[%s8 + $0xc0] sm:$0xff] %v10970
  %11014 = vst [vmem:[%s8 + $0xc8] sm:$0xff] %v10972
  %11015 = vst [vmem:[%s8 + $0xd0] sm:$0xff] %v10975
  %11016 = vst [vmem:[%s8 + $0xd8] sm:$0xff] %v10977
  %11017 = vst [vmem:[%s8 + $0xe0] sm:$0xff] %v10980
  %11018 = vst [vmem:[%s8 + $0xe8] sm:$0xff] %v10982
  %11019 = vst [vmem:[%s8 + $0xf0] sm:$0xff] %v10985
  %11020 = vst [vmem:[%s8 + $0xf8] sm:$0xff] %v10987
  // Predicated region
  $region34: #{gnn_forward.1} parent=0 // pred_check
    _
  $region35: #{gnn_forward.1} parent=0 // pred_check_branch
    %11022 = sbr.rel (0) target = $region37
  $region36: #{gnn_forward.1} parent=0 // pred_region
    _
  $region37: #{gnn_forward.1} parent=0 // pred_fallthru
    _
  // Predicated region
  $region38: #{gnn_forward.1} parent=0 // pred_check
    _
  $region39: #{gnn_forward.1} parent=0 // pred_check_branch
    %11024 = sbr.rel (0) target = $region41
  $region40: #{gnn_forward.1} parent=0 // pred_region
    _
  $region41: #{gnn_forward.1} parent=0 // pred_fallthru
    _

</llo_original>
